<compile_context>
chip_gen: v7x
topology: tpu7x:2x2x1
jax: 0.10.0
libtpu: 0.0.40
codegen_flags: <defaults>
</compile_context>

<pallas_src>
import functools

import jax
import jax.numpy as jnp
import numpy as np
from jax import lax
from jax.experimental import pallas as pl
from jax.experimental.pallas import tpu as pltpu


def _inception_aux_kernel(x_ref, pool_ref, wcT_ref, bc_ref, band_ref,
                          b1_ref, w2t_ref, b2_ref, w1_hbm_ref,
                          o_ref,
                          w1_vmem, dma_sems,
                          *, n_batch, n_spatial, n_chunks):
    rows_per_chunk = (n_spatial * 128) // n_chunks
    spat_per_chunk = n_spatial // n_chunks

    # Kick off every fc1-weight chunk DMA immediately; they stream HBM->VMEM
    # while the (tiny) conv/LRN stage below runs on the MXU/VPU.
    copies = []
    for k in range(n_chunks):
        cp = pltpu.make_async_copy(
            w1_hbm_ref.at[pl.ds(k * rows_per_chunk, rows_per_chunk), :],
            w1_vmem.at[pl.ds(k * rows_per_chunk, rows_per_chunk), :],
            dma_sems.at[k])
        cp.start()
        copies.append(cp)

    pool = pool_ref[...]          # (S, H*W)  AvgPool2d(5, stride=3) as a matmul
    wcT = wcT_ref[...]            # (C_in, 128)
    bc = bc_ref[...]              # (1, 128)
    band = band_ref[...]          # (128, 128) 0/1 band |c-c'| <= 2 for LRN

    # --- conv stage, per batch (channel-last, 128-lane-dense) ---
    ys = []
    for n in range(n_batch):
        x_n = x_ref[n]                                              # (H*W, C_in)
        pooled = jnp.dot(pool, x_n, preferred_element_type=jnp.float32)   # (S, C_in)
        y = jnp.dot(pooled, wcT, preferred_element_type=jnp.float32) + bc  # (S, 128)
        y = jnp.maximum(y, 0.0)                                     # ReLU
        # LocalResponseNorm(size=5, alpha=1e-4, beta=0.75, k=2) over channels.
        winsum = jnp.dot(y * y, band, preferred_element_type=jnp.float32)
        base = 2.0 + (1e-4 / 5.0) * winsum
        y = y * lax.rsqrt(base * jnp.sqrt(base))                    # y / base**0.75
        # The module's outer ReLU after the LRN is a no-op (y >= 0, denom > 0).
        ys.append(y)

    # --- FC1 (2048 -> 1024): K-chunked accumulation overlapping the weight DMA.
    #     Packed weight row = s*128 + c already encodes the NCHW-flatten
    #     permutation (feature = c*S + s), so no flatten scratch is needed. ---
    h = jnp.zeros((n_batch, 1024), jnp.float32)
    for k in range(n_chunks):
        copies[k].wait()
        for t in range(spat_per_chunk):
            s = k * spat_per_chunk + t
            y_s = jnp.concatenate([ys[n][s:s + 1, :] for n in range(n_batch)],
                                  axis=0)                           # (N, 128)
            w1_s = w1_vmem[pl.ds(s * 128, 128), :]                  # (128, 1024) bf16
            h = h + jnp.dot(y_s.astype(jnp.bfloat16), w1_s,
                            preferred_element_type=jnp.float32)
    h = jnp.maximum(h + b1_ref[...], 0.0)                           # ReLU
    # TODO(synk): nn.Dropout() treated as identity (inference / eval semantics).

    # --- FC2 (1024 -> num_classes, padded to 128 lanes for a lane-dense store).
    o_ref[...] = jnp.dot(h.astype(jnp.bfloat16), w2t_ref[...],
                         preferred_element_type=jnp.float32) + b2_ref[...]


@functools.lru_cache(maxsize=None)
def _pool_matrix(h, w):
    """Batch-independent (S, H*W) AvgPool2d(kernel=5, stride=3) matrix."""
    ho = (h - 5) // 3 + 1
    wo = (w - 5) // 3 + 1
    m = np.zeros((ho * wo, h * w), dtype=np.float32)
    for i in range(ho):
        for j in range(wo):
            r = i * wo + j
            for dh in range(5):
                for dw in range(5):
                    m[r, (3 * i + dh) * w + (3 * j + dw)] = 1.0 / 25.0
    return jnp.asarray(m)


@functools.lru_cache(maxsize=None)
def _band_matrix():
    """Banded 0/1 matrix for the LRN channel window |c - c'| <= 2."""
    idx = np.arange(128)
    return jnp.asarray((np.abs(idx[:, None] - idx[None, :]) <= 2).astype(np.float32))


def pack_params(params):
    """One-time parameter preparation (hoisted out of the per-call forward)."""
    conv_w = params["conv_w"]
    c_in = conv_w.shape[1]
    s_tot = 2048 // 128                                   # Linear(2048, 1024) => S = 16

    wcT = conv_w.reshape(128, c_in).T                     # (C_in, 128) f32
    bc = params["conv_b"].reshape(1, 128)

    # fc1 weight: fold the NCHW-flatten permutation (feature = c*S + s) into the
    # rows (row = s*128 + c) and cast to bf16 -- done ONCE, not per forward call.
    w1 = params["fc1_w"]                                  # (1024, 2048)
    w1p = jnp.transpose(w1.reshape(1024, 128, s_tot), (2, 1, 0))
    w1p = w1p.reshape(s_tot * 128, 1024).astype(jnp.bfloat16)
    b1 = params["fc1_b"].reshape(1, 1024)

    nc = params["fc2_w"].shape[0]
    ncp = max(128, ((nc + 127) // 128) * 128)             # lane-dense padded width
    w2t = jnp.zeros((1024, ncp), jnp.bfloat16).at[:, :nc].set(
        params["fc2_w"].T.astype(jnp.bfloat16))
    b2 = jnp.zeros((1, ncp), jnp.float32).at[:, :nc].set(
        params["fc2_b"].reshape(1, nc))

    return {"wcT": wcT, "bc": bc, "band": _band_matrix(), "w1p": w1p, "b1": b1,
            "w2t": w2t, "b2": b2, "num_classes": nc}


def inception_aux_forward(x, packed):
    N, C_in, H, W = x.shape
    Ho = (H - 5) // 3 + 1
    Wo = (W - 5) // 3 + 1
    S = Ho * Wo
    assert 128 * S == 2048, "InceptionAux hard-codes Linear(2048, 1024)"

    poolS = _pool_matrix(H, W)                                    # (S, H*W)
    xt = jnp.transpose(x, (0, 2, 3, 1)).reshape(N, H * W, C_in)   # channel-last

    n_chunks = 4 if S % 4 == 0 else (2 if S % 2 == 0 else 1)
    ncp = packed["w2t"].shape[1]

    kernel = functools.partial(_inception_aux_kernel,
                               n_batch=N, n_spatial=S, n_chunks=n_chunks)

    out = pl.pallas_call(
        kernel,
        out_shape=jax.ShapeDtypeStruct((N, ncp), jnp.float32),
        grid=(1,),
        in_specs=[
            pl.BlockSpec((N, H * W, C_in), lambda i: (0, 0, 0)),   # x (channel-last)
            pl.BlockSpec((S, H * W), lambda i: (0, 0)),            # pool matrix
            pl.BlockSpec((C_in, 128), lambda i: (0, 0)),           # conv weight^T
            pl.BlockSpec((1, 128), lambda i: (0, 0)),              # conv bias
            pl.BlockSpec((128, 128), lambda i: (0, 0)),            # LRN band matrix
            pl.BlockSpec((1, 1024), lambda i: (0, 0)),             # fc1 bias
            pl.BlockSpec((1024, ncp), lambda i: (0, 0)),           # fc2 weight^T (bf16, padded)
            pl.BlockSpec((1, ncp), lambda i: (0, 0)),              # fc2 bias (padded)
            pl.BlockSpec(memory_space=pl.ANY),                     # fc1 weight (bf16, HBM)
        ],
        out_specs=pl.BlockSpec((N, ncp), lambda i: (0, 0)),
        scratch_shapes=[
            pltpu.VMEM((S * 128, 1024), jnp.bfloat16),             # fc1 weight landing buffer
            pltpu.SemaphoreType.DMA((n_chunks,)),                  # per-chunk DMA semaphores
        ],
        compiler_params=pltpu.CompilerParams(
            dimension_semantics=("arbitrary",),
            vmem_limit_bytes=32 * 1024 * 1024),
    )(xt, poolS, packed["wcT"], packed["bc"], packed["band"], packed["b1"],
      packed["w2t"], packed["b2"], packed["w1p"])

    return out[:, :packed["num_classes"]]


def init_params(key, in_channels, num_classes):
    """Deterministic PyTorch-default-style (uniform +/- 1/sqrt(fan_in)) init."""
    ks = jax.random.split(key, 6)

    def u(k, shape, fan_in):
        bound = 1.0 / float(np.sqrt(fan_in))
        return jax.random.uniform(k, shape, jnp.float32, -bound, bound)

    return {
        "conv_w": u(ks[0], (128, in_channels, 1, 1), in_channels),  # Conv2d(in,128,1)
        "conv_b": u(ks[1], (128,), in_channels),
        "fc1_w": u(ks[2], (1024, 2048), 2048),                      # Linear(2048,1024)
        "fc1_b": u(ks[3], (1024,), 2048),
        "fc2_w": u(ks[4], (num_classes, 1024), 1024),               # Linear(1024,C)
        "fc2_b": u(ks[5], (num_classes,), 1024),
    }


if __name__ == "__main__":
    key = jax.random.PRNGKey(0)
    kx, kp = jax.random.split(key)

    # 14x14 spatial -> AvgPool2d(5, stride=3) -> 4x4; 128 * 4 * 4 = 2048
    # (required by the module's hard-coded Linear(2048, 1024)).
    N, C_in, H, W = 2, 8, 14, 14
    num_classes = 10

    x = jax.random.normal(kx, (N, C_in, H, W), jnp.float32)
    raw_params = init_params(kp, C_in, num_classes)
    packed = pack_params(raw_params)        # one-time weight repack (hoisted)

    out = inception_aux_forward(x, packed)
    jax.block_until_ready(out)
    assert out.shape == (N, num_classes) and out.dtype == jnp.float32
    print("KERNEL_OK")
</pallas_src>

<mosaic_0001>
module attributes {stable_mosaic.version = 11 : i64} {
  func.func @_inception_aux_kernel(%arg0: i32, %arg1: memref<2x196x8xf32, #tpu.memory_space<vmem>>, %arg2: memref<16x196xf32, #tpu.memory_space<vmem>>, %arg3: memref<8x128xf32, #tpu.memory_space<vmem>>, %arg4: memref<1x128xf32, #tpu.memory_space<vmem>>, %arg5: memref<128x128xf32, #tpu.memory_space<vmem>>, %arg6: memref<1x1024xf32, #tpu.memory_space<vmem>>, %arg7: memref<1024x128xbf16, #tpu.memory_space<vmem>>, %arg8: memref<1x128xf32, #tpu.memory_space<vmem>>, %arg9: memref<2048x1024xbf16, #tpu.memory_space<any>>, %arg10: memref<2x128xf32, #tpu.memory_space<vmem>>, %arg11: memref<2048x1024xbf16, #tpu.memory_space<vmem>>, %arg12: memref<4x!tpu.dma_semaphore, #tpu.memory_space<semaphore_mem>>) attributes {dimension_semantics = [#tpu.dimension_semantics<arbitrary>], iteration_bounds = array<i64: 1>, scalar_prefetch = 0 : i64, scratch_operands = 2 : i64, tpu.core_type = #tpu.core_type<tc>, window_params = [{pipeline_mode = #tpu.pipeline_mode<synchronous>, transform_indices = @transform_0, window_bounds = array<i64: 2, 196, 8>}, {pipeline_mode = #tpu.pipeline_mode<synchronous>, transform_indices = @transform_1, window_bounds = array<i64: 16, 196>}, {pipeline_mode = #tpu.pipeline_mode<synchronous>, transform_indices = @transform_2, window_bounds = array<i64: 8, 128>}, {pipeline_mode = #tpu.pipeline_mode<synchronous>, transform_indices = @transform_3, window_bounds = array<i64: 1, 128>}, {pipeline_mode = #tpu.pipeline_mode<synchronous>, transform_indices = @transform_4, window_bounds = array<i64: 128, 128>}, {pipeline_mode = #tpu.pipeline_mode<synchronous>, transform_indices = @transform_5, window_bounds = array<i64: 1, 1024>}, {pipeline_mode = #tpu.pipeline_mode<synchronous>, transform_indices = @transform_6, window_bounds = array<i64: 1024, 128>}, {pipeline_mode = #tpu.pipeline_mode<synchronous>, transform_indices = @transform_7, window_bounds = array<i64: 1, 128>}, {}, {pipeline_mode = #tpu.pipeline_mode<synchronous>, transform_indices = @transform_9, window_bounds = array<i64: 2, 128>}]} {
    %c0_i32 = arith.constant 0 : i32
    %c0_i32_0 = arith.constant 0 : i32
    %c0_i32_1 = arith.constant 0 : i32
    %0 = tpu.memref_slice %arg9[%c0_i32_0, %c0_i32_1] : memref<2048x1024xbf16, #tpu.memory_space<any>> -> memref<512x1024xbf16, #tpu.memory_space<any>>
    %c0_i32_2 = arith.constant 0 : i32
    %c0_i32_3 = arith.constant 0 : i32
    %1 = tpu.memref_slice %arg11[%c0_i32_2, %c0_i32_3] : memref<2048x1024xbf16, #tpu.memory_space<vmem>> -> memref<512x1024xbf16, #tpu.memory_space<vmem>>
    %2 = tpu.memref_slice %arg12[%c0_i32] : memref<4x!tpu.dma_semaphore, #tpu.memory_space<semaphore_mem>> -> memref<1x!tpu.dma_semaphore, #tpu.memory_space<semaphore_mem>>
    %3 = tpu.memref_squeeze %2 : memref<1x!tpu.dma_semaphore, #tpu.memory_space<semaphore_mem>> -> memref<!tpu.dma_semaphore, #tpu.memory_space<semaphore_mem>>
    tpu.enqueue_dma source(%0 : memref<512x1024xbf16, #tpu.memory_space<any>>) target(%1 : memref<512x1024xbf16, #tpu.memory_space<vmem>>) target_semaphore(%3 : memref<!tpu.dma_semaphore, #tpu.memory_space<semaphore_mem>>)
    %c1_i32 = arith.constant 1 : i32
    %c512_i32 = arith.constant 512 : i32
    %c0_i32_4 = arith.constant 0 : i32
    %4 = tpu.memref_slice %arg9[%c512_i32, %c0_i32_4] : memref<2048x1024xbf16, #tpu.memory_space<any>> -> memref<512x1024xbf16, #tpu.memory_space<any>>
    %c512_i32_5 = arith.constant 512 : i32
    %c0_i32_6 = arith.constant 0 : i32
    %5 = tpu.memref_slice %arg11[%c512_i32_5, %c0_i32_6] : memref<2048x1024xbf16, #tpu.memory_space<vmem>> -> memref<512x1024xbf16, #tpu.memory_space<vmem>>
    %6 = tpu.memref_slice %arg12[%c1_i32] : memref<4x!tpu.dma_semaphore, #tpu.memory_space<semaphore_mem>> -> memref<1x!tpu.dma_semaphore, #tpu.memory_space<semaphore_mem>>
    %7 = tpu.memref_squeeze %6 : memref<1x!tpu.dma_semaphore, #tpu.memory_space<semaphore_mem>> -> memref<!tpu.dma_semaphore, #tpu.memory_space<semaphore_mem>>
    tpu.enqueue_dma source(%4 : memref<512x1024xbf16, #tpu.memory_space<any>>) target(%5 : memref<512x1024xbf16, #tpu.memory_space<vmem>>) target_semaphore(%7 : memref<!tpu.dma_semaphore, #tpu.memory_space<semaphore_mem>>)
    %c2_i32 = arith.constant 2 : i32
    %c1024_i32 = arith.constant 1024 : i32
    %c0_i32_7 = arith.constant 0 : i32
    %8 = tpu.memref_slice %arg9[%c1024_i32, %c0_i32_7] : memref<2048x1024xbf16, #tpu.memory_space<any>> -> memref<512x1024xbf16, #tpu.memory_space<any>>
    %c1024_i32_8 = arith.constant 1024 : i32
    %c0_i32_9 = arith.constant 0 : i32
    %9 = tpu.memref_slice %arg11[%c1024_i32_8, %c0_i32_9] : memref<2048x1024xbf16, #tpu.memory_space<vmem>> -> memref<512x1024xbf16, #tpu.memory_space<vmem>>
    %10 = tpu.memref_slice %arg12[%c2_i32] : memref<4x!tpu.dma_semaphore, #tpu.memory_space<semaphore_mem>> -> memref<1x!tpu.dma_semaphore, #tpu.memory_space<semaphore_mem>>
    %11 = tpu.memref_squeeze %10 : memref<1x!tpu.dma_semaphore, #tpu.memory_space<semaphore_mem>> -> memref<!tpu.dma_semaphore, #tpu.memory_space<semaphore_mem>>
    tpu.enqueue_dma source(%8 : memref<512x1024xbf16, #tpu.memory_space<any>>) target(%9 : memref<512x1024xbf16, #tpu.memory_space<vmem>>) target_semaphore(%11 : memref<!tpu.dma_semaphore, #tpu.memory_space<semaphore_mem>>)
    %c3_i32 = arith.constant 3 : i32
    %c1536_i32 = arith.constant 1536 : i32
    %c0_i32_10 = arith.constant 0 : i32
    %12 = tpu.memref_slice %arg9[%c1536_i32, %c0_i32_10] : memref<2048x1024xbf16, #tpu.memory_space<any>> -> memref<512x1024xbf16, #tpu.memory_space<any>>
    %c1536_i32_11 = arith.constant 1536 : i32
    %c0_i32_12 = arith.constant 0 : i32
    %13 = tpu.memref_slice %arg11[%c1536_i32_11, %c0_i32_12] : memref<2048x1024xbf16, #tpu.memory_space<vmem>> -> memref<512x1024xbf16, #tpu.memory_space<vmem>>
    %14 = tpu.memref_slice %arg12[%c3_i32] : memref<4x!tpu.dma_semaphore, #tpu.memory_space<semaphore_mem>> -> memref<1x!tpu.dma_semaphore, #tpu.memory_space<semaphore_mem>>
    %15 = tpu.memref_squeeze %14 : memref<1x!tpu.dma_semaphore, #tpu.memory_space<semaphore_mem>> -> memref<!tpu.dma_semaphore, #tpu.memory_space<semaphore_mem>>
    tpu.enqueue_dma source(%12 : memref<512x1024xbf16, #tpu.memory_space<any>>) target(%13 : memref<512x1024xbf16, #tpu.memory_space<vmem>>) target_semaphore(%15 : memref<!tpu.dma_semaphore, #tpu.memory_space<semaphore_mem>>)
    %c0 = arith.constant 0 : index
    %c0_13 = arith.constant 0 : index
    %16 = vector.load %arg2[%c0, %c0_13] : memref<16x196xf32, #tpu.memory_space<vmem>>, vector<16x196xf32>
    %c0_14 = arith.constant 0 : index
    %c0_15 = arith.constant 0 : index
    %17 = vector.load %arg3[%c0_14, %c0_15] : memref<8x128xf32, #tpu.memory_space<vmem>>, vector<8x128xf32>
    %c0_16 = arith.constant 0 : index
    %c0_17 = arith.constant 0 : index
    %18 = vector.load %arg4[%c0_16, %c0_17] : memref<1x128xf32, #tpu.memory_space<vmem>>, vector<1x128xf32>
    %c0_18 = arith.constant 0 : index
    %c0_19 = arith.constant 0 : index
    %19 = vector.load %arg5[%c0_18, %c0_19] : memref<128x128xf32, #tpu.memory_space<vmem>>, vector<128x128xf32>
    %c0_20 = arith.constant 0 : index
    %c0_21 = arith.constant 0 : index
    %c0_22 = arith.constant 0 : index
    %20 = vector.load %arg1[%c0_20, %c0_21, %c0_22] : memref<2x196x8xf32, #tpu.memory_space<vmem>>, vector<1x196x8xf32>
    %21 = vector.shape_cast %20 : vector<1x196x8xf32> to vector<196x8xf32>
    %cst = arith.constant dense<0.000000e+00> : vector<16x8xf32>
    %22 = tpu.matmul %16, %21, %cst {dimension_numbers = #tpu.dot_dimension_numbers<[1], [0], [0], [1], [0, 0, 1, 1], [], []>} : vector<16x196xf32>, vector<196x8xf32>, vector<16x8xf32> -> vector<16x8xf32>
    %cst_23 = arith.constant dense<0.000000e+00> : vector<16x128xf32>
    %23 = tpu.matmul %22, %17, %cst_23 {dimension_numbers = #tpu.dot_dimension_numbers<[1], [0], [0], [1], [0, 0, 1, 1], [], []>} : vector<16x8xf32>, vector<8x128xf32>, vector<16x128xf32> -> vector<16x128xf32>
    %24 = vector.broadcast %18 : vector<1x128xf32> to vector<16x128xf32>
    %25 = arith.addf %23, %24 : vector<16x128xf32>
    %cst_24 = arith.constant 0.000000e+00 : f32
    %26 = vector.broadcast %cst_24 : f32 to vector<16x128xf32>
    %27 = arith.maximumf %25, %26 : vector<16x128xf32>
    %28 = arith.mulf %27, %27 : vector<16x128xf32>
    %cst_25 = arith.constant dense<0.000000e+00> : vector<16x128xf32>
    %29 = tpu.matmul %28, %19, %cst_25 {dimension_numbers = #tpu.dot_dimension_numbers<[1], [0], [0], [1], [0, 0, 1, 1], [], []>} : vector<16x128xf32>, vector<128x128xf32>, vector<16x128xf32> -> vector<16x128xf32>
    %cst_26 = arith.constant 2.000000e-05 : f32
    %30 = vector.broadcast %cst_26 : f32 to vector<16x128xf32>
    %31 = arith.mulf %30, %29 : vector<16x128xf32>
    %cst_27 = arith.constant 2.000000e+00 : f32
    %32 = vector.broadcast %cst_27 : f32 to vector<16x128xf32>
    %33 = arith.addf %32, %31 : vector<16x128xf32>
    %34 = math.sqrt %33 : vector<16x128xf32>
    %35 = arith.mulf %33, %34 : vector<16x128xf32>
    %36 = math.rsqrt %35 : vector<16x128xf32>
    %37 = arith.mulf %27, %36 : vector<16x128xf32>
    %c1 = arith.constant 1 : index
    %c0_28 = arith.constant 0 : index
    %c0_29 = arith.constant 0 : index
    %38 = vector.load %arg1[%c1, %c0_28, %c0_29] : memref<2x196x8xf32, #tpu.memory_space<vmem>>, vector<1x196x8xf32>
    %39 = vector.shape_cast %38 : vector<1x196x8xf32> to vector<196x8xf32>
    %cst_30 = arith.constant dense<0.000000e+00> : vector<16x8xf32>
    %40 = tpu.matmul %16, %39, %cst_30 {dimension_numbers = #tpu.dot_dimension_numbers<[1], [0], [0], [1], [0, 0, 1, 1], [], []>} : vector<16x196xf32>, vector<196x8xf32>, vector<16x8xf32> -> vector<16x8xf32>
    %cst_31 = arith.constant dense<0.000000e+00> : vector<16x128xf32>
    %41 = tpu.matmul %40, %17, %cst_31 {dimension_numbers = #tpu.dot_dimension_numbers<[1], [0], [0], [1], [0, 0, 1, 1], [], []>} : vector<16x8xf32>, vector<8x128xf32>, vector<16x128xf32> -> vector<16x128xf32>
    %42 = vector.broadcast %18 : vector<1x128xf32> to vector<16x128xf32>
    %43 = arith.addf %41, %42 : vector<16x128xf32>
    %cst_32 = arith.constant 0.000000e+00 : f32
    %44 = vector.broadcast %cst_32 : f32 to vector<16x128xf32>
    %45 = arith.maximumf %43, %44 : vector<16x128xf32>
    %46 = arith.mulf %45, %45 : vector<16x128xf32>
    %cst_33 = arith.constant dense<0.000000e+00> : vector<16x128xf32>
    %47 = tpu.matmul %46, %19, %cst_33 {dimension_numbers = #tpu.dot_dimension_numbers<[1], [0], [0], [1], [0, 0, 1, 1], [], []>} : vector<16x128xf32>, vector<128x128xf32>, vector<16x128xf32> -> vector<16x128xf32>
    %cst_34 = arith.constant 2.000000e-05 : f32
    %48 = vector.broadcast %cst_34 : f32 to vector<16x128xf32>
    %49 = arith.mulf %48, %47 : vector<16x128xf32>
    %cst_35 = arith.constant 2.000000e+00 : f32
    %50 = vector.broadcast %cst_35 : f32 to vector<16x128xf32>
    %51 = arith.addf %50, %49 : vector<16x128xf32>
    %52 = math.sqrt %51 : vector<16x128xf32>
    %53 = arith.mulf %51, %52 : vector<16x128xf32>
    %54 = math.rsqrt %53 : vector<16x128xf32>
    %55 = arith.mulf %45, %54 : vector<16x128xf32>
    %cst_36 = arith.constant 0.000000e+00 : f32
    %56 = vector.broadcast %cst_36 : f32 to vector<2x1024xf32>
    %c0_i32_37 = arith.constant 0 : i32
    %c0_i32_38 = arith.constant 0 : i32
    %c0_i32_39 = arith.constant 0 : i32
    %57 = tpu.memref_slice %arg9[%c0_i32_38, %c0_i32_39] : memref<2048x1024xbf16, #tpu.memory_space<any>> -> memref<512x1024xbf16, #tpu.memory_space<any>>
    %c0_i32_40 = arith.constant 0 : i32
    %c0_i32_41 = arith.constant 0 : i32
    %58 = tpu.memref_slice %arg11[%c0_i32_40, %c0_i32_41] : memref<2048x1024xbf16, #tpu.memory_space<vmem>> -> memref<512x1024xbf16, #tpu.memory_space<vmem>>
    %59 = tpu.memref_slice %arg12[%c0_i32_37] : memref<4x!tpu.dma_semaphore, #tpu.memory_space<semaphore_mem>> -> memref<1x!tpu.dma_semaphore, #tpu.memory_space<semaphore_mem>>
    %60 = tpu.memref_squeeze %59 : memref<1x!tpu.dma_semaphore, #tpu.memory_space<semaphore_mem>> -> memref<!tpu.dma_semaphore, #tpu.memory_space<semaphore_mem>>
    tpu.wait_dma2 semaphore(%60 : memref<!tpu.dma_semaphore, #tpu.memory_space<semaphore_mem>>) src(%57 : memref<512x1024xbf16, #tpu.memory_space<any>>) dst(%58 : memref<512x1024xbf16, #tpu.memory_space<vmem>>)
    %61 = vector.extract_strided_slice %37 {offsets = [0, 0], sizes = [1, 128], strides = [1, 1]} : vector<16x128xf32> to vector<1x128xf32>
    %62 = vector.extract_strided_slice %55 {offsets = [0, 0], sizes = [1, 128], strides = [1, 1]} : vector<16x128xf32> to vector<1x128xf32>
    %63 = tpu.concatenate %61, %62 in 0 : vector<1x128xf32>, vector<1x128xf32> -> vector<2x128xf32>
    %c0_42 = arith.constant 0 : index
    %c0_43 = arith.constant 0 : index
    %64 = vector.load %arg11[%c0_42, %c0_43] : memref<2048x1024xbf16, #tpu.memory_space<vmem>>, vector<128x1024xbf16>
    %65 = arith.truncf %63 : vector<2x128xf32> to vector<2x128xbf16>
    %cst_44 = arith.constant dense<0.000000e+00> : vector<2x1024xf32>
    %66 = tpu.matmul %65, %64, %cst_44 {dimension_numbers = #tpu.dot_dimension_numbers<[1], [0], [0], [1], [0, 0, 1, 1], [], []>} : vector<2x128xbf16>, vector<128x1024xbf16>, vector<2x1024xf32> -> vector<2x1024xf32>
    %67 = arith.addf %56, %66 : vector<2x1024xf32>
    %68 = vector.extract_strided_slice %37 {offsets = [1, 0], sizes = [1, 128], strides = [1, 1]} : vector<16x128xf32> to vector<1x128xf32>
    %69 = vector.extract_strided_slice %55 {offsets = [1, 0], sizes = [1, 128], strides = [1, 1]} : vector<16x128xf32> to vector<1x128xf32>
    %70 = tpu.concatenate %68, %69 in 0 : vector<1x128xf32>, vector<1x128xf32> -> vector<2x128xf32>
    %c128 = arith.constant 128 : index
    %c0_45 = arith.constant 0 : index
    %71 = vector.load %arg11[%c128, %c0_45] : memref<2048x1024xbf16, #tpu.memory_space<vmem>>, vector<128x1024xbf16>
    %72 = arith.truncf %70 : vector<2x128xf32> to vector<2x128xbf16>
    %cst_46 = arith.constant dense<0.000000e+00> : vector<2x1024xf32>
    %73 = tpu.matmul %72, %71, %cst_46 {dimension_numbers = #tpu.dot_dimension_numbers<[1], [0], [0], [1], [0, 0, 1, 1], [], []>} : vector<2x128xbf16>, vector<128x1024xbf16>, vector<2x1024xf32> -> vector<2x1024xf32>
    %74 = arith.addf %67, %73 : vector<2x1024xf32>
    %75 = vector.extract_strided_slice %37 {offsets = [2, 0], sizes = [1, 128], strides = [1, 1]} : vector<16x128xf32> to vector<1x128xf32>
    %76 = vector.extract_strided_slice %55 {offsets = [2, 0], sizes = [1, 128], strides = [1, 1]} : vector<16x128xf32> to vector<1x128xf32>
    %77 = tpu.concatenate %75, %76 in 0 : vector<1x128xf32>, vector<1x128xf32> -> vector<2x128xf32>
    %c256 = arith.constant 256 : index
    %c0_47 = arith.constant 0 : index
    %78 = vector.load %arg11[%c256, %c0_47] : memref<2048x1024xbf16, #tpu.memory_space<vmem>>, vector<128x1024xbf16>
    %79 = arith.truncf %77 : vector<2x128xf32> to vector<2x128xbf16>
    %cst_48 = arith.constant dense<0.000000e+00> : vector<2x1024xf32>
    %80 = tpu.matmul %79, %78, %cst_48 {dimension_numbers = #tpu.dot_dimension_numbers<[1], [0], [0], [1], [0, 0, 1, 1], [], []>} : vector<2x128xbf16>, vector<128x1024xbf16>, vector<2x1024xf32> -> vector<2x1024xf32>
    %81 = arith.addf %74, %80 : vector<2x1024xf32>
    %82 = vector.extract_strided_slice %37 {offsets = [3, 0], sizes = [1, 128], strides = [1, 1]} : vector<16x128xf32> to vector<1x128xf32>
    %83 = vector.extract_strided_slice %55 {offsets = [3, 0], sizes = [1, 128], strides = [1, 1]} : vector<16x128xf32> to vector<1x128xf32>
    %84 = tpu.concatenate %82, %83 in 0 : vector<1x128xf32>, vector<1x128xf32> -> vector<2x128xf32>
    %c384 = arith.constant 384 : index
    %c0_49 = arith.constant 0 : index
    %85 = vector.load %arg11[%c384, %c0_49] : memref<2048x1024xbf16, #tpu.memory_space<vmem>>, vector<128x1024xbf16>
    %86 = arith.truncf %84 : vector<2x128xf32> to vector<2x128xbf16>
    %cst_50 = arith.constant dense<0.000000e+00> : vector<2x1024xf32>
    %87 = tpu.matmul %86, %85, %cst_50 {dimension_numbers = #tpu.dot_dimension_numbers<[1], [0], [0], [1], [0, 0, 1, 1], [], []>} : vector<2x128xbf16>, vector<128x1024xbf16>, vector<2x1024xf32> -> vector<2x1024xf32>
    %88 = arith.addf %81, %87 : vector<2x1024xf32>
    %c1_i32_51 = arith.constant 1 : i32
    %c512_i32_52 = arith.constant 512 : i32
    %c0_i32_53 = arith.constant 0 : i32
    %89 = tpu.memref_slice %arg9[%c512_i32_52, %c0_i32_53] : memref<2048x1024xbf16, #tpu.memory_space<any>> -> memref<512x1024xbf16, #tpu.memory_space<any>>
    %c512_i32_54 = arith.constant 512 : i32
    %c0_i32_55 = arith.constant 0 : i32
    %90 = tpu.memref_slice %arg11[%c512_i32_54, %c0_i32_55] : memref<2048x1024xbf16, #tpu.memory_space<vmem>> -> memref<512x1024xbf16, #tpu.memory_space<vmem>>
    %91 = tpu.memref_slice %arg12[%c1_i32_51] : memref<4x!tpu.dma_semaphore, #tpu.memory_space<semaphore_mem>> -> memref<1x!tpu.dma_semaphore, #tpu.memory_space<semaphore_mem>>
    %92 = tpu.memref_squeeze %91 : memref<1x!tpu.dma_semaphore, #tpu.memory_space<semaphore_mem>> -> memref<!tpu.dma_semaphore, #tpu.memory_space<semaphore_mem>>
    tpu.wait_dma2 semaphore(%92 : memref<!tpu.dma_semaphore, #tpu.memory_space<semaphore_mem>>) src(%89 : memref<512x1024xbf16, #tpu.memory_space<any>>) dst(%90 : memref<512x1024xbf16, #tpu.memory_space<vmem>>)
    %93 = vector.extract_strided_slice %37 {offsets = [4, 0], sizes = [1, 128], strides = [1, 1]} : vector<16x128xf32> to vector<1x128xf32>
    %94 = vector.extract_strided_slice %55 {offsets = [4, 0], sizes = [1, 128], strides = [1, 1]} : vector<16x128xf32> to vector<1x128xf32>
    %95 = tpu.concatenate %93, %94 in 0 : vector<1x128xf32>, vector<1x128xf32> -> vector<2x128xf32>
    %c512 = arith.constant 512 : index
    %c0_56 = arith.constant 0 : index
    %96 = vector.load %arg11[%c512, %c0_56] : memref<2048x1024xbf16, #tpu.memory_space<vmem>>, vector<128x1024xbf16>
    %97 = arith.truncf %95 : vector<2x128xf32> to vector<2x128xbf16>
    %cst_57 = arith.constant dense<0.000000e+00> : vector<2x1024xf32>
    %98 = tpu.matmul %97, %96, %cst_57 {dimension_numbers = #tpu.dot_dimension_numbers<[1], [0], [0], [1], [0, 0, 1, 1], [], []>} : vector<2x128xbf16>, vector<128x1024xbf16>, vector<2x1024xf32> -> vector<2x1024xf32>
    %99 = arith.addf %88, %98 : vector<2x1024xf32>
    %100 = vector.extract_strided_slice %37 {offsets = [5, 0], sizes = [1, 128], strides = [1, 1]} : vector<16x128xf32> to vector<1x128xf32>
    %101 = vector.extract_strided_slice %55 {offsets = [5, 0], sizes = [1, 128], strides = [1, 1]} : vector<16x128xf32> to vector<1x128xf32>
    %102 = tpu.concatenate %100, %101 in 0 : vector<1x128xf32>, vector<1x128xf32> -> vector<2x128xf32>
    %c640 = arith.constant 640 : index
    %c0_58 = arith.constant 0 : index
    %103 = vector.load %arg11[%c640, %c0_58] : memref<2048x1024xbf16, #tpu.memory_space<vmem>>, vector<128x1024xbf16>
    %104 = arith.truncf %102 : vector<2x128xf32> to vector<2x128xbf16>
    %cst_59 = arith.constant dense<0.000000e+00> : vector<2x1024xf32>
    %105 = tpu.matmul %104, %103, %cst_59 {dimension_numbers = #tpu.dot_dimension_numbers<[1], [0], [0], [1], [0, 0, 1, 1], [], []>} : vector<2x128xbf16>, vector<128x1024xbf16>, vector<2x1024xf32> -> vector<2x1024xf32>
    %106 = arith.addf %99, %105 : vector<2x1024xf32>
    %107 = vector.extract_strided_slice %37 {offsets = [6, 0], sizes = [1, 128], strides = [1, 1]} : vector<16x128xf32> to vector<1x128xf32>
    %108 = vector.extract_strided_slice %55 {offsets = [6, 0], sizes = [1, 128], strides = [1, 1]} : vector<16x128xf32> to vector<1x128xf32>
    %109 = tpu.concatenate %107, %108 in 0 : vector<1x128xf32>, vector<1x128xf32> -> vector<2x128xf32>
    %c768 = arith.constant 768 : index
    %c0_60 = arith.constant 0 : index
    %110 = vector.load %arg11[%c768, %c0_60] : memref<2048x1024xbf16, #tpu.memory_space<vmem>>, vector<128x1024xbf16>
    %111 = arith.truncf %109 : vector<2x128xf32> to vector<2x128xbf16>
    %cst_61 = arith.constant dense<0.000000e+00> : vector<2x1024xf32>
    %112 = tpu.matmul %111, %110, %cst_61 {dimension_numbers = #tpu.dot_dimension_numbers<[1], [0], [0], [1], [0, 0, 1, 1], [], []>} : vector<2x128xbf16>, vector<128x1024xbf16>, vector<2x1024xf32> -> vector<2x1024xf32>
    %113 = arith.addf %106, %112 : vector<2x1024xf32>
    %114 = vector.extract_strided_slice %37 {offsets = [7, 0], sizes = [1, 128], strides = [1, 1]} : vector<16x128xf32> to vector<1x128xf32>
    %115 = vector.extract_strided_slice %55 {offsets = [7, 0], sizes = [1, 128], strides = [1, 1]} : vector<16x128xf32> to vector<1x128xf32>
    %116 = tpu.concatenate %114, %115 in 0 : vector<1x128xf32>, vector<1x128xf32> -> vector<2x128xf32>
    %c896 = arith.constant 896 : index
    %c0_62 = arith.constant 0 : index
    %117 = vector.load %arg11[%c896, %c0_62] : memref<2048x1024xbf16, #tpu.memory_space<vmem>>, vector<128x1024xbf16>
    %118 = arith.truncf %116 : vector<2x128xf32> to vector<2x128xbf16>
    %cst_63 = arith.constant dense<0.000000e+00> : vector<2x1024xf32>
    %119 = tpu.matmul %118, %117, %cst_63 {dimension_numbers = #tpu.dot_dimension_numbers<[1], [0], [0], [1], [0, 0, 1, 1], [], []>} : vector<2x128xbf16>, vector<128x1024xbf16>, vector<2x1024xf32> -> vector<2x1024xf32>
    %120 = arith.addf %113, %119 : vector<2x1024xf32>
    %c2_i32_64 = arith.constant 2 : i32
    %c1024_i32_65 = arith.constant 1024 : i32
    %c0_i32_66 = arith.constant 0 : i32
    %121 = tpu.memref_slice %arg9[%c1024_i32_65, %c0_i32_66] : memref<2048x1024xbf16, #tpu.memory_space<any>> -> memref<512x1024xbf16, #tpu.memory_space<any>>
    %c1024_i32_67 = arith.constant 1024 : i32
    %c0_i32_68 = arith.constant 0 : i32
    %122 = tpu.memref_slice %arg11[%c1024_i32_67, %c0_i32_68] : memref<2048x1024xbf16, #tpu.memory_space<vmem>> -> memref<512x1024xbf16, #tpu.memory_space<vmem>>
    %123 = tpu.memref_slice %arg12[%c2_i32_64] : memref<4x!tpu.dma_semaphore, #tpu.memory_space<semaphore_mem>> -> memref<1x!tpu.dma_semaphore, #tpu.memory_space<semaphore_mem>>
    %124 = tpu.memref_squeeze %123 : memref<1x!tpu.dma_semaphore, #tpu.memory_space<semaphore_mem>> -> memref<!tpu.dma_semaphore, #tpu.memory_space<semaphore_mem>>
    tpu.wait_dma2 semaphore(%124 : memref<!tpu.dma_semaphore, #tpu.memory_space<semaphore_mem>>) src(%121 : memref<512x1024xbf16, #tpu.memory_space<any>>) dst(%122 : memref<512x1024xbf16, #tpu.memory_space<vmem>>)
    %125 = vector.extract_strided_slice %37 {offsets = [8, 0], sizes = [1, 128], strides = [1, 1]} : vector<16x128xf32> to vector<1x128xf32>
    %126 = vector.extract_strided_slice %55 {offsets = [8, 0], sizes = [1, 128], strides = [1, 1]} : vector<16x128xf32> to vector<1x128xf32>
    %127 = tpu.concatenate %125, %126 in 0 : vector<1x128xf32>, vector<1x128xf32> -> vector<2x128xf32>
    %c1024 = arith.constant 1024 : index
    %c0_69 = arith.constant 0 : index
    %128 = vector.load %arg11[%c1024, %c0_69] : memref<2048x1024xbf16, #tpu.memory_space<vmem>>, vector<128x1024xbf16>
    %129 = arith.truncf %127 : vector<2x128xf32> to vector<2x128xbf16>
    %cst_70 = arith.constant dense<0.000000e+00> : vector<2x1024xf32>
    %130 = tpu.matmul %129, %128, %cst_70 {dimension_numbers = #tpu.dot_dimension_numbers<[1], [0], [0], [1], [0, 0, 1, 1], [], []>} : vector<2x128xbf16>, vector<128x1024xbf16>, vector<2x1024xf32> -> vector<2x1024xf32>
    %131 = arith.addf %120, %130 : vector<2x1024xf32>
    %132 = vector.extract_strided_slice %37 {offsets = [9, 0], sizes = [1, 128], strides = [1, 1]} : vector<16x128xf32> to vector<1x128xf32>
    %133 = vector.extract_strided_slice %55 {offsets = [9, 0], sizes = [1, 128], strides = [1, 1]} : vector<16x128xf32> to vector<1x128xf32>
    %134 = tpu.concatenate %132, %133 in 0 : vector<1x128xf32>, vector<1x128xf32> -> vector<2x128xf32>
    %c1152 = arith.constant 1152 : index
    %c0_71 = arith.constant 0 : index
    %135 = vector.load %arg11[%c1152, %c0_71] : memref<2048x1024xbf16, #tpu.memory_space<vmem>>, vector<128x1024xbf16>
    %136 = arith.truncf %134 : vector<2x128xf32> to vector<2x128xbf16>
    %cst_72 = arith.constant dense<0.000000e+00> : vector<2x1024xf32>
    %137 = tpu.matmul %136, %135, %cst_72 {dimension_numbers = #tpu.dot_dimension_numbers<[1], [0], [0], [1], [0, 0, 1, 1], [], []>} : vector<2x128xbf16>, vector<128x1024xbf16>, vector<2x1024xf32> -> vector<2x1024xf32>
    %138 = arith.addf %131, %137 : vector<2x1024xf32>
    %139 = vector.extract_strided_slice %37 {offsets = [10, 0], sizes = [1, 128], strides = [1, 1]} : vector<16x128xf32> to vector<1x128xf32>
    %140 = vector.extract_strided_slice %55 {offsets = [10, 0], sizes = [1, 128], strides = [1, 1]} : vector<16x128xf32> to vector<1x128xf32>
    %141 = tpu.concatenate %139, %140 in 0 : vector<1x128xf32>, vector<1x128xf32> -> vector<2x128xf32>
    %c1280 = arith.constant 1280 : index
    %c0_73 = arith.constant 0 : index
    %142 = vector.load %arg11[%c1280, %c0_73] : memref<2048x1024xbf16, #tpu.memory_space<vmem>>, vector<128x1024xbf16>
    %143 = arith.truncf %141 : vector<2x128xf32> to vector<2x128xbf16>
    %cst_74 = arith.constant dense<0.000000e+00> : vector<2x1024xf32>
    %144 = tpu.matmul %143, %142, %cst_74 {dimension_numbers = #tpu.dot_dimension_numbers<[1], [0], [0], [1], [0, 0, 1, 1], [], []>} : vector<2x128xbf16>, vector<128x1024xbf16>, vector<2x1024xf32> -> vector<2x1024xf32>
    %145 = arith.addf %138, %144 : vector<2x1024xf32>
    %146 = vector.extract_strided_slice %37 {offsets = [11, 0], sizes = [1, 128], strides = [1, 1]} : vector<16x128xf32> to vector<1x128xf32>
    %147 = vector.extract_strided_slice %55 {offsets = [11, 0], sizes = [1, 128], strides = [1, 1]} : vector<16x128xf32> to vector<1x128xf32>
    %148 = tpu.concatenate %146, %147 in 0 : vector<1x128xf32>, vector<1x128xf32> -> vector<2x128xf32>
    %c1408 = arith.constant 1408 : index
    %c0_75 = arith.constant 0 : index
    %149 = vector.load %arg11[%c1408, %c0_75] : memref<2048x1024xbf16, #tpu.memory_space<vmem>>, vector<128x1024xbf16>
    %150 = arith.truncf %148 : vector<2x128xf32> to vector<2x128xbf16>
    %cst_76 = arith.constant dense<0.000000e+00> : vector<2x1024xf32>
    %151 = tpu.matmul %150, %149, %cst_76 {dimension_numbers = #tpu.dot_dimension_numbers<[1], [0], [0], [1], [0, 0, 1, 1], [], []>} : vector<2x128xbf16>, vector<128x1024xbf16>, vector<2x1024xf32> -> vector<2x1024xf32>
    %152 = arith.addf %145, %151 : vector<2x1024xf32>
    %c3_i32_77 = arith.constant 3 : i32
    %c1536_i32_78 = arith.constant 1536 : i32
    %c0_i32_79 = arith.constant 0 : i32
    %153 = tpu.memref_slice %arg9[%c1536_i32_78, %c0_i32_79] : memref<2048x1024xbf16, #tpu.memory_space<any>> -> memref<512x1024xbf16, #tpu.memory_space<any>>
    %c1536_i32_80 = arith.constant 1536 : i32
    %c0_i32_81 = arith.constant 0 : i32
    %154 = tpu.memref_slice %arg11[%c1536_i32_80, %c0_i32_81] : memref<2048x1024xbf16, #tpu.memory_space<vmem>> -> memref<512x1024xbf16, #tpu.memory_space<vmem>>
    %155 = tpu.memref_slice %arg12[%c3_i32_77] : memref<4x!tpu.dma_semaphore, #tpu.memory_space<semaphore_mem>> -> memref<1x!tpu.dma_semaphore, #tpu.memory_space<semaphore_mem>>
    %156 = tpu.memref_squeeze %155 : memref<1x!tpu.dma_semaphore, #tpu.memory_space<semaphore_mem>> -> memref<!tpu.dma_semaphore, #tpu.memory_space<semaphore_mem>>
    tpu.wait_dma2 semaphore(%156 : memref<!tpu.dma_semaphore, #tpu.memory_space<semaphore_mem>>) src(%153 : memref<512x1024xbf16, #tpu.memory_space<any>>) dst(%154 : memref<512x1024xbf16, #tpu.memory_space<vmem>>)
    %157 = vector.extract_strided_slice %37 {offsets = [12, 0], sizes = [1, 128], strides = [1, 1]} : vector<16x128xf32> to vector<1x128xf32>
    %158 = vector.extract_strided_slice %55 {offsets = [12, 0], sizes = [1, 128], strides = [1, 1]} : vector<16x128xf32> to vector<1x128xf32>
    %159 = tpu.concatenate %157, %158 in 0 : vector<1x128xf32>, vector<1x128xf32> -> vector<2x128xf32>
    %c1536 = arith.constant 1536 : index
    %c0_82 = arith.constant 0 : index
    %160 = vector.load %arg11[%c1536, %c0_82] : memref<2048x1024xbf16, #tpu.memory_space<vmem>>, vector<128x1024xbf16>
    %161 = arith.truncf %159 : vector<2x128xf32> to vector<2x128xbf16>
    %cst_83 = arith.constant dense<0.000000e+00> : vector<2x1024xf32>
    %162 = tpu.matmul %161, %160, %cst_83 {dimension_numbers = #tpu.dot_dimension_numbers<[1], [0], [0], [1], [0, 0, 1, 1], [], []>} : vector<2x128xbf16>, vector<128x1024xbf16>, vector<2x1024xf32> -> vector<2x1024xf32>
    %163 = arith.addf %152, %162 : vector<2x1024xf32>
    %164 = vector.extract_strided_slice %37 {offsets = [13, 0], sizes = [1, 128], strides = [1, 1]} : vector<16x128xf32> to vector<1x128xf32>
    %165 = vector.extract_strided_slice %55 {offsets = [13, 0], sizes = [1, 128], strides = [1, 1]} : vector<16x128xf32> to vector<1x128xf32>
    %166 = tpu.concatenate %164, %165 in 0 : vector<1x128xf32>, vector<1x128xf32> -> vector<2x128xf32>
    %c1664 = arith.constant 1664 : index
    %c0_84 = arith.constant 0 : index
    %167 = vector.load %arg11[%c1664, %c0_84] : memref<2048x1024xbf16, #tpu.memory_space<vmem>>, vector<128x1024xbf16>
    %168 = arith.truncf %166 : vector<2x128xf32> to vector<2x128xbf16>
    %cst_85 = arith.constant dense<0.000000e+00> : vector<2x1024xf32>
    %169 = tpu.matmul %168, %167, %cst_85 {dimension_numbers = #tpu.dot_dimension_numbers<[1], [0], [0], [1], [0, 0, 1, 1], [], []>} : vector<2x128xbf16>, vector<128x1024xbf16>, vector<2x1024xf32> -> vector<2x1024xf32>
    %170 = arith.addf %163, %169 : vector<2x1024xf32>
    %171 = vector.extract_strided_slice %37 {offsets = [14, 0], sizes = [1, 128], strides = [1, 1]} : vector<16x128xf32> to vector<1x128xf32>
    %172 = vector.extract_strided_slice %55 {offsets = [14, 0], sizes = [1, 128], strides = [1, 1]} : vector<16x128xf32> to vector<1x128xf32>
    %173 = tpu.concatenate %171, %172 in 0 : vector<1x128xf32>, vector<1x128xf32> -> vector<2x128xf32>
    %c1792 = arith.constant 1792 : index
    %c0_86 = arith.constant 0 : index
    %174 = vector.load %arg11[%c1792, %c0_86] : memref<2048x1024xbf16, #tpu.memory_space<vmem>>, vector<128x1024xbf16>
    %175 = arith.truncf %173 : vector<2x128xf32> to vector<2x128xbf16>
    %cst_87 = arith.constant dense<0.000000e+00> : vector<2x1024xf32>
    %176 = tpu.matmul %175, %174, %cst_87 {dimension_numbers = #tpu.dot_dimension_numbers<[1], [0], [0], [1], [0, 0, 1, 1], [], []>} : vector<2x128xbf16>, vector<128x1024xbf16>, vector<2x1024xf32> -> vector<2x1024xf32>
    %177 = arith.addf %170, %176 : vector<2x1024xf32>
    %178 = vector.extract_strided_slice %37 {offsets = [15, 0], sizes = [1, 128], strides = [1, 1]} : vector<16x128xf32> to vector<1x128xf32>
    %179 = vector.extract_strided_slice %55 {offsets = [15, 0], sizes = [1, 128], strides = [1, 1]} : vector<16x128xf32> to vector<1x128xf32>
    %180 = tpu.concatenate %178, %179 in 0 : vector<1x128xf32>, vector<1x128xf32> -> vector<2x128xf32>
    %c1920 = arith.constant 1920 : index
    %c0_88 = arith.constant 0 : index
    %181 = vector.load %arg11[%c1920, %c0_88] : memref<2048x1024xbf16, #tpu.memory_space<vmem>>, vector<128x1024xbf16>
    %182 = arith.truncf %180 : vector<2x128xf32> to vector<2x128xbf16>
    %cst_89 = arith.constant dense<0.000000e+00> : vector<2x1024xf32>
    %183 = tpu.matmul %182, %181, %cst_89 {dimension_numbers = #tpu.dot_dimension_numbers<[1], [0], [0], [1], [0, 0, 1, 1], [], []>} : vector<2x128xbf16>, vector<128x1024xbf16>, vector<2x1024xf32> -> vector<2x1024xf32>
    %184 = arith.addf %177, %183 : vector<2x1024xf32>
    %c0_90 = arith.constant 0 : index
    %c0_91 = arith.constant 0 : index
    %185 = vector.load %arg6[%c0_90, %c0_91] : memref<1x1024xf32, #tpu.memory_space<vmem>>, vector<1x1024xf32>
    %186 = vector.broadcast %185 : vector<1x1024xf32> to vector<2x1024xf32>
    %187 = arith.addf %184, %186 : vector<2x1024xf32>
    %cst_92 = arith.constant 0.000000e+00 : f32
    %188 = vector.broadcast %cst_92 : f32 to vector<2x1024xf32>
    %189 = arith.maximumf %187, %188 : vector<2x1024xf32>
    %190 = arith.truncf %189 : vector<2x1024xf32> to vector<2x1024xbf16>
    %c0_93 = arith.constant 0 : index
    %c0_94 = arith.constant 0 : index
    %191 = vector.load %arg7[%c0_93, %c0_94] : memref<1024x128xbf16, #tpu.memory_space<vmem>>, vector<1024x128xbf16>
    %cst_95 = arith.constant dense<0.000000e+00> : vector<2x128xf32>
    %192 = tpu.matmul %190, %191, %cst_95 {dimension_numbers = #tpu.dot_dimension_numbers<[1], [0], [0], [1], [0, 0, 1, 1], [], []>} : vector<2x1024xbf16>, vector<1024x128xbf16>, vector<2x128xf32> -> vector<2x128xf32>
    %c0_96 = arith.constant 0 : index
    %c0_97 = arith.constant 0 : index
    %193 = vector.load %arg8[%c0_96, %c0_97] : memref<1x128xf32, #tpu.memory_space<vmem>>, vector<1x128xf32>
    %194 = vector.broadcast %193 : vector<1x128xf32> to vector<2x128xf32>
    %195 = arith.addf %192, %194 : vector<2x128xf32>
    %c0_98 = arith.constant 0 : index
    %c0_99 = arith.constant 0 : index
    %196 = vector.load %arg10[%c0_98, %c0_99] : memref<2x128xf32, #tpu.memory_space<vmem>>, vector<2x128xf32>
    tpu.vector_store %arg10[%c0_98, %c0_99], %195 {strides = array<i32>} : memref<2x128xf32, #tpu.memory_space<vmem>>, vector<2x128xf32>,
    return
  }
  func.func @transform_0(%arg0: i32) -> (i32, i32, i32) {
    %c0_i32 = arith.constant 0 : i32
    %c0_i32_0 = arith.constant 0 : i32
    %c0_i32_1 = arith.constant 0 : i32
    %c0_i32_2 = arith.constant 0 : i32
    return %c0_i32, %c0_i32_0, %c0_i32_1 : i32, i32, i32
  }
  func.func @transform_1(%arg0: i32) -> (i32, i32) {
    %c0_i32 = arith.constant 0 : i32
    %c0_i32_0 = arith.constant 0 : i32
    %c0_i32_1 = arith.constant 0 : i32
    return %c0_i32, %c0_i32_0 : i32, i32
  }
  func.func @transform_2(%arg0: i32) -> (i32, i32) {
    %c0_i32 = arith.constant 0 : i32
    %c0_i32_0 = arith.constant 0 : i32
    %c0_i32_1 = arith.constant 0 : i32
    return %c0_i32, %c0_i32_0 : i32, i32
  }
  func.func @transform_3(%arg0: i32) -> (i32, i32) {
    %c0_i32 = arith.constant 0 : i32
    %c0_i32_0 = arith.constant 0 : i32
    %c0_i32_1 = arith.constant 0 : i32
    return %c0_i32, %c0_i32_0 : i32, i32
  }
  func.func @transform_4(%arg0: i32) -> (i32, i32) {
    %c0_i32 = arith.constant 0 : i32
    %c0_i32_0 = arith.constant 0 : i32
    %c0_i32_1 = arith.constant 0 : i32
    return %c0_i32, %c0_i32_0 : i32, i32
  }
  func.func @transform_5(%arg0: i32) -> (i32, i32) {
    %c0_i32 = arith.constant 0 : i32
    %c0_i32_0 = arith.constant 0 : i32
    %c0_i32_1 = arith.constant 0 : i32
    return %c0_i32, %c0_i32_0 : i32, i32
  }
  func.func @transform_6(%arg0: i32) -> (i32, i32) {
    %c0_i32 = arith.constant 0 : i32
    %c0_i32_0 = arith.constant 0 : i32
    %c0_i32_1 = arith.constant 0 : i32
    return %c0_i32, %c0_i32_0 : i32, i32
  }
  func.func @transform_7(%arg0: i32) -> (i32, i32) {
    %c0_i32 = arith.constant 0 : i32
    %c0_i32_0 = arith.constant 0 : i32
    %c0_i32_1 = arith.constant 0 : i32
    return %c0_i32, %c0_i32_0 : i32, i32
  }
  func.func @transform_9(%arg0: i32) -> (i32, i32) {
    %c0_i32 = arith.constant 0 : i32
    %c0_i32_0 = arith.constant 0 : i32
    %c0_i32_1 = arith.constant 0 : i32
    return %c0_i32, %c0_i32_0 : i32, i32
  }
}

</mosaic_0001>

<llo_original>
// kernel: tpu_custom_call.1
$region0: #{tpu_custom_call.1}
  #allocation0 [shape = 'u32[]', space=smem, size = 0x4, offset = 0x4, fixed_abs, tag = 'smem constant byte address 0x4 - core index']
  #allocation1 [shape = 'u32[144,128]{1,0:T(1,128)}', space=vmem, size = 0x12000, scoped, tag = 'internal scratch']
  #allocation2 [shape = 'bf16[2048,1024]{1,0:T(16,128)(2,1)}', space=vmem, size = 0x400000, scoped, tag = 'scratch operand']
  #allocation3 [shape = 's32[4]{0}', space=sflag, size = 0x10, scoped, tag = 'scratch operand']
  #allocation17 [shape = 's32[]', space=sflag, size = 0x4, offset = 0, fixed_abs, tag = 'sflag constant byte address 0x0 - dummy sync flag']
  #allocation19 [shape = 's32[]', space=sflag, size = 0x4, offset = 0, fixed_abs, tag = 'sflag constant byte address 0x0 - dummy sync flag']
  #allocation21 [shape = 's32[]', space=sflag, size = 0x4, offset = 0, fixed_abs, tag = 'sflag constant byte address 0x0 - dummy sync flag']
  #allocation23 [shape = 's32[]', space=sflag, size = 0x4, offset = 0, fixed_abs, tag = 'sflag constant byte address 0x0 - dummy sync flag']
  %s0 = inlined_call_operand.vmem [shape: f32[2,196,8], index: 0, kind: input, shape index: {}]
  %s1 = inlined_call_operand.hbm [shape: f32[16,196], index: 1, kind: input, shape index: {}]
  %s2 = inlined_call_operand.hbm [shape: f32[8,128], index: 2, kind: input, shape index: {}]
  %s3 = inlined_call_operand.hbm [shape: f32[1,128], index: 3, kind: input, shape index: {}]
  %s4 = inlined_call_operand.hbm [shape: f32[128,128], index: 4, kind: input, shape index: {}]
  %s5 = inlined_call_operand.hbm [shape: f32[1,1024], index: 5, kind: input, shape index: {}]
  %s6 = inlined_call_operand.hbm [shape: bf16[1024,128], index: 6, kind: input, shape index: {}]
  %s7 = inlined_call_operand.hbm [shape: f32[1,128], index: 7, kind: input, shape index: {}]
  %s8 = inlined_call_operand.hbm [shape: bf16[2048,1024], index: 8, kind: input, shape index: {}]
  %s9 = inlined_call_operand.hbm [shape: f32[2,128], index: 9, kind: output, shape index: {}]
  %s10 = sld [smem:[#allocation0]]
  $region70: #{tpu_custom_call.1} parent=0
    _
  %s12 = ssub.s32 1, %s10
  %s13 = scalar_select 0, %s12, %s10
  $region1: #{tpu_custom_call.1} parent=0
    #allocation4 [shape = 'u8[16384]{0}', space=vmem, size = 0x4000, scoped, tag = 'input window, operand 1, single buffered']
    #allocation5 [shape = 's32[1]{0}', space=sflag, size = 0x4, scoped, tag = 'scoped memory for tpu_custom_call.1']
    #allocation6 [shape = 's32[1]{0}', space=sflag, size = 0x4, scoped, tag = 'scoped memory for tpu_custom_call.1']
    #allocation7 [shape = 'u8[4096]{0}', space=vmem, size = 0x1000, scoped, tag = 'input window, operand 2, single buffered']
    #allocation8 [shape = 's32[1]{0}', space=sflag, size = 0x4, scoped, tag = 'scoped memory for tpu_custom_call.1']
    #allocation9 [shape = 'u8[512]{0}', space=vmem, size = 0x400, scoped, tag = 'input window, operand 3, single buffered']
    #allocation10 [shape = 'u8[65536]{0}', space=vmem, size = 0x10000, scoped, tag = 'input window, operand 4, single buffered']
    #allocation11 [shape = 's32[1]{0}', space=sflag, size = 0x4, scoped, tag = 'scoped memory for tpu_custom_call.1']
    #allocation12 [shape = 'u8[4096]{0}', space=vmem, size = 0x1000, scoped, tag = 'input window, operand 5, single buffered']
    #allocation13 [shape = 'u8[262144]{0}', space=vmem, size = 0x40000, scoped, tag = 'input window, operand 6, single buffered']
    #allocation14 [shape = 's32[1]{0}', space=sflag, size = 0x4, scoped, tag = 'scoped memory for tpu_custom_call.1']
    #allocation15 [shape = 'u8[512]{0}', space=vmem, size = 0x400, scoped, tag = 'input window, operand 7, single buffered']
    #allocation16 [shape = 'u8[1024]{0}', space=vmem, size = 0x400, scoped, tag = 'output window, operand 0, single buffered']
    #allocation18 [shape = 'u32[9]{0}', space=smem, size = 0x24, scoped, tag = 'DMA stride descriptor']
    #allocation20 [shape = 'u32[9]{0}', space=smem, size = 0x24, scoped, tag = 'DMA stride descriptor']
    #allocation22 [shape = 'u32[9]{0}', space=smem, size = 0x24, scoped, tag = 'DMA stride descriptor']
    #allocation24 [shape = 'u32[9]{0}', space=smem, size = 0x24, scoped, tag = 'DMA stride descriptor']
    %14 = vsyncpa [#allocation5], 0
    %15 = vsyncpa [#allocation8], 0
    %16 = vsyncpa [#allocation11], 0
    %17 = vsyncpa [#allocation14], 0
    %18 = vsyncpa [#allocation6], 0
    // Predicated region
    $region2: #{tpu_custom_call.1} parent=1 // pred_check
      _
    $region3: #{tpu_custom_call.1} parent=1 // pred_check_branch
      %20 = sbr.rel (0) target = $region5
    $region4: #{tpu_custom_call.1} parent=1 // pred_region
      _
    $region5: #{tpu_custom_call.1} parent=1 // pred_fallthru
      _
    // Predicated region
    $region6: #{tpu_custom_call.1} parent=1 // pred_check
      _
    $region7: #{tpu_custom_call.1} parent=1 // pred_check_branch
      %22 = sbr.rel (0) target = $region9
    $region8: #{tpu_custom_call.1} parent=1 // pred_region
      %s24 = ssub.s32 512, 512
      %25 = vsyncadd [#allocation5], %s24
      %s26 = sshll.u32 [#allocation4], 4
      %s27 = int_to_ptr.vmem [resolvable:$true] %s26
      %32 = dma.hbm_to_vmem [thread:$0]  %s1, 512, %s27, [#allocation5], 256, 256, 16
    $region9: #{tpu_custom_call.1} parent=1 // pred_fallthru
      _
    // Predicated region
    $region10: #{tpu_custom_call.1} parent=1 // pred_check
      _
    $region11: #{tpu_custom_call.1} parent=1 // pred_check_branch
      %34 = sbr.rel (0) target = $region13
    $region12: #{tpu_custom_call.1} parent=1 // pred_region
      %s36 = ssub.s32 128, 128
      %37 = vsyncadd [#allocation8], %s36
      %s39 = sshll.u32 [#allocation7], 4
      %s40 = int_to_ptr.vmem [resolvable:$true] %s39
      %42 = dma.hbm_to_vmem [thread:$0]  %s2, 128, %s40, [#allocation8]
    $region13: #{tpu_custom_call.1} parent=1 // pred_fallthru
      _
    // Predicated region
    $region14: #{tpu_custom_call.1} parent=1 // pred_check
      _
    $region15: #{tpu_custom_call.1} parent=1 // pred_check_branch
      %44 = sbr.rel (0) target = $region17
    $region16: #{tpu_custom_call.1} parent=1 // pred_region
      %s46 = ssub.s32 16, 16
      %47 = vsyncadd [#allocation8], %s46
      %s49 = sshll.u32 [#allocation9], 4
      %s50 = int_to_ptr.vmem [resolvable:$true] %s49
      %52 = dma.hbm_to_vmem [thread:$0]  %s3, 16, %s50, [#allocation8]
    $region17: #{tpu_custom_call.1} parent=1 // pred_fallthru
      _
    // Predicated region
    $region18: #{tpu_custom_call.1} parent=1 // pred_check
      _
    $region19: #{tpu_custom_call.1} parent=1 // pred_check_branch
      %54 = sbr.rel (0) target = $region21
    $region20: #{tpu_custom_call.1} parent=1 // pred_region
      %s56 = ssub.s32 2048, 2048
      %57 = vsyncadd [#allocation11], %s56
      %s58 = sshll.u32 [#allocation10], 4
      %s59 = int_to_ptr.vmem [resolvable:$true] %s58
      %64 = dma.hbm_to_vmem [thread:$0]  %s4, 2048, %s59, [#allocation11], 128, 128, 8
    $region21: #{tpu_custom_call.1} parent=1 // pred_fallthru
      _
    // Predicated region
    $region22: #{tpu_custom_call.1} parent=1 // pred_check
      _
    $region23: #{tpu_custom_call.1} parent=1 // pred_check_branch
      %66 = sbr.rel (0) target = $region25
    $region24: #{tpu_custom_call.1} parent=1 // pred_region
      %s68 = ssub.s32 128, 128
      %69 = vsyncadd [#allocation11], %s68
      %s71 = sshll.u32 [#allocation12], 4
      %s72 = int_to_ptr.vmem [resolvable:$true] %s71
      %74 = dma.hbm_to_vmem [thread:$0]  %s5, 128, %s72, [#allocation11]
    $region25: #{tpu_custom_call.1} parent=1 // pred_fallthru
      _
    // Predicated region
    $region26: #{tpu_custom_call.1} parent=1 // pred_check
      _
    $region27: #{tpu_custom_call.1} parent=1 // pred_check_branch
      %76 = sbr.rel (0) target = $region29
    $region28: #{tpu_custom_call.1} parent=1 // pred_region
      %s78 = ssub.s32 8192, 8192
      %79 = vsyncadd [#allocation14], %s78
      %s80 = sshll.u32 [#allocation13], 4
      %s81 = int_to_ptr.vmem [resolvable:$true] %s80
      %86 = dma.hbm_to_vmem [thread:$0]  %s6, 8192, %s81, [#allocation14], 64, 64, 4
    $region29: #{tpu_custom_call.1} parent=1 // pred_fallthru
      _
    // Predicated region
    $region30: #{tpu_custom_call.1} parent=1 // pred_check
      _
    $region31: #{tpu_custom_call.1} parent=1 // pred_check_branch
      %88 = sbr.rel (0) target = $region33
    $region32: #{tpu_custom_call.1} parent=1 // pred_region
      %s90 = ssub.s32 16, 16
      %91 = vsyncadd [#allocation14], %s90
      %s93 = sshll.u32 [#allocation15], 4
      %s94 = int_to_ptr.vmem [resolvable:$true] %s93
      %96 = dma.hbm_to_vmem [thread:$0]  %s7, 16, %s94, [#allocation14]
    $region33: #{tpu_custom_call.1} parent=1 // pred_fallthru
      _
    // Predicated region
    $region34: #{tpu_custom_call.1} parent=1 // pred_check
      _
    $region35: #{tpu_custom_call.1} parent=1 // pred_check_branch
      %98 = sbr.rel (0) target = $region37
    $region36: #{tpu_custom_call.1} parent=1 // pred_region
      %99 = dma.done [#allocation5], 512
    $region37: #{tpu_custom_call.1} parent=1 // pred_fallthru
      _
    // Predicated region
    $region38: #{tpu_custom_call.1} parent=1 // pred_check
      _
    $region39: #{tpu_custom_call.1} parent=1 // pred_check_branch
      %101 = sbr.rel (0) target = $region41
    $region40: #{tpu_custom_call.1} parent=1 // pred_region
      %102 = dma.done [#allocation8], 128
    $region41: #{tpu_custom_call.1} parent=1 // pred_fallthru
      _
    // Predicated region
    $region42: #{tpu_custom_call.1} parent=1 // pred_check
      _
    $region43: #{tpu_custom_call.1} parent=1 // pred_check_branch
      %104 = sbr.rel (0) target = $region45
    $region44: #{tpu_custom_call.1} parent=1 // pred_region
      %105 = dma.done [#allocation8], 16
    $region45: #{tpu_custom_call.1} parent=1 // pred_fallthru
      _
    // Predicated region
    $region46: #{tpu_custom_call.1} parent=1 // pred_check
      _
    $region47: #{tpu_custom_call.1} parent=1 // pred_check_branch
      %107 = sbr.rel (0) target = $region49
    $region48: #{tpu_custom_call.1} parent=1 // pred_region
      %108 = dma.done [#allocation11], 2048
    $region49: #{tpu_custom_call.1} parent=1 // pred_fallthru
      _
    // Predicated region
    $region50: #{tpu_custom_call.1} parent=1 // pred_check
      _
    $region51: #{tpu_custom_call.1} parent=1 // pred_check_branch
      %110 = sbr.rel (0) target = $region53
    $region52: #{tpu_custom_call.1} parent=1 // pred_region
      %111 = dma.done [#allocation11], 128
    $region53: #{tpu_custom_call.1} parent=1 // pred_fallthru
      _
    // Predicated region
    $region54: #{tpu_custom_call.1} parent=1 // pred_check
      _
    $region55: #{tpu_custom_call.1} parent=1 // pred_check_branch
      %113 = sbr.rel (0) target = $region57
    $region56: #{tpu_custom_call.1} parent=1 // pred_region
      %114 = dma.done [#allocation14], 8192
    $region57: #{tpu_custom_call.1} parent=1 // pred_fallthru
      _
    // Predicated region
    $region58: #{tpu_custom_call.1} parent=1 // pred_check
      _
    $region59: #{tpu_custom_call.1} parent=1 // pred_check_branch
      %116 = sbr.rel (0) target = $region61
    $region60: #{tpu_custom_call.1} parent=1 // pred_region
      %117 = dma.done [#allocation14], 16
    $region61: #{tpu_custom_call.1} parent=1 // pred_fallthru
      _
    %s120 = sshll.u32 1, 14
    %s121 = sxor.u32 4294967295, %s120
    %s123 = sld [smem:[#allocation0]]
    %s124 = sadd.s32 2, %s123
    %s126 = sshll.u32 7, 26
    %s127 = sxor.u32 4294967295, %s126
    %s128 = sand.u32 0, %s127
    %s129 = sshll.u32 %s124, 26
    %s130 = sor.u32 %s128, %s129
    %s131 = sshll.u32 [#allocation2], 4
    %s132 = int_to_ptr.vmem [resolvable:$true] %s131
    %135 = sst [smem:[#allocation18]] 1024
    %s136 = scalar_lea.smem [#allocation18], 1
    %137 = sst [smem:[%s136]] 1024
    %s138 = scalar_lea.smem [#allocation18], 2
    %139 = sst [smem:[%s138]] 8
    %s140 = scalar_lea.smem [#allocation18], 3
    %141 = sst [smem:[%s140]] 64
    %s142 = scalar_lea.smem [#allocation18], 4
    %143 = sst [smem:[%s142]] 128
    %s144 = scalar_lea.smem [#allocation18], 5
    %145 = sst [smem:[%s144]] 2
    %s146 = scalar_lea.smem [#allocation18], 6
    %147 = sst [smem:[%s146]] 512
    %s148 = scalar_lea.smem [#allocation18], 7
    %149 = sst [smem:[%s148]] 64
    %s150 = scalar_lea.smem [#allocation18], 8
    %151 = sst [smem:[%s150]] 4
    %153 = dma.general %s8, 32768, %s132, [#allocation3], [#allocation17], [#allocation18], %s130, 0
    %s154 = scalar_lea.hbm %s8, 32768
    %s155 = scalar_lea.vmem [#allocation2], 2048
    %s156 = scalar_lea.sflag [#allocation3], 1
    %s158 = sshll.u32 1, 14
    %s159 = sxor.u32 4294967295, %s158
    %s161 = sadd.s32 2, %s123
    %s163 = sshll.u32 7, 26
    %s164 = sxor.u32 4294967295, %s163
    %s165 = sand.u32 0, %s164
    %s166 = sshll.u32 %s161, 26
    %s167 = sor.u32 %s165, %s166
    %s168 = sshll.u32 %s155, 4
    %s169 = int_to_ptr.vmem [resolvable:$true] %s168
    %172 = sst [smem:[#allocation20]] 1024
    %s173 = scalar_lea.smem [#allocation20], 1
    %174 = sst [smem:[%s173]] 1024
    %s175 = scalar_lea.smem [#allocation20], 2
    %176 = sst [smem:[%s175]] 8
    %s177 = scalar_lea.smem [#allocation20], 3
    %178 = sst [smem:[%s177]] 64
    %s179 = scalar_lea.smem [#allocation20], 4
    %180 = sst [smem:[%s179]] 128
    %s181 = scalar_lea.smem [#allocation20], 5
    %182 = sst [smem:[%s181]] 2
    %s183 = scalar_lea.smem [#allocation20], 6
    %184 = sst [smem:[%s183]] 512
    %s185 = scalar_lea.smem [#allocation20], 7
    %186 = sst [smem:[%s185]] 64
    %s187 = scalar_lea.smem [#allocation20], 8
    %188 = sst [smem:[%s187]] 4
    %190 = dma.general %s154, 32768, %s169, %s156, [#allocation19], [#allocation20], %s167, 0
    %s191 = scalar_lea.hbm %s8, 65536
    %s192 = scalar_lea.vmem [#allocation2], 4096
    %s193 = scalar_lea.sflag [#allocation3], 2
    %s195 = sshll.u32 1, 14
    %s196 = sxor.u32 4294967295, %s195
    %s198 = sadd.s32 2, %s123
    %s200 = sshll.u32 7, 26
    %s201 = sxor.u32 4294967295, %s200
    %s202 = sand.u32 0, %s201
    %s203 = sshll.u32 %s198, 26
    %s204 = sor.u32 %s202, %s203
    %s205 = sshll.u32 %s192, 4
    %s206 = int_to_ptr.vmem [resolvable:$true] %s205
    %209 = sst [smem:[#allocation22]] 1024
    %s210 = scalar_lea.smem [#allocation22], 1
    %211 = sst [smem:[%s210]] 1024
    %s212 = scalar_lea.smem [#allocation22], 2
    %213 = sst [smem:[%s212]] 8
    %s214 = scalar_lea.smem [#allocation22], 3
    %215 = sst [smem:[%s214]] 64
    %s216 = scalar_lea.smem [#allocation22], 4
    %217 = sst [smem:[%s216]] 128
    %s218 = scalar_lea.smem [#allocation22], 5
    %219 = sst [smem:[%s218]] 2
    %s220 = scalar_lea.smem [#allocation22], 6
    %221 = sst [smem:[%s220]] 512
    %s222 = scalar_lea.smem [#allocation22], 7
    %223 = sst [smem:[%s222]] 64
    %s224 = scalar_lea.smem [#allocation22], 8
    %225 = sst [smem:[%s224]] 4
    %227 = dma.general %s191, 32768, %s206, %s193, [#allocation21], [#allocation22], %s204, 0
    %s228 = scalar_lea.hbm %s8, 98304
    %s229 = scalar_lea.vmem [#allocation2], 6144
    %s230 = scalar_lea.sflag [#allocation3], 3
    %s232 = sshll.u32 1, 14
    %s233 = sxor.u32 4294967295, %s232
    %s235 = sadd.s32 2, %s123
    %s237 = sshll.u32 7, 26
    %s238 = sxor.u32 4294967295, %s237
    %s239 = sand.u32 0, %s238
    %s240 = sshll.u32 %s235, 26
    %s241 = sor.u32 %s239, %s240
    %s242 = sshll.u32 %s229, 4
    %s243 = int_to_ptr.vmem [resolvable:$true] %s242
    %246 = sst [smem:[#allocation24]] 1024
    %s247 = scalar_lea.smem [#allocation24], 1
    %248 = sst [smem:[%s247]] 1024
    %s249 = scalar_lea.smem [#allocation24], 2
    %250 = sst [smem:[%s249]] 8
    %s251 = scalar_lea.smem [#allocation24], 3
    %252 = sst [smem:[%s251]] 64
    %s253 = scalar_lea.smem [#allocation24], 4
    %254 = sst [smem:[%s253]] 128
    %s255 = scalar_lea.smem [#allocation24], 5
    %256 = sst [smem:[%s255]] 2
    %s257 = scalar_lea.smem [#allocation24], 6
    %258 = sst [smem:[%s257]] 512
    %s259 = scalar_lea.smem [#allocation24], 7
    %260 = sst [smem:[%s259]] 64
    %s261 = scalar_lea.smem [#allocation24], 8
    %262 = sst [smem:[%s261]] 4
    %264 = dma.general %s228, 32768, %s243, %s230, [#allocation23], [#allocation24], %s241, 0
    %v265 = vld [vmem:[#allocation4] sm:$0xff]
    %v266 = vld [vmem:[#allocation4 + $0x8] sm:$0xff]
    %v267 = vld [vmem:[#allocation4 + $0x10] sm:$0xff]
    %v268 = vld [vmem:[#allocation4 + $0x18] sm:$0xff]
    %v269 = vld [vmem:[#allocation7] sm:$0xff]
    %v270 = vld [vmem:[#allocation9] sm:$0x1]
    %v271 = vld [vmem:[#allocation10] sm:$0xff]
    %v272 = vld [vmem:[#allocation10 + $0x8] sm:$0xff]
    %v273 = vld [vmem:[#allocation10 + $0x10] sm:$0xff]
    %v274 = vld [vmem:[#allocation10 + $0x18] sm:$0xff]
    %v275 = vld [vmem:[#allocation10 + $0x20] sm:$0xff]
    %v276 = vld [vmem:[#allocation10 + $0x28] sm:$0xff]
    %v277 = vld [vmem:[#allocation10 + $0x30] sm:$0xff]
    %v278 = vld [vmem:[#allocation10 + $0x38] sm:$0xff]
    %v279 = vld [vmem:[#allocation10 + $0x40] sm:$0xff]
    %v280 = vld [vmem:[#allocation10 + $0x48] sm:$0xff]
    %v281 = vld [vmem:[#allocation10 + $0x50] sm:$0xff]
    %v282 = vld [vmem:[#allocation10 + $0x58] sm:$0xff]
    %v283 = vld [vmem:[#allocation10 + $0x60] sm:$0xff]
    %v284 = vld [vmem:[#allocation10 + $0x68] sm:$0xff]
    %v285 = vld [vmem:[#allocation10 + $0x70] sm:$0xff]
    %v286 = vld [vmem:[#allocation10 + $0x78] sm:$0xff]
    %v287 = vld [vmem:[%s0] sm:$0xff]
    %v288 = vld [vmem:[%s0 + $0x8] sm:$0xff]
    %v289 = vld [vmem:[%s0 + $0x10] sm:$0xff]
    %v290 = vld [vmem:[%s0 + $0x18] sm:$0xff]
    %v291 = vld [vmem:[%s0 + $0x20] sm:$0xff]
    %v292 = vld [vmem:[%s0 + $0x28] sm:$0xff]
    %v293 = vld [vmem:[%s0 + $0x30] sm:$0xff]
    %v294 = vld [vmem:[%s0 + $0x38] sm:$0xff]
    %v295 = vld [vmem:[%s0 + $0x40] sm:$0xff]
    %v296 = vld [vmem:[%s0 + $0x48] sm:$0xff]
    %v297 = vld [vmem:[%s0 + $0x50] sm:$0xff]
    %v298 = vld [vmem:[%s0 + $0x58] sm:$0xff]
    %v299 = vld [vmem:[%s0 + $0x60] sm:$0xff]
    %v300 = vld [vmem:[%s0 + $0x68] sm:$0xff]
    %v301 = vld [vmem:[%s0 + $0x70] sm:$0xff]
    %v302 = vld [vmem:[%s0 + $0x78] sm:$0xff]
    %v303 = vld [vmem:[%s0 + $0x80] sm:$0xff]
    %v304 = vld [vmem:[%s0 + $0x88] sm:$0xff]
    %v305 = vld [vmem:[%s0 + $0x90] sm:$0xff]
    %v306 = vld [vmem:[%s0 + $0x98] sm:$0xff]
    %v307 = vld [vmem:[%s0 + $0xa0] sm:$0xff]
    %v308 = vld [vmem:[%s0 + $0xa8] sm:$0xff]
    %v309 = vld [vmem:[%s0 + $0xb0] sm:$0xff]
    %v310 = vld [vmem:[%s0 + $0xb8] sm:$0xff]
    %v311 = vld [vmem:[%s0 + $0xc0] sm:$0xf]
    %vm312 = vcmask 556032
    %v314 = vsel %vm312, %v266, 0
    %v317 = vsel %vm312, %v268, 0
    %vm319 = vcmask 1043456
    %v321 = vsel %vm319, %v311, 0
    %323 = vmatprep.subr.mxu0 0.0
    %324 = vmatpush1.msra.mxu0 %v287
    %325 = vmatprep.subr.mxu0 0.0
    %326 = vmatpush1.msra.mxu0 %v288
    %327 = vmatprep.subr.mxu0 0.0
    %328 = vmatpush1.msra.mxu0 %v289
    %329 = vmatprep.subr.mxu0 0.0
    %330 = vmatpush1.msra.mxu0 %v290
    %331 = vmatprep.subr.mxu0 0.0
    %332 = vmatpush1.msra.mxu0 %v291
    %333 = vmatprep.subr.mxu0 0.0
    %334 = vmatpush1.msra.mxu0 %v292
    %335 = vmatprep.subr.mxu0 0.0
    %336 = vmatpush1.msra.mxu0 %v293
    %337 = vmatprep.subr.mxu0 0.0
    %338 = vmatpush1.msra.mxu0 %v294
    %339 = vmatprep.subr.mxu0 0.0
    %340 = vmatpush1.msra.mxu0 %v295
    %341 = vmatprep.subr.mxu0 0.0
    %342 = vmatpush1.msra.mxu0 %v296
    %343 = vmatprep.subr.mxu0 0.0
    %344 = vmatpush1.msra.mxu0 %v297
    %345 = vmatprep.subr.mxu0 0.0
    %346 = vmatpush1.msra.mxu0 %v298
    %347 = vmatprep.subr.mxu0 0.0
    %348 = vmatpush1.msra.mxu0 %v299
    %349 = vmatprep.subr.mxu0 0.0
    %350 = vmatpush1.msra.mxu0 %v300
    %351 = vmatprep.subr.mxu0 0.0
    %352 = vmatpush1.msra.mxu0 %v301
    %353 = vmatprep.subr.mxu0 0.0
    %354 = vmatpush1.msra.mxu0 %v302
    %355 = vmatprep.subr.mxu0 0.0
    %356 = vmatpush1.msra.mxu0 %v303
    %357 = vmatprep.subr.mxu0 0.0
    %358 = vmatpush1.msra.mxu0 %v304
    %359 = vmatprep.subr.mxu0 0.0
    %360 = vmatpush1.msra.mxu0 %v305
    %361 = vmatprep.subr.mxu0 0.0
    %362 = vmatpush1.msra.mxu0 %v306
    %363 = vmatprep.subr.mxu0 0.0
    %364 = vmatpush1.msra.mxu0 %v307
    %365 = vmatprep.subr.mxu0 0.0
    %366 = vmatpush1.msra.mxu0 %v308
    %367 = vmatprep.subr.mxu0 0.0
    %368 = vmatpush1.msra.mxu0 %v309
    %369 = vmatprep.subr.mxu0 0.0
    %370 = vmatpush1.msra.mxu0 %v310
    %371 = vmatprep.subr.mxu0 0.0
    %372 = vmatpush1.msra.mxu0 %v321
    %373 = vmatprep.subr.mxu0 0.0
    %374 = vmatpush1.msra.mxu0 0.0
    %375 = vmatprep.subr.mxu0 0.0
    %376 = vmatpush1.msra.mxu0 0.0
    %377 = vmatprep.subr.mxu0 0.0
    %378 = vmatpush1.msra.mxu0 0.0
    %379 = vmatprep.subr.mxu0 0.0
    %380 = vmatpush1.msra.mxu0 0.0
    %381 = vmatprep.subr.mxu0 0.0
    %382 = vmatpush1.msra.mxu0 0.0
    %383 = vmatprep.subr.mxu0 0.0
    %384 = vmatpush1.msra.mxu0 0.0
    %385 = vmatprep.subr.mxu0 0.0
    %386 = vmatpush1.msra.mxu0 0.0
    %387 = vmatprep.mubr.f32.mxu0 %v314
    %388 = vmatmul.mubr.f32.gmra.mrb[0].mxu0 %v265
    %v389 = vpop.f32.mrb[0].mxu0
    %v390 = vadd.f32 0.0, %v389
    %v391 = vpop.f32.mrb[0].mxu0
    %392 = vmatprep.mubr.f32.mxu0 %v317
    %393 = vmatmul.mubr.f32.gmra.mrb[0].mxu0 %v267
    %v394 = vpop.f32.mrb[0].mxu0
    %v395 = vadd.f32 0.0, %v394
    %v396 = vpop.f32.mrb[0].mxu0
    %397 = vdwg.mxu0
    %v399 = vlaneseq
    %v400 = vshrl.u32 %v399, 7
    %v401 = vsub.s32 0, %v400
    %v402 = vrot.slane %v270, %v401
    %vm404 = vcmask 64512
    %v406 = vsel %vm404, %v390, 0
    %v409 = vsel %vm404, %v395, 0
    %411 = vmatprep.subr.mxu0 0.0
    %412 = vmatpush1.msra.mxu0 %v269
    %413 = vmatprep.subr.mxu0 0.0
    %414 = vmatpush1.msra.mxu0 0.0
    %415 = vmatprep.subr.mxu0 0.0
    %416 = vmatpush1.msra.mxu0 0.0
    %417 = vmatprep.subr.mxu0 0.0
    %418 = vmatpush1.msra.mxu0 0.0
    %419 = vmatprep.subr.mxu0 0.0
    %420 = vmatpush1.msra.mxu0 0.0
    %421 = vmatprep.subr.mxu0 0.0
    %422 = vmatpush1.msra.mxu0 0.0
    %423 = vmatprep.subr.mxu0 0.0
    %424 = vmatpush1.msra.mxu0 0.0
    %425 = vmatprep.subr.mxu0 0.0
    %426 = vmatpush1.msra.mxu0 0.0
    %427 = vmatprep.subr.mxu0 0.0
    %428 = vmatpush1.msra.mxu0 0.0
    %429 = vmatprep.subr.mxu0 0.0
    %430 = vmatpush1.msra.mxu0 0.0
    %431 = vmatprep.subr.mxu0 0.0
    %432 = vmatpush1.msra.mxu0 0.0
    %433 = vmatprep.subr.mxu0 0.0
    %434 = vmatpush1.msra.mxu0 0.0
    %435 = vmatprep.subr.mxu0 0.0
    %436 = vmatpush1.msra.mxu0 0.0
    %437 = vmatprep.subr.mxu0 0.0
    %438 = vmatpush1.msra.mxu0 0.0
    %439 = vmatprep.subr.mxu0 0.0
    %440 = vmatpush1.msra.mxu0 0.0
    %441 = vmatprep.subr.mxu0 0.0
    %442 = vmatpush1.msra.mxu0 0.0
    %443 = vmatprep.subr.mxu0 0.0
    %444 = vmatpush1.msra.mxu0 0.0
    %445 = vmatprep.subr.mxu0 0.0
    %446 = vmatpush1.msra.mxu0 0.0
    %447 = vmatprep.subr.mxu0 0.0
    %448 = vmatpush1.msra.mxu0 0.0
    %449 = vmatprep.subr.mxu0 0.0
    %450 = vmatpush1.msra.mxu0 0.0
    %451 = vmatprep.subr.mxu0 0.0
    %452 = vmatpush1.msra.mxu0 0.0
    %453 = vmatprep.subr.mxu0 0.0
    %454 = vmatpush1.msra.mxu0 0.0
    %455 = vmatprep.subr.mxu0 0.0
    %456 = vmatpush1.msra.mxu0 0.0
    %457 = vmatprep.subr.mxu0 0.0
    %458 = vmatpush1.msra.mxu0 0.0
    %459 = vmatprep.subr.mxu0 0.0
    %460 = vmatpush1.msra.mxu0 0.0
    %461 = vmatprep.subr.mxu0 0.0
    %462 = vmatpush1.msra.mxu0 0.0
    %463 = vmatprep.subr.mxu0 0.0
    %464 = vmatpush1.msra.mxu0 0.0
    %465 = vmatprep.subr.mxu0 0.0
    %466 = vmatpush1.msra.mxu0 0.0
    %467 = vmatprep.subr.mxu0 0.0
    %468 = vmatpush1.msra.mxu0 0.0
    %469 = vmatprep.subr.mxu0 0.0
    %470 = vmatpush1.msra.mxu0 0.0
    %471 = vmatprep.subr.mxu0 0.0
    %472 = vmatpush1.msra.mxu0 0.0
    %473 = vmatprep.subr.mxu0 0.0
    %474 = vmatpush1.msra.mxu0 0.0
    %475 = vmatprep.mubr.f32.mxu0 0.0
    %476 = vmatmul.mubr.f32.gmra.mrb[0].mxu0 %v406
    %v477 = vpop.f32.mrb[0].mxu0
    %v478 = vadd.f32 %v402, %v477
    %v479 = vpop.f32.mrb[0].mxu0
    %480 = vmatprep.mubr.f32.mxu0 0.0
    %481 = vmatmul.mubr.f32.gmra.mrb[0].mxu0 %v409
    %v482 = vpop.f32.mrb[0].mxu0
    %v483 = vadd.f32 %v402, %v482
    %v484 = vpop.f32.mrb[0].mxu0
    %485 = vdwg.mxu0
    %v486 = vmax.f32 %v478, 0.0
    %v487 = vmax.f32 %v483, 0.0
    %v488 = vmul.f32 %v486, %v486
    %v489 = vmul.f32 %v487, %v487
    %490 = vmatprep.subr.mxu0 0.0
    %491 = vmatpush1.msra.mxu0 %v271
    %492 = vmatprep.subr.mxu0 0.0
    %493 = vmatpush1.msra.mxu0 %v272
    %494 = vmatprep.subr.mxu0 0.0
    %495 = vmatpush1.msra.mxu0 %v273
    %496 = vmatprep.subr.mxu0 0.0
    %497 = vmatpush1.msra.mxu0 %v274
    %498 = vmatprep.subr.mxu0 0.0
    %499 = vmatpush1.msra.mxu0 %v275
    %500 = vmatprep.subr.mxu0 0.0
    %501 = vmatpush1.msra.mxu0 %v276
    %502 = vmatprep.subr.mxu0 0.0
    %503 = vmatpush1.msra.mxu0 %v277
    %504 = vmatprep.subr.mxu0 0.0
    %505 = vmatpush1.msra.mxu0 %v278
    %506 = vmatprep.subr.mxu0 0.0
    %507 = vmatpush1.msra.mxu0 %v279
    %508 = vmatprep.subr.mxu0 0.0
    %509 = vmatpush1.msra.mxu0 %v280
    %510 = vmatprep.subr.mxu0 0.0
    %511 = vmatpush1.msra.mxu0 %v281
    %512 = vmatprep.subr.mxu0 0.0
    %513 = vmatpush1.msra.mxu0 %v282
    %514 = vmatprep.subr.mxu0 0.0
    %515 = vmatpush1.msra.mxu0 %v283
    %516 = vmatprep.subr.mxu0 0.0
    %517 = vmatpush1.msra.mxu0 %v284
    %518 = vmatprep.subr.mxu0 0.0
    %519 = vmatpush1.msra.mxu0 %v285
    %520 = vmatprep.subr.mxu0 0.0
    %521 = vmatpush1.msra.mxu0 %v286
    %522 = vmatprep.subr.mxu0 0.0
    %523 = vmatpush1.msra.mxu0 0.0
    %524 = vmatprep.subr.mxu0 0.0
    %525 = vmatpush1.msra.mxu0 0.0
    %526 = vmatprep.subr.mxu0 0.0
    %527 = vmatpush1.msra.mxu0 0.0
    %528 = vmatprep.subr.mxu0 0.0
    %529 = vmatpush1.msra.mxu0 0.0
    %530 = vmatprep.subr.mxu0 0.0
    %531 = vmatpush1.msra.mxu0 0.0
    %532 = vmatprep.subr.mxu0 0.0
    %533 = vmatpush1.msra.mxu0 0.0
    %534 = vmatprep.subr.mxu0 0.0
    %535 = vmatpush1.msra.mxu0 0.0
    %536 = vmatprep.subr.mxu0 0.0
    %537 = vmatpush1.msra.mxu0 0.0
    %538 = vmatprep.subr.mxu0 0.0
    %539 = vmatpush1.msra.mxu0 0.0
    %540 = vmatprep.subr.mxu0 0.0
    %541 = vmatpush1.msra.mxu0 0.0
    %542 = vmatprep.subr.mxu0 0.0
    %543 = vmatpush1.msra.mxu0 0.0
    %544 = vmatprep.subr.mxu0 0.0
    %545 = vmatpush1.msra.mxu0 0.0
    %546 = vmatprep.subr.mxu0 0.0
    %547 = vmatpush1.msra.mxu0 0.0
    %548 = vmatprep.subr.mxu0 0.0
    %549 = vmatpush1.msra.mxu0 0.0
    %550 = vmatprep.subr.mxu0 0.0
    %551 = vmatpush1.msra.mxu0 0.0
    %552 = vmatprep.subr.mxu0 0.0
    %553 = vmatpush1.msra.mxu0 0.0
    %554 = vmatprep.mubr.f32.mxu0 0.0
    %555 = vmatmul.mubr.f32.gmra.mrb[0].mxu0 %v488
    %v556 = vpop.f32.mrb[0].mxu0
    %v557 = vadd.f32 0.0, %v556
    %v558 = vpop.f32.mrb[0].mxu0
    %559 = vmatprep.mubr.f32.mxu0 0.0
    %560 = vmatmul.mubr.f32.gmra.mrb[0].mxu0 %v489
    %v561 = vpop.f32.mrb[0].mxu0
    %v562 = vadd.f32 0.0, %v561
    %v563 = vpop.f32.mrb[0].mxu0
    %564 = vdwg.mxu0
    %v565 = vmul.f32 %v557, 2e-05
    %v566 = vmul.f32 %v562, 2e-05
    %v567 = vadd.f32 %v565, 2.0
    %v568 = vadd.f32 %v566, 2.0
    %v569 = vrsqrt.pop %v567
    %v570 = vmul.f32 %v567, %v569
    %vm571 = vcmp.eq.f32.partialorder %v567, inf
    %v572 = vsel %vm571, %v567, %v570
    %vm573 = vcmp.eq.f32.partialorder %v567, 0.0
    %v574 = vand.u32 %v567, 2147483648
    %v575 = vsel %vm573, %v574, %v572
    %v576 = vrsqrt.pop %v568
    %v577 = vmul.f32 %v568, %v576
    %vm578 = vcmp.eq.f32.partialorder %v568, inf
    %v579 = vsel %vm578, %v568, %v577
    %vm580 = vcmp.eq.f32.partialorder %v568, 0.0
    %v581 = vand.u32 %v568, 2147483648
    %v582 = vsel %vm580, %v581, %v579
    %v583 = vmul.f32 %v567, %v575
    %v584 = vmul.f32 %v568, %v582
    %v585 = vrsqrt.pop %v583
    %v586 = vrsqrt.pop %v584
    %v587 = vmul.f32 %v486, %v585
    %v588 = vmul.f32 %v487, %v586
    %s589 = scalar_lea.vmem %s0, 200
    %v590 = vld [vmem:[%s589] sm:$0xff]
    %v591 = vld [vmem:[%s589 + $0x8] sm:$0xff]
    %v592 = vld [vmem:[%s589 + $0x10] sm:$0xff]
    %v593 = vld [vmem:[%s589 + $0x18] sm:$0xff]
    %v594 = vld [vmem:[%s589 + $0x20] sm:$0xff]
    %v595 = vld [vmem:[%s589 + $0x28] sm:$0xff]
    %v596 = vld [vmem:[%s589 + $0x30] sm:$0xff]
    %v597 = vld [vmem:[%s589 + $0x38] sm:$0xff]
    %v598 = vld [vmem:[%s589 + $0x40] sm:$0xff]
    %v599 = vld [vmem:[%s589 + $0x48] sm:$0xff]
    %v600 = vld [vmem:[%s589 + $0x50] sm:$0xff]
    %v601 = vld [vmem:[%s589 + $0x58] sm:$0xff]
    %v602 = vld [vmem:[%s589 + $0x60] sm:$0xff]
    %v603 = vld [vmem:[%s589 + $0x68] sm:$0xff]
    %v604 = vld [vmem:[%s589 + $0x70] sm:$0xff]
    %v605 = vld [vmem:[%s589 + $0x78] sm:$0xff]
    %v606 = vld [vmem:[%s589 + $0x80] sm:$0xff]
    %v607 = vld [vmem:[%s589 + $0x88] sm:$0xff]
    %v608 = vld [vmem:[%s589 + $0x90] sm:$0xff]
    %v609 = vld [vmem:[%s589 + $0x98] sm:$0xff]
    %v610 = vld [vmem:[%s589 + $0xa0] sm:$0xff]
    %v611 = vld [vmem:[%s589 + $0xa8] sm:$0xff]
    %v612 = vld [vmem:[%s589 + $0xb0] sm:$0xff]
    %v613 = vld [vmem:[%s589 + $0xb8] sm:$0xff]
    %v614 = vld [vmem:[%s589 + $0xc0] sm:$0xf]
    %v616 = vsel %vm319, %v614, 0
    %618 = vmatprep.subr.mxu0 0.0
    %619 = vmatpush1.msra.mxu0 %v590
    %620 = vmatprep.subr.mxu0 0.0
    %621 = vmatpush1.msra.mxu0 %v591
    %622 = vmatprep.subr.mxu0 0.0
    %623 = vmatpush1.msra.mxu0 %v592
    %624 = vmatprep.subr.mxu0 0.0
    %625 = vmatpush1.msra.mxu0 %v593
    %626 = vmatprep.subr.mxu0 0.0
    %627 = vmatpush1.msra.mxu0 %v594
    %628 = vmatprep.subr.mxu0 0.0
    %629 = vmatpush1.msra.mxu0 %v595
    %630 = vmatprep.subr.mxu0 0.0
    %631 = vmatpush1.msra.mxu0 %v596
    %632 = vmatprep.subr.mxu0 0.0
    %633 = vmatpush1.msra.mxu0 %v597
    %634 = vmatprep.subr.mxu0 0.0
    %635 = vmatpush1.msra.mxu0 %v598
    %636 = vmatprep.subr.mxu0 0.0
    %637 = vmatpush1.msra.mxu0 %v599
    %638 = vmatprep.subr.mxu0 0.0
    %639 = vmatpush1.msra.mxu0 %v600
    %640 = vmatprep.subr.mxu0 0.0
    %641 = vmatpush1.msra.mxu0 %v601
    %642 = vmatprep.subr.mxu0 0.0
    %643 = vmatpush1.msra.mxu0 %v602
    %644 = vmatprep.subr.mxu0 0.0
    %645 = vmatpush1.msra.mxu0 %v603
    %646 = vmatprep.subr.mxu0 0.0
    %647 = vmatpush1.msra.mxu0 %v604
    %648 = vmatprep.subr.mxu0 0.0
    %649 = vmatpush1.msra.mxu0 %v605
    %650 = vmatprep.subr.mxu0 0.0
    %651 = vmatpush1.msra.mxu0 %v606
    %652 = vmatprep.subr.mxu0 0.0
    %653 = vmatpush1.msra.mxu0 %v607
    %654 = vmatprep.subr.mxu0 0.0
    %655 = vmatpush1.msra.mxu0 %v608
    %656 = vmatprep.subr.mxu0 0.0
    %657 = vmatpush1.msra.mxu0 %v609
    %658 = vmatprep.subr.mxu0 0.0
    %659 = vmatpush1.msra.mxu0 %v610
    %660 = vmatprep.subr.mxu0 0.0
    %661 = vmatpush1.msra.mxu0 %v611
    %662 = vmatprep.subr.mxu0 0.0
    %663 = vmatpush1.msra.mxu0 %v612
    %664 = vmatprep.subr.mxu0 0.0
    %665 = vmatpush1.msra.mxu0 %v613
    %666 = vmatprep.subr.mxu0 0.0
    %667 = vmatpush1.msra.mxu0 %v616
    %668 = vmatprep.subr.mxu0 0.0
    %669 = vmatpush1.msra.mxu0 0.0
    %670 = vmatprep.subr.mxu0 0.0
    %671 = vmatpush1.msra.mxu0 0.0
    %672 = vmatprep.subr.mxu0 0.0
    %673 = vmatpush1.msra.mxu0 0.0
    %674 = vmatprep.subr.mxu0 0.0
    %675 = vmatpush1.msra.mxu0 0.0
    %676 = vmatprep.subr.mxu0 0.0
    %677 = vmatpush1.msra.mxu0 0.0
    %678 = vmatprep.subr.mxu0 0.0
    %679 = vmatpush1.msra.mxu0 0.0
    %680 = vmatprep.subr.mxu0 0.0
    %681 = vmatpush1.msra.mxu0 0.0
    %682 = vmatprep.mubr.f32.mxu0 %v314
    %683 = vmatmul.mubr.f32.gmra.mrb[0].mxu0 %v265
    %v684 = vpop.f32.mrb[0].mxu0
    %v685 = vadd.f32 0.0, %v684
    %v686 = vpop.f32.mrb[0].mxu0
    %687 = vmatprep.mubr.f32.mxu0 %v317
    %688 = vmatmul.mubr.f32.gmra.mrb[0].mxu0 %v267
    %v689 = vpop.f32.mrb[0].mxu0
    %v690 = vadd.f32 0.0, %v689
    %v691 = vpop.f32.mrb[0].mxu0
    %692 = vdwg.mxu0
    %v694 = vsel %vm404, %v685, 0
    %v697 = vsel %vm404, %v690, 0
    %699 = vmatprep.subr.mxu0 0.0
    %700 = vmatpush1.msra.mxu0 %v269
    %701 = vmatprep.subr.mxu0 0.0
    %702 = vmatpush1.msra.mxu0 0.0
    %703 = vmatprep.subr.mxu0 0.0
    %704 = vmatpush1.msra.mxu0 0.0
    %705 = vmatprep.subr.mxu0 0.0
    %706 = vmatpush1.msra.mxu0 0.0
    %707 = vmatprep.subr.mxu0 0.0
    %708 = vmatpush1.msra.mxu0 0.0
    %709 = vmatprep.subr.mxu0 0.0
    %710 = vmatpush1.msra.mxu0 0.0
    %711 = vmatprep.subr.mxu0 0.0
    %712 = vmatpush1.msra.mxu0 0.0
    %713 = vmatprep.subr.mxu0 0.0
    %714 = vmatpush1.msra.mxu0 0.0
    %715 = vmatprep.subr.mxu0 0.0
    %716 = vmatpush1.msra.mxu0 0.0
    %717 = vmatprep.subr.mxu0 0.0
    %718 = vmatpush1.msra.mxu0 0.0
    %719 = vmatprep.subr.mxu0 0.0
    %720 = vmatpush1.msra.mxu0 0.0
    %721 = vmatprep.subr.mxu0 0.0
    %722 = vmatpush1.msra.mxu0 0.0
    %723 = vmatprep.subr.mxu0 0.0
    %724 = vmatpush1.msra.mxu0 0.0
    %725 = vmatprep.subr.mxu0 0.0
    %726 = vmatpush1.msra.mxu0 0.0
    %727 = vmatprep.subr.mxu0 0.0
    %728 = vmatpush1.msra.mxu0 0.0
    %729 = vmatprep.subr.mxu0 0.0
    %730 = vmatpush1.msra.mxu0 0.0
    %731 = vmatprep.subr.mxu0 0.0
    %732 = vmatpush1.msra.mxu0 0.0
    %733 = vmatprep.subr.mxu0 0.0
    %734 = vmatpush1.msra.mxu0 0.0
    %735 = vmatprep.subr.mxu0 0.0
    %736 = vmatpush1.msra.mxu0 0.0
    %737 = vmatprep.subr.mxu0 0.0
    %738 = vmatpush1.msra.mxu0 0.0
    %739 = vmatprep.subr.mxu0 0.0
    %740 = vmatpush1.msra.mxu0 0.0
    %741 = vmatprep.subr.mxu0 0.0
    %742 = vmatpush1.msra.mxu0 0.0
    %743 = vmatprep.subr.mxu0 0.0
    %744 = vmatpush1.msra.mxu0 0.0
    %745 = vmatprep.subr.mxu0 0.0
    %746 = vmatpush1.msra.mxu0 0.0
    %747 = vmatprep.subr.mxu0 0.0
    %748 = vmatpush1.msra.mxu0 0.0
    %749 = vmatprep.subr.mxu0 0.0
    %750 = vmatpush1.msra.mxu0 0.0
    %751 = vmatprep.subr.mxu0 0.0
    %752 = vmatpush1.msra.mxu0 0.0
    %753 = vmatprep.subr.mxu0 0.0
    %754 = vmatpush1.msra.mxu0 0.0
    %755 = vmatprep.subr.mxu0 0.0
    %756 = vmatpush1.msra.mxu0 0.0
    %757 = vmatprep.subr.mxu0 0.0
    %758 = vmatpush1.msra.mxu0 0.0
    %759 = vmatprep.subr.mxu0 0.0
    %760 = vmatpush1.msra.mxu0 0.0
    %761 = vmatprep.subr.mxu0 0.0
    %762 = vmatpush1.msra.mxu0 0.0
    %763 = vmatprep.mubr.f32.mxu0 0.0
    %764 = vmatmul.mubr.f32.gmra.mrb[0].mxu0 %v694
    %v765 = vpop.f32.mrb[0].mxu0
    %v766 = vadd.f32 %v402, %v765
    %v767 = vpop.f32.mrb[0].mxu0
    %768 = vmatprep.mubr.f32.mxu0 0.0
    %769 = vmatmul.mubr.f32.gmra.mrb[0].mxu0 %v697
    %v770 = vpop.f32.mrb[0].mxu0
    %v771 = vadd.f32 %v402, %v770
    %v772 = vpop.f32.mrb[0].mxu0
    %773 = vdwg.mxu0
    %v774 = vmax.f32 %v766, 0.0
    %v775 = vmax.f32 %v771, 0.0
    %v776 = vmul.f32 %v774, %v774
    %v777 = vmul.f32 %v775, %v775
    %778 = vmatprep.subr.mxu0 0.0
    %779 = vmatpush1.msra.mxu0 %v271
    %780 = vmatprep.subr.mxu0 0.0
    %781 = vmatpush1.msra.mxu0 %v272
    %782 = vmatprep.subr.mxu0 0.0
    %783 = vmatpush1.msra.mxu0 %v273
    %784 = vmatprep.subr.mxu0 0.0
    %785 = vmatpush1.msra.mxu0 %v274
    %786 = vmatprep.subr.mxu0 0.0
    %787 = vmatpush1.msra.mxu0 %v275
    %788 = vmatprep.subr.mxu0 0.0
    %789 = vmatpush1.msra.mxu0 %v276
    %790 = vmatprep.subr.mxu0 0.0
    %791 = vmatpush1.msra.mxu0 %v277
    %792 = vmatprep.subr.mxu0 0.0
    %793 = vmatpush1.msra.mxu0 %v278
    %794 = vmatprep.subr.mxu0 0.0
    %795 = vmatpush1.msra.mxu0 %v279
    %796 = vmatprep.subr.mxu0 0.0
    %797 = vmatpush1.msra.mxu0 %v280
    %798 = vmatprep.subr.mxu0 0.0
    %799 = vmatpush1.msra.mxu0 %v281
    %800 = vmatprep.subr.mxu0 0.0
    %801 = vmatpush1.msra.mxu0 %v282
    %802 = vmatprep.subr.mxu0 0.0
    %803 = vmatpush1.msra.mxu0 %v283
    %804 = vmatprep.subr.mxu0 0.0
    %805 = vmatpush1.msra.mxu0 %v284
    %806 = vmatprep.subr.mxu0 0.0
    %807 = vmatpush1.msra.mxu0 %v285
    %808 = vmatprep.subr.mxu0 0.0
    %809 = vmatpush1.msra.mxu0 %v286
    %810 = vmatprep.subr.mxu0 0.0
    %811 = vmatpush1.msra.mxu0 0.0
    %812 = vmatprep.subr.mxu0 0.0
    %813 = vmatpush1.msra.mxu0 0.0
    %814 = vmatprep.subr.mxu0 0.0
    %815 = vmatpush1.msra.mxu0 0.0
    %816 = vmatprep.subr.mxu0 0.0
    %817 = vmatpush1.msra.mxu0 0.0
    %818 = vmatprep.subr.mxu0 0.0
    %819 = vmatpush1.msra.mxu0 0.0
    %820 = vmatprep.subr.mxu0 0.0
    %821 = vmatpush1.msra.mxu0 0.0
    %822 = vmatprep.subr.mxu0 0.0
    %823 = vmatpush1.msra.mxu0 0.0
    %824 = vmatprep.subr.mxu0 0.0
    %825 = vmatpush1.msra.mxu0 0.0
    %826 = vmatprep.subr.mxu0 0.0
    %827 = vmatpush1.msra.mxu0 0.0
    %828 = vmatprep.subr.mxu0 0.0
    %829 = vmatpush1.msra.mxu0 0.0
    %830 = vmatprep.subr.mxu0 0.0
    %831 = vmatpush1.msra.mxu0 0.0
    %832 = vmatprep.subr.mxu0 0.0
    %833 = vmatpush1.msra.mxu0 0.0
    %834 = vmatprep.subr.mxu0 0.0
    %835 = vmatpush1.msra.mxu0 0.0
    %836 = vmatprep.subr.mxu0 0.0
    %837 = vmatpush1.msra.mxu0 0.0
    %838 = vmatprep.subr.mxu0 0.0
    %839 = vmatpush1.msra.mxu0 0.0
    %840 = vmatprep.subr.mxu0 0.0
    %841 = vmatpush1.msra.mxu0 0.0
    %842 = vmatprep.mubr.f32.mxu0 0.0
    %843 = vmatmul.mubr.f32.gmra.mrb[0].mxu0 %v776
    %v844 = vpop.f32.mrb[0].mxu0
    %v845 = vadd.f32 0.0, %v844
    %v846 = vpop.f32.mrb[0].mxu0
    %847 = vmatprep.mubr.f32.mxu0 0.0
    %848 = vmatmul.mubr.f32.gmra.mrb[0].mxu0 %v777
    %v849 = vpop.f32.mrb[0].mxu0
    %v850 = vadd.f32 0.0, %v849
    %v851 = vpop.f32.mrb[0].mxu0
    %852 = vdwg.mxu0
    %v853 = vmul.f32 %v845, 2e-05
    %v854 = vmul.f32 %v850, 2e-05
    %v855 = vadd.f32 %v853, 2.0
    %v856 = vadd.f32 %v854, 2.0
    %v857 = vrsqrt.pop %v855
    %v858 = vmul.f32 %v855, %v857
    %vm859 = vcmp.eq.f32.partialorder %v855, inf
    %v860 = vsel %vm859, %v855, %v858
    %vm861 = vcmp.eq.f32.partialorder %v855, 0.0
    %v862 = vand.u32 %v855, 2147483648
    %v863 = vsel %vm861, %v862, %v860
    %v864 = vrsqrt.pop %v856
    %v865 = vmul.f32 %v856, %v864
    %vm866 = vcmp.eq.f32.partialorder %v856, inf
    %v867 = vsel %vm866, %v856, %v865
    %vm868 = vcmp.eq.f32.partialorder %v856, 0.0
    %v869 = vand.u32 %v856, 2147483648
    %v870 = vsel %vm868, %v869, %v867
    %v871 = vmul.f32 %v855, %v863
    %v872 = vmul.f32 %v856, %v870
    %v873 = vrsqrt.pop %v871
    %v874 = vrsqrt.pop %v872
    %v875 = vmul.f32 %v774, %v873
    %v876 = vmul.f32 %v775, %v874
    %s877 = smul.u32 4, 64
    %s878 = smul.u32 %s877, 8
    %s879 = sshll.u32 %s878, 4
    %880 = dma.done [#allocation3], %s879
    %v882 = vrot.slane %v875, 7
    %vm884 = vcmask 1040384
    %v885 = vsel %vm884, %v587, %v882
    %v886 = vld [vmem:[#allocation2] sm:$0xff]
    %v887 = vld [vmem:[#allocation2 + $0x8] sm:$0xff]
    %v888 = vld [vmem:[#allocation2 + $0x10] sm:$0xff]
    %v889 = vld [vmem:[#allocation2 + $0x18] sm:$0xff]
    %v890 = vld [vmem:[#allocation2 + $0x20] sm:$0xff]
    %v891 = vld [vmem:[#allocation2 + $0x28] sm:$0xff]
    %v892 = vld [vmem:[#allocation2 + $0x30] sm:$0xff]
    %v893 = vld [vmem:[#allocation2 + $0x38] sm:$0xff]
    %v894 = vld [vmem:[#allocation2 + $0x40] sm:$0xff]
    %v895 = vld [vmem:[#allocation2 + $0x48] sm:$0xff]
    %v896 = vld [vmem:[#allocation2 + $0x50] sm:$0xff]
    %v897 = vld [vmem:[#allocation2 + $0x58] sm:$0xff]
    %v898 = vld [vmem:[#allocation2 + $0x60] sm:$0xff]
    %v899 = vld [vmem:[#allocation2 + $0x68] sm:$0xff]
    %v900 = vld [vmem:[#allocation2 + $0x70] sm:$0xff]
    %v901 = vld [vmem:[#allocation2 + $0x78] sm:$0xff]
    %v902 = vld [vmem:[#allocation2 + $0x80] sm:$0xff]
    %v903 = vld [vmem:[#allocation2 + $0x88] sm:$0xff]
    %v904 = vld [vmem:[#allocation2 + $0x90] sm:$0xff]
    %v905 = vld [vmem:[#allocation2 + $0x98] sm:$0xff]
    %v906 = vld [vmem:[#allocation2 + $0xa0] sm:$0xff]
    %v907 = vld [vmem:[#allocation2 + $0xa8] sm:$0xff]
    %v908 = vld [vmem:[#allocation2 + $0xb0] sm:$0xff]
    %v909 = vld [vmem:[#allocation2 + $0xb8] sm:$0xff]
    %v910 = vld [vmem:[#allocation2 + $0xc0] sm:$0xff]
    %v911 = vld [vmem:[#allocation2 + $0xc8] sm:$0xff]
    %v912 = vld [vmem:[#allocation2 + $0xd0] sm:$0xff]
    %v913 = vld [vmem:[#allocation2 + $0xd8] sm:$0xff]
    %v914 = vld [vmem:[#allocation2 + $0xe0] sm:$0xff]
    %v915 = vld [vmem:[#allocation2 + $0xe8] sm:$0xff]
    %v916 = vld [vmem:[#allocation2 + $0xf0] sm:$0xff]
    %v917 = vld [vmem:[#allocation2 + $0xf8] sm:$0xff]
    %v918 = vld [vmem:[#allocation2 + $0x100] sm:$0xff]
    %v919 = vld [vmem:[#allocation2 + $0x108] sm:$0xff]
    %v920 = vld [vmem:[#allocation2 + $0x110] sm:$0xff]
    %v921 = vld [vmem:[#allocation2 + $0x118] sm:$0xff]
    %v922 = vld [vmem:[#allocation2 + $0x120] sm:$0xff]
    %v923 = vld [vmem:[#allocation2 + $0x128] sm:$0xff]
    %v924 = vld [vmem:[#allocation2 + $0x130] sm:$0xff]
    %v925 = vld [vmem:[#allocation2 + $0x138] sm:$0xff]
    %v926 = vld [vmem:[#allocation2 + $0x140] sm:$0xff]
    %v927 = vld [vmem:[#allocation2 + $0x148] sm:$0xff]
    %v928 = vld [vmem:[#allocation2 + $0x150] sm:$0xff]
    %v929 = vld [vmem:[#allocation2 + $0x158] sm:$0xff]
    %v930 = vld [vmem:[#allocation2 + $0x160] sm:$0xff]
    %v931 = vld [vmem:[#allocation2 + $0x168] sm:$0xff]
    %v932 = vld [vmem:[#allocation2 + $0x170] sm:$0xff]
    %v933 = vld [vmem:[#allocation2 + $0x178] sm:$0xff]
    %v934 = vld [vmem:[#allocation2 + $0x180] sm:$0xff]
    %v935 = vld [vmem:[#allocation2 + $0x188] sm:$0xff]
    %v936 = vld [vmem:[#allocation2 + $0x190] sm:$0xff]
    %v937 = vld [vmem:[#allocation2 + $0x198] sm:$0xff]
    %v938 = vld [vmem:[#allocation2 + $0x1a0] sm:$0xff]
    %v939 = vld [vmem:[#allocation2 + $0x1a8] sm:$0xff]
    %v940 = vld [vmem:[#allocation2 + $0x1b0] sm:$0xff]
    %v941 = vld [vmem:[#allocation2 + $0x1b8] sm:$0xff]
    %v942 = vld [vmem:[#allocation2 + $0x1c0] sm:$0xff]
    %v943 = vld [vmem:[#allocation2 + $0x1c8] sm:$0xff]
    %v944 = vld [vmem:[#allocation2 + $0x1d0] sm:$0xff]
    %v945 = vld [vmem:[#allocation2 + $0x1d8] sm:$0xff]
    %v946 = vld [vmem:[#allocation2 + $0x1e0] sm:$0xff]
    %v947 = vld [vmem:[#allocation2 + $0x1e8] sm:$0xff]
    %v948 = vld [vmem:[#allocation2 + $0x1f0] sm:$0xff]
    %v949 = vld [vmem:[#allocation2 + $0x1f8] sm:$0xff]
    %v950 = vpack.c.bf16 %v885, %v885
    %v952 = vrot.slane %v587, 1
    %v954 = vsel %vm884, %v952, %v875
    %v955 = vld [vmem:[#allocation2 + $0x200] sm:$0xff]
    %v956 = vld [vmem:[#allocation2 + $0x208] sm:$0xff]
    %v957 = vld [vmem:[#allocation2 + $0x210] sm:$0xff]
    %v958 = vld [vmem:[#allocation2 + $0x218] sm:$0xff]
    %v959 = vld [vmem:[#allocation2 + $0x220] sm:$0xff]
    %v960 = vld [vmem:[#allocation2 + $0x228] sm:$0xff]
    %v961 = vld [vmem:[#allocation2 + $0x230] sm:$0xff]
    %v962 = vld [vmem:[#allocation2 + $0x238] sm:$0xff]
    %v963 = vld [vmem:[#allocation2 + $0x240] sm:$0xff]
    %v964 = vld [vmem:[#allocation2 + $0x248] sm:$0xff]
    %v965 = vld [vmem:[#allocation2 + $0x250] sm:$0xff]
    %v966 = vld [vmem:[#allocation2 + $0x258] sm:$0xff]
    %v967 = vld [vmem:[#allocation2 + $0x260] sm:$0xff]
    %v968 = vld [vmem:[#allocation2 + $0x268] sm:$0xff]
    %v969 = vld [vmem:[#allocation2 + $0x270] sm:$0xff]
    %v970 = vld [vmem:[#allocation2 + $0x278] sm:$0xff]
    %v971 = vld [vmem:[#allocation2 + $0x280] sm:$0xff]
    %v972 = vld [vmem:[#allocation2 + $0x288] sm:$0xff]
    %v973 = vld [vmem:[#allocation2 + $0x290] sm:$0xff]
    %v974 = vld [vmem:[#allocation2 + $0x298] sm:$0xff]
    %v975 = vld [vmem:[#allocation2 + $0x2a0] sm:$0xff]
    %v976 = vld [vmem:[#allocation2 + $0x2a8] sm:$0xff]
    %v977 = vld [vmem:[#allocation2 + $0x2b0] sm:$0xff]
    %v978 = vld [vmem:[#allocation2 + $0x2b8] sm:$0xff]
    %v979 = vld [vmem:[#allocation2 + $0x2c0] sm:$0xff]
    %v980 = vld [vmem:[#allocation2 + $0x2c8] sm:$0xff]
    %v981 = vld [vmem:[#allocation2 + $0x2d0] sm:$0xff]
    %v982 = vld [vmem:[#allocation2 + $0x2d8] sm:$0xff]
    %v983 = vld [vmem:[#allocation2 + $0x2e0] sm:$0xff]
    %v984 = vld [vmem:[#allocation2 + $0x2e8] sm:$0xff]
    %v985 = vld [vmem:[#allocation2 + $0x2f0] sm:$0xff]
    %v986 = vld [vmem:[#allocation2 + $0x2f8] sm:$0xff]
    %v987 = vld [vmem:[#allocation2 + $0x300] sm:$0xff]
    %v988 = vld [vmem:[#allocation2 + $0x308] sm:$0xff]
    %v989 = vld [vmem:[#allocation2 + $0x310] sm:$0xff]
    %v990 = vld [vmem:[#allocation2 + $0x318] sm:$0xff]
    %v991 = vld [vmem:[#allocation2 + $0x320] sm:$0xff]
    %v992 = vld [vmem:[#allocation2 + $0x328] sm:$0xff]
    %v993 = vld [vmem:[#allocation2 + $0x330] sm:$0xff]
    %v994 = vld [vmem:[#allocation2 + $0x338] sm:$0xff]
    %v995 = vld [vmem:[#allocation2 + $0x340] sm:$0xff]
    %v996 = vld [vmem:[#allocation2 + $0x348] sm:$0xff]
    %v997 = vld [vmem:[#allocation2 + $0x350] sm:$0xff]
    %v998 = vld [vmem:[#allocation2 + $0x358] sm:$0xff]
    %v999 = vld [vmem:[#allocation2 + $0x360] sm:$0xff]
    %v1000 = vld [vmem:[#allocation2 + $0x368] sm:$0xff]
    %v1001 = vld [vmem:[#allocation2 + $0x370] sm:$0xff]
    %v1002 = vld [vmem:[#allocation2 + $0x378] sm:$0xff]
    %v1003 = vld [vmem:[#allocation2 + $0x380] sm:$0xff]
    %v1004 = vld [vmem:[#allocation2 + $0x388] sm:$0xff]
    %v1005 = vld [vmem:[#allocation2 + $0x390] sm:$0xff]
    %v1006 = vld [vmem:[#allocation2 + $0x398] sm:$0xff]
    %v1007 = vld [vmem:[#allocation2 + $0x3a0] sm:$0xff]
    %v1008 = vld [vmem:[#allocation2 + $0x3a8] sm:$0xff]
    %v1009 = vld [vmem:[#allocation2 + $0x3b0] sm:$0xff]
    %v1010 = vld [vmem:[#allocation2 + $0x3b8] sm:$0xff]
    %v1011 = vld [vmem:[#allocation2 + $0x3c0] sm:$0xff]
    %v1012 = vld [vmem:[#allocation2 + $0x3c8] sm:$0xff]
    %v1013 = vld [vmem:[#allocation2 + $0x3d0] sm:$0xff]
    %v1014 = vld [vmem:[#allocation2 + $0x3d8] sm:$0xff]
    %v1015 = vld [vmem:[#allocation2 + $0x3e0] sm:$0xff]
    %v1016 = vld [vmem:[#allocation2 + $0x3e8] sm:$0xff]
    %v1017 = vld [vmem:[#allocation2 + $0x3f0] sm:$0xff]
    %v1018 = vld [vmem:[#allocation2 + $0x3f8] sm:$0xff]
    %v1019 = vpack.c.bf16 %v954, %v954
    %1020 = vmatprep.subr.bf16.mxu0 %v956
    %1021 = vmatpush1.bf16.msra.mxu0 %v955
    %1022 = vmatprep.subr.bf16.mxu0 %v964
    %1023 = vmatpush1.bf16.msra.mxu0 %v963
    %1024 = vmatprep.subr.bf16.mxu0 %v972
    %1025 = vmatpush1.bf16.msra.mxu0 %v971
    %1026 = vmatprep.subr.bf16.mxu0 %v980
    %1027 = vmatpush1.bf16.msra.mxu0 %v979
    %1028 = vmatprep.subr.bf16.mxu0 %v988
    %1029 = vmatpush1.bf16.msra.mxu0 %v987
    %1030 = vmatprep.subr.bf16.mxu0 %v996
    %1031 = vmatpush1.bf16.msra.mxu0 %v995
    %1032 = vmatprep.subr.bf16.mxu0 %v1004
    %1033 = vmatpush1.bf16.msra.mxu0 %v1003
    %1034 = vmatprep.subr.bf16.mxu0 %v1012
    %1035 = vmatpush1.bf16.msra.mxu0 %v1011
    %1036 = vmatprep.subr.bf16.mxu0 0
    %1037 = vmatpush1.bf16.msra.mxu0 0
    %1038 = vmatprep.subr.bf16.mxu0 0
    %1039 = vmatpush1.bf16.msra.mxu0 0
    %1040 = vmatprep.subr.bf16.mxu0 0
    %1041 = vmatpush1.bf16.msra.mxu0 0
    %1042 = vmatprep.subr.bf16.mxu0 0
    %1043 = vmatpush1.bf16.msra.mxu0 0
    %1044 = vmatprep.subr.bf16.mxu0 0
    %1045 = vmatpush1.bf16.msra.mxu0 0
    %1046 = vmatprep.subr.bf16.mxu0 0
    %1047 = vmatpush1.bf16.msra.mxu0 0
    %1048 = vmatprep.subr.bf16.mxu0 0
    %1049 = vmatpush1.bf16.msra.mxu0 0
    %1050 = vmatprep.subr.bf16.mxu0 0
    %1051 = vmatpush1.bf16.msra.mxu0 0
    %1052 = vmatprep.mubr.bf16.mxu0 0
    %1053 = vmatmul.mubr.bf16.gmra.mrb[0].mxu0 %v1019
    %v1054 = vpop.f32.mrb[0].mxu0
    %v1055 = vadd.f32 0.0, %v1054
    %v1056 = vpop.f32.mrb[0].mxu0
    %v1057 = vadd.f32 0.0, %v1056
    %v1058 = vpop.f32.mrb[0].mxu0
    %v1059 = vpop.f32.mrb[0].mxu0
    %1060 = vdwg.mxu0
    %1061 = vmatprep.subr.bf16.mxu0 %v958
    %1062 = vmatpush1.bf16.msra.mxu0 %v957
    %1063 = vmatprep.subr.bf16.mxu0 %v966
    %1064 = vmatpush1.bf16.msra.mxu0 %v965
    %1065 = vmatprep.subr.bf16.mxu0 %v974
    %1066 = vmatpush1.bf16.msra.mxu0 %v973
    %1067 = vmatprep.subr.bf16.mxu0 %v982
    %1068 = vmatpush1.bf16.msra.mxu0 %v981
    %1069 = vmatprep.subr.bf16.mxu0 %v990
    %1070 = vmatpush1.bf16.msra.mxu0 %v989
    %1071 = vmatprep.subr.bf16.mxu0 %v998
    %1072 = vmatpush1.bf16.msra.mxu0 %v997
    %1073 = vmatprep.subr.bf16.mxu0 %v1006
    %1074 = vmatpush1.bf16.msra.mxu0 %v1005
    %1075 = vmatprep.subr.bf16.mxu0 %v1014
    %1076 = vmatpush1.bf16.msra.mxu0 %v1013
    %1077 = vmatprep.subr.bf16.mxu0 0
    %1078 = vmatpush1.bf16.msra.mxu0 0
    %1079 = vmatprep.subr.bf16.mxu0 0
    %1080 = vmatpush1.bf16.msra.mxu0 0
    %1081 = vmatprep.subr.bf16.mxu0 0
    %1082 = vmatpush1.bf16.msra.mxu0 0
    %1083 = vmatprep.subr.bf16.mxu0 0
    %1084 = vmatpush1.bf16.msra.mxu0 0
    %1085 = vmatprep.subr.bf16.mxu0 0
    %1086 = vmatpush1.bf16.msra.mxu0 0
    %1087 = vmatprep.subr.bf16.mxu0 0
    %1088 = vmatpush1.bf16.msra.mxu0 0
    %1089 = vmatprep.subr.bf16.mxu0 0
    %1090 = vmatpush1.bf16.msra.mxu0 0
    %1091 = vmatprep.subr.bf16.mxu0 0
    %1092 = vmatpush1.bf16.msra.mxu0 0
    %1093 = vmatprep.mubr.bf16.mxu0 0
    %1094 = vmatmul.mubr.bf16.gmra.mrb[0].mxu0 %v1019
    %v1095 = vpop.f32.mrb[0].mxu0
    %v1096 = vadd.f32 0.0, %v1095
    %v1097 = vpop.f32.mrb[0].mxu0
    %v1098 = vadd.f32 0.0, %v1097
    %v1099 = vpop.f32.mrb[0].mxu0
    %v1100 = vpop.f32.mrb[0].mxu0
    %1101 = vdwg.mxu0
    %1102 = vmatprep.subr.bf16.mxu0 %v960
    %1103 = vmatpush1.bf16.msra.mxu0 %v959
    %1104 = vmatprep.subr.bf16.mxu0 %v968
    %1105 = vmatpush1.bf16.msra.mxu0 %v967
    %1106 = vmatprep.subr.bf16.mxu0 %v976
    %1107 = vmatpush1.bf16.msra.mxu0 %v975
    %1108 = vmatprep.subr.bf16.mxu0 %v984
    %1109 = vmatpush1.bf16.msra.mxu0 %v983
    %1110 = vmatprep.subr.bf16.mxu0 %v992
    %1111 = vmatpush1.bf16.msra.mxu0 %v991
    %1112 = vmatprep.subr.bf16.mxu0 %v1000
    %1113 = vmatpush1.bf16.msra.mxu0 %v999
    %1114 = vmatprep.subr.bf16.mxu0 %v1008
    %1115 = vmatpush1.bf16.msra.mxu0 %v1007
    %1116 = vmatprep.subr.bf16.mxu0 %v1016
    %1117 = vmatpush1.bf16.msra.mxu0 %v1015
    %1118 = vmatprep.subr.bf16.mxu0 0
    %1119 = vmatpush1.bf16.msra.mxu0 0
    %1120 = vmatprep.subr.bf16.mxu0 0
    %1121 = vmatpush1.bf16.msra.mxu0 0
    %1122 = vmatprep.subr.bf16.mxu0 0
    %1123 = vmatpush1.bf16.msra.mxu0 0
    %1124 = vmatprep.subr.bf16.mxu0 0
    %1125 = vmatpush1.bf16.msra.mxu0 0
    %1126 = vmatprep.subr.bf16.mxu0 0
    %1127 = vmatpush1.bf16.msra.mxu0 0
    %1128 = vmatprep.subr.bf16.mxu0 0
    %1129 = vmatpush1.bf16.msra.mxu0 0
    %1130 = vmatprep.subr.bf16.mxu0 0
    %1131 = vmatpush1.bf16.msra.mxu0 0
    %1132 = vmatprep.subr.bf16.mxu0 0
    %1133 = vmatpush1.bf16.msra.mxu0 0
    %1134 = vmatprep.mubr.bf16.mxu0 0
    %1135 = vmatmul.mubr.bf16.gmra.mrb[0].mxu0 %v1019
    %v1136 = vpop.f32.mrb[0].mxu0
    %v1137 = vadd.f32 0.0, %v1136
    %v1138 = vpop.f32.mrb[0].mxu0
    %v1139 = vadd.f32 0.0, %v1138
    %v1140 = vpop.f32.mrb[0].mxu0
    %v1141 = vpop.f32.mrb[0].mxu0
    %1142 = vdwg.mxu0
    %1143 = vmatprep.subr.bf16.mxu0 %v962
    %1144 = vmatpush1.bf16.msra.mxu0 %v961
    %1145 = vmatprep.subr.bf16.mxu0 %v970
    %1146 = vmatpush1.bf16.msra.mxu0 %v969
    %1147 = vmatprep.subr.bf16.mxu0 %v978
    %1148 = vmatpush1.bf16.msra.mxu0 %v977
    %1149 = vmatprep.subr.bf16.mxu0 %v986
    %1150 = vmatpush1.bf16.msra.mxu0 %v985
    %1151 = vmatprep.subr.bf16.mxu0 %v994
    %1152 = vmatpush1.bf16.msra.mxu0 %v993
    %1153 = vmatprep.subr.bf16.mxu0 %v1002
    %1154 = vmatpush1.bf16.msra.mxu0 %v1001
    %1155 = vmatprep.subr.bf16.mxu0 %v1010
    %1156 = vmatpush1.bf16.msra.mxu0 %v1009
    %1157 = vmatprep.subr.bf16.mxu0 %v1018
    %1158 = vmatpush1.bf16.msra.mxu0 %v1017
    %1159 = vmatprep.subr.bf16.mxu0 0
    %1160 = vmatpush1.bf16.msra.mxu0 0
    %1161 = vmatprep.subr.bf16.mxu0 0
    %1162 = vmatpush1.bf16.msra.mxu0 0
    %1163 = vmatprep.subr.bf16.mxu0 0
    %1164 = vmatpush1.bf16.msra.mxu0 0
    %1165 = vmatprep.subr.bf16.mxu0 0
    %1166 = vmatpush1.bf16.msra.mxu0 0
    %1167 = vmatprep.subr.bf16.mxu0 0
    %1168 = vmatpush1.bf16.msra.mxu0 0
    %1169 = vmatprep.subr.bf16.mxu0 0
    %1170 = vmatpush1.bf16.msra.mxu0 0
    %1171 = vmatprep.subr.bf16.mxu0 0
    %1172 = vmatpush1.bf16.msra.mxu0 0
    %1173 = vmatprep.subr.bf16.mxu0 0
    %1174 = vmatpush1.bf16.msra.mxu0 0
    %1175 = vmatprep.mubr.bf16.mxu0 0
    %1176 = vmatmul.mubr.bf16.gmra.mrb[0].mxu0 %v1019
    %v1177 = vpop.f32.mrb[0].mxu0
    %v1178 = vadd.f32 0.0, %v1177
    %v1179 = vpop.f32.mrb[0].mxu0
    %v1180 = vadd.f32 0.0, %v1179
    %v1181 = vpop.f32.mrb[0].mxu0
    %v1182 = vpop.f32.mrb[0].mxu0
    %1183 = vdwg.mxu0
    %1184 = vmatprep.subr.bf16.mxu0 %v887
    %1185 = vmatpush1.bf16.msra.mxu0 %v886
    %1186 = vmatprep.subr.bf16.mxu0 %v895
    %1187 = vmatpush1.bf16.msra.mxu0 %v894
    %1188 = vmatprep.subr.bf16.mxu0 %v903
    %1189 = vmatpush1.bf16.msra.mxu0 %v902
    %1190 = vmatprep.subr.bf16.mxu0 %v911
    %1191 = vmatpush1.bf16.msra.mxu0 %v910
    %1192 = vmatprep.subr.bf16.mxu0 %v919
    %1193 = vmatpush1.bf16.msra.mxu0 %v918
    %1194 = vmatprep.subr.bf16.mxu0 %v927
    %1195 = vmatpush1.bf16.msra.mxu0 %v926
    %1196 = vmatprep.subr.bf16.mxu0 %v935
    %1197 = vmatpush1.bf16.msra.mxu0 %v934
    %1198 = vmatprep.subr.bf16.mxu0 %v943
    %1199 = vmatpush1.bf16.msra.mxu0 %v942
    %1200 = vmatprep.subr.bf16.mxu0 0
    %1201 = vmatpush1.bf16.msra.mxu0 0
    %1202 = vmatprep.subr.bf16.mxu0 0
    %1203 = vmatpush1.bf16.msra.mxu0 0
    %1204 = vmatprep.subr.bf16.mxu0 0
    %1205 = vmatpush1.bf16.msra.mxu0 0
    %1206 = vmatprep.subr.bf16.mxu0 0
    %1207 = vmatpush1.bf16.msra.mxu0 0
    %1208 = vmatprep.subr.bf16.mxu0 0
    %1209 = vmatpush1.bf16.msra.mxu0 0
    %1210 = vmatprep.subr.bf16.mxu0 0
    %1211 = vmatpush1.bf16.msra.mxu0 0
    %1212 = vmatprep.subr.bf16.mxu0 0
    %1213 = vmatpush1.bf16.msra.mxu0 0
    %1214 = vmatprep.subr.bf16.mxu0 0
    %1215 = vmatpush1.bf16.msra.mxu0 0
    %1216 = vmatprep.mubr.bf16.mxu0 0
    %1217 = vmatmul.mubr.bf16.gmra.mrb[0].mxu0 %v950
    %v1218 = vpop.f32.mrb[0].mxu0
    %v1219 = vadd.f32 %v1055, %v1218
    %v1220 = vpop.f32.mrb[0].mxu0
    %v1221 = vadd.f32 %v1057, %v1220
    %v1222 = vpop.f32.mrb[0].mxu0
    %v1223 = vpop.f32.mrb[0].mxu0
    %1224 = vdwg.mxu0
    %1225 = vmatprep.subr.bf16.mxu0 %v889
    %1226 = vmatpush1.bf16.msra.mxu0 %v888
    %1227 = vmatprep.subr.bf16.mxu0 %v897
    %1228 = vmatpush1.bf16.msra.mxu0 %v896
    %1229 = vmatprep.subr.bf16.mxu0 %v905
    %1230 = vmatpush1.bf16.msra.mxu0 %v904
    %1231 = vmatprep.subr.bf16.mxu0 %v913
    %1232 = vmatpush1.bf16.msra.mxu0 %v912
    %1233 = vmatprep.subr.bf16.mxu0 %v921
    %1234 = vmatpush1.bf16.msra.mxu0 %v920
    %1235 = vmatprep.subr.bf16.mxu0 %v929
    %1236 = vmatpush1.bf16.msra.mxu0 %v928
    %1237 = vmatprep.subr.bf16.mxu0 %v937
    %1238 = vmatpush1.bf16.msra.mxu0 %v936
    %1239 = vmatprep.subr.bf16.mxu0 %v945
    %1240 = vmatpush1.bf16.msra.mxu0 %v944
    %1241 = vmatprep.subr.bf16.mxu0 0
    %1242 = vmatpush1.bf16.msra.mxu0 0
    %1243 = vmatprep.subr.bf16.mxu0 0
    %1244 = vmatpush1.bf16.msra.mxu0 0
    %1245 = vmatprep.subr.bf16.mxu0 0
    %1246 = vmatpush1.bf16.msra.mxu0 0
    %1247 = vmatprep.subr.bf16.mxu0 0
    %1248 = vmatpush1.bf16.msra.mxu0 0
    %1249 = vmatprep.subr.bf16.mxu0 0
    %1250 = vmatpush1.bf16.msra.mxu0 0
    %1251 = vmatprep.subr.bf16.mxu0 0
    %1252 = vmatpush1.bf16.msra.mxu0 0
    %1253 = vmatprep.subr.bf16.mxu0 0
    %1254 = vmatpush1.bf16.msra.mxu0 0
    %1255 = vmatprep.subr.bf16.mxu0 0
    %1256 = vmatpush1.bf16.msra.mxu0 0
    %1257 = vmatprep.mubr.bf16.mxu0 0
    %1258 = vmatmul.mubr.bf16.gmra.mrb[0].mxu0 %v950
    %v1259 = vpop.f32.mrb[0].mxu0
    %v1260 = vadd.f32 %v1096, %v1259
    %v1261 = vpop.f32.mrb[0].mxu0
    %v1262 = vadd.f32 %v1098, %v1261
    %v1263 = vpop.f32.mrb[0].mxu0
    %v1264 = vpop.f32.mrb[0].mxu0
    %1265 = vdwg.mxu0
    %1266 = vmatprep.subr.bf16.mxu0 %v891
    %1267 = vmatpush1.bf16.msra.mxu0 %v890
    %1268 = vmatprep.subr.bf16.mxu0 %v899
    %1269 = vmatpush1.bf16.msra.mxu0 %v898
    %1270 = vmatprep.subr.bf16.mxu0 %v907
    %1271 = vmatpush1.bf16.msra.mxu0 %v906
    %1272 = vmatprep.subr.bf16.mxu0 %v915
    %1273 = vmatpush1.bf16.msra.mxu0 %v914
    %1274 = vmatprep.subr.bf16.mxu0 %v923
    %1275 = vmatpush1.bf16.msra.mxu0 %v922
    %1276 = vmatprep.subr.bf16.mxu0 %v931
    %1277 = vmatpush1.bf16.msra.mxu0 %v930
    %1278 = vmatprep.subr.bf16.mxu0 %v939
    %1279 = vmatpush1.bf16.msra.mxu0 %v938
    %1280 = vmatprep.subr.bf16.mxu0 %v947
    %1281 = vmatpush1.bf16.msra.mxu0 %v946
    %1282 = vmatprep.subr.bf16.mxu0 0
    %1283 = vmatpush1.bf16.msra.mxu0 0
    %1284 = vmatprep.subr.bf16.mxu0 0
    %1285 = vmatpush1.bf16.msra.mxu0 0
    %1286 = vmatprep.subr.bf16.mxu0 0
    %1287 = vmatpush1.bf16.msra.mxu0 0
    %1288 = vmatprep.subr.bf16.mxu0 0
    %1289 = vmatpush1.bf16.msra.mxu0 0
    %1290 = vmatprep.subr.bf16.mxu0 0
    %1291 = vmatpush1.bf16.msra.mxu0 0
    %1292 = vmatprep.subr.bf16.mxu0 0
    %1293 = vmatpush1.bf16.msra.mxu0 0
    %1294 = vmatprep.subr.bf16.mxu0 0
    %1295 = vmatpush1.bf16.msra.mxu0 0
    %1296 = vmatprep.subr.bf16.mxu0 0
    %1297 = vmatpush1.bf16.msra.mxu0 0
    %1298 = vmatprep.mubr.bf16.mxu0 0
    %1299 = vmatmul.mubr.bf16.gmra.mrb[0].mxu0 %v950
    %v1300 = vpop.f32.mrb[0].mxu0
    %v1301 = vadd.f32 %v1137, %v1300
    %v1302 = vpop.f32.mrb[0].mxu0
    %v1303 = vadd.f32 %v1139, %v1302
    %v1304 = vpop.f32.mrb[0].mxu0
    %v1305 = vpop.f32.mrb[0].mxu0
    %1306 = vdwg.mxu0
    %1307 = vmatprep.subr.bf16.mxu0 %v893
    %1308 = vmatpush1.bf16.msra.mxu0 %v892
    %1309 = vmatprep.subr.bf16.mxu0 %v901
    %1310 = vmatpush1.bf16.msra.mxu0 %v900
    %1311 = vmatprep.subr.bf16.mxu0 %v909
    %1312 = vmatpush1.bf16.msra.mxu0 %v908
    %1313 = vmatprep.subr.bf16.mxu0 %v917
    %1314 = vmatpush1.bf16.msra.mxu0 %v916
    %1315 = vmatprep.subr.bf16.mxu0 %v925
    %1316 = vmatpush1.bf16.msra.mxu0 %v924
    %1317 = vmatprep.subr.bf16.mxu0 %v933
    %1318 = vmatpush1.bf16.msra.mxu0 %v932
    %1319 = vmatprep.subr.bf16.mxu0 %v941
    %1320 = vmatpush1.bf16.msra.mxu0 %v940
    %1321 = vmatprep.subr.bf16.mxu0 %v949
    %1322 = vmatpush1.bf16.msra.mxu0 %v948
    %1323 = vmatprep.subr.bf16.mxu0 0
    %1324 = vmatpush1.bf16.msra.mxu0 0
    %1325 = vmatprep.subr.bf16.mxu0 0
    %1326 = vmatpush1.bf16.msra.mxu0 0
    %1327 = vmatprep.subr.bf16.mxu0 0
    %1328 = vmatpush1.bf16.msra.mxu0 0
    %1329 = vmatprep.subr.bf16.mxu0 0
    %1330 = vmatpush1.bf16.msra.mxu0 0
    %1331 = vmatprep.subr.bf16.mxu0 0
    %1332 = vmatpush1.bf16.msra.mxu0 0
    %1333 = vmatprep.subr.bf16.mxu0 0
    %1334 = vmatpush1.bf16.msra.mxu0 0
    %1335 = vmatprep.subr.bf16.mxu0 0
    %1336 = vmatpush1.bf16.msra.mxu0 0
    %1337 = vmatprep.subr.bf16.mxu0 0
    %1338 = vmatpush1.bf16.msra.mxu0 0
    %1339 = vmatprep.mubr.bf16.mxu0 0
    %1340 = vmatmul.mubr.bf16.gmra.mrb[0].mxu0 %v950
    %v1341 = vpop.f32.mrb[0].mxu0
    %v1342 = vadd.f32 %v1178, %v1341
    %v1343 = vpop.f32.mrb[0].mxu0
    %v1344 = vadd.f32 %v1180, %v1343
    %v1345 = vpop.f32.mrb[0].mxu0
    %v1346 = vpop.f32.mrb[0].mxu0
    %1347 = vdwg.mxu0
    %v1348 = vrot.slane %v587, 2
    %v1350 = vrot.slane %v875, 1
    %v1352 = vsel %vm884, %v1348, %v1350
    %v1353 = vld [vmem:[#allocation2 + $0x400] sm:$0xff]
    %v1354 = vld [vmem:[#allocation2 + $0x408] sm:$0xff]
    %v1355 = vld [vmem:[#allocation2 + $0x410] sm:$0xff]
    %v1356 = vld [vmem:[#allocation2 + $0x418] sm:$0xff]
    %v1357 = vld [vmem:[#allocation2 + $0x420] sm:$0xff]
    %v1358 = vld [vmem:[#allocation2 + $0x428] sm:$0xff]
    %v1359 = vld [vmem:[#allocation2 + $0x430] sm:$0xff]
    %v1360 = vld [vmem:[#allocation2 + $0x438] sm:$0xff]
    %v1361 = vld [vmem:[#allocation2 + $0x440] sm:$0xff]
    %v1362 = vld [vmem:[#allocation2 + $0x448] sm:$0xff]
    %v1363 = vld [vmem:[#allocation2 + $0x450] sm:$0xff]
    %v1364 = vld [vmem:[#allocation2 + $0x458] sm:$0xff]
    %v1365 = vld [vmem:[#allocation2 + $0x460] sm:$0xff]
    %v1366 = vld [vmem:[#allocation2 + $0x468] sm:$0xff]
    %v1367 = vld [vmem:[#allocation2 + $0x470] sm:$0xff]
    %v1368 = vld [vmem:[#allocation2 + $0x478] sm:$0xff]
    %v1369 = vld [vmem:[#allocation2 + $0x480] sm:$0xff]
    %v1370 = vld [vmem:[#allocation2 + $0x488] sm:$0xff]
    %v1371 = vld [vmem:[#allocation2 + $0x490] sm:$0xff]
    %v1372 = vld [vmem:[#allocation2 + $0x498] sm:$0xff]
    %v1373 = vld [vmem:[#allocation2 + $0x4a0] sm:$0xff]
    %v1374 = vld [vmem:[#allocation2 + $0x4a8] sm:$0xff]
    %v1375 = vld [vmem:[#allocation2 + $0x4b0] sm:$0xff]
    %v1376 = vld [vmem:[#allocation2 + $0x4b8] sm:$0xff]
    %v1377 = vld [vmem:[#allocation2 + $0x4c0] sm:$0xff]
    %v1378 = vld [vmem:[#allocation2 + $0x4c8] sm:$0xff]
    %v1379 = vld [vmem:[#allocation2 + $0x4d0] sm:$0xff]
    %v1380 = vld [vmem:[#allocation2 + $0x4d8] sm:$0xff]
    %v1381 = vld [vmem:[#allocation2 + $0x4e0] sm:$0xff]
    %v1382 = vld [vmem:[#allocation2 + $0x4e8] sm:$0xff]
    %v1383 = vld [vmem:[#allocation2 + $0x4f0] sm:$0xff]
    %v1384 = vld [vmem:[#allocation2 + $0x4f8] sm:$0xff]
    %v1385 = vld [vmem:[#allocation2 + $0x500] sm:$0xff]
    %v1386 = vld [vmem:[#allocation2 + $0x508] sm:$0xff]
    %v1387 = vld [vmem:[#allocation2 + $0x510] sm:$0xff]
    %v1388 = vld [vmem:[#allocation2 + $0x518] sm:$0xff]
    %v1389 = vld [vmem:[#allocation2 + $0x520] sm:$0xff]
    %v1390 = vld [vmem:[#allocation2 + $0x528] sm:$0xff]
    %v1391 = vld [vmem:[#allocation2 + $0x530] sm:$0xff]
    %v1392 = vld [vmem:[#allocation2 + $0x538] sm:$0xff]
    %v1393 = vld [vmem:[#allocation2 + $0x540] sm:$0xff]
    %v1394 = vld [vmem:[#allocation2 + $0x548] sm:$0xff]
    %v1395 = vld [vmem:[#allocation2 + $0x550] sm:$0xff]
    %v1396 = vld [vmem:[#allocation2 + $0x558] sm:$0xff]
    %v1397 = vld [vmem:[#allocation2 + $0x560] sm:$0xff]
    %v1398 = vld [vmem:[#allocation2 + $0x568] sm:$0xff]
    %v1399 = vld [vmem:[#allocation2 + $0x570] sm:$0xff]
    %v1400 = vld [vmem:[#allocation2 + $0x578] sm:$0xff]
    %v1401 = vld [vmem:[#allocation2 + $0x580] sm:$0xff]
    %v1402 = vld [vmem:[#allocation2 + $0x588] sm:$0xff]
    %v1403 = vld [vmem:[#allocation2 + $0x590] sm:$0xff]
    %v1404 = vld [vmem:[#allocation2 + $0x598] sm:$0xff]
    %v1405 = vld [vmem:[#allocation2 + $0x5a0] sm:$0xff]
    %v1406 = vld [vmem:[#allocation2 + $0x5a8] sm:$0xff]
    %v1407 = vld [vmem:[#allocation2 + $0x5b0] sm:$0xff]
    %v1408 = vld [vmem:[#allocation2 + $0x5b8] sm:$0xff]
    %v1409 = vld [vmem:[#allocation2 + $0x5c0] sm:$0xff]
    %v1410 = vld [vmem:[#allocation2 + $0x5c8] sm:$0xff]
    %v1411 = vld [vmem:[#allocation2 + $0x5d0] sm:$0xff]
    %v1412 = vld [vmem:[#allocation2 + $0x5d8] sm:$0xff]
    %v1413 = vld [vmem:[#allocation2 + $0x5e0] sm:$0xff]
    %v1414 = vld [vmem:[#allocation2 + $0x5e8] sm:$0xff]
    %v1415 = vld [vmem:[#allocation2 + $0x5f0] sm:$0xff]
    %v1416 = vld [vmem:[#allocation2 + $0x5f8] sm:$0xff]
    %v1417 = vpack.c.bf16 %v1352, %v1352
    %1418 = vmatprep.subr.bf16.mxu0 %v1354
    %1419 = vmatpush1.bf16.msra.mxu0 %v1353
    %1420 = vmatprep.subr.bf16.mxu0 %v1362
    %1421 = vmatpush1.bf16.msra.mxu0 %v1361
    %1422 = vmatprep.subr.bf16.mxu0 %v1370
    %1423 = vmatpush1.bf16.msra.mxu0 %v1369
    %1424 = vmatprep.subr.bf16.mxu0 %v1378
    %1425 = vmatpush1.bf16.msra.mxu0 %v1377
    %1426 = vmatprep.subr.bf16.mxu0 %v1386
    %1427 = vmatpush1.bf16.msra.mxu0 %v1385
    %1428 = vmatprep.subr.bf16.mxu0 %v1394
    %1429 = vmatpush1.bf16.msra.mxu0 %v1393
    %1430 = vmatprep.subr.bf16.mxu0 %v1402
    %1431 = vmatpush1.bf16.msra.mxu0 %v1401
    %1432 = vmatprep.subr.bf16.mxu0 %v1410
    %1433 = vmatpush1.bf16.msra.mxu0 %v1409
    %1434 = vmatprep.subr.bf16.mxu0 0
    %1435 = vmatpush1.bf16.msra.mxu0 0
    %1436 = vmatprep.subr.bf16.mxu0 0
    %1437 = vmatpush1.bf16.msra.mxu0 0
    %1438 = vmatprep.subr.bf16.mxu0 0
    %1439 = vmatpush1.bf16.msra.mxu0 0
    %1440 = vmatprep.subr.bf16.mxu0 0
    %1441 = vmatpush1.bf16.msra.mxu0 0
    %1442 = vmatprep.subr.bf16.mxu0 0
    %1443 = vmatpush1.bf16.msra.mxu0 0
    %1444 = vmatprep.subr.bf16.mxu0 0
    %1445 = vmatpush1.bf16.msra.mxu0 0
    %1446 = vmatprep.subr.bf16.mxu0 0
    %1447 = vmatpush1.bf16.msra.mxu0 0
    %1448 = vmatprep.subr.bf16.mxu0 0
    %1449 = vmatpush1.bf16.msra.mxu0 0
    %1450 = vmatprep.mubr.bf16.mxu0 0
    %1451 = vmatmul.mubr.bf16.gmra.mrb[0].mxu0 %v1417
    %v1452 = vpop.f32.mrb[0].mxu0
    %v1453 = vadd.f32 0.0, %v1452
    %v1454 = vpop.f32.mrb[0].mxu0
    %v1455 = vadd.f32 0.0, %v1454
    %v1456 = vpop.f32.mrb[0].mxu0
    %v1457 = vpop.f32.mrb[0].mxu0
    %1458 = vdwg.mxu0
    %1459 = vmatprep.subr.bf16.mxu0 %v1356
    %1460 = vmatpush1.bf16.msra.mxu0 %v1355
    %1461 = vmatprep.subr.bf16.mxu0 %v1364
    %1462 = vmatpush1.bf16.msra.mxu0 %v1363
    %1463 = vmatprep.subr.bf16.mxu0 %v1372
    %1464 = vmatpush1.bf16.msra.mxu0 %v1371
    %1465 = vmatprep.subr.bf16.mxu0 %v1380
    %1466 = vmatpush1.bf16.msra.mxu0 %v1379
    %1467 = vmatprep.subr.bf16.mxu0 %v1388
    %1468 = vmatpush1.bf16.msra.mxu0 %v1387
    %1469 = vmatprep.subr.bf16.mxu0 %v1396
    %1470 = vmatpush1.bf16.msra.mxu0 %v1395
    %1471 = vmatprep.subr.bf16.mxu0 %v1404
    %1472 = vmatpush1.bf16.msra.mxu0 %v1403
    %1473 = vmatprep.subr.bf16.mxu0 %v1412
    %1474 = vmatpush1.bf16.msra.mxu0 %v1411
    %1475 = vmatprep.subr.bf16.mxu0 0
    %1476 = vmatpush1.bf16.msra.mxu0 0
    %1477 = vmatprep.subr.bf16.mxu0 0
    %1478 = vmatpush1.bf16.msra.mxu0 0
    %1479 = vmatprep.subr.bf16.mxu0 0
    %1480 = vmatpush1.bf16.msra.mxu0 0
    %1481 = vmatprep.subr.bf16.mxu0 0
    %1482 = vmatpush1.bf16.msra.mxu0 0
    %1483 = vmatprep.subr.bf16.mxu0 0
    %1484 = vmatpush1.bf16.msra.mxu0 0
    %1485 = vmatprep.subr.bf16.mxu0 0
    %1486 = vmatpush1.bf16.msra.mxu0 0
    %1487 = vmatprep.subr.bf16.mxu0 0
    %1488 = vmatpush1.bf16.msra.mxu0 0
    %1489 = vmatprep.subr.bf16.mxu0 0
    %1490 = vmatpush1.bf16.msra.mxu0 0
    %1491 = vmatprep.mubr.bf16.mxu0 0
    %1492 = vmatmul.mubr.bf16.gmra.mrb[0].mxu0 %v1417
    %v1493 = vpop.f32.mrb[0].mxu0
    %v1494 = vadd.f32 0.0, %v1493
    %v1495 = vpop.f32.mrb[0].mxu0
    %v1496 = vadd.f32 0.0, %v1495
    %v1497 = vpop.f32.mrb[0].mxu0
    %v1498 = vpop.f32.mrb[0].mxu0
    %1499 = vdwg.mxu0
    %1500 = vmatprep.subr.bf16.mxu0 %v1358
    %1501 = vmatpush1.bf16.msra.mxu0 %v1357
    %1502 = vmatprep.subr.bf16.mxu0 %v1366
    %1503 = vmatpush1.bf16.msra.mxu0 %v1365
    %1504 = vmatprep.subr.bf16.mxu0 %v1374
    %1505 = vmatpush1.bf16.msra.mxu0 %v1373
    %1506 = vmatprep.subr.bf16.mxu0 %v1382
    %1507 = vmatpush1.bf16.msra.mxu0 %v1381
    %1508 = vmatprep.subr.bf16.mxu0 %v1390
    %1509 = vmatpush1.bf16.msra.mxu0 %v1389
    %1510 = vmatprep.subr.bf16.mxu0 %v1398
    %1511 = vmatpush1.bf16.msra.mxu0 %v1397
    %1512 = vmatprep.subr.bf16.mxu0 %v1406
    %1513 = vmatpush1.bf16.msra.mxu0 %v1405
    %1514 = vmatprep.subr.bf16.mxu0 %v1414
    %1515 = vmatpush1.bf16.msra.mxu0 %v1413
    %1516 = vmatprep.subr.bf16.mxu0 0
    %1517 = vmatpush1.bf16.msra.mxu0 0
    %1518 = vmatprep.subr.bf16.mxu0 0
    %1519 = vmatpush1.bf16.msra.mxu0 0
    %1520 = vmatprep.subr.bf16.mxu0 0
    %1521 = vmatpush1.bf16.msra.mxu0 0
    %1522 = vmatprep.subr.bf16.mxu0 0
    %1523 = vmatpush1.bf16.msra.mxu0 0
    %1524 = vmatprep.subr.bf16.mxu0 0
    %1525 = vmatpush1.bf16.msra.mxu0 0
    %1526 = vmatprep.subr.bf16.mxu0 0
    %1527 = vmatpush1.bf16.msra.mxu0 0
    %1528 = vmatprep.subr.bf16.mxu0 0
    %1529 = vmatpush1.bf16.msra.mxu0 0
    %1530 = vmatprep.subr.bf16.mxu0 0
    %1531 = vmatpush1.bf16.msra.mxu0 0
    %1532 = vmatprep.mubr.bf16.mxu0 0
    %1533 = vmatmul.mubr.bf16.gmra.mrb[0].mxu0 %v1417
    %v1534 = vpop.f32.mrb[0].mxu0
    %v1535 = vadd.f32 0.0, %v1534
    %v1536 = vpop.f32.mrb[0].mxu0
    %v1537 = vadd.f32 0.0, %v1536
    %v1538 = vpop.f32.mrb[0].mxu0
    %v1539 = vpop.f32.mrb[0].mxu0
    %1540 = vdwg.mxu0
    %1541 = vmatprep.subr.bf16.mxu0 %v1360
    %1542 = vmatpush1.bf16.msra.mxu0 %v1359
    %1543 = vmatprep.subr.bf16.mxu0 %v1368
    %1544 = vmatpush1.bf16.msra.mxu0 %v1367
    %1545 = vmatprep.subr.bf16.mxu0 %v1376
    %1546 = vmatpush1.bf16.msra.mxu0 %v1375
    %1547 = vmatprep.subr.bf16.mxu0 %v1384
    %1548 = vmatpush1.bf16.msra.mxu0 %v1383
    %1549 = vmatprep.subr.bf16.mxu0 %v1392
    %1550 = vmatpush1.bf16.msra.mxu0 %v1391
    %1551 = vmatprep.subr.bf16.mxu0 %v1400
    %1552 = vmatpush1.bf16.msra.mxu0 %v1399
    %1553 = vmatprep.subr.bf16.mxu0 %v1408
    %1554 = vmatpush1.bf16.msra.mxu0 %v1407
    %1555 = vmatprep.subr.bf16.mxu0 %v1416
    %1556 = vmatpush1.bf16.msra.mxu0 %v1415
    %1557 = vmatprep.subr.bf16.mxu0 0
    %1558 = vmatpush1.bf16.msra.mxu0 0
    %1559 = vmatprep.subr.bf16.mxu0 0
    %1560 = vmatpush1.bf16.msra.mxu0 0
    %1561 = vmatprep.subr.bf16.mxu0 0
    %1562 = vmatpush1.bf16.msra.mxu0 0
    %1563 = vmatprep.subr.bf16.mxu0 0
    %1564 = vmatpush1.bf16.msra.mxu0 0
    %1565 = vmatprep.subr.bf16.mxu0 0
    %1566 = vmatpush1.bf16.msra.mxu0 0
    %1567 = vmatprep.subr.bf16.mxu0 0
    %1568 = vmatpush1.bf16.msra.mxu0 0
    %1569 = vmatprep.subr.bf16.mxu0 0
    %1570 = vmatpush1.bf16.msra.mxu0 0
    %1571 = vmatprep.subr.bf16.mxu0 0
    %1572 = vmatpush1.bf16.msra.mxu0 0
    %1573 = vmatprep.mubr.bf16.mxu0 0
    %1574 = vmatmul.mubr.bf16.gmra.mrb[0].mxu0 %v1417
    %v1575 = vpop.f32.mrb[0].mxu0
    %v1576 = vadd.f32 0.0, %v1575
    %v1577 = vpop.f32.mrb[0].mxu0
    %v1578 = vadd.f32 0.0, %v1577
    %v1579 = vpop.f32.mrb[0].mxu0
    %v1580 = vpop.f32.mrb[0].mxu0
    %1581 = vdwg.mxu0
    %v1582 = vadd.f32 %v1219, %v1453
    %v1583 = vadd.f32 %v1221, %v1455
    %v1584 = vadd.f32 %v1260, %v1494
    %v1585 = vadd.f32 %v1262, %v1496
    %v1586 = vadd.f32 %v1301, %v1535
    %v1587 = vadd.f32 %v1303, %v1537
    %v1588 = vadd.f32 %v1342, %v1576
    %v1589 = vadd.f32 %v1344, %v1578
    %v1590 = vrot.slane %v587, 3
    %v1592 = vrot.slane %v875, 2
    %v1594 = vsel %vm884, %v1590, %v1592
    %v1595 = vld [vmem:[#allocation2 + $0x600] sm:$0xff]
    %v1596 = vld [vmem:[#allocation2 + $0x608] sm:$0xff]
    %v1597 = vld [vmem:[#allocation2 + $0x610] sm:$0xff]
    %v1598 = vld [vmem:[#allocation2 + $0x618] sm:$0xff]
    %v1599 = vld [vmem:[#allocation2 + $0x620] sm:$0xff]
    %v1600 = vld [vmem:[#allocation2 + $0x628] sm:$0xff]
    %v1601 = vld [vmem:[#allocation2 + $0x630] sm:$0xff]
    %v1602 = vld [vmem:[#allocation2 + $0x638] sm:$0xff]
    %v1603 = vld [vmem:[#allocation2 + $0x640] sm:$0xff]
    %v1604 = vld [vmem:[#allocation2 + $0x648] sm:$0xff]
    %v1605 = vld [vmem:[#allocation2 + $0x650] sm:$0xff]
    %v1606 = vld [vmem:[#allocation2 + $0x658] sm:$0xff]
    %v1607 = vld [vmem:[#allocation2 + $0x660] sm:$0xff]
    %v1608 = vld [vmem:[#allocation2 + $0x668] sm:$0xff]
    %v1609 = vld [vmem:[#allocation2 + $0x670] sm:$0xff]
    %v1610 = vld [vmem:[#allocation2 + $0x678] sm:$0xff]
    %v1611 = vld [vmem:[#allocation2 + $0x680] sm:$0xff]
    %v1612 = vld [vmem:[#allocation2 + $0x688] sm:$0xff]
    %v1613 = vld [vmem:[#allocation2 + $0x690] sm:$0xff]
    %v1614 = vld [vmem:[#allocation2 + $0x698] sm:$0xff]
    %v1615 = vld [vmem:[#allocation2 + $0x6a0] sm:$0xff]
    %v1616 = vld [vmem:[#allocation2 + $0x6a8] sm:$0xff]
    %v1617 = vld [vmem:[#allocation2 + $0x6b0] sm:$0xff]
    %v1618 = vld [vmem:[#allocation2 + $0x6b8] sm:$0xff]
    %v1619 = vld [vmem:[#allocation2 + $0x6c0] sm:$0xff]
    %v1620 = vld [vmem:[#allocation2 + $0x6c8] sm:$0xff]
    %v1621 = vld [vmem:[#allocation2 + $0x6d0] sm:$0xff]
    %v1622 = vld [vmem:[#allocation2 + $0x6d8] sm:$0xff]
    %v1623 = vld [vmem:[#allocation2 + $0x6e0] sm:$0xff]
    %v1624 = vld [vmem:[#allocation2 + $0x6e8] sm:$0xff]
    %v1625 = vld [vmem:[#allocation2 + $0x6f0] sm:$0xff]
    %v1626 = vld [vmem:[#allocation2 + $0x6f8] sm:$0xff]
    %v1627 = vld [vmem:[#allocation2 + $0x700] sm:$0xff]
    %v1628 = vld [vmem:[#allocation2 + $0x708] sm:$0xff]
    %v1629 = vld [vmem:[#allocation2 + $0x710] sm:$0xff]
    %v1630 = vld [vmem:[#allocation2 + $0x718] sm:$0xff]
    %v1631 = vld [vmem:[#allocation2 + $0x720] sm:$0xff]
    %v1632 = vld [vmem:[#allocation2 + $0x728] sm:$0xff]
    %v1633 = vld [vmem:[#allocation2 + $0x730] sm:$0xff]
    %v1634 = vld [vmem:[#allocation2 + $0x738] sm:$0xff]
    %v1635 = vld [vmem:[#allocation2 + $0x740] sm:$0xff]
    %v1636 = vld [vmem:[#allocation2 + $0x748] sm:$0xff]
    %v1637 = vld [vmem:[#allocation2 + $0x750] sm:$0xff]
    %v1638 = vld [vmem:[#allocation2 + $0x758] sm:$0xff]
    %v1639 = vld [vmem:[#allocation2 + $0x760] sm:$0xff]
    %v1640 = vld [vmem:[#allocation2 + $0x768] sm:$0xff]
    %v1641 = vld [vmem:[#allocation2 + $0x770] sm:$0xff]
    %v1642 = vld [vmem:[#allocation2 + $0x778] sm:$0xff]
    %v1643 = vld [vmem:[#allocation2 + $0x780] sm:$0xff]
    %v1644 = vld [vmem:[#allocation2 + $0x788] sm:$0xff]
    %v1645 = vld [vmem:[#allocation2 + $0x790] sm:$0xff]
    %v1646 = vld [vmem:[#allocation2 + $0x798] sm:$0xff]
    %v1647 = vld [vmem:[#allocation2 + $0x7a0] sm:$0xff]
    %v1648 = vld [vmem:[#allocation2 + $0x7a8] sm:$0xff]
    %v1649 = vld [vmem:[#allocation2 + $0x7b0] sm:$0xff]
    %v1650 = vld [vmem:[#allocation2 + $0x7b8] sm:$0xff]
    %v1651 = vld [vmem:[#allocation2 + $0x7c0] sm:$0xff]
    %v1652 = vld [vmem:[#allocation2 + $0x7c8] sm:$0xff]
    %v1653 = vld [vmem:[#allocation2 + $0x7d0] sm:$0xff]
    %v1654 = vld [vmem:[#allocation2 + $0x7d8] sm:$0xff]
    %v1655 = vld [vmem:[#allocation2 + $0x7e0] sm:$0xff]
    %v1656 = vld [vmem:[#allocation2 + $0x7e8] sm:$0xff]
    %v1657 = vld [vmem:[#allocation2 + $0x7f0] sm:$0xff]
    %v1658 = vld [vmem:[#allocation2 + $0x7f8] sm:$0xff]
    %v1659 = vpack.c.bf16 %v1594, %v1594
    %1660 = vmatprep.subr.bf16.mxu0 %v1596
    %1661 = vmatpush1.bf16.msra.mxu0 %v1595
    %1662 = vmatprep.subr.bf16.mxu0 %v1604
    %1663 = vmatpush1.bf16.msra.mxu0 %v1603
    %1664 = vmatprep.subr.bf16.mxu0 %v1612
    %1665 = vmatpush1.bf16.msra.mxu0 %v1611
    %1666 = vmatprep.subr.bf16.mxu0 %v1620
    %1667 = vmatpush1.bf16.msra.mxu0 %v1619
    %1668 = vmatprep.subr.bf16.mxu0 %v1628
    %1669 = vmatpush1.bf16.msra.mxu0 %v1627
    %1670 = vmatprep.subr.bf16.mxu0 %v1636
    %1671 = vmatpush1.bf16.msra.mxu0 %v1635
    %1672 = vmatprep.subr.bf16.mxu0 %v1644
    %1673 = vmatpush1.bf16.msra.mxu0 %v1643
    %1674 = vmatprep.subr.bf16.mxu0 %v1652
    %1675 = vmatpush1.bf16.msra.mxu0 %v1651
    %1676 = vmatprep.subr.bf16.mxu0 0
    %1677 = vmatpush1.bf16.msra.mxu0 0
    %1678 = vmatprep.subr.bf16.mxu0 0
    %1679 = vmatpush1.bf16.msra.mxu0 0
    %1680 = vmatprep.subr.bf16.mxu0 0
    %1681 = vmatpush1.bf16.msra.mxu0 0
    %1682 = vmatprep.subr.bf16.mxu0 0
    %1683 = vmatpush1.bf16.msra.mxu0 0
    %1684 = vmatprep.subr.bf16.mxu0 0
    %1685 = vmatpush1.bf16.msra.mxu0 0
    %1686 = vmatprep.subr.bf16.mxu0 0
    %1687 = vmatpush1.bf16.msra.mxu0 0
    %1688 = vmatprep.subr.bf16.mxu0 0
    %1689 = vmatpush1.bf16.msra.mxu0 0
    %1690 = vmatprep.subr.bf16.mxu0 0
    %1691 = vmatpush1.bf16.msra.mxu0 0
    %1692 = vmatprep.mubr.bf16.mxu0 0
    %1693 = vmatmul.mubr.bf16.gmra.mrb[0].mxu0 %v1659
    %v1694 = vpop.f32.mrb[0].mxu0
    %v1695 = vadd.f32 0.0, %v1694
    %v1696 = vpop.f32.mrb[0].mxu0
    %v1697 = vadd.f32 0.0, %v1696
    %v1698 = vpop.f32.mrb[0].mxu0
    %v1699 = vpop.f32.mrb[0].mxu0
    %1700 = vdwg.mxu0
    %1701 = vmatprep.subr.bf16.mxu0 %v1598
    %1702 = vmatpush1.bf16.msra.mxu0 %v1597
    %1703 = vmatprep.subr.bf16.mxu0 %v1606
    %1704 = vmatpush1.bf16.msra.mxu0 %v1605
    %1705 = vmatprep.subr.bf16.mxu0 %v1614
    %1706 = vmatpush1.bf16.msra.mxu0 %v1613
    %1707 = vmatprep.subr.bf16.mxu0 %v1622
    %1708 = vmatpush1.bf16.msra.mxu0 %v1621
    %1709 = vmatprep.subr.bf16.mxu0 %v1630
    %1710 = vmatpush1.bf16.msra.mxu0 %v1629
    %1711 = vmatprep.subr.bf16.mxu0 %v1638
    %1712 = vmatpush1.bf16.msra.mxu0 %v1637
    %1713 = vmatprep.subr.bf16.mxu0 %v1646
    %1714 = vmatpush1.bf16.msra.mxu0 %v1645
    %1715 = vmatprep.subr.bf16.mxu0 %v1654
    %1716 = vmatpush1.bf16.msra.mxu0 %v1653
    %1717 = vmatprep.subr.bf16.mxu0 0
    %1718 = vmatpush1.bf16.msra.mxu0 0
    %1719 = vmatprep.subr.bf16.mxu0 0
    %1720 = vmatpush1.bf16.msra.mxu0 0
    %1721 = vmatprep.subr.bf16.mxu0 0
    %1722 = vmatpush1.bf16.msra.mxu0 0
    %1723 = vmatprep.subr.bf16.mxu0 0
    %1724 = vmatpush1.bf16.msra.mxu0 0
    %1725 = vmatprep.subr.bf16.mxu0 0
    %1726 = vmatpush1.bf16.msra.mxu0 0
    %1727 = vmatprep.subr.bf16.mxu0 0
    %1728 = vmatpush1.bf16.msra.mxu0 0
    %1729 = vmatprep.subr.bf16.mxu0 0
    %1730 = vmatpush1.bf16.msra.mxu0 0
    %1731 = vmatprep.subr.bf16.mxu0 0
    %1732 = vmatpush1.bf16.msra.mxu0 0
    %1733 = vmatprep.mubr.bf16.mxu0 0
    %1734 = vmatmul.mubr.bf16.gmra.mrb[0].mxu0 %v1659
    %v1735 = vpop.f32.mrb[0].mxu0
    %v1736 = vadd.f32 0.0, %v1735
    %v1737 = vpop.f32.mrb[0].mxu0
    %v1738 = vadd.f32 0.0, %v1737
    %v1739 = vpop.f32.mrb[0].mxu0
    %v1740 = vpop.f32.mrb[0].mxu0
    %1741 = vdwg.mxu0
    %1742 = vmatprep.subr.bf16.mxu0 %v1600
    %1743 = vmatpush1.bf16.msra.mxu0 %v1599
    %1744 = vmatprep.subr.bf16.mxu0 %v1608
    %1745 = vmatpush1.bf16.msra.mxu0 %v1607
    %1746 = vmatprep.subr.bf16.mxu0 %v1616
    %1747 = vmatpush1.bf16.msra.mxu0 %v1615
    %1748 = vmatprep.subr.bf16.mxu0 %v1624
    %1749 = vmatpush1.bf16.msra.mxu0 %v1623
    %1750 = vmatprep.subr.bf16.mxu0 %v1632
    %1751 = vmatpush1.bf16.msra.mxu0 %v1631
    %1752 = vmatprep.subr.bf16.mxu0 %v1640
    %1753 = vmatpush1.bf16.msra.mxu0 %v1639
    %1754 = vmatprep.subr.bf16.mxu0 %v1648
    %1755 = vmatpush1.bf16.msra.mxu0 %v1647
    %1756 = vmatprep.subr.bf16.mxu0 %v1656
    %1757 = vmatpush1.bf16.msra.mxu0 %v1655
    %1758 = vmatprep.subr.bf16.mxu0 0
    %1759 = vmatpush1.bf16.msra.mxu0 0
    %1760 = vmatprep.subr.bf16.mxu0 0
    %1761 = vmatpush1.bf16.msra.mxu0 0
    %1762 = vmatprep.subr.bf16.mxu0 0
    %1763 = vmatpush1.bf16.msra.mxu0 0
    %1764 = vmatprep.subr.bf16.mxu0 0
    %1765 = vmatpush1.bf16.msra.mxu0 0
    %1766 = vmatprep.subr.bf16.mxu0 0
    %1767 = vmatpush1.bf16.msra.mxu0 0
    %1768 = vmatprep.subr.bf16.mxu0 0
    %1769 = vmatpush1.bf16.msra.mxu0 0
    %1770 = vmatprep.subr.bf16.mxu0 0
    %1771 = vmatpush1.bf16.msra.mxu0 0
    %1772 = vmatprep.subr.bf16.mxu0 0
    %1773 = vmatpush1.bf16.msra.mxu0 0
    %1774 = vmatprep.mubr.bf16.mxu0 0
    %1775 = vmatmul.mubr.bf16.gmra.mrb[0].mxu0 %v1659
    %v1776 = vpop.f32.mrb[0].mxu0
    %v1777 = vadd.f32 0.0, %v1776
    %v1778 = vpop.f32.mrb[0].mxu0
    %v1779 = vadd.f32 0.0, %v1778
    %v1780 = vpop.f32.mrb[0].mxu0
    %v1781 = vpop.f32.mrb[0].mxu0
    %1782 = vdwg.mxu0
    %1783 = vmatprep.subr.bf16.mxu0 %v1602
    %1784 = vmatpush1.bf16.msra.mxu0 %v1601
    %1785 = vmatprep.subr.bf16.mxu0 %v1610
    %1786 = vmatpush1.bf16.msra.mxu0 %v1609
    %1787 = vmatprep.subr.bf16.mxu0 %v1618
    %1788 = vmatpush1.bf16.msra.mxu0 %v1617
    %1789 = vmatprep.subr.bf16.mxu0 %v1626
    %1790 = vmatpush1.bf16.msra.mxu0 %v1625
    %1791 = vmatprep.subr.bf16.mxu0 %v1634
    %1792 = vmatpush1.bf16.msra.mxu0 %v1633
    %1793 = vmatprep.subr.bf16.mxu0 %v1642
    %1794 = vmatpush1.bf16.msra.mxu0 %v1641
    %1795 = vmatprep.subr.bf16.mxu0 %v1650
    %1796 = vmatpush1.bf16.msra.mxu0 %v1649
    %1797 = vmatprep.subr.bf16.mxu0 %v1658
    %1798 = vmatpush1.bf16.msra.mxu0 %v1657
    %1799 = vmatprep.subr.bf16.mxu0 0
    %1800 = vmatpush1.bf16.msra.mxu0 0
    %1801 = vmatprep.subr.bf16.mxu0 0
    %1802 = vmatpush1.bf16.msra.mxu0 0
    %1803 = vmatprep.subr.bf16.mxu0 0
    %1804 = vmatpush1.bf16.msra.mxu0 0
    %1805 = vmatprep.subr.bf16.mxu0 0
    %1806 = vmatpush1.bf16.msra.mxu0 0
    %1807 = vmatprep.subr.bf16.mxu0 0
    %1808 = vmatpush1.bf16.msra.mxu0 0
    %1809 = vmatprep.subr.bf16.mxu0 0
    %1810 = vmatpush1.bf16.msra.mxu0 0
    %1811 = vmatprep.subr.bf16.mxu0 0
    %1812 = vmatpush1.bf16.msra.mxu0 0
    %1813 = vmatprep.subr.bf16.mxu0 0
    %1814 = vmatpush1.bf16.msra.mxu0 0
    %1815 = vmatprep.mubr.bf16.mxu0 0
    %1816 = vmatmul.mubr.bf16.gmra.mrb[0].mxu0 %v1659
    %v1817 = vpop.f32.mrb[0].mxu0
    %v1818 = vadd.f32 0.0, %v1817
    %v1819 = vpop.f32.mrb[0].mxu0
    %v1820 = vadd.f32 0.0, %v1819
    %v1821 = vpop.f32.mrb[0].mxu0
    %v1822 = vpop.f32.mrb[0].mxu0
    %1823 = vdwg.mxu0
    %v1824 = vadd.f32 %v1582, %v1695
    %v1825 = vadd.f32 %v1583, %v1697
    %v1826 = vadd.f32 %v1584, %v1736
    %v1827 = vadd.f32 %v1585, %v1738
    %v1828 = vadd.f32 %v1586, %v1777
    %v1829 = vadd.f32 %v1587, %v1779
    %v1830 = vadd.f32 %v1588, %v1818
    %v1831 = vadd.f32 %v1589, %v1820
    %s1832 = sshll.u32 %s878, 4
    %1833 = dma.done %s156, %s1832
    %v1834 = vrot.slane %v587, 4
    %v1836 = vrot.slane %v875, 3
    %v1838 = vsel %vm884, %v1834, %v1836
    %v1839 = vld [vmem:[#allocation2 + $0x800] sm:$0xff]
    %v1840 = vld [vmem:[#allocation2 + $0x808] sm:$0xff]
    %v1841 = vld [vmem:[#allocation2 + $0x810] sm:$0xff]
    %v1842 = vld [vmem:[#allocation2 + $0x818] sm:$0xff]
    %v1843 = vld [vmem:[#allocation2 + $0x820] sm:$0xff]
    %v1844 = vld [vmem:[#allocation2 + $0x828] sm:$0xff]
    %v1845 = vld [vmem:[#allocation2 + $0x830] sm:$0xff]
    %v1846 = vld [vmem:[#allocation2 + $0x838] sm:$0xff]
    %v1847 = vld [vmem:[#allocation2 + $0x840] sm:$0xff]
    %v1848 = vld [vmem:[#allocation2 + $0x848] sm:$0xff]
    %v1849 = vld [vmem:[#allocation2 + $0x850] sm:$0xff]
    %v1850 = vld [vmem:[#allocation2 + $0x858] sm:$0xff]
    %v1851 = vld [vmem:[#allocation2 + $0x860] sm:$0xff]
    %v1852 = vld [vmem:[#allocation2 + $0x868] sm:$0xff]
    %v1853 = vld [vmem:[#allocation2 + $0x870] sm:$0xff]
    %v1854 = vld [vmem:[#allocation2 + $0x878] sm:$0xff]
    %v1855 = vld [vmem:[#allocation2 + $0x880] sm:$0xff]
    %v1856 = vld [vmem:[#allocation2 + $0x888] sm:$0xff]
    %v1857 = vld [vmem:[#allocation2 + $0x890] sm:$0xff]
    %v1858 = vld [vmem:[#allocation2 + $0x898] sm:$0xff]
    %v1859 = vld [vmem:[#allocation2 + $0x8a0] sm:$0xff]
    %v1860 = vld [vmem:[#allocation2 + $0x8a8] sm:$0xff]
    %v1861 = vld [vmem:[#allocation2 + $0x8b0] sm:$0xff]
    %v1862 = vld [vmem:[#allocation2 + $0x8b8] sm:$0xff]
    %v1863 = vld [vmem:[#allocation2 + $0x8c0] sm:$0xff]
    %v1864 = vld [vmem:[#allocation2 + $0x8c8] sm:$0xff]
    %v1865 = vld [vmem:[#allocation2 + $0x8d0] sm:$0xff]
    %v1866 = vld [vmem:[#allocation2 + $0x8d8] sm:$0xff]
    %v1867 = vld [vmem:[#allocation2 + $0x8e0] sm:$0xff]
    %v1868 = vld [vmem:[#allocation2 + $0x8e8] sm:$0xff]
    %v1869 = vld [vmem:[#allocation2 + $0x8f0] sm:$0xff]
    %v1870 = vld [vmem:[#allocation2 + $0x8f8] sm:$0xff]
    %v1871 = vld [vmem:[#allocation2 + $0x900] sm:$0xff]
    %v1872 = vld [vmem:[#allocation2 + $0x908] sm:$0xff]
    %v1873 = vld [vmem:[#allocation2 + $0x910] sm:$0xff]
    %v1874 = vld [vmem:[#allocation2 + $0x918] sm:$0xff]
    %v1875 = vld [vmem:[#allocation2 + $0x920] sm:$0xff]
    %v1876 = vld [vmem:[#allocation2 + $0x928] sm:$0xff]
    %v1877 = vld [vmem:[#allocation2 + $0x930] sm:$0xff]
    %v1878 = vld [vmem:[#allocation2 + $0x938] sm:$0xff]
    %v1879 = vld [vmem:[#allocation2 + $0x940] sm:$0xff]
    %v1880 = vld [vmem:[#allocation2 + $0x948] sm:$0xff]
    %v1881 = vld [vmem:[#allocation2 + $0x950] sm:$0xff]
    %v1882 = vld [vmem:[#allocation2 + $0x958] sm:$0xff]
    %v1883 = vld [vmem:[#allocation2 + $0x960] sm:$0xff]
    %v1884 = vld [vmem:[#allocation2 + $0x968] sm:$0xff]
    %v1885 = vld [vmem:[#allocation2 + $0x970] sm:$0xff]
    %v1886 = vld [vmem:[#allocation2 + $0x978] sm:$0xff]
    %v1887 = vld [vmem:[#allocation2 + $0x980] sm:$0xff]
    %v1888 = vld [vmem:[#allocation2 + $0x988] sm:$0xff]
    %v1889 = vld [vmem:[#allocation2 + $0x990] sm:$0xff]
    %v1890 = vld [vmem:[#allocation2 + $0x998] sm:$0xff]
    %v1891 = vld [vmem:[#allocation2 + $0x9a0] sm:$0xff]
    %v1892 = vld [vmem:[#allocation2 + $0x9a8] sm:$0xff]
    %v1893 = vld [vmem:[#allocation2 + $0x9b0] sm:$0xff]
    %v1894 = vld [vmem:[#allocation2 + $0x9b8] sm:$0xff]
    %v1895 = vld [vmem:[#allocation2 + $0x9c0] sm:$0xff]
    %v1896 = vld [vmem:[#allocation2 + $0x9c8] sm:$0xff]
    %v1897 = vld [vmem:[#allocation2 + $0x9d0] sm:$0xff]
    %v1898 = vld [vmem:[#allocation2 + $0x9d8] sm:$0xff]
    %v1899 = vld [vmem:[#allocation2 + $0x9e0] sm:$0xff]
    %v1900 = vld [vmem:[#allocation2 + $0x9e8] sm:$0xff]
    %v1901 = vld [vmem:[#allocation2 + $0x9f0] sm:$0xff]
    %v1902 = vld [vmem:[#allocation2 + $0x9f8] sm:$0xff]
    %v1903 = vpack.c.bf16 %v1838, %v1838
    %1904 = vmatprep.subr.bf16.mxu0 %v1840
    %1905 = vmatpush1.bf16.msra.mxu0 %v1839
    %1906 = vmatprep.subr.bf16.mxu0 %v1848
    %1907 = vmatpush1.bf16.msra.mxu0 %v1847
    %1908 = vmatprep.subr.bf16.mxu0 %v1856
    %1909 = vmatpush1.bf16.msra.mxu0 %v1855
    %1910 = vmatprep.subr.bf16.mxu0 %v1864
    %1911 = vmatpush1.bf16.msra.mxu0 %v1863
    %1912 = vmatprep.subr.bf16.mxu0 %v1872
    %1913 = vmatpush1.bf16.msra.mxu0 %v1871
    %1914 = vmatprep.subr.bf16.mxu0 %v1880
    %1915 = vmatpush1.bf16.msra.mxu0 %v1879
    %1916 = vmatprep.subr.bf16.mxu0 %v1888
    %1917 = vmatpush1.bf16.msra.mxu0 %v1887
    %1918 = vmatprep.subr.bf16.mxu0 %v1896
    %1919 = vmatpush1.bf16.msra.mxu0 %v1895
    %1920 = vmatprep.subr.bf16.mxu0 0
    %1921 = vmatpush1.bf16.msra.mxu0 0
    %1922 = vmatprep.subr.bf16.mxu0 0
    %1923 = vmatpush1.bf16.msra.mxu0 0
    %1924 = vmatprep.subr.bf16.mxu0 0
    %1925 = vmatpush1.bf16.msra.mxu0 0
    %1926 = vmatprep.subr.bf16.mxu0 0
    %1927 = vmatpush1.bf16.msra.mxu0 0
    %1928 = vmatprep.subr.bf16.mxu0 0
    %1929 = vmatpush1.bf16.msra.mxu0 0
    %1930 = vmatprep.subr.bf16.mxu0 0
    %1931 = vmatpush1.bf16.msra.mxu0 0
    %1932 = vmatprep.subr.bf16.mxu0 0
    %1933 = vmatpush1.bf16.msra.mxu0 0
    %1934 = vmatprep.subr.bf16.mxu0 0
    %1935 = vmatpush1.bf16.msra.mxu0 0
    %1936 = vmatprep.mubr.bf16.mxu0 0
    %1937 = vmatmul.mubr.bf16.gmra.mrb[0].mxu0 %v1903
    %v1938 = vpop.f32.mrb[0].mxu0
    %v1939 = vadd.f32 0.0, %v1938
    %v1940 = vpop.f32.mrb[0].mxu0
    %v1941 = vadd.f32 0.0, %v1940
    %v1942 = vpop.f32.mrb[0].mxu0
    %v1943 = vpop.f32.mrb[0].mxu0
    %1944 = vdwg.mxu0
    %1945 = vmatprep.subr.bf16.mxu0 %v1842
    %1946 = vmatpush1.bf16.msra.mxu0 %v1841
    %1947 = vmatprep.subr.bf16.mxu0 %v1850
    %1948 = vmatpush1.bf16.msra.mxu0 %v1849
    %1949 = vmatprep.subr.bf16.mxu0 %v1858
    %1950 = vmatpush1.bf16.msra.mxu0 %v1857
    %1951 = vmatprep.subr.bf16.mxu0 %v1866
    %1952 = vmatpush1.bf16.msra.mxu0 %v1865
    %1953 = vmatprep.subr.bf16.mxu0 %v1874
    %1954 = vmatpush1.bf16.msra.mxu0 %v1873
    %1955 = vmatprep.subr.bf16.mxu0 %v1882
    %1956 = vmatpush1.bf16.msra.mxu0 %v1881
    %1957 = vmatprep.subr.bf16.mxu0 %v1890
    %1958 = vmatpush1.bf16.msra.mxu0 %v1889
    %1959 = vmatprep.subr.bf16.mxu0 %v1898
    %1960 = vmatpush1.bf16.msra.mxu0 %v1897
    %1961 = vmatprep.subr.bf16.mxu0 0
    %1962 = vmatpush1.bf16.msra.mxu0 0
    %1963 = vmatprep.subr.bf16.mxu0 0
    %1964 = vmatpush1.bf16.msra.mxu0 0
    %1965 = vmatprep.subr.bf16.mxu0 0
    %1966 = vmatpush1.bf16.msra.mxu0 0
    %1967 = vmatprep.subr.bf16.mxu0 0
    %1968 = vmatpush1.bf16.msra.mxu0 0
    %1969 = vmatprep.subr.bf16.mxu0 0
    %1970 = vmatpush1.bf16.msra.mxu0 0
    %1971 = vmatprep.subr.bf16.mxu0 0
    %1972 = vmatpush1.bf16.msra.mxu0 0
    %1973 = vmatprep.subr.bf16.mxu0 0
    %1974 = vmatpush1.bf16.msra.mxu0 0
    %1975 = vmatprep.subr.bf16.mxu0 0
    %1976 = vmatpush1.bf16.msra.mxu0 0
    %1977 = vmatprep.mubr.bf16.mxu0 0
    %1978 = vmatmul.mubr.bf16.gmra.mrb[0].mxu0 %v1903
    %v1979 = vpop.f32.mrb[0].mxu0
    %v1980 = vadd.f32 0.0, %v1979
    %v1981 = vpop.f32.mrb[0].mxu0
    %v1982 = vadd.f32 0.0, %v1981
    %v1983 = vpop.f32.mrb[0].mxu0
    %v1984 = vpop.f32.mrb[0].mxu0
    %1985 = vdwg.mxu0
    %1986 = vmatprep.subr.bf16.mxu0 %v1844
    %1987 = vmatpush1.bf16.msra.mxu0 %v1843
    %1988 = vmatprep.subr.bf16.mxu0 %v1852
    %1989 = vmatpush1.bf16.msra.mxu0 %v1851
    %1990 = vmatprep.subr.bf16.mxu0 %v1860
    %1991 = vmatpush1.bf16.msra.mxu0 %v1859
    %1992 = vmatprep.subr.bf16.mxu0 %v1868
    %1993 = vmatpush1.bf16.msra.mxu0 %v1867
    %1994 = vmatprep.subr.bf16.mxu0 %v1876
    %1995 = vmatpush1.bf16.msra.mxu0 %v1875
    %1996 = vmatprep.subr.bf16.mxu0 %v1884
    %1997 = vmatpush1.bf16.msra.mxu0 %v1883
    %1998 = vmatprep.subr.bf16.mxu0 %v1892
    %1999 = vmatpush1.bf16.msra.mxu0 %v1891
    %2000 = vmatprep.subr.bf16.mxu0 %v1900
    %2001 = vmatpush1.bf16.msra.mxu0 %v1899
    %2002 = vmatprep.subr.bf16.mxu0 0
    %2003 = vmatpush1.bf16.msra.mxu0 0
    %2004 = vmatprep.subr.bf16.mxu0 0
    %2005 = vmatpush1.bf16.msra.mxu0 0
    %2006 = vmatprep.subr.bf16.mxu0 0
    %2007 = vmatpush1.bf16.msra.mxu0 0
    %2008 = vmatprep.subr.bf16.mxu0 0
    %2009 = vmatpush1.bf16.msra.mxu0 0
    %2010 = vmatprep.subr.bf16.mxu0 0
    %2011 = vmatpush1.bf16.msra.mxu0 0
    %2012 = vmatprep.subr.bf16.mxu0 0
    %2013 = vmatpush1.bf16.msra.mxu0 0
    %2014 = vmatprep.subr.bf16.mxu0 0
    %2015 = vmatpush1.bf16.msra.mxu0 0
    %2016 = vmatprep.subr.bf16.mxu0 0
    %2017 = vmatpush1.bf16.msra.mxu0 0
    %2018 = vmatprep.mubr.bf16.mxu0 0
    %2019 = vmatmul.mubr.bf16.gmra.mrb[0].mxu0 %v1903
    %v2020 = vpop.f32.mrb[0].mxu0
    %v2021 = vadd.f32 0.0, %v2020
    %v2022 = vpop.f32.mrb[0].mxu0
    %v2023 = vadd.f32 0.0, %v2022
    %v2024 = vpop.f32.mrb[0].mxu0
    %v2025 = vpop.f32.mrb[0].mxu0
    %2026 = vdwg.mxu0
    %2027 = vmatprep.subr.bf16.mxu0 %v1846
    %2028 = vmatpush1.bf16.msra.mxu0 %v1845
    %2029 = vmatprep.subr.bf16.mxu0 %v1854
    %2030 = vmatpush1.bf16.msra.mxu0 %v1853
    %2031 = vmatprep.subr.bf16.mxu0 %v1862
    %2032 = vmatpush1.bf16.msra.mxu0 %v1861
    %2033 = vmatprep.subr.bf16.mxu0 %v1870
    %2034 = vmatpush1.bf16.msra.mxu0 %v1869
    %2035 = vmatprep.subr.bf16.mxu0 %v1878
    %2036 = vmatpush1.bf16.msra.mxu0 %v1877
    %2037 = vmatprep.subr.bf16.mxu0 %v1886
    %2038 = vmatpush1.bf16.msra.mxu0 %v1885
    %2039 = vmatprep.subr.bf16.mxu0 %v1894
    %2040 = vmatpush1.bf16.msra.mxu0 %v1893
    %2041 = vmatprep.subr.bf16.mxu0 %v1902
    %2042 = vmatpush1.bf16.msra.mxu0 %v1901
    %2043 = vmatprep.subr.bf16.mxu0 0
    %2044 = vmatpush1.bf16.msra.mxu0 0
    %2045 = vmatprep.subr.bf16.mxu0 0
    %2046 = vmatpush1.bf16.msra.mxu0 0
    %2047 = vmatprep.subr.bf16.mxu0 0
    %2048 = vmatpush1.bf16.msra.mxu0 0
    %2049 = vmatprep.subr.bf16.mxu0 0
    %2050 = vmatpush1.bf16.msra.mxu0 0
    %2051 = vmatprep.subr.bf16.mxu0 0
    %2052 = vmatpush1.bf16.msra.mxu0 0
    %2053 = vmatprep.subr.bf16.mxu0 0
    %2054 = vmatpush1.bf16.msra.mxu0 0
    %2055 = vmatprep.subr.bf16.mxu0 0
    %2056 = vmatpush1.bf16.msra.mxu0 0
    %2057 = vmatprep.subr.bf16.mxu0 0
    %2058 = vmatpush1.bf16.msra.mxu0 0
    %2059 = vmatprep.mubr.bf16.mxu0 0
    %2060 = vmatmul.mubr.bf16.gmra.mrb[0].mxu0 %v1903
    %v2061 = vpop.f32.mrb[0].mxu0
    %v2062 = vadd.f32 0.0, %v2061
    %v2063 = vpop.f32.mrb[0].mxu0
    %v2064 = vadd.f32 0.0, %v2063
    %v2065 = vpop.f32.mrb[0].mxu0
    %v2066 = vpop.f32.mrb[0].mxu0
    %2067 = vdwg.mxu0
    %v2068 = vadd.f32 %v1824, %v1939
    %v2069 = vadd.f32 %v1825, %v1941
    %v2070 = vadd.f32 %v1826, %v1980
    %v2071 = vadd.f32 %v1827, %v1982
    %v2072 = vadd.f32 %v1828, %v2021
    %v2073 = vadd.f32 %v1829, %v2023
    %v2074 = vadd.f32 %v1830, %v2062
    %v2075 = vadd.f32 %v1831, %v2064
    %v2076 = vrot.slane %v587, 5
    %v2078 = vrot.slane %v875, 4
    %v2080 = vsel %vm884, %v2076, %v2078
    %v2081 = vld [vmem:[#allocation2 + $0xa00] sm:$0xff]
    %v2082 = vld [vmem:[#allocation2 + $0xa08] sm:$0xff]
    %v2083 = vld [vmem:[#allocation2 + $0xa10] sm:$0xff]
    %v2084 = vld [vmem:[#allocation2 + $0xa18] sm:$0xff]
    %v2085 = vld [vmem:[#allocation2 + $0xa20] sm:$0xff]
    %v2086 = vld [vmem:[#allocation2 + $0xa28] sm:$0xff]
    %v2087 = vld [vmem:[#allocation2 + $0xa30] sm:$0xff]
    %v2088 = vld [vmem:[#allocation2 + $0xa38] sm:$0xff]
    %v2089 = vld [vmem:[#allocation2 + $0xa40] sm:$0xff]
    %v2090 = vld [vmem:[#allocation2 + $0xa48] sm:$0xff]
    %v2091 = vld [vmem:[#allocation2 + $0xa50] sm:$0xff]
    %v2092 = vld [vmem:[#allocation2 + $0xa58] sm:$0xff]
    %v2093 = vld [vmem:[#allocation2 + $0xa60] sm:$0xff]
    %v2094 = vld [vmem:[#allocation2 + $0xa68] sm:$0xff]
    %v2095 = vld [vmem:[#allocation2 + $0xa70] sm:$0xff]
    %v2096 = vld [vmem:[#allocation2 + $0xa78] sm:$0xff]
    %v2097 = vld [vmem:[#allocation2 + $0xa80] sm:$0xff]
    %v2098 = vld [vmem:[#allocation2 + $0xa88] sm:$0xff]
    %v2099 = vld [vmem:[#allocation2 + $0xa90] sm:$0xff]
    %v2100 = vld [vmem:[#allocation2 + $0xa98] sm:$0xff]
    %v2101 = vld [vmem:[#allocation2 + $0xaa0] sm:$0xff]
    %v2102 = vld [vmem:[#allocation2 + $0xaa8] sm:$0xff]
    %v2103 = vld [vmem:[#allocation2 + $0xab0] sm:$0xff]
    %v2104 = vld [vmem:[#allocation2 + $0xab8] sm:$0xff]
    %v2105 = vld [vmem:[#allocation2 + $0xac0] sm:$0xff]
    %v2106 = vld [vmem:[#allocation2 + $0xac8] sm:$0xff]
    %v2107 = vld [vmem:[#allocation2 + $0xad0] sm:$0xff]
    %v2108 = vld [vmem:[#allocation2 + $0xad8] sm:$0xff]
    %v2109 = vld [vmem:[#allocation2 + $0xae0] sm:$0xff]
    %v2110 = vld [vmem:[#allocation2 + $0xae8] sm:$0xff]
    %v2111 = vld [vmem:[#allocation2 + $0xaf0] sm:$0xff]
    %v2112 = vld [vmem:[#allocation2 + $0xaf8] sm:$0xff]
    %v2113 = vld [vmem:[#allocation2 + $0xb00] sm:$0xff]
    %v2114 = vld [vmem:[#allocation2 + $0xb08] sm:$0xff]
    %v2115 = vld [vmem:[#allocation2 + $0xb10] sm:$0xff]
    %v2116 = vld [vmem:[#allocation2 + $0xb18] sm:$0xff]
    %v2117 = vld [vmem:[#allocation2 + $0xb20] sm:$0xff]
    %v2118 = vld [vmem:[#allocation2 + $0xb28] sm:$0xff]
    %v2119 = vld [vmem:[#allocation2 + $0xb30] sm:$0xff]
    %v2120 = vld [vmem:[#allocation2 + $0xb38] sm:$0xff]
    %v2121 = vld [vmem:[#allocation2 + $0xb40] sm:$0xff]
    %v2122 = vld [vmem:[#allocation2 + $0xb48] sm:$0xff]
    %v2123 = vld [vmem:[#allocation2 + $0xb50] sm:$0xff]
    %v2124 = vld [vmem:[#allocation2 + $0xb58] sm:$0xff]
    %v2125 = vld [vmem:[#allocation2 + $0xb60] sm:$0xff]
    %v2126 = vld [vmem:[#allocation2 + $0xb68] sm:$0xff]
    %v2127 = vld [vmem:[#allocation2 + $0xb70] sm:$0xff]
    %v2128 = vld [vmem:[#allocation2 + $0xb78] sm:$0xff]
    %v2129 = vld [vmem:[#allocation2 + $0xb80] sm:$0xff]
    %v2130 = vld [vmem:[#allocation2 + $0xb88] sm:$0xff]
    %v2131 = vld [vmem:[#allocation2 + $0xb90] sm:$0xff]
    %v2132 = vld [vmem:[#allocation2 + $0xb98] sm:$0xff]
    %v2133 = vld [vmem:[#allocation2 + $0xba0] sm:$0xff]
    %v2134 = vld [vmem:[#allocation2 + $0xba8] sm:$0xff]
    %v2135 = vld [vmem:[#allocation2 + $0xbb0] sm:$0xff]
    %v2136 = vld [vmem:[#allocation2 + $0xbb8] sm:$0xff]
    %v2137 = vld [vmem:[#allocation2 + $0xbc0] sm:$0xff]
    %v2138 = vld [vmem:[#allocation2 + $0xbc8] sm:$0xff]
    %v2139 = vld [vmem:[#allocation2 + $0xbd0] sm:$0xff]
    %v2140 = vld [vmem:[#allocation2 + $0xbd8] sm:$0xff]
    %v2141 = vld [vmem:[#allocation2 + $0xbe0] sm:$0xff]
    %v2142 = vld [vmem:[#allocation2 + $0xbe8] sm:$0xff]
    %v2143 = vld [vmem:[#allocation2 + $0xbf0] sm:$0xff]
    %v2144 = vld [vmem:[#allocation2 + $0xbf8] sm:$0xff]
    %v2145 = vpack.c.bf16 %v2080, %v2080
    %2146 = vmatprep.subr.bf16.mxu0 %v2082
    %2147 = vmatpush1.bf16.msra.mxu0 %v2081
    %2148 = vmatprep.subr.bf16.mxu0 %v2090
    %2149 = vmatpush1.bf16.msra.mxu0 %v2089
    %2150 = vmatprep.subr.bf16.mxu0 %v2098
    %2151 = vmatpush1.bf16.msra.mxu0 %v2097
    %2152 = vmatprep.subr.bf16.mxu0 %v2106
    %2153 = vmatpush1.bf16.msra.mxu0 %v2105
    %2154 = vmatprep.subr.bf16.mxu0 %v2114
    %2155 = vmatpush1.bf16.msra.mxu0 %v2113
    %2156 = vmatprep.subr.bf16.mxu0 %v2122
    %2157 = vmatpush1.bf16.msra.mxu0 %v2121
    %2158 = vmatprep.subr.bf16.mxu0 %v2130
    %2159 = vmatpush1.bf16.msra.mxu0 %v2129
    %2160 = vmatprep.subr.bf16.mxu0 %v2138
    %2161 = vmatpush1.bf16.msra.mxu0 %v2137
    %2162 = vmatprep.subr.bf16.mxu0 0
    %2163 = vmatpush1.bf16.msra.mxu0 0
    %2164 = vmatprep.subr.bf16.mxu0 0
    %2165 = vmatpush1.bf16.msra.mxu0 0
    %2166 = vmatprep.subr.bf16.mxu0 0
    %2167 = vmatpush1.bf16.msra.mxu0 0
    %2168 = vmatprep.subr.bf16.mxu0 0
    %2169 = vmatpush1.bf16.msra.mxu0 0
    %2170 = vmatprep.subr.bf16.mxu0 0
    %2171 = vmatpush1.bf16.msra.mxu0 0
    %2172 = vmatprep.subr.bf16.mxu0 0
    %2173 = vmatpush1.bf16.msra.mxu0 0
    %2174 = vmatprep.subr.bf16.mxu0 0
    %2175 = vmatpush1.bf16.msra.mxu0 0
    %2176 = vmatprep.subr.bf16.mxu0 0
    %2177 = vmatpush1.bf16.msra.mxu0 0
    %2178 = vmatprep.mubr.bf16.mxu0 0
    %2179 = vmatmul.mubr.bf16.gmra.mrb[0].mxu0 %v2145
    %v2180 = vpop.f32.mrb[0].mxu0
    %v2181 = vadd.f32 0.0, %v2180
    %v2182 = vpop.f32.mrb[0].mxu0
    %v2183 = vadd.f32 0.0, %v2182
    %v2184 = vpop.f32.mrb[0].mxu0
    %v2185 = vpop.f32.mrb[0].mxu0
    %2186 = vdwg.mxu0
    %2187 = vmatprep.subr.bf16.mxu0 %v2084
    %2188 = vmatpush1.bf16.msra.mxu0 %v2083
    %2189 = vmatprep.subr.bf16.mxu0 %v2092
    %2190 = vmatpush1.bf16.msra.mxu0 %v2091
    %2191 = vmatprep.subr.bf16.mxu0 %v2100
    %2192 = vmatpush1.bf16.msra.mxu0 %v2099
    %2193 = vmatprep.subr.bf16.mxu0 %v2108
    %2194 = vmatpush1.bf16.msra.mxu0 %v2107
    %2195 = vmatprep.subr.bf16.mxu0 %v2116
    %2196 = vmatpush1.bf16.msra.mxu0 %v2115
    %2197 = vmatprep.subr.bf16.mxu0 %v2124
    %2198 = vmatpush1.bf16.msra.mxu0 %v2123
    %2199 = vmatprep.subr.bf16.mxu0 %v2132
    %2200 = vmatpush1.bf16.msra.mxu0 %v2131
    %2201 = vmatprep.subr.bf16.mxu0 %v2140
    %2202 = vmatpush1.bf16.msra.mxu0 %v2139
    %2203 = vmatprep.subr.bf16.mxu0 0
    %2204 = vmatpush1.bf16.msra.mxu0 0
    %2205 = vmatprep.subr.bf16.mxu0 0
    %2206 = vmatpush1.bf16.msra.mxu0 0
    %2207 = vmatprep.subr.bf16.mxu0 0
    %2208 = vmatpush1.bf16.msra.mxu0 0
    %2209 = vmatprep.subr.bf16.mxu0 0
    %2210 = vmatpush1.bf16.msra.mxu0 0
    %2211 = vmatprep.subr.bf16.mxu0 0
    %2212 = vmatpush1.bf16.msra.mxu0 0
    %2213 = vmatprep.subr.bf16.mxu0 0
    %2214 = vmatpush1.bf16.msra.mxu0 0
    %2215 = vmatprep.subr.bf16.mxu0 0
    %2216 = vmatpush1.bf16.msra.mxu0 0
    %2217 = vmatprep.subr.bf16.mxu0 0
    %2218 = vmatpush1.bf16.msra.mxu0 0
    %2219 = vmatprep.mubr.bf16.mxu0 0
    %2220 = vmatmul.mubr.bf16.gmra.mrb[0].mxu0 %v2145
    %v2221 = vpop.f32.mrb[0].mxu0
    %v2222 = vadd.f32 0.0, %v2221
    %v2223 = vpop.f32.mrb[0].mxu0
    %v2224 = vadd.f32 0.0, %v2223
    %v2225 = vpop.f32.mrb[0].mxu0
    %v2226 = vpop.f32.mrb[0].mxu0
    %2227 = vdwg.mxu0
    %2228 = vmatprep.subr.bf16.mxu0 %v2086
    %2229 = vmatpush1.bf16.msra.mxu0 %v2085
    %2230 = vmatprep.subr.bf16.mxu0 %v2094
    %2231 = vmatpush1.bf16.msra.mxu0 %v2093
    %2232 = vmatprep.subr.bf16.mxu0 %v2102
    %2233 = vmatpush1.bf16.msra.mxu0 %v2101
    %2234 = vmatprep.subr.bf16.mxu0 %v2110
    %2235 = vmatpush1.bf16.msra.mxu0 %v2109
    %2236 = vmatprep.subr.bf16.mxu0 %v2118
    %2237 = vmatpush1.bf16.msra.mxu0 %v2117
    %2238 = vmatprep.subr.bf16.mxu0 %v2126
    %2239 = vmatpush1.bf16.msra.mxu0 %v2125
    %2240 = vmatprep.subr.bf16.mxu0 %v2134
    %2241 = vmatpush1.bf16.msra.mxu0 %v2133
    %2242 = vmatprep.subr.bf16.mxu0 %v2142
    %2243 = vmatpush1.bf16.msra.mxu0 %v2141
    %2244 = vmatprep.subr.bf16.mxu0 0
    %2245 = vmatpush1.bf16.msra.mxu0 0
    %2246 = vmatprep.subr.bf16.mxu0 0
    %2247 = vmatpush1.bf16.msra.mxu0 0
    %2248 = vmatprep.subr.bf16.mxu0 0
    %2249 = vmatpush1.bf16.msra.mxu0 0
    %2250 = vmatprep.subr.bf16.mxu0 0
    %2251 = vmatpush1.bf16.msra.mxu0 0
    %2252 = vmatprep.subr.bf16.mxu0 0
    %2253 = vmatpush1.bf16.msra.mxu0 0
    %2254 = vmatprep.subr.bf16.mxu0 0
    %2255 = vmatpush1.bf16.msra.mxu0 0
    %2256 = vmatprep.subr.bf16.mxu0 0
    %2257 = vmatpush1.bf16.msra.mxu0 0
    %2258 = vmatprep.subr.bf16.mxu0 0
    %2259 = vmatpush1.bf16.msra.mxu0 0
    %2260 = vmatprep.mubr.bf16.mxu0 0
    %2261 = vmatmul.mubr.bf16.gmra.mrb[0].mxu0 %v2145
    %v2262 = vpop.f32.mrb[0].mxu0
    %v2263 = vadd.f32 0.0, %v2262
    %v2264 = vpop.f32.mrb[0].mxu0
    %v2265 = vadd.f32 0.0, %v2264
    %v2266 = vpop.f32.mrb[0].mxu0
    %v2267 = vpop.f32.mrb[0].mxu0
    %2268 = vdwg.mxu0
    %2269 = vmatprep.subr.bf16.mxu0 %v2088
    %2270 = vmatpush1.bf16.msra.mxu0 %v2087
    %2271 = vmatprep.subr.bf16.mxu0 %v2096
    %2272 = vmatpush1.bf16.msra.mxu0 %v2095
    %2273 = vmatprep.subr.bf16.mxu0 %v2104
    %2274 = vmatpush1.bf16.msra.mxu0 %v2103
    %2275 = vmatprep.subr.bf16.mxu0 %v2112
    %2276 = vmatpush1.bf16.msra.mxu0 %v2111
    %2277 = vmatprep.subr.bf16.mxu0 %v2120
    %2278 = vmatpush1.bf16.msra.mxu0 %v2119
    %2279 = vmatprep.subr.bf16.mxu0 %v2128
    %2280 = vmatpush1.bf16.msra.mxu0 %v2127
    %2281 = vmatprep.subr.bf16.mxu0 %v2136
    %2282 = vmatpush1.bf16.msra.mxu0 %v2135
    %2283 = vmatprep.subr.bf16.mxu0 %v2144
    %2284 = vmatpush1.bf16.msra.mxu0 %v2143
    %2285 = vmatprep.subr.bf16.mxu0 0
    %2286 = vmatpush1.bf16.msra.mxu0 0
    %2287 = vmatprep.subr.bf16.mxu0 0
    %2288 = vmatpush1.bf16.msra.mxu0 0
    %2289 = vmatprep.subr.bf16.mxu0 0
    %2290 = vmatpush1.bf16.msra.mxu0 0
    %2291 = vmatprep.subr.bf16.mxu0 0
    %2292 = vmatpush1.bf16.msra.mxu0 0
    %2293 = vmatprep.subr.bf16.mxu0 0
    %2294 = vmatpush1.bf16.msra.mxu0 0
    %2295 = vmatprep.subr.bf16.mxu0 0
    %2296 = vmatpush1.bf16.msra.mxu0 0
    %2297 = vmatprep.subr.bf16.mxu0 0
    %2298 = vmatpush1.bf16.msra.mxu0 0
    %2299 = vmatprep.subr.bf16.mxu0 0
    %2300 = vmatpush1.bf16.msra.mxu0 0
    %2301 = vmatprep.mubr.bf16.mxu0 0
    %2302 = vmatmul.mubr.bf16.gmra.mrb[0].mxu0 %v2145
    %v2303 = vpop.f32.mrb[0].mxu0
    %v2304 = vadd.f32 0.0, %v2303
    %v2305 = vpop.f32.mrb[0].mxu0
    %v2306 = vadd.f32 0.0, %v2305
    %v2307 = vpop.f32.mrb[0].mxu0
    %v2308 = vpop.f32.mrb[0].mxu0
    %2309 = vdwg.mxu0
    %v2310 = vadd.f32 %v2068, %v2181
    %v2311 = vadd.f32 %v2069, %v2183
    %v2312 = vadd.f32 %v2070, %v2222
    %v2313 = vadd.f32 %v2071, %v2224
    %v2314 = vadd.f32 %v2072, %v2263
    %v2315 = vadd.f32 %v2073, %v2265
    %v2316 = vadd.f32 %v2074, %v2304
    %v2317 = vadd.f32 %v2075, %v2306
    %v2318 = vrot.slane %v587, 6
    %v2320 = vrot.slane %v875, 5
    %v2322 = vsel %vm884, %v2318, %v2320
    %v2323 = vld [vmem:[#allocation2 + $0xc00] sm:$0xff]
    %v2324 = vld [vmem:[#allocation2 + $0xc08] sm:$0xff]
    %v2325 = vld [vmem:[#allocation2 + $0xc10] sm:$0xff]
    %v2326 = vld [vmem:[#allocation2 + $0xc18] sm:$0xff]
    %v2327 = vld [vmem:[#allocation2 + $0xc20] sm:$0xff]
    %v2328 = vld [vmem:[#allocation2 + $0xc28] sm:$0xff]
    %v2329 = vld [vmem:[#allocation2 + $0xc30] sm:$0xff]
    %v2330 = vld [vmem:[#allocation2 + $0xc38] sm:$0xff]
    %v2331 = vld [vmem:[#allocation2 + $0xc40] sm:$0xff]
    %v2332 = vld [vmem:[#allocation2 + $0xc48] sm:$0xff]
    %v2333 = vld [vmem:[#allocation2 + $0xc50] sm:$0xff]
    %v2334 = vld [vmem:[#allocation2 + $0xc58] sm:$0xff]
    %v2335 = vld [vmem:[#allocation2 + $0xc60] sm:$0xff]
    %v2336 = vld [vmem:[#allocation2 + $0xc68] sm:$0xff]
    %v2337 = vld [vmem:[#allocation2 + $0xc70] sm:$0xff]
    %v2338 = vld [vmem:[#allocation2 + $0xc78] sm:$0xff]
    %v2339 = vld [vmem:[#allocation2 + $0xc80] sm:$0xff]
    %v2340 = vld [vmem:[#allocation2 + $0xc88] sm:$0xff]
    %v2341 = vld [vmem:[#allocation2 + $0xc90] sm:$0xff]
    %v2342 = vld [vmem:[#allocation2 + $0xc98] sm:$0xff]
    %v2343 = vld [vmem:[#allocation2 + $0xca0] sm:$0xff]
    %v2344 = vld [vmem:[#allocation2 + $0xca8] sm:$0xff]
    %v2345 = vld [vmem:[#allocation2 + $0xcb0] sm:$0xff]
    %v2346 = vld [vmem:[#allocation2 + $0xcb8] sm:$0xff]
    %v2347 = vld [vmem:[#allocation2 + $0xcc0] sm:$0xff]
    %v2348 = vld [vmem:[#allocation2 + $0xcc8] sm:$0xff]
    %v2349 = vld [vmem:[#allocation2 + $0xcd0] sm:$0xff]
    %v2350 = vld [vmem:[#allocation2 + $0xcd8] sm:$0xff]
    %v2351 = vld [vmem:[#allocation2 + $0xce0] sm:$0xff]
    %v2352 = vld [vmem:[#allocation2 + $0xce8] sm:$0xff]
    %v2353 = vld [vmem:[#allocation2 + $0xcf0] sm:$0xff]
    %v2354 = vld [vmem:[#allocation2 + $0xcf8] sm:$0xff]
    %v2355 = vld [vmem:[#allocation2 + $0xd00] sm:$0xff]
    %v2356 = vld [vmem:[#allocation2 + $0xd08] sm:$0xff]
    %v2357 = vld [vmem:[#allocation2 + $0xd10] sm:$0xff]
    %v2358 = vld [vmem:[#allocation2 + $0xd18] sm:$0xff]
    %v2359 = vld [vmem:[#allocation2 + $0xd20] sm:$0xff]
    %v2360 = vld [vmem:[#allocation2 + $0xd28] sm:$0xff]
    %v2361 = vld [vmem:[#allocation2 + $0xd30] sm:$0xff]
    %v2362 = vld [vmem:[#allocation2 + $0xd38] sm:$0xff]
    %v2363 = vld [vmem:[#allocation2 + $0xd40] sm:$0xff]
    %v2364 = vld [vmem:[#allocation2 + $0xd48] sm:$0xff]
    %v2365 = vld [vmem:[#allocation2 + $0xd50] sm:$0xff]
    %v2366 = vld [vmem:[#allocation2 + $0xd58] sm:$0xff]
    %v2367 = vld [vmem:[#allocation2 + $0xd60] sm:$0xff]
    %v2368 = vld [vmem:[#allocation2 + $0xd68] sm:$0xff]
    %v2369 = vld [vmem:[#allocation2 + $0xd70] sm:$0xff]
    %v2370 = vld [vmem:[#allocation2 + $0xd78] sm:$0xff]
    %v2371 = vld [vmem:[#allocation2 + $0xd80] sm:$0xff]
    %v2372 = vld [vmem:[#allocation2 + $0xd88] sm:$0xff]
    %v2373 = vld [vmem:[#allocation2 + $0xd90] sm:$0xff]
    %v2374 = vld [vmem:[#allocation2 + $0xd98] sm:$0xff]
    %v2375 = vld [vmem:[#allocation2 + $0xda0] sm:$0xff]
    %v2376 = vld [vmem:[#allocation2 + $0xda8] sm:$0xff]
    %v2377 = vld [vmem:[#allocation2 + $0xdb0] sm:$0xff]
    %v2378 = vld [vmem:[#allocation2 + $0xdb8] sm:$0xff]
    %v2379 = vld [vmem:[#allocation2 + $0xdc0] sm:$0xff]
    %v2380 = vld [vmem:[#allocation2 + $0xdc8] sm:$0xff]
    %v2381 = vld [vmem:[#allocation2 + $0xdd0] sm:$0xff]
    %v2382 = vld [vmem:[#allocation2 + $0xdd8] sm:$0xff]
    %v2383 = vld [vmem:[#allocation2 + $0xde0] sm:$0xff]
    %v2384 = vld [vmem:[#allocation2 + $0xde8] sm:$0xff]
    %v2385 = vld [vmem:[#allocation2 + $0xdf0] sm:$0xff]
    %v2386 = vld [vmem:[#allocation2 + $0xdf8] sm:$0xff]
    %v2387 = vpack.c.bf16 %v2322, %v2322
    %2388 = vmatprep.subr.bf16.mxu0 %v2324
    %2389 = vmatpush1.bf16.msra.mxu0 %v2323
    %2390 = vmatprep.subr.bf16.mxu0 %v2332
    %2391 = vmatpush1.bf16.msra.mxu0 %v2331
    %2392 = vmatprep.subr.bf16.mxu0 %v2340
    %2393 = vmatpush1.bf16.msra.mxu0 %v2339
    %2394 = vmatprep.subr.bf16.mxu0 %v2348
    %2395 = vmatpush1.bf16.msra.mxu0 %v2347
    %2396 = vmatprep.subr.bf16.mxu0 %v2356
    %2397 = vmatpush1.bf16.msra.mxu0 %v2355
    %2398 = vmatprep.subr.bf16.mxu0 %v2364
    %2399 = vmatpush1.bf16.msra.mxu0 %v2363
    %2400 = vmatprep.subr.bf16.mxu0 %v2372
    %2401 = vmatpush1.bf16.msra.mxu0 %v2371
    %2402 = vmatprep.subr.bf16.mxu0 %v2380
    %2403 = vmatpush1.bf16.msra.mxu0 %v2379
    %2404 = vmatprep.subr.bf16.mxu0 0
    %2405 = vmatpush1.bf16.msra.mxu0 0
    %2406 = vmatprep.subr.bf16.mxu0 0
    %2407 = vmatpush1.bf16.msra.mxu0 0
    %2408 = vmatprep.subr.bf16.mxu0 0
    %2409 = vmatpush1.bf16.msra.mxu0 0
    %2410 = vmatprep.subr.bf16.mxu0 0
    %2411 = vmatpush1.bf16.msra.mxu0 0
    %2412 = vmatprep.subr.bf16.mxu0 0
    %2413 = vmatpush1.bf16.msra.mxu0 0
    %2414 = vmatprep.subr.bf16.mxu0 0
    %2415 = vmatpush1.bf16.msra.mxu0 0
    %2416 = vmatprep.subr.bf16.mxu0 0
    %2417 = vmatpush1.bf16.msra.mxu0 0
    %2418 = vmatprep.subr.bf16.mxu0 0
    %2419 = vmatpush1.bf16.msra.mxu0 0
    %2420 = vmatprep.mubr.bf16.mxu0 0
    %2421 = vmatmul.mubr.bf16.gmra.mrb[0].mxu0 %v2387
    %v2422 = vpop.f32.mrb[0].mxu0
    %v2423 = vadd.f32 0.0, %v2422
    %v2424 = vpop.f32.mrb[0].mxu0
    %v2425 = vadd.f32 0.0, %v2424
    %v2426 = vpop.f32.mrb[0].mxu0
    %v2427 = vpop.f32.mrb[0].mxu0
    %2428 = vdwg.mxu0
    %2429 = vmatprep.subr.bf16.mxu0 %v2326
    %2430 = vmatpush1.bf16.msra.mxu0 %v2325
    %2431 = vmatprep.subr.bf16.mxu0 %v2334
    %2432 = vmatpush1.bf16.msra.mxu0 %v2333
    %2433 = vmatprep.subr.bf16.mxu0 %v2342
    %2434 = vmatpush1.bf16.msra.mxu0 %v2341
    %2435 = vmatprep.subr.bf16.mxu0 %v2350
    %2436 = vmatpush1.bf16.msra.mxu0 %v2349
    %2437 = vmatprep.subr.bf16.mxu0 %v2358
    %2438 = vmatpush1.bf16.msra.mxu0 %v2357
    %2439 = vmatprep.subr.bf16.mxu0 %v2366
    %2440 = vmatpush1.bf16.msra.mxu0 %v2365
    %2441 = vmatprep.subr.bf16.mxu0 %v2374
    %2442 = vmatpush1.bf16.msra.mxu0 %v2373
    %2443 = vmatprep.subr.bf16.mxu0 %v2382
    %2444 = vmatpush1.bf16.msra.mxu0 %v2381
    %2445 = vmatprep.subr.bf16.mxu0 0
    %2446 = vmatpush1.bf16.msra.mxu0 0
    %2447 = vmatprep.subr.bf16.mxu0 0
    %2448 = vmatpush1.bf16.msra.mxu0 0
    %2449 = vmatprep.subr.bf16.mxu0 0
    %2450 = vmatpush1.bf16.msra.mxu0 0
    %2451 = vmatprep.subr.bf16.mxu0 0
    %2452 = vmatpush1.bf16.msra.mxu0 0
    %2453 = vmatprep.subr.bf16.mxu0 0
    %2454 = vmatpush1.bf16.msra.mxu0 0
    %2455 = vmatprep.subr.bf16.mxu0 0
    %2456 = vmatpush1.bf16.msra.mxu0 0
    %2457 = vmatprep.subr.bf16.mxu0 0
    %2458 = vmatpush1.bf16.msra.mxu0 0
    %2459 = vmatprep.subr.bf16.mxu0 0
    %2460 = vmatpush1.bf16.msra.mxu0 0
    %2461 = vmatprep.mubr.bf16.mxu0 0
    %2462 = vmatmul.mubr.bf16.gmra.mrb[0].mxu0 %v2387
    %v2463 = vpop.f32.mrb[0].mxu0
    %v2464 = vadd.f32 0.0, %v2463
    %v2465 = vpop.f32.mrb[0].mxu0
    %v2466 = vadd.f32 0.0, %v2465
    %v2467 = vpop.f32.mrb[0].mxu0
    %v2468 = vpop.f32.mrb[0].mxu0
    %2469 = vdwg.mxu0
    %2470 = vmatprep.subr.bf16.mxu0 %v2328
    %2471 = vmatpush1.bf16.msra.mxu0 %v2327
    %2472 = vmatprep.subr.bf16.mxu0 %v2336
    %2473 = vmatpush1.bf16.msra.mxu0 %v2335
    %2474 = vmatprep.subr.bf16.mxu0 %v2344
    %2475 = vmatpush1.bf16.msra.mxu0 %v2343
    %2476 = vmatprep.subr.bf16.mxu0 %v2352
    %2477 = vmatpush1.bf16.msra.mxu0 %v2351
    %2478 = vmatprep.subr.bf16.mxu0 %v2360
    %2479 = vmatpush1.bf16.msra.mxu0 %v2359
    %2480 = vmatprep.subr.bf16.mxu0 %v2368
    %2481 = vmatpush1.bf16.msra.mxu0 %v2367
    %2482 = vmatprep.subr.bf16.mxu0 %v2376
    %2483 = vmatpush1.bf16.msra.mxu0 %v2375
    %2484 = vmatprep.subr.bf16.mxu0 %v2384
    %2485 = vmatpush1.bf16.msra.mxu0 %v2383
    %2486 = vmatprep.subr.bf16.mxu0 0
    %2487 = vmatpush1.bf16.msra.mxu0 0
    %2488 = vmatprep.subr.bf16.mxu0 0
    %2489 = vmatpush1.bf16.msra.mxu0 0
    %2490 = vmatprep.subr.bf16.mxu0 0
    %2491 = vmatpush1.bf16.msra.mxu0 0
    %2492 = vmatprep.subr.bf16.mxu0 0
    %2493 = vmatpush1.bf16.msra.mxu0 0
    %2494 = vmatprep.subr.bf16.mxu0 0
    %2495 = vmatpush1.bf16.msra.mxu0 0
    %2496 = vmatprep.subr.bf16.mxu0 0
    %2497 = vmatpush1.bf16.msra.mxu0 0
    %2498 = vmatprep.subr.bf16.mxu0 0
    %2499 = vmatpush1.bf16.msra.mxu0 0
    %2500 = vmatprep.subr.bf16.mxu0 0
    %2501 = vmatpush1.bf16.msra.mxu0 0
    %2502 = vmatprep.mubr.bf16.mxu0 0
    %2503 = vmatmul.mubr.bf16.gmra.mrb[0].mxu0 %v2387
    %v2504 = vpop.f32.mrb[0].mxu0
    %v2505 = vadd.f32 0.0, %v2504
    %v2506 = vpop.f32.mrb[0].mxu0
    %v2507 = vadd.f32 0.0, %v2506
    %v2508 = vpop.f32.mrb[0].mxu0
    %v2509 = vpop.f32.mrb[0].mxu0
    %2510 = vdwg.mxu0
    %2511 = vmatprep.subr.bf16.mxu0 %v2330
    %2512 = vmatpush1.bf16.msra.mxu0 %v2329
    %2513 = vmatprep.subr.bf16.mxu0 %v2338
    %2514 = vmatpush1.bf16.msra.mxu0 %v2337
    %2515 = vmatprep.subr.bf16.mxu0 %v2346
    %2516 = vmatpush1.bf16.msra.mxu0 %v2345
    %2517 = vmatprep.subr.bf16.mxu0 %v2354
    %2518 = vmatpush1.bf16.msra.mxu0 %v2353
    %2519 = vmatprep.subr.bf16.mxu0 %v2362
    %2520 = vmatpush1.bf16.msra.mxu0 %v2361
    %2521 = vmatprep.subr.bf16.mxu0 %v2370
    %2522 = vmatpush1.bf16.msra.mxu0 %v2369
    %2523 = vmatprep.subr.bf16.mxu0 %v2378
    %2524 = vmatpush1.bf16.msra.mxu0 %v2377
    %2525 = vmatprep.subr.bf16.mxu0 %v2386
    %2526 = vmatpush1.bf16.msra.mxu0 %v2385
    %2527 = vmatprep.subr.bf16.mxu0 0
    %2528 = vmatpush1.bf16.msra.mxu0 0
    %2529 = vmatprep.subr.bf16.mxu0 0
    %2530 = vmatpush1.bf16.msra.mxu0 0
    %2531 = vmatprep.subr.bf16.mxu0 0
    %2532 = vmatpush1.bf16.msra.mxu0 0
    %2533 = vmatprep.subr.bf16.mxu0 0
    %2534 = vmatpush1.bf16.msra.mxu0 0
    %2535 = vmatprep.subr.bf16.mxu0 0
    %2536 = vmatpush1.bf16.msra.mxu0 0
    %2537 = vmatprep.subr.bf16.mxu0 0
    %2538 = vmatpush1.bf16.msra.mxu0 0
    %2539 = vmatprep.subr.bf16.mxu0 0
    %2540 = vmatpush1.bf16.msra.mxu0 0
    %2541 = vmatprep.subr.bf16.mxu0 0
    %2542 = vmatpush1.bf16.msra.mxu0 0
    %2543 = vmatprep.mubr.bf16.mxu0 0
    %2544 = vmatmul.mubr.bf16.gmra.mrb[0].mxu0 %v2387
    %v2545 = vpop.f32.mrb[0].mxu0
    %v2546 = vadd.f32 0.0, %v2545
    %v2547 = vpop.f32.mrb[0].mxu0
    %v2548 = vadd.f32 0.0, %v2547
    %v2549 = vpop.f32.mrb[0].mxu0
    %v2550 = vpop.f32.mrb[0].mxu0
    %2551 = vdwg.mxu0
    %v2552 = vadd.f32 %v2310, %v2423
    %v2553 = vadd.f32 %v2311, %v2425
    %v2554 = vadd.f32 %v2312, %v2464
    %v2555 = vadd.f32 %v2313, %v2466
    %v2556 = vadd.f32 %v2314, %v2505
    %v2557 = vadd.f32 %v2315, %v2507
    %v2558 = vadd.f32 %v2316, %v2546
    %v2559 = vadd.f32 %v2317, %v2548
    %v2560 = vrot.slane %v587, 7
    %v2562 = vrot.slane %v875, 6
    %v2564 = vsel %vm884, %v2560, %v2562
    %v2565 = vld [vmem:[#allocation2 + $0xe00] sm:$0xff]
    %v2566 = vld [vmem:[#allocation2 + $0xe08] sm:$0xff]
    %v2567 = vld [vmem:[#allocation2 + $0xe10] sm:$0xff]
    %v2568 = vld [vmem:[#allocation2 + $0xe18] sm:$0xff]
    %v2569 = vld [vmem:[#allocation2 + $0xe20] sm:$0xff]
    %v2570 = vld [vmem:[#allocation2 + $0xe28] sm:$0xff]
    %v2571 = vld [vmem:[#allocation2 + $0xe30] sm:$0xff]
    %v2572 = vld [vmem:[#allocation2 + $0xe38] sm:$0xff]
    %v2573 = vld [vmem:[#allocation2 + $0xe40] sm:$0xff]
    %v2574 = vld [vmem:[#allocation2 + $0xe48] sm:$0xff]
    %v2575 = vld [vmem:[#allocation2 + $0xe50] sm:$0xff]
    %v2576 = vld [vmem:[#allocation2 + $0xe58] sm:$0xff]
    %v2577 = vld [vmem:[#allocation2 + $0xe60] sm:$0xff]
    %v2578 = vld [vmem:[#allocation2 + $0xe68] sm:$0xff]
    %v2579 = vld [vmem:[#allocation2 + $0xe70] sm:$0xff]
    %v2580 = vld [vmem:[#allocation2 + $0xe78] sm:$0xff]
    %v2581 = vld [vmem:[#allocation2 + $0xe80] sm:$0xff]
    %v2582 = vld [vmem:[#allocation2 + $0xe88] sm:$0xff]
    %v2583 = vld [vmem:[#allocation2 + $0xe90] sm:$0xff]
    %v2584 = vld [vmem:[#allocation2 + $0xe98] sm:$0xff]
    %v2585 = vld [vmem:[#allocation2 + $0xea0] sm:$0xff]
    %v2586 = vld [vmem:[#allocation2 + $0xea8] sm:$0xff]
    %v2587 = vld [vmem:[#allocation2 + $0xeb0] sm:$0xff]
    %v2588 = vld [vmem:[#allocation2 + $0xeb8] sm:$0xff]
    %v2589 = vld [vmem:[#allocation2 + $0xec0] sm:$0xff]
    %v2590 = vld [vmem:[#allocation2 + $0xec8] sm:$0xff]
    %v2591 = vld [vmem:[#allocation2 + $0xed0] sm:$0xff]
    %v2592 = vld [vmem:[#allocation2 + $0xed8] sm:$0xff]
    %v2593 = vld [vmem:[#allocation2 + $0xee0] sm:$0xff]
    %v2594 = vld [vmem:[#allocation2 + $0xee8] sm:$0xff]
    %v2595 = vld [vmem:[#allocation2 + $0xef0] sm:$0xff]
    %v2596 = vld [vmem:[#allocation2 + $0xef8] sm:$0xff]
    %v2597 = vld [vmem:[#allocation2 + $0xf00] sm:$0xff]
    %v2598 = vld [vmem:[#allocation2 + $0xf08] sm:$0xff]
    %v2599 = vld [vmem:[#allocation2 + $0xf10] sm:$0xff]
    %v2600 = vld [vmem:[#allocation2 + $0xf18] sm:$0xff]
    %v2601 = vld [vmem:[#allocation2 + $0xf20] sm:$0xff]
    %v2602 = vld [vmem:[#allocation2 + $0xf28] sm:$0xff]
    %v2603 = vld [vmem:[#allocation2 + $0xf30] sm:$0xff]
    %v2604 = vld [vmem:[#allocation2 + $0xf38] sm:$0xff]
    %v2605 = vld [vmem:[#allocation2 + $0xf40] sm:$0xff]
    %v2606 = vld [vmem:[#allocation2 + $0xf48] sm:$0xff]
    %v2607 = vld [vmem:[#allocation2 + $0xf50] sm:$0xff]
    %v2608 = vld [vmem:[#allocation2 + $0xf58] sm:$0xff]
    %v2609 = vld [vmem:[#allocation2 + $0xf60] sm:$0xff]
    %v2610 = vld [vmem:[#allocation2 + $0xf68] sm:$0xff]
    %v2611 = vld [vmem:[#allocation2 + $0xf70] sm:$0xff]
    %v2612 = vld [vmem:[#allocation2 + $0xf78] sm:$0xff]
    %v2613 = vld [vmem:[#allocation2 + $0xf80] sm:$0xff]
    %v2614 = vld [vmem:[#allocation2 + $0xf88] sm:$0xff]
    %v2615 = vld [vmem:[#allocation2 + $0xf90] sm:$0xff]
    %v2616 = vld [vmem:[#allocation2 + $0xf98] sm:$0xff]
    %v2617 = vld [vmem:[#allocation2 + $0xfa0] sm:$0xff]
    %v2618 = vld [vmem:[#allocation2 + $0xfa8] sm:$0xff]
    %v2619 = vld [vmem:[#allocation2 + $0xfb0] sm:$0xff]
    %v2620 = vld [vmem:[#allocation2 + $0xfb8] sm:$0xff]
    %v2621 = vld [vmem:[#allocation2 + $0xfc0] sm:$0xff]
    %v2622 = vld [vmem:[#allocation2 + $0xfc8] sm:$0xff]
    %v2623 = vld [vmem:[#allocation2 + $0xfd0] sm:$0xff]
    %v2624 = vld [vmem:[#allocation2 + $0xfd8] sm:$0xff]
    %v2625 = vld [vmem:[#allocation2 + $0xfe0] sm:$0xff]
    %v2626 = vld [vmem:[#allocation2 + $0xfe8] sm:$0xff]
    %v2627 = vld [vmem:[#allocation2 + $0xff0] sm:$0xff]
    %v2628 = vld [vmem:[#allocation2 + $0xff8] sm:$0xff]
    %v2629 = vpack.c.bf16 %v2564, %v2564
    %2630 = vmatprep.subr.bf16.mxu0 %v2566
    %2631 = vmatpush1.bf16.msra.mxu0 %v2565
    %2632 = vmatprep.subr.bf16.mxu0 %v2574
    %2633 = vmatpush1.bf16.msra.mxu0 %v2573
    %2634 = vmatprep.subr.bf16.mxu0 %v2582
    %2635 = vmatpush1.bf16.msra.mxu0 %v2581
    %2636 = vmatprep.subr.bf16.mxu0 %v2590
    %2637 = vmatpush1.bf16.msra.mxu0 %v2589
    %2638 = vmatprep.subr.bf16.mxu0 %v2598
    %2639 = vmatpush1.bf16.msra.mxu0 %v2597
    %2640 = vmatprep.subr.bf16.mxu0 %v2606
    %2641 = vmatpush1.bf16.msra.mxu0 %v2605
    %2642 = vmatprep.subr.bf16.mxu0 %v2614
    %2643 = vmatpush1.bf16.msra.mxu0 %v2613
    %2644 = vmatprep.subr.bf16.mxu0 %v2622
    %2645 = vmatpush1.bf16.msra.mxu0 %v2621
    %2646 = vmatprep.subr.bf16.mxu0 0
    %2647 = vmatpush1.bf16.msra.mxu0 0
    %2648 = vmatprep.subr.bf16.mxu0 0
    %2649 = vmatpush1.bf16.msra.mxu0 0
    %2650 = vmatprep.subr.bf16.mxu0 0
    %2651 = vmatpush1.bf16.msra.mxu0 0
    %2652 = vmatprep.subr.bf16.mxu0 0
    %2653 = vmatpush1.bf16.msra.mxu0 0
    %2654 = vmatprep.subr.bf16.mxu0 0
    %2655 = vmatpush1.bf16.msra.mxu0 0
    %2656 = vmatprep.subr.bf16.mxu0 0
    %2657 = vmatpush1.bf16.msra.mxu0 0
    %2658 = vmatprep.subr.bf16.mxu0 0
    %2659 = vmatpush1.bf16.msra.mxu0 0
    %2660 = vmatprep.subr.bf16.mxu0 0
    %2661 = vmatpush1.bf16.msra.mxu0 0
    %2662 = vmatprep.mubr.bf16.mxu0 0
    %2663 = vmatmul.mubr.bf16.gmra.mrb[0].mxu0 %v2629
    %v2664 = vpop.f32.mrb[0].mxu0
    %v2665 = vadd.f32 0.0, %v2664
    %v2666 = vpop.f32.mrb[0].mxu0
    %v2667 = vadd.f32 0.0, %v2666
    %v2668 = vpop.f32.mrb[0].mxu0
    %v2669 = vpop.f32.mrb[0].mxu0
    %2670 = vdwg.mxu0
    %2671 = vmatprep.subr.bf16.mxu0 %v2568
    %2672 = vmatpush1.bf16.msra.mxu0 %v2567
    %2673 = vmatprep.subr.bf16.mxu0 %v2576
    %2674 = vmatpush1.bf16.msra.mxu0 %v2575
    %2675 = vmatprep.subr.bf16.mxu0 %v2584
    %2676 = vmatpush1.bf16.msra.mxu0 %v2583
    %2677 = vmatprep.subr.bf16.mxu0 %v2592
    %2678 = vmatpush1.bf16.msra.mxu0 %v2591
    %2679 = vmatprep.subr.bf16.mxu0 %v2600
    %2680 = vmatpush1.bf16.msra.mxu0 %v2599
    %2681 = vmatprep.subr.bf16.mxu0 %v2608
    %2682 = vmatpush1.bf16.msra.mxu0 %v2607
    %2683 = vmatprep.subr.bf16.mxu0 %v2616
    %2684 = vmatpush1.bf16.msra.mxu0 %v2615
    %2685 = vmatprep.subr.bf16.mxu0 %v2624
    %2686 = vmatpush1.bf16.msra.mxu0 %v2623
    %2687 = vmatprep.subr.bf16.mxu0 0
    %2688 = vmatpush1.bf16.msra.mxu0 0
    %2689 = vmatprep.subr.bf16.mxu0 0
    %2690 = vmatpush1.bf16.msra.mxu0 0
    %2691 = vmatprep.subr.bf16.mxu0 0
    %2692 = vmatpush1.bf16.msra.mxu0 0
    %2693 = vmatprep.subr.bf16.mxu0 0
    %2694 = vmatpush1.bf16.msra.mxu0 0
    %2695 = vmatprep.subr.bf16.mxu0 0
    %2696 = vmatpush1.bf16.msra.mxu0 0
    %2697 = vmatprep.subr.bf16.mxu0 0
    %2698 = vmatpush1.bf16.msra.mxu0 0
    %2699 = vmatprep.subr.bf16.mxu0 0
    %2700 = vmatpush1.bf16.msra.mxu0 0
    %2701 = vmatprep.subr.bf16.mxu0 0
    %2702 = vmatpush1.bf16.msra.mxu0 0
    %2703 = vmatprep.mubr.bf16.mxu0 0
    %2704 = vmatmul.mubr.bf16.gmra.mrb[0].mxu0 %v2629
    %v2705 = vpop.f32.mrb[0].mxu0
    %v2706 = vadd.f32 0.0, %v2705
    %v2707 = vpop.f32.mrb[0].mxu0
    %v2708 = vadd.f32 0.0, %v2707
    %v2709 = vpop.f32.mrb[0].mxu0
    %v2710 = vpop.f32.mrb[0].mxu0
    %2711 = vdwg.mxu0
    %2712 = vmatprep.subr.bf16.mxu0 %v2570
    %2713 = vmatpush1.bf16.msra.mxu0 %v2569
    %2714 = vmatprep.subr.bf16.mxu0 %v2578
    %2715 = vmatpush1.bf16.msra.mxu0 %v2577
    %2716 = vmatprep.subr.bf16.mxu0 %v2586
    %2717 = vmatpush1.bf16.msra.mxu0 %v2585
    %2718 = vmatprep.subr.bf16.mxu0 %v2594
    %2719 = vmatpush1.bf16.msra.mxu0 %v2593
    %2720 = vmatprep.subr.bf16.mxu0 %v2602
    %2721 = vmatpush1.bf16.msra.mxu0 %v2601
    %2722 = vmatprep.subr.bf16.mxu0 %v2610
    %2723 = vmatpush1.bf16.msra.mxu0 %v2609
    %2724 = vmatprep.subr.bf16.mxu0 %v2618
    %2725 = vmatpush1.bf16.msra.mxu0 %v2617
    %2726 = vmatprep.subr.bf16.mxu0 %v2626
    %2727 = vmatpush1.bf16.msra.mxu0 %v2625
    %2728 = vmatprep.subr.bf16.mxu0 0
    %2729 = vmatpush1.bf16.msra.mxu0 0
    %2730 = vmatprep.subr.bf16.mxu0 0
    %2731 = vmatpush1.bf16.msra.mxu0 0
    %2732 = vmatprep.subr.bf16.mxu0 0
    %2733 = vmatpush1.bf16.msra.mxu0 0
    %2734 = vmatprep.subr.bf16.mxu0 0
    %2735 = vmatpush1.bf16.msra.mxu0 0
    %2736 = vmatprep.subr.bf16.mxu0 0
    %2737 = vmatpush1.bf16.msra.mxu0 0
    %2738 = vmatprep.subr.bf16.mxu0 0
    %2739 = vmatpush1.bf16.msra.mxu0 0
    %2740 = vmatprep.subr.bf16.mxu0 0
    %2741 = vmatpush1.bf16.msra.mxu0 0
    %2742 = vmatprep.subr.bf16.mxu0 0
    %2743 = vmatpush1.bf16.msra.mxu0 0
    %2744 = vmatprep.mubr.bf16.mxu0 0
    %2745 = vmatmul.mubr.bf16.gmra.mrb[0].mxu0 %v2629
    %v2746 = vpop.f32.mrb[0].mxu0
    %v2747 = vadd.f32 0.0, %v2746
    %v2748 = vpop.f32.mrb[0].mxu0
    %v2749 = vadd.f32 0.0, %v2748
    %v2750 = vpop.f32.mrb[0].mxu0
    %v2751 = vpop.f32.mrb[0].mxu0
    %2752 = vdwg.mxu0
    %2753 = vmatprep.subr.bf16.mxu0 %v2572
    %2754 = vmatpush1.bf16.msra.mxu0 %v2571
    %2755 = vmatprep.subr.bf16.mxu0 %v2580
    %2756 = vmatpush1.bf16.msra.mxu0 %v2579
    %2757 = vmatprep.subr.bf16.mxu0 %v2588
    %2758 = vmatpush1.bf16.msra.mxu0 %v2587
    %2759 = vmatprep.subr.bf16.mxu0 %v2596
    %2760 = vmatpush1.bf16.msra.mxu0 %v2595
    %2761 = vmatprep.subr.bf16.mxu0 %v2604
    %2762 = vmatpush1.bf16.msra.mxu0 %v2603
    %2763 = vmatprep.subr.bf16.mxu0 %v2612
    %2764 = vmatpush1.bf16.msra.mxu0 %v2611
    %2765 = vmatprep.subr.bf16.mxu0 %v2620
    %2766 = vmatpush1.bf16.msra.mxu0 %v2619
    %2767 = vmatprep.subr.bf16.mxu0 %v2628
    %2768 = vmatpush1.bf16.msra.mxu0 %v2627
    %2769 = vmatprep.subr.bf16.mxu0 0
    %2770 = vmatpush1.bf16.msra.mxu0 0
    %2771 = vmatprep.subr.bf16.mxu0 0
    %2772 = vmatpush1.bf16.msra.mxu0 0
    %2773 = vmatprep.subr.bf16.mxu0 0
    %2774 = vmatpush1.bf16.msra.mxu0 0
    %2775 = vmatprep.subr.bf16.mxu0 0
    %2776 = vmatpush1.bf16.msra.mxu0 0
    %2777 = vmatprep.subr.bf16.mxu0 0
    %2778 = vmatpush1.bf16.msra.mxu0 0
    %2779 = vmatprep.subr.bf16.mxu0 0
    %2780 = vmatpush1.bf16.msra.mxu0 0
    %2781 = vmatprep.subr.bf16.mxu0 0
    %2782 = vmatpush1.bf16.msra.mxu0 0
    %2783 = vmatprep.subr.bf16.mxu0 0
    %2784 = vmatpush1.bf16.msra.mxu0 0
    %2785 = vmatprep.mubr.bf16.mxu0 0
    %2786 = vmatmul.mubr.bf16.gmra.mrb[0].mxu0 %v2629
    %v2787 = vpop.f32.mrb[0].mxu0
    %v2788 = vadd.f32 0.0, %v2787
    %v2789 = vpop.f32.mrb[0].mxu0
    %v2790 = vadd.f32 0.0, %v2789
    %v2791 = vpop.f32.mrb[0].mxu0
    %v2792 = vpop.f32.mrb[0].mxu0
    %2793 = vdwg.mxu0
    %v2794 = vadd.f32 %v2552, %v2665
    %v2795 = vadd.f32 %v2553, %v2667
    %v2796 = vadd.f32 %v2554, %v2706
    %v2797 = vadd.f32 %v2555, %v2708
    %v2798 = vadd.f32 %v2556, %v2747
    %v2799 = vadd.f32 %v2557, %v2749
    %v2800 = vadd.f32 %v2558, %v2788
    %v2801 = vadd.f32 %v2559, %v2790
    %s2802 = sshll.u32 %s878, 4
    %2803 = dma.done %s193, %s2802
    %v2805 = vrot.slane %v876, 7
    %v2807 = vsel %vm884, %v588, %v2805
    %v2808 = vld [vmem:[#allocation2 + $0x1000] sm:$0xff]
    %v2809 = vld [vmem:[#allocation2 + $0x1008] sm:$0xff]
    %v2810 = vld [vmem:[#allocation2 + $0x1010] sm:$0xff]
    %v2811 = vld [vmem:[#allocation2 + $0x1018] sm:$0xff]
    %v2812 = vld [vmem:[#allocation2 + $0x1020] sm:$0xff]
    %v2813 = vld [vmem:[#allocation2 + $0x1028] sm:$0xff]
    %v2814 = vld [vmem:[#allocation2 + $0x1030] sm:$0xff]
    %v2815 = vld [vmem:[#allocation2 + $0x1038] sm:$0xff]
    %v2816 = vld [vmem:[#allocation2 + $0x1040] sm:$0xff]
    %v2817 = vld [vmem:[#allocation2 + $0x1048] sm:$0xff]
    %v2818 = vld [vmem:[#allocation2 + $0x1050] sm:$0xff]
    %v2819 = vld [vmem:[#allocation2 + $0x1058] sm:$0xff]
    %v2820 = vld [vmem:[#allocation2 + $0x1060] sm:$0xff]
    %v2821 = vld [vmem:[#allocation2 + $0x1068] sm:$0xff]
    %v2822 = vld [vmem:[#allocation2 + $0x1070] sm:$0xff]
    %v2823 = vld [vmem:[#allocation2 + $0x1078] sm:$0xff]
    %v2824 = vld [vmem:[#allocation2 + $0x1080] sm:$0xff]
    %v2825 = vld [vmem:[#allocation2 + $0x1088] sm:$0xff]
    %v2826 = vld [vmem:[#allocation2 + $0x1090] sm:$0xff]
    %v2827 = vld [vmem:[#allocation2 + $0x1098] sm:$0xff]
    %v2828 = vld [vmem:[#allocation2 + $0x10a0] sm:$0xff]
    %v2829 = vld [vmem:[#allocation2 + $0x10a8] sm:$0xff]
    %v2830 = vld [vmem:[#allocation2 + $0x10b0] sm:$0xff]
    %v2831 = vld [vmem:[#allocation2 + $0x10b8] sm:$0xff]
    %v2832 = vld [vmem:[#allocation2 + $0x10c0] sm:$0xff]
    %v2833 = vld [vmem:[#allocation2 + $0x10c8] sm:$0xff]
    %v2834 = vld [vmem:[#allocation2 + $0x10d0] sm:$0xff]
    %v2835 = vld [vmem:[#allocation2 + $0x10d8] sm:$0xff]
    %v2836 = vld [vmem:[#allocation2 + $0x10e0] sm:$0xff]
    %v2837 = vld [vmem:[#allocation2 + $0x10e8] sm:$0xff]
    %v2838 = vld [vmem:[#allocation2 + $0x10f0] sm:$0xff]
    %v2839 = vld [vmem:[#allocation2 + $0x10f8] sm:$0xff]
    %v2840 = vld [vmem:[#allocation2 + $0x1100] sm:$0xff]
    %v2841 = vld [vmem:[#allocation2 + $0x1108] sm:$0xff]
    %v2842 = vld [vmem:[#allocation2 + $0x1110] sm:$0xff]
    %v2843 = vld [vmem:[#allocation2 + $0x1118] sm:$0xff]
    %v2844 = vld [vmem:[#allocation2 + $0x1120] sm:$0xff]
    %v2845 = vld [vmem:[#allocation2 + $0x1128] sm:$0xff]
    %v2846 = vld [vmem:[#allocation2 + $0x1130] sm:$0xff]
    %v2847 = vld [vmem:[#allocation2 + $0x1138] sm:$0xff]
    %v2848 = vld [vmem:[#allocation2 + $0x1140] sm:$0xff]
    %v2849 = vld [vmem:[#allocation2 + $0x1148] sm:$0xff]
    %v2850 = vld [vmem:[#allocation2 + $0x1150] sm:$0xff]
    %v2851 = vld [vmem:[#allocation2 + $0x1158] sm:$0xff]
    %v2852 = vld [vmem:[#allocation2 + $0x1160] sm:$0xff]
    %v2853 = vld [vmem:[#allocation2 + $0x1168] sm:$0xff]
    %v2854 = vld [vmem:[#allocation2 + $0x1170] sm:$0xff]
    %v2855 = vld [vmem:[#allocation2 + $0x1178] sm:$0xff]
    %v2856 = vld [vmem:[#allocation2 + $0x1180] sm:$0xff]
    %v2857 = vld [vmem:[#allocation2 + $0x1188] sm:$0xff]
    %v2858 = vld [vmem:[#allocation2 + $0x1190] sm:$0xff]
    %v2859 = vld [vmem:[#allocation2 + $0x1198] sm:$0xff]
    %v2860 = vld [vmem:[#allocation2 + $0x11a0] sm:$0xff]
    %v2861 = vld [vmem:[#allocation2 + $0x11a8] sm:$0xff]
    %v2862 = vld [vmem:[#allocation2 + $0x11b0] sm:$0xff]
    %v2863 = vld [vmem:[#allocation2 + $0x11b8] sm:$0xff]
    %v2864 = vld [vmem:[#allocation2 + $0x11c0] sm:$0xff]
    %v2865 = vld [vmem:[#allocation2 + $0x11c8] sm:$0xff]
    %v2866 = vld [vmem:[#allocation2 + $0x11d0] sm:$0xff]
    %v2867 = vld [vmem:[#allocation2 + $0x11d8] sm:$0xff]
    %v2868 = vld [vmem:[#allocation2 + $0x11e0] sm:$0xff]
    %v2869 = vld [vmem:[#allocation2 + $0x11e8] sm:$0xff]
    %v2870 = vld [vmem:[#allocation2 + $0x11f0] sm:$0xff]
    %v2871 = vld [vmem:[#allocation2 + $0x11f8] sm:$0xff]
    %v2872 = vpack.c.bf16 %v2807, %v2807
    %2873 = vmatprep.subr.bf16.mxu0 %v2809
    %2874 = vmatpush1.bf16.msra.mxu0 %v2808
    %2875 = vmatprep.subr.bf16.mxu0 %v2817
    %2876 = vmatpush1.bf16.msra.mxu0 %v2816
    %2877 = vmatprep.subr.bf16.mxu0 %v2825
    %2878 = vmatpush1.bf16.msra.mxu0 %v2824
    %2879 = vmatprep.subr.bf16.mxu0 %v2833
    %2880 = vmatpush1.bf16.msra.mxu0 %v2832
    %2881 = vmatprep.subr.bf16.mxu0 %v2841
    %2882 = vmatpush1.bf16.msra.mxu0 %v2840
    %2883 = vmatprep.subr.bf16.mxu0 %v2849
    %2884 = vmatpush1.bf16.msra.mxu0 %v2848
    %2885 = vmatprep.subr.bf16.mxu0 %v2857
    %2886 = vmatpush1.bf16.msra.mxu0 %v2856
    %2887 = vmatprep.subr.bf16.mxu0 %v2865
    %2888 = vmatpush1.bf16.msra.mxu0 %v2864
    %2889 = vmatprep.subr.bf16.mxu0 0
    %2890 = vmatpush1.bf16.msra.mxu0 0
    %2891 = vmatprep.subr.bf16.mxu0 0
    %2892 = vmatpush1.bf16.msra.mxu0 0
    %2893 = vmatprep.subr.bf16.mxu0 0
    %2894 = vmatpush1.bf16.msra.mxu0 0
    %2895 = vmatprep.subr.bf16.mxu0 0
    %2896 = vmatpush1.bf16.msra.mxu0 0
    %2897 = vmatprep.subr.bf16.mxu0 0
    %2898 = vmatpush1.bf16.msra.mxu0 0
    %2899 = vmatprep.subr.bf16.mxu0 0
    %2900 = vmatpush1.bf16.msra.mxu0 0
    %2901 = vmatprep.subr.bf16.mxu0 0
    %2902 = vmatpush1.bf16.msra.mxu0 0
    %2903 = vmatprep.subr.bf16.mxu0 0
    %2904 = vmatpush1.bf16.msra.mxu0 0
    %2905 = vmatprep.mubr.bf16.mxu0 0
    %2906 = vmatmul.mubr.bf16.gmra.mrb[0].mxu0 %v2872
    %v2907 = vpop.f32.mrb[0].mxu0
    %v2908 = vadd.f32 0.0, %v2907
    %v2909 = vpop.f32.mrb[0].mxu0
    %v2910 = vadd.f32 0.0, %v2909
    %v2911 = vpop.f32.mrb[0].mxu0
    %v2912 = vpop.f32.mrb[0].mxu0
    %2913 = vdwg.mxu0
    %2914 = vmatprep.subr.bf16.mxu0 %v2811
    %2915 = vmatpush1.bf16.msra.mxu0 %v2810
    %2916 = vmatprep.subr.bf16.mxu0 %v2819
    %2917 = vmatpush1.bf16.msra.mxu0 %v2818
    %2918 = vmatprep.subr.bf16.mxu0 %v2827
    %2919 = vmatpush1.bf16.msra.mxu0 %v2826
    %2920 = vmatprep.subr.bf16.mxu0 %v2835
    %2921 = vmatpush1.bf16.msra.mxu0 %v2834
    %2922 = vmatprep.subr.bf16.mxu0 %v2843
    %2923 = vmatpush1.bf16.msra.mxu0 %v2842
    %2924 = vmatprep.subr.bf16.mxu0 %v2851
    %2925 = vmatpush1.bf16.msra.mxu0 %v2850
    %2926 = vmatprep.subr.bf16.mxu0 %v2859
    %2927 = vmatpush1.bf16.msra.mxu0 %v2858
    %2928 = vmatprep.subr.bf16.mxu0 %v2867
    %2929 = vmatpush1.bf16.msra.mxu0 %v2866
    %2930 = vmatprep.subr.bf16.mxu0 0
    %2931 = vmatpush1.bf16.msra.mxu0 0
    %2932 = vmatprep.subr.bf16.mxu0 0
    %2933 = vmatpush1.bf16.msra.mxu0 0
    %2934 = vmatprep.subr.bf16.mxu0 0
    %2935 = vmatpush1.bf16.msra.mxu0 0
    %2936 = vmatprep.subr.bf16.mxu0 0
    %2937 = vmatpush1.bf16.msra.mxu0 0
    %2938 = vmatprep.subr.bf16.mxu0 0
    %2939 = vmatpush1.bf16.msra.mxu0 0
    %2940 = vmatprep.subr.bf16.mxu0 0
    %2941 = vmatpush1.bf16.msra.mxu0 0
    %2942 = vmatprep.subr.bf16.mxu0 0
    %2943 = vmatpush1.bf16.msra.mxu0 0
    %2944 = vmatprep.subr.bf16.mxu0 0
    %2945 = vmatpush1.bf16.msra.mxu0 0
    %2946 = vmatprep.mubr.bf16.mxu0 0
    %2947 = vmatmul.mubr.bf16.gmra.mrb[0].mxu0 %v2872
    %v2948 = vpop.f32.mrb[0].mxu0
    %v2949 = vadd.f32 0.0, %v2948
    %v2950 = vpop.f32.mrb[0].mxu0
    %v2951 = vadd.f32 0.0, %v2950
    %v2952 = vpop.f32.mrb[0].mxu0
    %v2953 = vpop.f32.mrb[0].mxu0
    %2954 = vdwg.mxu0
    %2955 = vmatprep.subr.bf16.mxu0 %v2813
    %2956 = vmatpush1.bf16.msra.mxu0 %v2812
    %2957 = vmatprep.subr.bf16.mxu0 %v2821
    %2958 = vmatpush1.bf16.msra.mxu0 %v2820
    %2959 = vmatprep.subr.bf16.mxu0 %v2829
    %2960 = vmatpush1.bf16.msra.mxu0 %v2828
    %2961 = vmatprep.subr.bf16.mxu0 %v2837
    %2962 = vmatpush1.bf16.msra.mxu0 %v2836
    %2963 = vmatprep.subr.bf16.mxu0 %v2845
    %2964 = vmatpush1.bf16.msra.mxu0 %v2844
    %2965 = vmatprep.subr.bf16.mxu0 %v2853
    %2966 = vmatpush1.bf16.msra.mxu0 %v2852
    %2967 = vmatprep.subr.bf16.mxu0 %v2861
    %2968 = vmatpush1.bf16.msra.mxu0 %v2860
    %2969 = vmatprep.subr.bf16.mxu0 %v2869
    %2970 = vmatpush1.bf16.msra.mxu0 %v2868
    %2971 = vmatprep.subr.bf16.mxu0 0
    %2972 = vmatpush1.bf16.msra.mxu0 0
    %2973 = vmatprep.subr.bf16.mxu0 0
    %2974 = vmatpush1.bf16.msra.mxu0 0
    %2975 = vmatprep.subr.bf16.mxu0 0
    %2976 = vmatpush1.bf16.msra.mxu0 0
    %2977 = vmatprep.subr.bf16.mxu0 0
    %2978 = vmatpush1.bf16.msra.mxu0 0
    %2979 = vmatprep.subr.bf16.mxu0 0
    %2980 = vmatpush1.bf16.msra.mxu0 0
    %2981 = vmatprep.subr.bf16.mxu0 0
    %2982 = vmatpush1.bf16.msra.mxu0 0
    %2983 = vmatprep.subr.bf16.mxu0 0
    %2984 = vmatpush1.bf16.msra.mxu0 0
    %2985 = vmatprep.subr.bf16.mxu0 0
    %2986 = vmatpush1.bf16.msra.mxu0 0
    %2987 = vmatprep.mubr.bf16.mxu0 0
    %2988 = vmatmul.mubr.bf16.gmra.mrb[0].mxu0 %v2872
    %v2989 = vpop.f32.mrb[0].mxu0
    %v2990 = vadd.f32 0.0, %v2989
    %v2991 = vpop.f32.mrb[0].mxu0
    %v2992 = vadd.f32 0.0, %v2991
    %v2993 = vpop.f32.mrb[0].mxu0
    %v2994 = vpop.f32.mrb[0].mxu0
    %2995 = vdwg.mxu0
    %2996 = vmatprep.subr.bf16.mxu0 %v2815
    %2997 = vmatpush1.bf16.msra.mxu0 %v2814
    %2998 = vmatprep.subr.bf16.mxu0 %v2823
    %2999 = vmatpush1.bf16.msra.mxu0 %v2822
    %3000 = vmatprep.subr.bf16.mxu0 %v2831
    %3001 = vmatpush1.bf16.msra.mxu0 %v2830
    %3002 = vmatprep.subr.bf16.mxu0 %v2839
    %3003 = vmatpush1.bf16.msra.mxu0 %v2838
    %3004 = vmatprep.subr.bf16.mxu0 %v2847
    %3005 = vmatpush1.bf16.msra.mxu0 %v2846
    %3006 = vmatprep.subr.bf16.mxu0 %v2855
    %3007 = vmatpush1.bf16.msra.mxu0 %v2854
    %3008 = vmatprep.subr.bf16.mxu0 %v2863
    %3009 = vmatpush1.bf16.msra.mxu0 %v2862
    %3010 = vmatprep.subr.bf16.mxu0 %v2871
    %3011 = vmatpush1.bf16.msra.mxu0 %v2870
    %3012 = vmatprep.subr.bf16.mxu0 0
    %3013 = vmatpush1.bf16.msra.mxu0 0
    %3014 = vmatprep.subr.bf16.mxu0 0
    %3015 = vmatpush1.bf16.msra.mxu0 0
    %3016 = vmatprep.subr.bf16.mxu0 0
    %3017 = vmatpush1.bf16.msra.mxu0 0
    %3018 = vmatprep.subr.bf16.mxu0 0
    %3019 = vmatpush1.bf16.msra.mxu0 0
    %3020 = vmatprep.subr.bf16.mxu0 0
    %3021 = vmatpush1.bf16.msra.mxu0 0
    %3022 = vmatprep.subr.bf16.mxu0 0
    %3023 = vmatpush1.bf16.msra.mxu0 0
    %3024 = vmatprep.subr.bf16.mxu0 0
    %3025 = vmatpush1.bf16.msra.mxu0 0
    %3026 = vmatprep.subr.bf16.mxu0 0
    %3027 = vmatpush1.bf16.msra.mxu0 0
    %3028 = vmatprep.mubr.bf16.mxu0 0
    %3029 = vmatmul.mubr.bf16.gmra.mrb[0].mxu0 %v2872
    %v3030 = vpop.f32.mrb[0].mxu0
    %v3031 = vadd.f32 0.0, %v3030
    %v3032 = vpop.f32.mrb[0].mxu0
    %v3033 = vadd.f32 0.0, %v3032
    %v3034 = vpop.f32.mrb[0].mxu0
    %v3035 = vpop.f32.mrb[0].mxu0
    %3036 = vdwg.mxu0
    %v3037 = vadd.f32 %v2794, %v2908
    %v3038 = vadd.f32 %v2795, %v2910
    %v3039 = vadd.f32 %v2796, %v2949
    %v3040 = vadd.f32 %v2797, %v2951
    %v3041 = vadd.f32 %v2798, %v2990
    %v3042 = vadd.f32 %v2799, %v2992
    %v3043 = vadd.f32 %v2800, %v3031
    %v3044 = vadd.f32 %v2801, %v3033
    %v3046 = vrot.slane %v588, 1
    %v3048 = vsel %vm884, %v3046, %v876
    %v3049 = vld [vmem:[#allocation2 + $0x1200] sm:$0xff]
    %v3050 = vld [vmem:[#allocation2 + $0x1208] sm:$0xff]
    %v3051 = vld [vmem:[#allocation2 + $0x1210] sm:$0xff]
    %v3052 = vld [vmem:[#allocation2 + $0x1218] sm:$0xff]
    %v3053 = vld [vmem:[#allocation2 + $0x1220] sm:$0xff]
    %v3054 = vld [vmem:[#allocation2 + $0x1228] sm:$0xff]
    %v3055 = vld [vmem:[#allocation2 + $0x1230] sm:$0xff]
    %v3056 = vld [vmem:[#allocation2 + $0x1238] sm:$0xff]
    %v3057 = vld [vmem:[#allocation2 + $0x1240] sm:$0xff]
    %v3058 = vld [vmem:[#allocation2 + $0x1248] sm:$0xff]
    %v3059 = vld [vmem:[#allocation2 + $0x1250] sm:$0xff]
    %v3060 = vld [vmem:[#allocation2 + $0x1258] sm:$0xff]
    %v3061 = vld [vmem:[#allocation2 + $0x1260] sm:$0xff]
    %v3062 = vld [vmem:[#allocation2 + $0x1268] sm:$0xff]
    %v3063 = vld [vmem:[#allocation2 + $0x1270] sm:$0xff]
    %v3064 = vld [vmem:[#allocation2 + $0x1278] sm:$0xff]
    %v3065 = vld [vmem:[#allocation2 + $0x1280] sm:$0xff]
    %v3066 = vld [vmem:[#allocation2 + $0x1288] sm:$0xff]
    %v3067 = vld [vmem:[#allocation2 + $0x1290] sm:$0xff]
    %v3068 = vld [vmem:[#allocation2 + $0x1298] sm:$0xff]
    %v3069 = vld [vmem:[#allocation2 + $0x12a0] sm:$0xff]
    %v3070 = vld [vmem:[#allocation2 + $0x12a8] sm:$0xff]
    %v3071 = vld [vmem:[#allocation2 + $0x12b0] sm:$0xff]
    %v3072 = vld [vmem:[#allocation2 + $0x12b8] sm:$0xff]
    %v3073 = vld [vmem:[#allocation2 + $0x12c0] sm:$0xff]
    %v3074 = vld [vmem:[#allocation2 + $0x12c8] sm:$0xff]
    %v3075 = vld [vmem:[#allocation2 + $0x12d0] sm:$0xff]
    %v3076 = vld [vmem:[#allocation2 + $0x12d8] sm:$0xff]
    %v3077 = vld [vmem:[#allocation2 + $0x12e0] sm:$0xff]
    %v3078 = vld [vmem:[#allocation2 + $0x12e8] sm:$0xff]
    %v3079 = vld [vmem:[#allocation2 + $0x12f0] sm:$0xff]
    %v3080 = vld [vmem:[#allocation2 + $0x12f8] sm:$0xff]
    %v3081 = vld [vmem:[#allocation2 + $0x1300] sm:$0xff]
    %v3082 = vld [vmem:[#allocation2 + $0x1308] sm:$0xff]
    %v3083 = vld [vmem:[#allocation2 + $0x1310] sm:$0xff]
    %v3084 = vld [vmem:[#allocation2 + $0x1318] sm:$0xff]
    %v3085 = vld [vmem:[#allocation2 + $0x1320] sm:$0xff]
    %v3086 = vld [vmem:[#allocation2 + $0x1328] sm:$0xff]
    %v3087 = vld [vmem:[#allocation2 + $0x1330] sm:$0xff]
    %v3088 = vld [vmem:[#allocation2 + $0x1338] sm:$0xff]
    %v3089 = vld [vmem:[#allocation2 + $0x1340] sm:$0xff]
    %v3090 = vld [vmem:[#allocation2 + $0x1348] sm:$0xff]
    %v3091 = vld [vmem:[#allocation2 + $0x1350] sm:$0xff]
    %v3092 = vld [vmem:[#allocation2 + $0x1358] sm:$0xff]
    %v3093 = vld [vmem:[#allocation2 + $0x1360] sm:$0xff]
    %v3094 = vld [vmem:[#allocation2 + $0x1368] sm:$0xff]
    %v3095 = vld [vmem:[#allocation2 + $0x1370] sm:$0xff]
    %v3096 = vld [vmem:[#allocation2 + $0x1378] sm:$0xff]
    %v3097 = vld [vmem:[#allocation2 + $0x1380] sm:$0xff]
    %v3098 = vld [vmem:[#allocation2 + $0x1388] sm:$0xff]
    %v3099 = vld [vmem:[#allocation2 + $0x1390] sm:$0xff]
    %v3100 = vld [vmem:[#allocation2 + $0x1398] sm:$0xff]
    %v3101 = vld [vmem:[#allocation2 + $0x13a0] sm:$0xff]
    %v3102 = vld [vmem:[#allocation2 + $0x13a8] sm:$0xff]
    %v3103 = vld [vmem:[#allocation2 + $0x13b0] sm:$0xff]
    %v3104 = vld [vmem:[#allocation2 + $0x13b8] sm:$0xff]
    %v3105 = vld [vmem:[#allocation2 + $0x13c0] sm:$0xff]
    %v3106 = vld [vmem:[#allocation2 + $0x13c8] sm:$0xff]
    %v3107 = vld [vmem:[#allocation2 + $0x13d0] sm:$0xff]
    %v3108 = vld [vmem:[#allocation2 + $0x13d8] sm:$0xff]
    %v3109 = vld [vmem:[#allocation2 + $0x13e0] sm:$0xff]
    %v3110 = vld [vmem:[#allocation2 + $0x13e8] sm:$0xff]
    %v3111 = vld [vmem:[#allocation2 + $0x13f0] sm:$0xff]
    %v3112 = vld [vmem:[#allocation2 + $0x13f8] sm:$0xff]
    %v3113 = vpack.c.bf16 %v3048, %v3048
    %3114 = vmatprep.subr.bf16.mxu0 %v3050
    %3115 = vmatpush1.bf16.msra.mxu0 %v3049
    %3116 = vmatprep.subr.bf16.mxu0 %v3058
    %3117 = vmatpush1.bf16.msra.mxu0 %v3057
    %3118 = vmatprep.subr.bf16.mxu0 %v3066
    %3119 = vmatpush1.bf16.msra.mxu0 %v3065
    %3120 = vmatprep.subr.bf16.mxu0 %v3074
    %3121 = vmatpush1.bf16.msra.mxu0 %v3073
    %3122 = vmatprep.subr.bf16.mxu0 %v3082
    %3123 = vmatpush1.bf16.msra.mxu0 %v3081
    %3124 = vmatprep.subr.bf16.mxu0 %v3090
    %3125 = vmatpush1.bf16.msra.mxu0 %v3089
    %3126 = vmatprep.subr.bf16.mxu0 %v3098
    %3127 = vmatpush1.bf16.msra.mxu0 %v3097
    %3128 = vmatprep.subr.bf16.mxu0 %v3106
    %3129 = vmatpush1.bf16.msra.mxu0 %v3105
    %3130 = vmatprep.subr.bf16.mxu0 0
    %3131 = vmatpush1.bf16.msra.mxu0 0
    %3132 = vmatprep.subr.bf16.mxu0 0
    %3133 = vmatpush1.bf16.msra.mxu0 0
    %3134 = vmatprep.subr.bf16.mxu0 0
    %3135 = vmatpush1.bf16.msra.mxu0 0
    %3136 = vmatprep.subr.bf16.mxu0 0
    %3137 = vmatpush1.bf16.msra.mxu0 0
    %3138 = vmatprep.subr.bf16.mxu0 0
    %3139 = vmatpush1.bf16.msra.mxu0 0
    %3140 = vmatprep.subr.bf16.mxu0 0
    %3141 = vmatpush1.bf16.msra.mxu0 0
    %3142 = vmatprep.subr.bf16.mxu0 0
    %3143 = vmatpush1.bf16.msra.mxu0 0
    %3144 = vmatprep.subr.bf16.mxu0 0
    %3145 = vmatpush1.bf16.msra.mxu0 0
    %3146 = vmatprep.mubr.bf16.mxu0 0
    %3147 = vmatmul.mubr.bf16.gmra.mrb[0].mxu0 %v3113
    %v3148 = vpop.f32.mrb[0].mxu0
    %v3149 = vadd.f32 0.0, %v3148
    %v3150 = vpop.f32.mrb[0].mxu0
    %v3151 = vadd.f32 0.0, %v3150
    %v3152 = vpop.f32.mrb[0].mxu0
    %v3153 = vpop.f32.mrb[0].mxu0
    %3154 = vdwg.mxu0
    %3155 = vmatprep.subr.bf16.mxu0 %v3052
    %3156 = vmatpush1.bf16.msra.mxu0 %v3051
    %3157 = vmatprep.subr.bf16.mxu0 %v3060
    %3158 = vmatpush1.bf16.msra.mxu0 %v3059
    %3159 = vmatprep.subr.bf16.mxu0 %v3068
    %3160 = vmatpush1.bf16.msra.mxu0 %v3067
    %3161 = vmatprep.subr.bf16.mxu0 %v3076
    %3162 = vmatpush1.bf16.msra.mxu0 %v3075
    %3163 = vmatprep.subr.bf16.mxu0 %v3084
    %3164 = vmatpush1.bf16.msra.mxu0 %v3083
    %3165 = vmatprep.subr.bf16.mxu0 %v3092
    %3166 = vmatpush1.bf16.msra.mxu0 %v3091
    %3167 = vmatprep.subr.bf16.mxu0 %v3100
    %3168 = vmatpush1.bf16.msra.mxu0 %v3099
    %3169 = vmatprep.subr.bf16.mxu0 %v3108
    %3170 = vmatpush1.bf16.msra.mxu0 %v3107
    %3171 = vmatprep.subr.bf16.mxu0 0
    %3172 = vmatpush1.bf16.msra.mxu0 0
    %3173 = vmatprep.subr.bf16.mxu0 0
    %3174 = vmatpush1.bf16.msra.mxu0 0
    %3175 = vmatprep.subr.bf16.mxu0 0
    %3176 = vmatpush1.bf16.msra.mxu0 0
    %3177 = vmatprep.subr.bf16.mxu0 0
    %3178 = vmatpush1.bf16.msra.mxu0 0
    %3179 = vmatprep.subr.bf16.mxu0 0
    %3180 = vmatpush1.bf16.msra.mxu0 0
    %3181 = vmatprep.subr.bf16.mxu0 0
    %3182 = vmatpush1.bf16.msra.mxu0 0
    %3183 = vmatprep.subr.bf16.mxu0 0
    %3184 = vmatpush1.bf16.msra.mxu0 0
    %3185 = vmatprep.subr.bf16.mxu0 0
    %3186 = vmatpush1.bf16.msra.mxu0 0
    %3187 = vmatprep.mubr.bf16.mxu0 0
    %3188 = vmatmul.mubr.bf16.gmra.mrb[0].mxu0 %v3113
    %v3189 = vpop.f32.mrb[0].mxu0
    %v3190 = vadd.f32 0.0, %v3189
    %v3191 = vpop.f32.mrb[0].mxu0
    %v3192 = vadd.f32 0.0, %v3191
    %v3193 = vpop.f32.mrb[0].mxu0
    %v3194 = vpop.f32.mrb[0].mxu0
    %3195 = vdwg.mxu0
    %3196 = vmatprep.subr.bf16.mxu0 %v3054
    %3197 = vmatpush1.bf16.msra.mxu0 %v3053
    %3198 = vmatprep.subr.bf16.mxu0 %v3062
    %3199 = vmatpush1.bf16.msra.mxu0 %v3061
    %3200 = vmatprep.subr.bf16.mxu0 %v3070
    %3201 = vmatpush1.bf16.msra.mxu0 %v3069
    %3202 = vmatprep.subr.bf16.mxu0 %v3078
    %3203 = vmatpush1.bf16.msra.mxu0 %v3077
    %3204 = vmatprep.subr.bf16.mxu0 %v3086
    %3205 = vmatpush1.bf16.msra.mxu0 %v3085
    %3206 = vmatprep.subr.bf16.mxu0 %v3094
    %3207 = vmatpush1.bf16.msra.mxu0 %v3093
    %3208 = vmatprep.subr.bf16.mxu0 %v3102
    %3209 = vmatpush1.bf16.msra.mxu0 %v3101
    %3210 = vmatprep.subr.bf16.mxu0 %v3110
    %3211 = vmatpush1.bf16.msra.mxu0 %v3109
    %3212 = vmatprep.subr.bf16.mxu0 0
    %3213 = vmatpush1.bf16.msra.mxu0 0
    %3214 = vmatprep.subr.bf16.mxu0 0
    %3215 = vmatpush1.bf16.msra.mxu0 0
    %3216 = vmatprep.subr.bf16.mxu0 0
    %3217 = vmatpush1.bf16.msra.mxu0 0
    %3218 = vmatprep.subr.bf16.mxu0 0
    %3219 = vmatpush1.bf16.msra.mxu0 0
    %3220 = vmatprep.subr.bf16.mxu0 0
    %3221 = vmatpush1.bf16.msra.mxu0 0
    %3222 = vmatprep.subr.bf16.mxu0 0
    %3223 = vmatpush1.bf16.msra.mxu0 0
    %3224 = vmatprep.subr.bf16.mxu0 0
    %3225 = vmatpush1.bf16.msra.mxu0 0
    %3226 = vmatprep.subr.bf16.mxu0 0
    %3227 = vmatpush1.bf16.msra.mxu0 0
    %3228 = vmatprep.mubr.bf16.mxu0 0
    %3229 = vmatmul.mubr.bf16.gmra.mrb[0].mxu0 %v3113
    %v3230 = vpop.f32.mrb[0].mxu0
    %v3231 = vadd.f32 0.0, %v3230
    %v3232 = vpop.f32.mrb[0].mxu0
    %v3233 = vadd.f32 0.0, %v3232
    %v3234 = vpop.f32.mrb[0].mxu0
    %v3235 = vpop.f32.mrb[0].mxu0
    %3236 = vdwg.mxu0
    %3237 = vmatprep.subr.bf16.mxu0 %v3056
    %3238 = vmatpush1.bf16.msra.mxu0 %v3055
    %3239 = vmatprep.subr.bf16.mxu0 %v3064
    %3240 = vmatpush1.bf16.msra.mxu0 %v3063
    %3241 = vmatprep.subr.bf16.mxu0 %v3072
    %3242 = vmatpush1.bf16.msra.mxu0 %v3071
    %3243 = vmatprep.subr.bf16.mxu0 %v3080
    %3244 = vmatpush1.bf16.msra.mxu0 %v3079
    %3245 = vmatprep.subr.bf16.mxu0 %v3088
    %3246 = vmatpush1.bf16.msra.mxu0 %v3087
    %3247 = vmatprep.subr.bf16.mxu0 %v3096
    %3248 = vmatpush1.bf16.msra.mxu0 %v3095
    %3249 = vmatprep.subr.bf16.mxu0 %v3104
    %3250 = vmatpush1.bf16.msra.mxu0 %v3103
    %3251 = vmatprep.subr.bf16.mxu0 %v3112
    %3252 = vmatpush1.bf16.msra.mxu0 %v3111
    %3253 = vmatprep.subr.bf16.mxu0 0
    %3254 = vmatpush1.bf16.msra.mxu0 0
    %3255 = vmatprep.subr.bf16.mxu0 0
    %3256 = vmatpush1.bf16.msra.mxu0 0
    %3257 = vmatprep.subr.bf16.mxu0 0
    %3258 = vmatpush1.bf16.msra.mxu0 0
    %3259 = vmatprep.subr.bf16.mxu0 0
    %3260 = vmatpush1.bf16.msra.mxu0 0
    %3261 = vmatprep.subr.bf16.mxu0 0
    %3262 = vmatpush1.bf16.msra.mxu0 0
    %3263 = vmatprep.subr.bf16.mxu0 0
    %3264 = vmatpush1.bf16.msra.mxu0 0
    %3265 = vmatprep.subr.bf16.mxu0 0
    %3266 = vmatpush1.bf16.msra.mxu0 0
    %3267 = vmatprep.subr.bf16.mxu0 0
    %3268 = vmatpush1.bf16.msra.mxu0 0
    %3269 = vmatprep.mubr.bf16.mxu0 0
    %3270 = vmatmul.mubr.bf16.gmra.mrb[0].mxu0 %v3113
    %v3271 = vpop.f32.mrb[0].mxu0
    %v3272 = vadd.f32 0.0, %v3271
    %v3273 = vpop.f32.mrb[0].mxu0
    %v3274 = vadd.f32 0.0, %v3273
    %v3275 = vpop.f32.mrb[0].mxu0
    %v3276 = vpop.f32.mrb[0].mxu0
    %3277 = vdwg.mxu0
    %v3278 = vadd.f32 %v3037, %v3149
    %v3279 = vadd.f32 %v3038, %v3151
    %v3280 = vadd.f32 %v3039, %v3190
    %v3281 = vadd.f32 %v3040, %v3192
    %v3282 = vadd.f32 %v3041, %v3231
    %v3283 = vadd.f32 %v3042, %v3233
    %v3284 = vadd.f32 %v3043, %v3272
    %v3285 = vadd.f32 %v3044, %v3274
    %v3286 = vrot.slane %v588, 2
    %v3288 = vrot.slane %v876, 1
    %v3290 = vsel %vm884, %v3286, %v3288
    %v3291 = vld [vmem:[#allocation2 + $0x1400] sm:$0xff]
    %v3292 = vld [vmem:[#allocation2 + $0x1408] sm:$0xff]
    %v3293 = vld [vmem:[#allocation2 + $0x1410] sm:$0xff]
    %v3294 = vld [vmem:[#allocation2 + $0x1418] sm:$0xff]
    %v3295 = vld [vmem:[#allocation2 + $0x1420] sm:$0xff]
    %v3296 = vld [vmem:[#allocation2 + $0x1428] sm:$0xff]
    %v3297 = vld [vmem:[#allocation2 + $0x1430] sm:$0xff]
    %v3298 = vld [vmem:[#allocation2 + $0x1438] sm:$0xff]
    %v3299 = vld [vmem:[#allocation2 + $0x1440] sm:$0xff]
    %v3300 = vld [vmem:[#allocation2 + $0x1448] sm:$0xff]
    %v3301 = vld [vmem:[#allocation2 + $0x1450] sm:$0xff]
    %v3302 = vld [vmem:[#allocation2 + $0x1458] sm:$0xff]
    %v3303 = vld [vmem:[#allocation2 + $0x1460] sm:$0xff]
    %v3304 = vld [vmem:[#allocation2 + $0x1468] sm:$0xff]
    %v3305 = vld [vmem:[#allocation2 + $0x1470] sm:$0xff]
    %v3306 = vld [vmem:[#allocation2 + $0x1478] sm:$0xff]
    %v3307 = vld [vmem:[#allocation2 + $0x1480] sm:$0xff]
    %v3308 = vld [vmem:[#allocation2 + $0x1488] sm:$0xff]
    %v3309 = vld [vmem:[#allocation2 + $0x1490] sm:$0xff]
    %v3310 = vld [vmem:[#allocation2 + $0x1498] sm:$0xff]
    %v3311 = vld [vmem:[#allocation2 + $0x14a0] sm:$0xff]
    %v3312 = vld [vmem:[#allocation2 + $0x14a8] sm:$0xff]
    %v3313 = vld [vmem:[#allocation2 + $0x14b0] sm:$0xff]
    %v3314 = vld [vmem:[#allocation2 + $0x14b8] sm:$0xff]
    %v3315 = vld [vmem:[#allocation2 + $0x14c0] sm:$0xff]
    %v3316 = vld [vmem:[#allocation2 + $0x14c8] sm:$0xff]
    %v3317 = vld [vmem:[#allocation2 + $0x14d0] sm:$0xff]
    %v3318 = vld [vmem:[#allocation2 + $0x14d8] sm:$0xff]
    %v3319 = vld [vmem:[#allocation2 + $0x14e0] sm:$0xff]
    %v3320 = vld [vmem:[#allocation2 + $0x14e8] sm:$0xff]
    %v3321 = vld [vmem:[#allocation2 + $0x14f0] sm:$0xff]
    %v3322 = vld [vmem:[#allocation2 + $0x14f8] sm:$0xff]
    %v3323 = vld [vmem:[#allocation2 + $0x1500] sm:$0xff]
    %v3324 = vld [vmem:[#allocation2 + $0x1508] sm:$0xff]
    %v3325 = vld [vmem:[#allocation2 + $0x1510] sm:$0xff]
    %v3326 = vld [vmem:[#allocation2 + $0x1518] sm:$0xff]
    %v3327 = vld [vmem:[#allocation2 + $0x1520] sm:$0xff]
    %v3328 = vld [vmem:[#allocation2 + $0x1528] sm:$0xff]
    %v3329 = vld [vmem:[#allocation2 + $0x1530] sm:$0xff]
    %v3330 = vld [vmem:[#allocation2 + $0x1538] sm:$0xff]
    %v3331 = vld [vmem:[#allocation2 + $0x1540] sm:$0xff]
    %v3332 = vld [vmem:[#allocation2 + $0x1548] sm:$0xff]
    %v3333 = vld [vmem:[#allocation2 + $0x1550] sm:$0xff]
    %v3334 = vld [vmem:[#allocation2 + $0x1558] sm:$0xff]
    %v3335 = vld [vmem:[#allocation2 + $0x1560] sm:$0xff]
    %v3336 = vld [vmem:[#allocation2 + $0x1568] sm:$0xff]
    %v3337 = vld [vmem:[#allocation2 + $0x1570] sm:$0xff]
    %v3338 = vld [vmem:[#allocation2 + $0x1578] sm:$0xff]
    %v3339 = vld [vmem:[#allocation2 + $0x1580] sm:$0xff]
    %v3340 = vld [vmem:[#allocation2 + $0x1588] sm:$0xff]
    %v3341 = vld [vmem:[#allocation2 + $0x1590] sm:$0xff]
    %v3342 = vld [vmem:[#allocation2 + $0x1598] sm:$0xff]
    %v3343 = vld [vmem:[#allocation2 + $0x15a0] sm:$0xff]
    %v3344 = vld [vmem:[#allocation2 + $0x15a8] sm:$0xff]
    %v3345 = vld [vmem:[#allocation2 + $0x15b0] sm:$0xff]
    %v3346 = vld [vmem:[#allocation2 + $0x15b8] sm:$0xff]
    %v3347 = vld [vmem:[#allocation2 + $0x15c0] sm:$0xff]
    %v3348 = vld [vmem:[#allocation2 + $0x15c8] sm:$0xff]
    %v3349 = vld [vmem:[#allocation2 + $0x15d0] sm:$0xff]
    %v3350 = vld [vmem:[#allocation2 + $0x15d8] sm:$0xff]
    %v3351 = vld [vmem:[#allocation2 + $0x15e0] sm:$0xff]
    %v3352 = vld [vmem:[#allocation2 + $0x15e8] sm:$0xff]
    %v3353 = vld [vmem:[#allocation2 + $0x15f0] sm:$0xff]
    %v3354 = vld [vmem:[#allocation2 + $0x15f8] sm:$0xff]
    %v3355 = vpack.c.bf16 %v3290, %v3290
    %3356 = vmatprep.subr.bf16.mxu0 %v3292
    %3357 = vmatpush1.bf16.msra.mxu0 %v3291
    %3358 = vmatprep.subr.bf16.mxu0 %v3300
    %3359 = vmatpush1.bf16.msra.mxu0 %v3299
    %3360 = vmatprep.subr.bf16.mxu0 %v3308
    %3361 = vmatpush1.bf16.msra.mxu0 %v3307
    %3362 = vmatprep.subr.bf16.mxu0 %v3316
    %3363 = vmatpush1.bf16.msra.mxu0 %v3315
    %3364 = vmatprep.subr.bf16.mxu0 %v3324
    %3365 = vmatpush1.bf16.msra.mxu0 %v3323
    %3366 = vmatprep.subr.bf16.mxu0 %v3332
    %3367 = vmatpush1.bf16.msra.mxu0 %v3331
    %3368 = vmatprep.subr.bf16.mxu0 %v3340
    %3369 = vmatpush1.bf16.msra.mxu0 %v3339
    %3370 = vmatprep.subr.bf16.mxu0 %v3348
    %3371 = vmatpush1.bf16.msra.mxu0 %v3347
    %3372 = vmatprep.subr.bf16.mxu0 0
    %3373 = vmatpush1.bf16.msra.mxu0 0
    %3374 = vmatprep.subr.bf16.mxu0 0
    %3375 = vmatpush1.bf16.msra.mxu0 0
    %3376 = vmatprep.subr.bf16.mxu0 0
    %3377 = vmatpush1.bf16.msra.mxu0 0
    %3378 = vmatprep.subr.bf16.mxu0 0
    %3379 = vmatpush1.bf16.msra.mxu0 0
    %3380 = vmatprep.subr.bf16.mxu0 0
    %3381 = vmatpush1.bf16.msra.mxu0 0
    %3382 = vmatprep.subr.bf16.mxu0 0
    %3383 = vmatpush1.bf16.msra.mxu0 0
    %3384 = vmatprep.subr.bf16.mxu0 0
    %3385 = vmatpush1.bf16.msra.mxu0 0
    %3386 = vmatprep.subr.bf16.mxu0 0
    %3387 = vmatpush1.bf16.msra.mxu0 0
    %3388 = vmatprep.mubr.bf16.mxu0 0
    %3389 = vmatmul.mubr.bf16.gmra.mrb[0].mxu0 %v3355
    %v3390 = vpop.f32.mrb[0].mxu0
    %v3391 = vadd.f32 0.0, %v3390
    %v3392 = vpop.f32.mrb[0].mxu0
    %v3393 = vadd.f32 0.0, %v3392
    %v3394 = vpop.f32.mrb[0].mxu0
    %v3395 = vpop.f32.mrb[0].mxu0
    %3396 = vdwg.mxu0
    %3397 = vmatprep.subr.bf16.mxu0 %v3294
    %3398 = vmatpush1.bf16.msra.mxu0 %v3293
    %3399 = vmatprep.subr.bf16.mxu0 %v3302
    %3400 = vmatpush1.bf16.msra.mxu0 %v3301
    %3401 = vmatprep.subr.bf16.mxu0 %v3310
    %3402 = vmatpush1.bf16.msra.mxu0 %v3309
    %3403 = vmatprep.subr.bf16.mxu0 %v3318
    %3404 = vmatpush1.bf16.msra.mxu0 %v3317
    %3405 = vmatprep.subr.bf16.mxu0 %v3326
    %3406 = vmatpush1.bf16.msra.mxu0 %v3325
    %3407 = vmatprep.subr.bf16.mxu0 %v3334
    %3408 = vmatpush1.bf16.msra.mxu0 %v3333
    %3409 = vmatprep.subr.bf16.mxu0 %v3342
    %3410 = vmatpush1.bf16.msra.mxu0 %v3341
    %3411 = vmatprep.subr.bf16.mxu0 %v3350
    %3412 = vmatpush1.bf16.msra.mxu0 %v3349
    %3413 = vmatprep.subr.bf16.mxu0 0
    %3414 = vmatpush1.bf16.msra.mxu0 0
    %3415 = vmatprep.subr.bf16.mxu0 0
    %3416 = vmatpush1.bf16.msra.mxu0 0
    %3417 = vmatprep.subr.bf16.mxu0 0
    %3418 = vmatpush1.bf16.msra.mxu0 0
    %3419 = vmatprep.subr.bf16.mxu0 0
    %3420 = vmatpush1.bf16.msra.mxu0 0
    %3421 = vmatprep.subr.bf16.mxu0 0
    %3422 = vmatpush1.bf16.msra.mxu0 0
    %3423 = vmatprep.subr.bf16.mxu0 0
    %3424 = vmatpush1.bf16.msra.mxu0 0
    %3425 = vmatprep.subr.bf16.mxu0 0
    %3426 = vmatpush1.bf16.msra.mxu0 0
    %3427 = vmatprep.subr.bf16.mxu0 0
    %3428 = vmatpush1.bf16.msra.mxu0 0
    %3429 = vmatprep.mubr.bf16.mxu0 0
    %3430 = vmatmul.mubr.bf16.gmra.mrb[0].mxu0 %v3355
    %v3431 = vpop.f32.mrb[0].mxu0
    %v3432 = vadd.f32 0.0, %v3431
    %v3433 = vpop.f32.mrb[0].mxu0
    %v3434 = vadd.f32 0.0, %v3433
    %v3435 = vpop.f32.mrb[0].mxu0
    %v3436 = vpop.f32.mrb[0].mxu0
    %3437 = vdwg.mxu0
    %3438 = vmatprep.subr.bf16.mxu0 %v3296
    %3439 = vmatpush1.bf16.msra.mxu0 %v3295
    %3440 = vmatprep.subr.bf16.mxu0 %v3304
    %3441 = vmatpush1.bf16.msra.mxu0 %v3303
    %3442 = vmatprep.subr.bf16.mxu0 %v3312
    %3443 = vmatpush1.bf16.msra.mxu0 %v3311
    %3444 = vmatprep.subr.bf16.mxu0 %v3320
    %3445 = vmatpush1.bf16.msra.mxu0 %v3319
    %3446 = vmatprep.subr.bf16.mxu0 %v3328
    %3447 = vmatpush1.bf16.msra.mxu0 %v3327
    %3448 = vmatprep.subr.bf16.mxu0 %v3336
    %3449 = vmatpush1.bf16.msra.mxu0 %v3335
    %3450 = vmatprep.subr.bf16.mxu0 %v3344
    %3451 = vmatpush1.bf16.msra.mxu0 %v3343
    %3452 = vmatprep.subr.bf16.mxu0 %v3352
    %3453 = vmatpush1.bf16.msra.mxu0 %v3351
    %3454 = vmatprep.subr.bf16.mxu0 0
    %3455 = vmatpush1.bf16.msra.mxu0 0
    %3456 = vmatprep.subr.bf16.mxu0 0
    %3457 = vmatpush1.bf16.msra.mxu0 0
    %3458 = vmatprep.subr.bf16.mxu0 0
    %3459 = vmatpush1.bf16.msra.mxu0 0
    %3460 = vmatprep.subr.bf16.mxu0 0
    %3461 = vmatpush1.bf16.msra.mxu0 0
    %3462 = vmatprep.subr.bf16.mxu0 0
    %3463 = vmatpush1.bf16.msra.mxu0 0
    %3464 = vmatprep.subr.bf16.mxu0 0
    %3465 = vmatpush1.bf16.msra.mxu0 0
    %3466 = vmatprep.subr.bf16.mxu0 0
    %3467 = vmatpush1.bf16.msra.mxu0 0
    %3468 = vmatprep.subr.bf16.mxu0 0
    %3469 = vmatpush1.bf16.msra.mxu0 0
    %3470 = vmatprep.mubr.bf16.mxu0 0
    %3471 = vmatmul.mubr.bf16.gmra.mrb[0].mxu0 %v3355
    %v3472 = vpop.f32.mrb[0].mxu0
    %v3473 = vadd.f32 0.0, %v3472
    %v3474 = vpop.f32.mrb[0].mxu0
    %v3475 = vadd.f32 0.0, %v3474
    %v3476 = vpop.f32.mrb[0].mxu0
    %v3477 = vpop.f32.mrb[0].mxu0
    %3478 = vdwg.mxu0
    %3479 = vmatprep.subr.bf16.mxu0 %v3298
    %3480 = vmatpush1.bf16.msra.mxu0 %v3297
    %3481 = vmatprep.subr.bf16.mxu0 %v3306
    %3482 = vmatpush1.bf16.msra.mxu0 %v3305
    %3483 = vmatprep.subr.bf16.mxu0 %v3314
    %3484 = vmatpush1.bf16.msra.mxu0 %v3313
    %3485 = vmatprep.subr.bf16.mxu0 %v3322
    %3486 = vmatpush1.bf16.msra.mxu0 %v3321
    %3487 = vmatprep.subr.bf16.mxu0 %v3330
    %3488 = vmatpush1.bf16.msra.mxu0 %v3329
    %3489 = vmatprep.subr.bf16.mxu0 %v3338
    %3490 = vmatpush1.bf16.msra.mxu0 %v3337
    %3491 = vmatprep.subr.bf16.mxu0 %v3346
    %3492 = vmatpush1.bf16.msra.mxu0 %v3345
    %3493 = vmatprep.subr.bf16.mxu0 %v3354
    %3494 = vmatpush1.bf16.msra.mxu0 %v3353
    %3495 = vmatprep.subr.bf16.mxu0 0
    %3496 = vmatpush1.bf16.msra.mxu0 0
    %3497 = vmatprep.subr.bf16.mxu0 0
    %3498 = vmatpush1.bf16.msra.mxu0 0
    %3499 = vmatprep.subr.bf16.mxu0 0
    %3500 = vmatpush1.bf16.msra.mxu0 0
    %3501 = vmatprep.subr.bf16.mxu0 0
    %3502 = vmatpush1.bf16.msra.mxu0 0
    %3503 = vmatprep.subr.bf16.mxu0 0
    %3504 = vmatpush1.bf16.msra.mxu0 0
    %3505 = vmatprep.subr.bf16.mxu0 0
    %3506 = vmatpush1.bf16.msra.mxu0 0
    %3507 = vmatprep.subr.bf16.mxu0 0
    %3508 = vmatpush1.bf16.msra.mxu0 0
    %3509 = vmatprep.subr.bf16.mxu0 0
    %3510 = vmatpush1.bf16.msra.mxu0 0
    %3511 = vmatprep.mubr.bf16.mxu0 0
    %3512 = vmatmul.mubr.bf16.gmra.mrb[0].mxu0 %v3355
    %v3513 = vpop.f32.mrb[0].mxu0
    %v3514 = vadd.f32 0.0, %v3513
    %v3515 = vpop.f32.mrb[0].mxu0
    %v3516 = vadd.f32 0.0, %v3515
    %v3517 = vpop.f32.mrb[0].mxu0
    %v3518 = vpop.f32.mrb[0].mxu0
    %3519 = vdwg.mxu0
    %v3520 = vadd.f32 %v3278, %v3391
    %v3521 = vadd.f32 %v3279, %v3393
    %v3522 = vadd.f32 %v3280, %v3432
    %v3523 = vadd.f32 %v3281, %v3434
    %v3524 = vadd.f32 %v3282, %v3473
    %v3525 = vadd.f32 %v3283, %v3475
    %v3526 = vadd.f32 %v3284, %v3514
    %v3527 = vadd.f32 %v3285, %v3516
    %v3528 = vrot.slane %v588, 3
    %v3530 = vrot.slane %v876, 2
    %v3532 = vsel %vm884, %v3528, %v3530
    %v3533 = vld [vmem:[#allocation2 + $0x1600] sm:$0xff]
    %v3534 = vld [vmem:[#allocation2 + $0x1608] sm:$0xff]
    %v3535 = vld [vmem:[#allocation2 + $0x1610] sm:$0xff]
    %v3536 = vld [vmem:[#allocation2 + $0x1618] sm:$0xff]
    %v3537 = vld [vmem:[#allocation2 + $0x1620] sm:$0xff]
    %v3538 = vld [vmem:[#allocation2 + $0x1628] sm:$0xff]
    %v3539 = vld [vmem:[#allocation2 + $0x1630] sm:$0xff]
    %v3540 = vld [vmem:[#allocation2 + $0x1638] sm:$0xff]
    %v3541 = vld [vmem:[#allocation2 + $0x1640] sm:$0xff]
    %v3542 = vld [vmem:[#allocation2 + $0x1648] sm:$0xff]
    %v3543 = vld [vmem:[#allocation2 + $0x1650] sm:$0xff]
    %v3544 = vld [vmem:[#allocation2 + $0x1658] sm:$0xff]
    %v3545 = vld [vmem:[#allocation2 + $0x1660] sm:$0xff]
    %v3546 = vld [vmem:[#allocation2 + $0x1668] sm:$0xff]
    %v3547 = vld [vmem:[#allocation2 + $0x1670] sm:$0xff]
    %v3548 = vld [vmem:[#allocation2 + $0x1678] sm:$0xff]
    %v3549 = vld [vmem:[#allocation2 + $0x1680] sm:$0xff]
    %v3550 = vld [vmem:[#allocation2 + $0x1688] sm:$0xff]
    %v3551 = vld [vmem:[#allocation2 + $0x1690] sm:$0xff]
    %v3552 = vld [vmem:[#allocation2 + $0x1698] sm:$0xff]
    %v3553 = vld [vmem:[#allocation2 + $0x16a0] sm:$0xff]
    %v3554 = vld [vmem:[#allocation2 + $0x16a8] sm:$0xff]
    %v3555 = vld [vmem:[#allocation2 + $0x16b0] sm:$0xff]
    %v3556 = vld [vmem:[#allocation2 + $0x16b8] sm:$0xff]
    %v3557 = vld [vmem:[#allocation2 + $0x16c0] sm:$0xff]
    %v3558 = vld [vmem:[#allocation2 + $0x16c8] sm:$0xff]
    %v3559 = vld [vmem:[#allocation2 + $0x16d0] sm:$0xff]
    %v3560 = vld [vmem:[#allocation2 + $0x16d8] sm:$0xff]
    %v3561 = vld [vmem:[#allocation2 + $0x16e0] sm:$0xff]
    %v3562 = vld [vmem:[#allocation2 + $0x16e8] sm:$0xff]
    %v3563 = vld [vmem:[#allocation2 + $0x16f0] sm:$0xff]
    %v3564 = vld [vmem:[#allocation2 + $0x16f8] sm:$0xff]
    %v3565 = vld [vmem:[#allocation2 + $0x1700] sm:$0xff]
    %v3566 = vld [vmem:[#allocation2 + $0x1708] sm:$0xff]
    %v3567 = vld [vmem:[#allocation2 + $0x1710] sm:$0xff]
    %v3568 = vld [vmem:[#allocation2 + $0x1718] sm:$0xff]
    %v3569 = vld [vmem:[#allocation2 + $0x1720] sm:$0xff]
    %v3570 = vld [vmem:[#allocation2 + $0x1728] sm:$0xff]
    %v3571 = vld [vmem:[#allocation2 + $0x1730] sm:$0xff]
    %v3572 = vld [vmem:[#allocation2 + $0x1738] sm:$0xff]
    %v3573 = vld [vmem:[#allocation2 + $0x1740] sm:$0xff]
    %v3574 = vld [vmem:[#allocation2 + $0x1748] sm:$0xff]
    %v3575 = vld [vmem:[#allocation2 + $0x1750] sm:$0xff]
    %v3576 = vld [vmem:[#allocation2 + $0x1758] sm:$0xff]
    %v3577 = vld [vmem:[#allocation2 + $0x1760] sm:$0xff]
    %v3578 = vld [vmem:[#allocation2 + $0x1768] sm:$0xff]
    %v3579 = vld [vmem:[#allocation2 + $0x1770] sm:$0xff]
    %v3580 = vld [vmem:[#allocation2 + $0x1778] sm:$0xff]
    %v3581 = vld [vmem:[#allocation2 + $0x1780] sm:$0xff]
    %v3582 = vld [vmem:[#allocation2 + $0x1788] sm:$0xff]
    %v3583 = vld [vmem:[#allocation2 + $0x1790] sm:$0xff]
    %v3584 = vld [vmem:[#allocation2 + $0x1798] sm:$0xff]
    %v3585 = vld [vmem:[#allocation2 + $0x17a0] sm:$0xff]
    %v3586 = vld [vmem:[#allocation2 + $0x17a8] sm:$0xff]
    %v3587 = vld [vmem:[#allocation2 + $0x17b0] sm:$0xff]
    %v3588 = vld [vmem:[#allocation2 + $0x17b8] sm:$0xff]
    %v3589 = vld [vmem:[#allocation2 + $0x17c0] sm:$0xff]
    %v3590 = vld [vmem:[#allocation2 + $0x17c8] sm:$0xff]
    %v3591 = vld [vmem:[#allocation2 + $0x17d0] sm:$0xff]
    %v3592 = vld [vmem:[#allocation2 + $0x17d8] sm:$0xff]
    %v3593 = vld [vmem:[#allocation2 + $0x17e0] sm:$0xff]
    %v3594 = vld [vmem:[#allocation2 + $0x17e8] sm:$0xff]
    %v3595 = vld [vmem:[#allocation2 + $0x17f0] sm:$0xff]
    %v3596 = vld [vmem:[#allocation2 + $0x17f8] sm:$0xff]
    %v3597 = vpack.c.bf16 %v3532, %v3532
    %3598 = vmatprep.subr.bf16.mxu0 %v3534
    %3599 = vmatpush1.bf16.msra.mxu0 %v3533
    %3600 = vmatprep.subr.bf16.mxu0 %v3542
    %3601 = vmatpush1.bf16.msra.mxu0 %v3541
    %3602 = vmatprep.subr.bf16.mxu0 %v3550
    %3603 = vmatpush1.bf16.msra.mxu0 %v3549
    %3604 = vmatprep.subr.bf16.mxu0 %v3558
    %3605 = vmatpush1.bf16.msra.mxu0 %v3557
    %3606 = vmatprep.subr.bf16.mxu0 %v3566
    %3607 = vmatpush1.bf16.msra.mxu0 %v3565
    %3608 = vmatprep.subr.bf16.mxu0 %v3574
    %3609 = vmatpush1.bf16.msra.mxu0 %v3573
    %3610 = vmatprep.subr.bf16.mxu0 %v3582
    %3611 = vmatpush1.bf16.msra.mxu0 %v3581
    %3612 = vmatprep.subr.bf16.mxu0 %v3590
    %3613 = vmatpush1.bf16.msra.mxu0 %v3589
    %3614 = vmatprep.subr.bf16.mxu0 0
    %3615 = vmatpush1.bf16.msra.mxu0 0
    %3616 = vmatprep.subr.bf16.mxu0 0
    %3617 = vmatpush1.bf16.msra.mxu0 0
    %3618 = vmatprep.subr.bf16.mxu0 0
    %3619 = vmatpush1.bf16.msra.mxu0 0
    %3620 = vmatprep.subr.bf16.mxu0 0
    %3621 = vmatpush1.bf16.msra.mxu0 0
    %3622 = vmatprep.subr.bf16.mxu0 0
    %3623 = vmatpush1.bf16.msra.mxu0 0
    %3624 = vmatprep.subr.bf16.mxu0 0
    %3625 = vmatpush1.bf16.msra.mxu0 0
    %3626 = vmatprep.subr.bf16.mxu0 0
    %3627 = vmatpush1.bf16.msra.mxu0 0
    %3628 = vmatprep.subr.bf16.mxu0 0
    %3629 = vmatpush1.bf16.msra.mxu0 0
    %3630 = vmatprep.mubr.bf16.mxu0 0
    %3631 = vmatmul.mubr.bf16.gmra.mrb[0].mxu0 %v3597
    %v3632 = vpop.f32.mrb[0].mxu0
    %v3633 = vadd.f32 0.0, %v3632
    %v3634 = vpop.f32.mrb[0].mxu0
    %v3635 = vadd.f32 0.0, %v3634
    %v3636 = vpop.f32.mrb[0].mxu0
    %v3637 = vpop.f32.mrb[0].mxu0
    %3638 = vdwg.mxu0
    %3639 = vmatprep.subr.bf16.mxu0 %v3536
    %3640 = vmatpush1.bf16.msra.mxu0 %v3535
    %3641 = vmatprep.subr.bf16.mxu0 %v3544
    %3642 = vmatpush1.bf16.msra.mxu0 %v3543
    %3643 = vmatprep.subr.bf16.mxu0 %v3552
    %3644 = vmatpush1.bf16.msra.mxu0 %v3551
    %3645 = vmatprep.subr.bf16.mxu0 %v3560
    %3646 = vmatpush1.bf16.msra.mxu0 %v3559
    %3647 = vmatprep.subr.bf16.mxu0 %v3568
    %3648 = vmatpush1.bf16.msra.mxu0 %v3567
    %3649 = vmatprep.subr.bf16.mxu0 %v3576
    %3650 = vmatpush1.bf16.msra.mxu0 %v3575
    %3651 = vmatprep.subr.bf16.mxu0 %v3584
    %3652 = vmatpush1.bf16.msra.mxu0 %v3583
    %3653 = vmatprep.subr.bf16.mxu0 %v3592
    %3654 = vmatpush1.bf16.msra.mxu0 %v3591
    %3655 = vmatprep.subr.bf16.mxu0 0
    %3656 = vmatpush1.bf16.msra.mxu0 0
    %3657 = vmatprep.subr.bf16.mxu0 0
    %3658 = vmatpush1.bf16.msra.mxu0 0
    %3659 = vmatprep.subr.bf16.mxu0 0
    %3660 = vmatpush1.bf16.msra.mxu0 0
    %3661 = vmatprep.subr.bf16.mxu0 0
    %3662 = vmatpush1.bf16.msra.mxu0 0
    %3663 = vmatprep.subr.bf16.mxu0 0
    %3664 = vmatpush1.bf16.msra.mxu0 0
    %3665 = vmatprep.subr.bf16.mxu0 0
    %3666 = vmatpush1.bf16.msra.mxu0 0
    %3667 = vmatprep.subr.bf16.mxu0 0
    %3668 = vmatpush1.bf16.msra.mxu0 0
    %3669 = vmatprep.subr.bf16.mxu0 0
    %3670 = vmatpush1.bf16.msra.mxu0 0
    %3671 = vmatprep.mubr.bf16.mxu0 0
    %3672 = vmatmul.mubr.bf16.gmra.mrb[0].mxu0 %v3597
    %v3673 = vpop.f32.mrb[0].mxu0
    %v3674 = vadd.f32 0.0, %v3673
    %v3675 = vpop.f32.mrb[0].mxu0
    %v3676 = vadd.f32 0.0, %v3675
    %v3677 = vpop.f32.mrb[0].mxu0
    %v3678 = vpop.f32.mrb[0].mxu0
    %3679 = vdwg.mxu0
    %3680 = vmatprep.subr.bf16.mxu0 %v3538
    %3681 = vmatpush1.bf16.msra.mxu0 %v3537
    %3682 = vmatprep.subr.bf16.mxu0 %v3546
    %3683 = vmatpush1.bf16.msra.mxu0 %v3545
    %3684 = vmatprep.subr.bf16.mxu0 %v3554
    %3685 = vmatpush1.bf16.msra.mxu0 %v3553
    %3686 = vmatprep.subr.bf16.mxu0 %v3562
    %3687 = vmatpush1.bf16.msra.mxu0 %v3561
    %3688 = vmatprep.subr.bf16.mxu0 %v3570
    %3689 = vmatpush1.bf16.msra.mxu0 %v3569
    %3690 = vmatprep.subr.bf16.mxu0 %v3578
    %3691 = vmatpush1.bf16.msra.mxu0 %v3577
    %3692 = vmatprep.subr.bf16.mxu0 %v3586
    %3693 = vmatpush1.bf16.msra.mxu0 %v3585
    %3694 = vmatprep.subr.bf16.mxu0 %v3594
    %3695 = vmatpush1.bf16.msra.mxu0 %v3593
    %3696 = vmatprep.subr.bf16.mxu0 0
    %3697 = vmatpush1.bf16.msra.mxu0 0
    %3698 = vmatprep.subr.bf16.mxu0 0
    %3699 = vmatpush1.bf16.msra.mxu0 0
    %3700 = vmatprep.subr.bf16.mxu0 0
    %3701 = vmatpush1.bf16.msra.mxu0 0
    %3702 = vmatprep.subr.bf16.mxu0 0
    %3703 = vmatpush1.bf16.msra.mxu0 0
    %3704 = vmatprep.subr.bf16.mxu0 0
    %3705 = vmatpush1.bf16.msra.mxu0 0
    %3706 = vmatprep.subr.bf16.mxu0 0
    %3707 = vmatpush1.bf16.msra.mxu0 0
    %3708 = vmatprep.subr.bf16.mxu0 0
    %3709 = vmatpush1.bf16.msra.mxu0 0
    %3710 = vmatprep.subr.bf16.mxu0 0
    %3711 = vmatpush1.bf16.msra.mxu0 0
    %3712 = vmatprep.mubr.bf16.mxu0 0
    %3713 = vmatmul.mubr.bf16.gmra.mrb[0].mxu0 %v3597
    %v3714 = vpop.f32.mrb[0].mxu0
    %v3715 = vadd.f32 0.0, %v3714
    %v3716 = vpop.f32.mrb[0].mxu0
    %v3717 = vadd.f32 0.0, %v3716
    %v3718 = vpop.f32.mrb[0].mxu0
    %v3719 = vpop.f32.mrb[0].mxu0
    %3720 = vdwg.mxu0
    %3721 = vmatprep.subr.bf16.mxu0 %v3540
    %3722 = vmatpush1.bf16.msra.mxu0 %v3539
    %3723 = vmatprep.subr.bf16.mxu0 %v3548
    %3724 = vmatpush1.bf16.msra.mxu0 %v3547
    %3725 = vmatprep.subr.bf16.mxu0 %v3556
    %3726 = vmatpush1.bf16.msra.mxu0 %v3555
    %3727 = vmatprep.subr.bf16.mxu0 %v3564
    %3728 = vmatpush1.bf16.msra.mxu0 %v3563
    %3729 = vmatprep.subr.bf16.mxu0 %v3572
    %3730 = vmatpush1.bf16.msra.mxu0 %v3571
    %3731 = vmatprep.subr.bf16.mxu0 %v3580
    %3732 = vmatpush1.bf16.msra.mxu0 %v3579
    %3733 = vmatprep.subr.bf16.mxu0 %v3588
    %3734 = vmatpush1.bf16.msra.mxu0 %v3587
    %3735 = vmatprep.subr.bf16.mxu0 %v3596
    %3736 = vmatpush1.bf16.msra.mxu0 %v3595
    %3737 = vmatprep.subr.bf16.mxu0 0
    %3738 = vmatpush1.bf16.msra.mxu0 0
    %3739 = vmatprep.subr.bf16.mxu0 0
    %3740 = vmatpush1.bf16.msra.mxu0 0
    %3741 = vmatprep.subr.bf16.mxu0 0
    %3742 = vmatpush1.bf16.msra.mxu0 0
    %3743 = vmatprep.subr.bf16.mxu0 0
    %3744 = vmatpush1.bf16.msra.mxu0 0
    %3745 = vmatprep.subr.bf16.mxu0 0
    %3746 = vmatpush1.bf16.msra.mxu0 0
    %3747 = vmatprep.subr.bf16.mxu0 0
    %3748 = vmatpush1.bf16.msra.mxu0 0
    %3749 = vmatprep.subr.bf16.mxu0 0
    %3750 = vmatpush1.bf16.msra.mxu0 0
    %3751 = vmatprep.subr.bf16.mxu0 0
    %3752 = vmatpush1.bf16.msra.mxu0 0
    %3753 = vmatprep.mubr.bf16.mxu0 0
    %3754 = vmatmul.mubr.bf16.gmra.mrb[0].mxu0 %v3597
    %v3755 = vpop.f32.mrb[0].mxu0
    %v3756 = vadd.f32 0.0, %v3755
    %v3757 = vpop.f32.mrb[0].mxu0
    %v3758 = vadd.f32 0.0, %v3757
    %v3759 = vpop.f32.mrb[0].mxu0
    %v3760 = vpop.f32.mrb[0].mxu0
    %3761 = vdwg.mxu0
    %v3762 = vadd.f32 %v3520, %v3633
    %v3763 = vadd.f32 %v3521, %v3635
    %v3764 = vadd.f32 %v3522, %v3674
    %v3765 = vadd.f32 %v3523, %v3676
    %v3766 = vadd.f32 %v3524, %v3715
    %v3767 = vadd.f32 %v3525, %v3717
    %v3768 = vadd.f32 %v3526, %v3756
    %v3769 = vadd.f32 %v3527, %v3758
    %s3770 = sshll.u32 %s878, 4
    %3771 = dma.done %s230, %s3770
    %v3772 = vrot.slane %v588, 4
    %v3774 = vrot.slane %v876, 3
    %v3776 = vsel %vm884, %v3772, %v3774
    %v3777 = vld [vmem:[#allocation2 + $0x1800] sm:$0xff]
    %v3778 = vld [vmem:[#allocation2 + $0x1808] sm:$0xff]
    %v3779 = vld [vmem:[#allocation2 + $0x1810] sm:$0xff]
    %v3780 = vld [vmem:[#allocation2 + $0x1818] sm:$0xff]
    %v3781 = vld [vmem:[#allocation2 + $0x1820] sm:$0xff]
    %v3782 = vld [vmem:[#allocation2 + $0x1828] sm:$0xff]
    %v3783 = vld [vmem:[#allocation2 + $0x1830] sm:$0xff]
    %v3784 = vld [vmem:[#allocation2 + $0x1838] sm:$0xff]
    %v3785 = vld [vmem:[#allocation2 + $0x1840] sm:$0xff]
    %v3786 = vld [vmem:[#allocation2 + $0x1848] sm:$0xff]
    %v3787 = vld [vmem:[#allocation2 + $0x1850] sm:$0xff]
    %v3788 = vld [vmem:[#allocation2 + $0x1858] sm:$0xff]
    %v3789 = vld [vmem:[#allocation2 + $0x1860] sm:$0xff]
    %v3790 = vld [vmem:[#allocation2 + $0x1868] sm:$0xff]
    %v3791 = vld [vmem:[#allocation2 + $0x1870] sm:$0xff]
    %v3792 = vld [vmem:[#allocation2 + $0x1878] sm:$0xff]
    %v3793 = vld [vmem:[#allocation2 + $0x1880] sm:$0xff]
    %v3794 = vld [vmem:[#allocation2 + $0x1888] sm:$0xff]
    %v3795 = vld [vmem:[#allocation2 + $0x1890] sm:$0xff]
    %v3796 = vld [vmem:[#allocation2 + $0x1898] sm:$0xff]
    %v3797 = vld [vmem:[#allocation2 + $0x18a0] sm:$0xff]
    %v3798 = vld [vmem:[#allocation2 + $0x18a8] sm:$0xff]
    %v3799 = vld [vmem:[#allocation2 + $0x18b0] sm:$0xff]
    %v3800 = vld [vmem:[#allocation2 + $0x18b8] sm:$0xff]
    %v3801 = vld [vmem:[#allocation2 + $0x18c0] sm:$0xff]
    %v3802 = vld [vmem:[#allocation2 + $0x18c8] sm:$0xff]
    %v3803 = vld [vmem:[#allocation2 + $0x18d0] sm:$0xff]
    %v3804 = vld [vmem:[#allocation2 + $0x18d8] sm:$0xff]
    %v3805 = vld [vmem:[#allocation2 + $0x18e0] sm:$0xff]
    %v3806 = vld [vmem:[#allocation2 + $0x18e8] sm:$0xff]
    %v3807 = vld [vmem:[#allocation2 + $0x18f0] sm:$0xff]
    %v3808 = vld [vmem:[#allocation2 + $0x18f8] sm:$0xff]
    %v3809 = vld [vmem:[#allocation2 + $0x1900] sm:$0xff]
    %v3810 = vld [vmem:[#allocation2 + $0x1908] sm:$0xff]
    %v3811 = vld [vmem:[#allocation2 + $0x1910] sm:$0xff]
    %v3812 = vld [vmem:[#allocation2 + $0x1918] sm:$0xff]
    %v3813 = vld [vmem:[#allocation2 + $0x1920] sm:$0xff]
    %v3814 = vld [vmem:[#allocation2 + $0x1928] sm:$0xff]
    %v3815 = vld [vmem:[#allocation2 + $0x1930] sm:$0xff]
    %v3816 = vld [vmem:[#allocation2 + $0x1938] sm:$0xff]
    %v3817 = vld [vmem:[#allocation2 + $0x1940] sm:$0xff]
    %v3818 = vld [vmem:[#allocation2 + $0x1948] sm:$0xff]
    %v3819 = vld [vmem:[#allocation2 + $0x1950] sm:$0xff]
    %v3820 = vld [vmem:[#allocation2 + $0x1958] sm:$0xff]
    %v3821 = vld [vmem:[#allocation2 + $0x1960] sm:$0xff]
    %v3822 = vld [vmem:[#allocation2 + $0x1968] sm:$0xff]
    %v3823 = vld [vmem:[#allocation2 + $0x1970] sm:$0xff]
    %v3824 = vld [vmem:[#allocation2 + $0x1978] sm:$0xff]
    %v3825 = vld [vmem:[#allocation2 + $0x1980] sm:$0xff]
    %v3826 = vld [vmem:[#allocation2 + $0x1988] sm:$0xff]
    %v3827 = vld [vmem:[#allocation2 + $0x1990] sm:$0xff]
    %v3828 = vld [vmem:[#allocation2 + $0x1998] sm:$0xff]
    %v3829 = vld [vmem:[#allocation2 + $0x19a0] sm:$0xff]
    %v3830 = vld [vmem:[#allocation2 + $0x19a8] sm:$0xff]
    %v3831 = vld [vmem:[#allocation2 + $0x19b0] sm:$0xff]
    %v3832 = vld [vmem:[#allocation2 + $0x19b8] sm:$0xff]
    %v3833 = vld [vmem:[#allocation2 + $0x19c0] sm:$0xff]
    %v3834 = vld [vmem:[#allocation2 + $0x19c8] sm:$0xff]
    %v3835 = vld [vmem:[#allocation2 + $0x19d0] sm:$0xff]
    %v3836 = vld [vmem:[#allocation2 + $0x19d8] sm:$0xff]
    %v3837 = vld [vmem:[#allocation2 + $0x19e0] sm:$0xff]
    %v3838 = vld [vmem:[#allocation2 + $0x19e8] sm:$0xff]
    %v3839 = vld [vmem:[#allocation2 + $0x19f0] sm:$0xff]
    %v3840 = vld [vmem:[#allocation2 + $0x19f8] sm:$0xff]
    %v3841 = vpack.c.bf16 %v3776, %v3776
    %3842 = vmatprep.subr.bf16.mxu0 %v3778
    %3843 = vmatpush1.bf16.msra.mxu0 %v3777
    %3844 = vmatprep.subr.bf16.mxu0 %v3786
    %3845 = vmatpush1.bf16.msra.mxu0 %v3785
    %3846 = vmatprep.subr.bf16.mxu0 %v3794
    %3847 = vmatpush1.bf16.msra.mxu0 %v3793
    %3848 = vmatprep.subr.bf16.mxu0 %v3802
    %3849 = vmatpush1.bf16.msra.mxu0 %v3801
    %3850 = vmatprep.subr.bf16.mxu0 %v3810
    %3851 = vmatpush1.bf16.msra.mxu0 %v3809
    %3852 = vmatprep.subr.bf16.mxu0 %v3818
    %3853 = vmatpush1.bf16.msra.mxu0 %v3817
    %3854 = vmatprep.subr.bf16.mxu0 %v3826
    %3855 = vmatpush1.bf16.msra.mxu0 %v3825
    %3856 = vmatprep.subr.bf16.mxu0 %v3834
    %3857 = vmatpush1.bf16.msra.mxu0 %v3833
    %3858 = vmatprep.subr.bf16.mxu0 0
    %3859 = vmatpush1.bf16.msra.mxu0 0
    %3860 = vmatprep.subr.bf16.mxu0 0
    %3861 = vmatpush1.bf16.msra.mxu0 0
    %3862 = vmatprep.subr.bf16.mxu0 0
    %3863 = vmatpush1.bf16.msra.mxu0 0
    %3864 = vmatprep.subr.bf16.mxu0 0
    %3865 = vmatpush1.bf16.msra.mxu0 0
    %3866 = vmatprep.subr.bf16.mxu0 0
    %3867 = vmatpush1.bf16.msra.mxu0 0
    %3868 = vmatprep.subr.bf16.mxu0 0
    %3869 = vmatpush1.bf16.msra.mxu0 0
    %3870 = vmatprep.subr.bf16.mxu0 0
    %3871 = vmatpush1.bf16.msra.mxu0 0
    %3872 = vmatprep.subr.bf16.mxu0 0
    %3873 = vmatpush1.bf16.msra.mxu0 0
    %3874 = vmatprep.mubr.bf16.mxu0 0
    %3875 = vmatmul.mubr.bf16.gmra.mrb[0].mxu0 %v3841
    %v3876 = vpop.f32.mrb[0].mxu0
    %v3877 = vadd.f32 0.0, %v3876
    %v3878 = vpop.f32.mrb[0].mxu0
    %v3879 = vadd.f32 0.0, %v3878
    %v3880 = vpop.f32.mrb[0].mxu0
    %v3881 = vpop.f32.mrb[0].mxu0
    %3882 = vdwg.mxu0
    %3883 = vmatprep.subr.bf16.mxu0 %v3780
    %3884 = vmatpush1.bf16.msra.mxu0 %v3779
    %3885 = vmatprep.subr.bf16.mxu0 %v3788
    %3886 = vmatpush1.bf16.msra.mxu0 %v3787
    %3887 = vmatprep.subr.bf16.mxu0 %v3796
    %3888 = vmatpush1.bf16.msra.mxu0 %v3795
    %3889 = vmatprep.subr.bf16.mxu0 %v3804
    %3890 = vmatpush1.bf16.msra.mxu0 %v3803
    %3891 = vmatprep.subr.bf16.mxu0 %v3812
    %3892 = vmatpush1.bf16.msra.mxu0 %v3811
    %3893 = vmatprep.subr.bf16.mxu0 %v3820
    %3894 = vmatpush1.bf16.msra.mxu0 %v3819
    %3895 = vmatprep.subr.bf16.mxu0 %v3828
    %3896 = vmatpush1.bf16.msra.mxu0 %v3827
    %3897 = vmatprep.subr.bf16.mxu0 %v3836
    %3898 = vmatpush1.bf16.msra.mxu0 %v3835
    %3899 = vmatprep.subr.bf16.mxu0 0
    %3900 = vmatpush1.bf16.msra.mxu0 0
    %3901 = vmatprep.subr.bf16.mxu0 0
    %3902 = vmatpush1.bf16.msra.mxu0 0
    %3903 = vmatprep.subr.bf16.mxu0 0
    %3904 = vmatpush1.bf16.msra.mxu0 0
    %3905 = vmatprep.subr.bf16.mxu0 0
    %3906 = vmatpush1.bf16.msra.mxu0 0
    %3907 = vmatprep.subr.bf16.mxu0 0
    %3908 = vmatpush1.bf16.msra.mxu0 0
    %3909 = vmatprep.subr.bf16.mxu0 0
    %3910 = vmatpush1.bf16.msra.mxu0 0
    %3911 = vmatprep.subr.bf16.mxu0 0
    %3912 = vmatpush1.bf16.msra.mxu0 0
    %3913 = vmatprep.subr.bf16.mxu0 0
    %3914 = vmatpush1.bf16.msra.mxu0 0
    %3915 = vmatprep.mubr.bf16.mxu0 0
    %3916 = vmatmul.mubr.bf16.gmra.mrb[0].mxu0 %v3841
    %v3917 = vpop.f32.mrb[0].mxu0
    %v3918 = vadd.f32 0.0, %v3917
    %v3919 = vpop.f32.mrb[0].mxu0
    %v3920 = vadd.f32 0.0, %v3919
    %v3921 = vpop.f32.mrb[0].mxu0
    %v3922 = vpop.f32.mrb[0].mxu0
    %3923 = vdwg.mxu0
    %3924 = vmatprep.subr.bf16.mxu0 %v3782
    %3925 = vmatpush1.bf16.msra.mxu0 %v3781
    %3926 = vmatprep.subr.bf16.mxu0 %v3790
    %3927 = vmatpush1.bf16.msra.mxu0 %v3789
    %3928 = vmatprep.subr.bf16.mxu0 %v3798
    %3929 = vmatpush1.bf16.msra.mxu0 %v3797
    %3930 = vmatprep.subr.bf16.mxu0 %v3806
    %3931 = vmatpush1.bf16.msra.mxu0 %v3805
    %3932 = vmatprep.subr.bf16.mxu0 %v3814
    %3933 = vmatpush1.bf16.msra.mxu0 %v3813
    %3934 = vmatprep.subr.bf16.mxu0 %v3822
    %3935 = vmatpush1.bf16.msra.mxu0 %v3821
    %3936 = vmatprep.subr.bf16.mxu0 %v3830
    %3937 = vmatpush1.bf16.msra.mxu0 %v3829
    %3938 = vmatprep.subr.bf16.mxu0 %v3838
    %3939 = vmatpush1.bf16.msra.mxu0 %v3837
    %3940 = vmatprep.subr.bf16.mxu0 0
    %3941 = vmatpush1.bf16.msra.mxu0 0
    %3942 = vmatprep.subr.bf16.mxu0 0
    %3943 = vmatpush1.bf16.msra.mxu0 0
    %3944 = vmatprep.subr.bf16.mxu0 0
    %3945 = vmatpush1.bf16.msra.mxu0 0
    %3946 = vmatprep.subr.bf16.mxu0 0
    %3947 = vmatpush1.bf16.msra.mxu0 0
    %3948 = vmatprep.subr.bf16.mxu0 0
    %3949 = vmatpush1.bf16.msra.mxu0 0
    %3950 = vmatprep.subr.bf16.mxu0 0
    %3951 = vmatpush1.bf16.msra.mxu0 0
    %3952 = vmatprep.subr.bf16.mxu0 0
    %3953 = vmatpush1.bf16.msra.mxu0 0
    %3954 = vmatprep.subr.bf16.mxu0 0
    %3955 = vmatpush1.bf16.msra.mxu0 0
    %3956 = vmatprep.mubr.bf16.mxu0 0
    %3957 = vmatmul.mubr.bf16.gmra.mrb[0].mxu0 %v3841
    %v3958 = vpop.f32.mrb[0].mxu0
    %v3959 = vadd.f32 0.0, %v3958
    %v3960 = vpop.f32.mrb[0].mxu0
    %v3961 = vadd.f32 0.0, %v3960
    %v3962 = vpop.f32.mrb[0].mxu0
    %v3963 = vpop.f32.mrb[0].mxu0
    %3964 = vdwg.mxu0
    %3965 = vmatprep.subr.bf16.mxu0 %v3784
    %3966 = vmatpush1.bf16.msra.mxu0 %v3783
    %3967 = vmatprep.subr.bf16.mxu0 %v3792
    %3968 = vmatpush1.bf16.msra.mxu0 %v3791
    %3969 = vmatprep.subr.bf16.mxu0 %v3800
    %3970 = vmatpush1.bf16.msra.mxu0 %v3799
    %3971 = vmatprep.subr.bf16.mxu0 %v3808
    %3972 = vmatpush1.bf16.msra.mxu0 %v3807
    %3973 = vmatprep.subr.bf16.mxu0 %v3816
    %3974 = vmatpush1.bf16.msra.mxu0 %v3815
    %3975 = vmatprep.subr.bf16.mxu0 %v3824
    %3976 = vmatpush1.bf16.msra.mxu0 %v3823
    %3977 = vmatprep.subr.bf16.mxu0 %v3832
    %3978 = vmatpush1.bf16.msra.mxu0 %v3831
    %3979 = vmatprep.subr.bf16.mxu0 %v3840
    %3980 = vmatpush1.bf16.msra.mxu0 %v3839
    %3981 = vmatprep.subr.bf16.mxu0 0
    %3982 = vmatpush1.bf16.msra.mxu0 0
    %3983 = vmatprep.subr.bf16.mxu0 0
    %3984 = vmatpush1.bf16.msra.mxu0 0
    %3985 = vmatprep.subr.bf16.mxu0 0
    %3986 = vmatpush1.bf16.msra.mxu0 0
    %3987 = vmatprep.subr.bf16.mxu0 0
    %3988 = vmatpush1.bf16.msra.mxu0 0
    %3989 = vmatprep.subr.bf16.mxu0 0
    %3990 = vmatpush1.bf16.msra.mxu0 0
    %3991 = vmatprep.subr.bf16.mxu0 0
    %3992 = vmatpush1.bf16.msra.mxu0 0
    %3993 = vmatprep.subr.bf16.mxu0 0
    %3994 = vmatpush1.bf16.msra.mxu0 0
    %3995 = vmatprep.subr.bf16.mxu0 0
    %3996 = vmatpush1.bf16.msra.mxu0 0
    %3997 = vmatprep.mubr.bf16.mxu0 0
    %3998 = vmatmul.mubr.bf16.gmra.mrb[0].mxu0 %v3841
    %v3999 = vpop.f32.mrb[0].mxu0
    %v4000 = vadd.f32 0.0, %v3999
    %v4001 = vpop.f32.mrb[0].mxu0
    %v4002 = vadd.f32 0.0, %v4001
    %v4003 = vpop.f32.mrb[0].mxu0
    %v4004 = vpop.f32.mrb[0].mxu0
    %4005 = vdwg.mxu0
    %v4006 = vadd.f32 %v3762, %v3877
    %v4007 = vadd.f32 %v3763, %v3879
    %v4008 = vadd.f32 %v3764, %v3918
    %v4009 = vadd.f32 %v3765, %v3920
    %v4010 = vadd.f32 %v3766, %v3959
    %v4011 = vadd.f32 %v3767, %v3961
    %v4012 = vadd.f32 %v3768, %v4000
    %v4013 = vadd.f32 %v3769, %v4002
    %v4014 = vrot.slane %v588, 5
    %v4016 = vrot.slane %v876, 4
    %v4018 = vsel %vm884, %v4014, %v4016
    %v4019 = vld [vmem:[#allocation2 + $0x1a00] sm:$0xff]
    %v4020 = vld [vmem:[#allocation2 + $0x1a08] sm:$0xff]
    %v4021 = vld [vmem:[#allocation2 + $0x1a10] sm:$0xff]
    %v4022 = vld [vmem:[#allocation2 + $0x1a18] sm:$0xff]
    %v4023 = vld [vmem:[#allocation2 + $0x1a20] sm:$0xff]
    %v4024 = vld [vmem:[#allocation2 + $0x1a28] sm:$0xff]
    %v4025 = vld [vmem:[#allocation2 + $0x1a30] sm:$0xff]
    %v4026 = vld [vmem:[#allocation2 + $0x1a38] sm:$0xff]
    %v4027 = vld [vmem:[#allocation2 + $0x1a40] sm:$0xff]
    %v4028 = vld [vmem:[#allocation2 + $0x1a48] sm:$0xff]
    %v4029 = vld [vmem:[#allocation2 + $0x1a50] sm:$0xff]
    %v4030 = vld [vmem:[#allocation2 + $0x1a58] sm:$0xff]
    %v4031 = vld [vmem:[#allocation2 + $0x1a60] sm:$0xff]
    %v4032 = vld [vmem:[#allocation2 + $0x1a68] sm:$0xff]
    %v4033 = vld [vmem:[#allocation2 + $0x1a70] sm:$0xff]
    %v4034 = vld [vmem:[#allocation2 + $0x1a78] sm:$0xff]
    %v4035 = vld [vmem:[#allocation2 + $0x1a80] sm:$0xff]
    %v4036 = vld [vmem:[#allocation2 + $0x1a88] sm:$0xff]
    %v4037 = vld [vmem:[#allocation2 + $0x1a90] sm:$0xff]
    %v4038 = vld [vmem:[#allocation2 + $0x1a98] sm:$0xff]
    %v4039 = vld [vmem:[#allocation2 + $0x1aa0] sm:$0xff]
    %v4040 = vld [vmem:[#allocation2 + $0x1aa8] sm:$0xff]
    %v4041 = vld [vmem:[#allocation2 + $0x1ab0] sm:$0xff]
    %v4042 = vld [vmem:[#allocation2 + $0x1ab8] sm:$0xff]
    %v4043 = vld [vmem:[#allocation2 + $0x1ac0] sm:$0xff]
    %v4044 = vld [vmem:[#allocation2 + $0x1ac8] sm:$0xff]
    %v4045 = vld [vmem:[#allocation2 + $0x1ad0] sm:$0xff]
    %v4046 = vld [vmem:[#allocation2 + $0x1ad8] sm:$0xff]
    %v4047 = vld [vmem:[#allocation2 + $0x1ae0] sm:$0xff]
    %v4048 = vld [vmem:[#allocation2 + $0x1ae8] sm:$0xff]
    %v4049 = vld [vmem:[#allocation2 + $0x1af0] sm:$0xff]
    %v4050 = vld [vmem:[#allocation2 + $0x1af8] sm:$0xff]
    %v4051 = vld [vmem:[#allocation2 + $0x1b00] sm:$0xff]
    %v4052 = vld [vmem:[#allocation2 + $0x1b08] sm:$0xff]
    %v4053 = vld [vmem:[#allocation2 + $0x1b10] sm:$0xff]
    %v4054 = vld [vmem:[#allocation2 + $0x1b18] sm:$0xff]
    %v4055 = vld [vmem:[#allocation2 + $0x1b20] sm:$0xff]
    %v4056 = vld [vmem:[#allocation2 + $0x1b28] sm:$0xff]
    %v4057 = vld [vmem:[#allocation2 + $0x1b30] sm:$0xff]
    %v4058 = vld [vmem:[#allocation2 + $0x1b38] sm:$0xff]
    %v4059 = vld [vmem:[#allocation2 + $0x1b40] sm:$0xff]
    %v4060 = vld [vmem:[#allocation2 + $0x1b48] sm:$0xff]
    %v4061 = vld [vmem:[#allocation2 + $0x1b50] sm:$0xff]
    %v4062 = vld [vmem:[#allocation2 + $0x1b58] sm:$0xff]
    %v4063 = vld [vmem:[#allocation2 + $0x1b60] sm:$0xff]
    %v4064 = vld [vmem:[#allocation2 + $0x1b68] sm:$0xff]
    %v4065 = vld [vmem:[#allocation2 + $0x1b70] sm:$0xff]
    %v4066 = vld [vmem:[#allocation2 + $0x1b78] sm:$0xff]
    %v4067 = vld [vmem:[#allocation2 + $0x1b80] sm:$0xff]
    %v4068 = vld [vmem:[#allocation2 + $0x1b88] sm:$0xff]
    %v4069 = vld [vmem:[#allocation2 + $0x1b90] sm:$0xff]
    %v4070 = vld [vmem:[#allocation2 + $0x1b98] sm:$0xff]
    %v4071 = vld [vmem:[#allocation2 + $0x1ba0] sm:$0xff]
    %v4072 = vld [vmem:[#allocation2 + $0x1ba8] sm:$0xff]
    %v4073 = vld [vmem:[#allocation2 + $0x1bb0] sm:$0xff]
    %v4074 = vld [vmem:[#allocation2 + $0x1bb8] sm:$0xff]
    %v4075 = vld [vmem:[#allocation2 + $0x1bc0] sm:$0xff]
    %v4076 = vld [vmem:[#allocation2 + $0x1bc8] sm:$0xff]
    %v4077 = vld [vmem:[#allocation2 + $0x1bd0] sm:$0xff]
    %v4078 = vld [vmem:[#allocation2 + $0x1bd8] sm:$0xff]
    %v4079 = vld [vmem:[#allocation2 + $0x1be0] sm:$0xff]
    %v4080 = vld [vmem:[#allocation2 + $0x1be8] sm:$0xff]
    %v4081 = vld [vmem:[#allocation2 + $0x1bf0] sm:$0xff]
    %v4082 = vld [vmem:[#allocation2 + $0x1bf8] sm:$0xff]
    %v4083 = vpack.c.bf16 %v4018, %v4018
    %4084 = vmatprep.subr.bf16.mxu0 %v4020
    %4085 = vmatpush1.bf16.msra.mxu0 %v4019
    %4086 = vmatprep.subr.bf16.mxu0 %v4028
    %4087 = vmatpush1.bf16.msra.mxu0 %v4027
    %4088 = vmatprep.subr.bf16.mxu0 %v4036
    %4089 = vmatpush1.bf16.msra.mxu0 %v4035
    %4090 = vmatprep.subr.bf16.mxu0 %v4044
    %4091 = vmatpush1.bf16.msra.mxu0 %v4043
    %4092 = vmatprep.subr.bf16.mxu0 %v4052
    %4093 = vmatpush1.bf16.msra.mxu0 %v4051
    %4094 = vmatprep.subr.bf16.mxu0 %v4060
    %4095 = vmatpush1.bf16.msra.mxu0 %v4059
    %4096 = vmatprep.subr.bf16.mxu0 %v4068
    %4097 = vmatpush1.bf16.msra.mxu0 %v4067
    %4098 = vmatprep.subr.bf16.mxu0 %v4076
    %4099 = vmatpush1.bf16.msra.mxu0 %v4075
    %4100 = vmatprep.subr.bf16.mxu0 0
    %4101 = vmatpush1.bf16.msra.mxu0 0
    %4102 = vmatprep.subr.bf16.mxu0 0
    %4103 = vmatpush1.bf16.msra.mxu0 0
    %4104 = vmatprep.subr.bf16.mxu0 0
    %4105 = vmatpush1.bf16.msra.mxu0 0
    %4106 = vmatprep.subr.bf16.mxu0 0
    %4107 = vmatpush1.bf16.msra.mxu0 0
    %4108 = vmatprep.subr.bf16.mxu0 0
    %4109 = vmatpush1.bf16.msra.mxu0 0
    %4110 = vmatprep.subr.bf16.mxu0 0
    %4111 = vmatpush1.bf16.msra.mxu0 0
    %4112 = vmatprep.subr.bf16.mxu0 0
    %4113 = vmatpush1.bf16.msra.mxu0 0
    %4114 = vmatprep.subr.bf16.mxu0 0
    %4115 = vmatpush1.bf16.msra.mxu0 0
    %4116 = vmatprep.mubr.bf16.mxu0 0
    %4117 = vmatmul.mubr.bf16.gmra.mrb[0].mxu0 %v4083
    %v4118 = vpop.f32.mrb[0].mxu0
    %v4119 = vadd.f32 0.0, %v4118
    %v4120 = vpop.f32.mrb[0].mxu0
    %v4121 = vadd.f32 0.0, %v4120
    %v4122 = vpop.f32.mrb[0].mxu0
    %v4123 = vpop.f32.mrb[0].mxu0
    %4124 = vdwg.mxu0
    %4125 = vmatprep.subr.bf16.mxu0 %v4022
    %4126 = vmatpush1.bf16.msra.mxu0 %v4021
    %4127 = vmatprep.subr.bf16.mxu0 %v4030
    %4128 = vmatpush1.bf16.msra.mxu0 %v4029
    %4129 = vmatprep.subr.bf16.mxu0 %v4038
    %4130 = vmatpush1.bf16.msra.mxu0 %v4037
    %4131 = vmatprep.subr.bf16.mxu0 %v4046
    %4132 = vmatpush1.bf16.msra.mxu0 %v4045
    %4133 = vmatprep.subr.bf16.mxu0 %v4054
    %4134 = vmatpush1.bf16.msra.mxu0 %v4053
    %4135 = vmatprep.subr.bf16.mxu0 %v4062
    %4136 = vmatpush1.bf16.msra.mxu0 %v4061
    %4137 = vmatprep.subr.bf16.mxu0 %v4070
    %4138 = vmatpush1.bf16.msra.mxu0 %v4069
    %4139 = vmatprep.subr.bf16.mxu0 %v4078
    %4140 = vmatpush1.bf16.msra.mxu0 %v4077
    %4141 = vmatprep.subr.bf16.mxu0 0
    %4142 = vmatpush1.bf16.msra.mxu0 0
    %4143 = vmatprep.subr.bf16.mxu0 0
    %4144 = vmatpush1.bf16.msra.mxu0 0
    %4145 = vmatprep.subr.bf16.mxu0 0
    %4146 = vmatpush1.bf16.msra.mxu0 0
    %4147 = vmatprep.subr.bf16.mxu0 0
    %4148 = vmatpush1.bf16.msra.mxu0 0
    %4149 = vmatprep.subr.bf16.mxu0 0
    %4150 = vmatpush1.bf16.msra.mxu0 0
    %4151 = vmatprep.subr.bf16.mxu0 0
    %4152 = vmatpush1.bf16.msra.mxu0 0
    %4153 = vmatprep.subr.bf16.mxu0 0
    %4154 = vmatpush1.bf16.msra.mxu0 0
    %4155 = vmatprep.subr.bf16.mxu0 0
    %4156 = vmatpush1.bf16.msra.mxu0 0
    %4157 = vmatprep.mubr.bf16.mxu0 0
    %4158 = vmatmul.mubr.bf16.gmra.mrb[0].mxu0 %v4083
    %v4159 = vpop.f32.mrb[0].mxu0
    %v4160 = vadd.f32 0.0, %v4159
    %v4161 = vpop.f32.mrb[0].mxu0
    %v4162 = vadd.f32 0.0, %v4161
    %v4163 = vpop.f32.mrb[0].mxu0
    %v4164 = vpop.f32.mrb[0].mxu0
    %4165 = vdwg.mxu0
    %4166 = vmatprep.subr.bf16.mxu0 %v4024
    %4167 = vmatpush1.bf16.msra.mxu0 %v4023
    %4168 = vmatprep.subr.bf16.mxu0 %v4032
    %4169 = vmatpush1.bf16.msra.mxu0 %v4031
    %4170 = vmatprep.subr.bf16.mxu0 %v4040
    %4171 = vmatpush1.bf16.msra.mxu0 %v4039
    %4172 = vmatprep.subr.bf16.mxu0 %v4048
    %4173 = vmatpush1.bf16.msra.mxu0 %v4047
    %4174 = vmatprep.subr.bf16.mxu0 %v4056
    %4175 = vmatpush1.bf16.msra.mxu0 %v4055
    %4176 = vmatprep.subr.bf16.mxu0 %v4064
    %4177 = vmatpush1.bf16.msra.mxu0 %v4063
    %4178 = vmatprep.subr.bf16.mxu0 %v4072
    %4179 = vmatpush1.bf16.msra.mxu0 %v4071
    %4180 = vmatprep.subr.bf16.mxu0 %v4080
    %4181 = vmatpush1.bf16.msra.mxu0 %v4079
    %4182 = vmatprep.subr.bf16.mxu0 0
    %4183 = vmatpush1.bf16.msra.mxu0 0
    %4184 = vmatprep.subr.bf16.mxu0 0
    %4185 = vmatpush1.bf16.msra.mxu0 0
    %4186 = vmatprep.subr.bf16.mxu0 0
    %4187 = vmatpush1.bf16.msra.mxu0 0
    %4188 = vmatprep.subr.bf16.mxu0 0
    %4189 = vmatpush1.bf16.msra.mxu0 0
    %4190 = vmatprep.subr.bf16.mxu0 0
    %4191 = vmatpush1.bf16.msra.mxu0 0
    %4192 = vmatprep.subr.bf16.mxu0 0
    %4193 = vmatpush1.bf16.msra.mxu0 0
    %4194 = vmatprep.subr.bf16.mxu0 0
    %4195 = vmatpush1.bf16.msra.mxu0 0
    %4196 = vmatprep.subr.bf16.mxu0 0
    %4197 = vmatpush1.bf16.msra.mxu0 0
    %4198 = vmatprep.mubr.bf16.mxu0 0
    %4199 = vmatmul.mubr.bf16.gmra.mrb[0].mxu0 %v4083
    %v4200 = vpop.f32.mrb[0].mxu0
    %v4201 = vadd.f32 0.0, %v4200
    %v4202 = vpop.f32.mrb[0].mxu0
    %v4203 = vadd.f32 0.0, %v4202
    %v4204 = vpop.f32.mrb[0].mxu0
    %v4205 = vpop.f32.mrb[0].mxu0
    %4206 = vdwg.mxu0
    %4207 = vmatprep.subr.bf16.mxu0 %v4026
    %4208 = vmatpush1.bf16.msra.mxu0 %v4025
    %4209 = vmatprep.subr.bf16.mxu0 %v4034
    %4210 = vmatpush1.bf16.msra.mxu0 %v4033
    %4211 = vmatprep.subr.bf16.mxu0 %v4042
    %4212 = vmatpush1.bf16.msra.mxu0 %v4041
    %4213 = vmatprep.subr.bf16.mxu0 %v4050
    %4214 = vmatpush1.bf16.msra.mxu0 %v4049
    %4215 = vmatprep.subr.bf16.mxu0 %v4058
    %4216 = vmatpush1.bf16.msra.mxu0 %v4057
    %4217 = vmatprep.subr.bf16.mxu0 %v4066
    %4218 = vmatpush1.bf16.msra.mxu0 %v4065
    %4219 = vmatprep.subr.bf16.mxu0 %v4074
    %4220 = vmatpush1.bf16.msra.mxu0 %v4073
    %4221 = vmatprep.subr.bf16.mxu0 %v4082
    %4222 = vmatpush1.bf16.msra.mxu0 %v4081
    %4223 = vmatprep.subr.bf16.mxu0 0
    %4224 = vmatpush1.bf16.msra.mxu0 0
    %4225 = vmatprep.subr.bf16.mxu0 0
    %4226 = vmatpush1.bf16.msra.mxu0 0
    %4227 = vmatprep.subr.bf16.mxu0 0
    %4228 = vmatpush1.bf16.msra.mxu0 0
    %4229 = vmatprep.subr.bf16.mxu0 0
    %4230 = vmatpush1.bf16.msra.mxu0 0
    %4231 = vmatprep.subr.bf16.mxu0 0
    %4232 = vmatpush1.bf16.msra.mxu0 0
    %4233 = vmatprep.subr.bf16.mxu0 0
    %4234 = vmatpush1.bf16.msra.mxu0 0
    %4235 = vmatprep.subr.bf16.mxu0 0
    %4236 = vmatpush1.bf16.msra.mxu0 0
    %4237 = vmatprep.subr.bf16.mxu0 0
    %4238 = vmatpush1.bf16.msra.mxu0 0
    %4239 = vmatprep.mubr.bf16.mxu0 0
    %4240 = vmatmul.mubr.bf16.gmra.mrb[0].mxu0 %v4083
    %v4241 = vpop.f32.mrb[0].mxu0
    %v4242 = vadd.f32 0.0, %v4241
    %v4243 = vpop.f32.mrb[0].mxu0
    %v4244 = vadd.f32 0.0, %v4243
    %v4245 = vpop.f32.mrb[0].mxu0
    %v4246 = vpop.f32.mrb[0].mxu0
    %4247 = vdwg.mxu0
    %v4248 = vadd.f32 %v4006, %v4119
    %v4249 = vadd.f32 %v4007, %v4121
    %v4250 = vadd.f32 %v4008, %v4160
    %v4251 = vadd.f32 %v4009, %v4162
    %v4252 = vadd.f32 %v4010, %v4201
    %v4253 = vadd.f32 %v4011, %v4203
    %v4254 = vadd.f32 %v4012, %v4242
    %v4255 = vadd.f32 %v4013, %v4244
    %v4256 = vrot.slane %v588, 6
    %v4258 = vrot.slane %v876, 5
    %v4260 = vsel %vm884, %v4256, %v4258
    %v4261 = vld [vmem:[#allocation2 + $0x1c00] sm:$0xff]
    %v4262 = vld [vmem:[#allocation2 + $0x1c08] sm:$0xff]
    %v4263 = vld [vmem:[#allocation2 + $0x1c10] sm:$0xff]
    %v4264 = vld [vmem:[#allocation2 + $0x1c18] sm:$0xff]
    %v4265 = vld [vmem:[#allocation2 + $0x1c20] sm:$0xff]
    %v4266 = vld [vmem:[#allocation2 + $0x1c28] sm:$0xff]
    %v4267 = vld [vmem:[#allocation2 + $0x1c30] sm:$0xff]
    %v4268 = vld [vmem:[#allocation2 + $0x1c38] sm:$0xff]
    %v4269 = vld [vmem:[#allocation2 + $0x1c40] sm:$0xff]
    %v4270 = vld [vmem:[#allocation2 + $0x1c48] sm:$0xff]
    %v4271 = vld [vmem:[#allocation2 + $0x1c50] sm:$0xff]
    %v4272 = vld [vmem:[#allocation2 + $0x1c58] sm:$0xff]
    %v4273 = vld [vmem:[#allocation2 + $0x1c60] sm:$0xff]
    %v4274 = vld [vmem:[#allocation2 + $0x1c68] sm:$0xff]
    %v4275 = vld [vmem:[#allocation2 + $0x1c70] sm:$0xff]
    %v4276 = vld [vmem:[#allocation2 + $0x1c78] sm:$0xff]
    %v4277 = vld [vmem:[#allocation2 + $0x1c80] sm:$0xff]
    %v4278 = vld [vmem:[#allocation2 + $0x1c88] sm:$0xff]
    %v4279 = vld [vmem:[#allocation2 + $0x1c90] sm:$0xff]
    %v4280 = vld [vmem:[#allocation2 + $0x1c98] sm:$0xff]
    %v4281 = vld [vmem:[#allocation2 + $0x1ca0] sm:$0xff]
    %v4282 = vld [vmem:[#allocation2 + $0x1ca8] sm:$0xff]
    %v4283 = vld [vmem:[#allocation2 + $0x1cb0] sm:$0xff]
    %v4284 = vld [vmem:[#allocation2 + $0x1cb8] sm:$0xff]
    %v4285 = vld [vmem:[#allocation2 + $0x1cc0] sm:$0xff]
    %v4286 = vld [vmem:[#allocation2 + $0x1cc8] sm:$0xff]
    %v4287 = vld [vmem:[#allocation2 + $0x1cd0] sm:$0xff]
    %v4288 = vld [vmem:[#allocation2 + $0x1cd8] sm:$0xff]
    %v4289 = vld [vmem:[#allocation2 + $0x1ce0] sm:$0xff]
    %v4290 = vld [vmem:[#allocation2 + $0x1ce8] sm:$0xff]
    %v4291 = vld [vmem:[#allocation2 + $0x1cf0] sm:$0xff]
    %v4292 = vld [vmem:[#allocation2 + $0x1cf8] sm:$0xff]
    %v4293 = vld [vmem:[#allocation2 + $0x1d00] sm:$0xff]
    %v4294 = vld [vmem:[#allocation2 + $0x1d08] sm:$0xff]
    %v4295 = vld [vmem:[#allocation2 + $0x1d10] sm:$0xff]
    %v4296 = vld [vmem:[#allocation2 + $0x1d18] sm:$0xff]
    %v4297 = vld [vmem:[#allocation2 + $0x1d20] sm:$0xff]
    %v4298 = vld [vmem:[#allocation2 + $0x1d28] sm:$0xff]
    %v4299 = vld [vmem:[#allocation2 + $0x1d30] sm:$0xff]
    %v4300 = vld [vmem:[#allocation2 + $0x1d38] sm:$0xff]
    %v4301 = vld [vmem:[#allocation2 + $0x1d40] sm:$0xff]
    %v4302 = vld [vmem:[#allocation2 + $0x1d48] sm:$0xff]
    %v4303 = vld [vmem:[#allocation2 + $0x1d50] sm:$0xff]
    %v4304 = vld [vmem:[#allocation2 + $0x1d58] sm:$0xff]
    %v4305 = vld [vmem:[#allocation2 + $0x1d60] sm:$0xff]
    %v4306 = vld [vmem:[#allocation2 + $0x1d68] sm:$0xff]
    %v4307 = vld [vmem:[#allocation2 + $0x1d70] sm:$0xff]
    %v4308 = vld [vmem:[#allocation2 + $0x1d78] sm:$0xff]
    %v4309 = vld [vmem:[#allocation2 + $0x1d80] sm:$0xff]
    %v4310 = vld [vmem:[#allocation2 + $0x1d88] sm:$0xff]
    %v4311 = vld [vmem:[#allocation2 + $0x1d90] sm:$0xff]
    %v4312 = vld [vmem:[#allocation2 + $0x1d98] sm:$0xff]
    %v4313 = vld [vmem:[#allocation2 + $0x1da0] sm:$0xff]
    %v4314 = vld [vmem:[#allocation2 + $0x1da8] sm:$0xff]
    %v4315 = vld [vmem:[#allocation2 + $0x1db0] sm:$0xff]
    %v4316 = vld [vmem:[#allocation2 + $0x1db8] sm:$0xff]
    %v4317 = vld [vmem:[#allocation2 + $0x1dc0] sm:$0xff]
    %v4318 = vld [vmem:[#allocation2 + $0x1dc8] sm:$0xff]
    %v4319 = vld [vmem:[#allocation2 + $0x1dd0] sm:$0xff]
    %v4320 = vld [vmem:[#allocation2 + $0x1dd8] sm:$0xff]
    %v4321 = vld [vmem:[#allocation2 + $0x1de0] sm:$0xff]
    %v4322 = vld [vmem:[#allocation2 + $0x1de8] sm:$0xff]
    %v4323 = vld [vmem:[#allocation2 + $0x1df0] sm:$0xff]
    %v4324 = vld [vmem:[#allocation2 + $0x1df8] sm:$0xff]
    %v4325 = vpack.c.bf16 %v4260, %v4260
    %4326 = vmatprep.subr.bf16.mxu0 %v4262
    %4327 = vmatpush1.bf16.msra.mxu0 %v4261
    %4328 = vmatprep.subr.bf16.mxu0 %v4270
    %4329 = vmatpush1.bf16.msra.mxu0 %v4269
    %4330 = vmatprep.subr.bf16.mxu0 %v4278
    %4331 = vmatpush1.bf16.msra.mxu0 %v4277
    %4332 = vmatprep.subr.bf16.mxu0 %v4286
    %4333 = vmatpush1.bf16.msra.mxu0 %v4285
    %4334 = vmatprep.subr.bf16.mxu0 %v4294
    %4335 = vmatpush1.bf16.msra.mxu0 %v4293
    %4336 = vmatprep.subr.bf16.mxu0 %v4302
    %4337 = vmatpush1.bf16.msra.mxu0 %v4301
    %4338 = vmatprep.subr.bf16.mxu0 %v4310
    %4339 = vmatpush1.bf16.msra.mxu0 %v4309
    %4340 = vmatprep.subr.bf16.mxu0 %v4318
    %4341 = vmatpush1.bf16.msra.mxu0 %v4317
    %4342 = vmatprep.subr.bf16.mxu0 0
    %4343 = vmatpush1.bf16.msra.mxu0 0
    %4344 = vmatprep.subr.bf16.mxu0 0
    %4345 = vmatpush1.bf16.msra.mxu0 0
    %4346 = vmatprep.subr.bf16.mxu0 0
    %4347 = vmatpush1.bf16.msra.mxu0 0
    %4348 = vmatprep.subr.bf16.mxu0 0
    %4349 = vmatpush1.bf16.msra.mxu0 0
    %4350 = vmatprep.subr.bf16.mxu0 0
    %4351 = vmatpush1.bf16.msra.mxu0 0
    %4352 = vmatprep.subr.bf16.mxu0 0
    %4353 = vmatpush1.bf16.msra.mxu0 0
    %4354 = vmatprep.subr.bf16.mxu0 0
    %4355 = vmatpush1.bf16.msra.mxu0 0
    %4356 = vmatprep.subr.bf16.mxu0 0
    %4357 = vmatpush1.bf16.msra.mxu0 0
    %4358 = vmatprep.mubr.bf16.mxu0 0
    %4359 = vmatmul.mubr.bf16.gmra.mrb[0].mxu0 %v4325
    %v4360 = vpop.f32.mrb[0].mxu0
    %v4361 = vadd.f32 0.0, %v4360
    %v4362 = vpop.f32.mrb[0].mxu0
    %v4363 = vadd.f32 0.0, %v4362
    %v4364 = vpop.f32.mrb[0].mxu0
    %v4365 = vpop.f32.mrb[0].mxu0
    %4366 = vdwg.mxu0
    %4367 = vmatprep.subr.bf16.mxu0 %v4264
    %4368 = vmatpush1.bf16.msra.mxu0 %v4263
    %4369 = vmatprep.subr.bf16.mxu0 %v4272
    %4370 = vmatpush1.bf16.msra.mxu0 %v4271
    %4371 = vmatprep.subr.bf16.mxu0 %v4280
    %4372 = vmatpush1.bf16.msra.mxu0 %v4279
    %4373 = vmatprep.subr.bf16.mxu0 %v4288
    %4374 = vmatpush1.bf16.msra.mxu0 %v4287
    %4375 = vmatprep.subr.bf16.mxu0 %v4296
    %4376 = vmatpush1.bf16.msra.mxu0 %v4295
    %4377 = vmatprep.subr.bf16.mxu0 %v4304
    %4378 = vmatpush1.bf16.msra.mxu0 %v4303
    %4379 = vmatprep.subr.bf16.mxu0 %v4312
    %4380 = vmatpush1.bf16.msra.mxu0 %v4311
    %4381 = vmatprep.subr.bf16.mxu0 %v4320
    %4382 = vmatpush1.bf16.msra.mxu0 %v4319
    %4383 = vmatprep.subr.bf16.mxu0 0
    %4384 = vmatpush1.bf16.msra.mxu0 0
    %4385 = vmatprep.subr.bf16.mxu0 0
    %4386 = vmatpush1.bf16.msra.mxu0 0
    %4387 = vmatprep.subr.bf16.mxu0 0
    %4388 = vmatpush1.bf16.msra.mxu0 0
    %4389 = vmatprep.subr.bf16.mxu0 0
    %4390 = vmatpush1.bf16.msra.mxu0 0
    %4391 = vmatprep.subr.bf16.mxu0 0
    %4392 = vmatpush1.bf16.msra.mxu0 0
    %4393 = vmatprep.subr.bf16.mxu0 0
    %4394 = vmatpush1.bf16.msra.mxu0 0
    %4395 = vmatprep.subr.bf16.mxu0 0
    %4396 = vmatpush1.bf16.msra.mxu0 0
    %4397 = vmatprep.subr.bf16.mxu0 0
    %4398 = vmatpush1.bf16.msra.mxu0 0
    %4399 = vmatprep.mubr.bf16.mxu0 0
    %4400 = vmatmul.mubr.bf16.gmra.mrb[0].mxu0 %v4325
    %v4401 = vpop.f32.mrb[0].mxu0
    %v4402 = vadd.f32 0.0, %v4401
    %v4403 = vpop.f32.mrb[0].mxu0
    %v4404 = vadd.f32 0.0, %v4403
    %v4405 = vpop.f32.mrb[0].mxu0
    %v4406 = vpop.f32.mrb[0].mxu0
    %4407 = vdwg.mxu0
    %4408 = vmatprep.subr.bf16.mxu0 %v4266
    %4409 = vmatpush1.bf16.msra.mxu0 %v4265
    %4410 = vmatprep.subr.bf16.mxu0 %v4274
    %4411 = vmatpush1.bf16.msra.mxu0 %v4273
    %4412 = vmatprep.subr.bf16.mxu0 %v4282
    %4413 = vmatpush1.bf16.msra.mxu0 %v4281
    %4414 = vmatprep.subr.bf16.mxu0 %v4290
    %4415 = vmatpush1.bf16.msra.mxu0 %v4289
    %4416 = vmatprep.subr.bf16.mxu0 %v4298
    %4417 = vmatpush1.bf16.msra.mxu0 %v4297
    %4418 = vmatprep.subr.bf16.mxu0 %v4306
    %4419 = vmatpush1.bf16.msra.mxu0 %v4305
    %4420 = vmatprep.subr.bf16.mxu0 %v4314
    %4421 = vmatpush1.bf16.msra.mxu0 %v4313
    %4422 = vmatprep.subr.bf16.mxu0 %v4322
    %4423 = vmatpush1.bf16.msra.mxu0 %v4321
    %4424 = vmatprep.subr.bf16.mxu0 0
    %4425 = vmatpush1.bf16.msra.mxu0 0
    %4426 = vmatprep.subr.bf16.mxu0 0
    %4427 = vmatpush1.bf16.msra.mxu0 0
    %4428 = vmatprep.subr.bf16.mxu0 0
    %4429 = vmatpush1.bf16.msra.mxu0 0
    %4430 = vmatprep.subr.bf16.mxu0 0
    %4431 = vmatpush1.bf16.msra.mxu0 0
    %4432 = vmatprep.subr.bf16.mxu0 0
    %4433 = vmatpush1.bf16.msra.mxu0 0
    %4434 = vmatprep.subr.bf16.mxu0 0
    %4435 = vmatpush1.bf16.msra.mxu0 0
    %4436 = vmatprep.subr.bf16.mxu0 0
    %4437 = vmatpush1.bf16.msra.mxu0 0
    %4438 = vmatprep.subr.bf16.mxu0 0
    %4439 = vmatpush1.bf16.msra.mxu0 0
    %4440 = vmatprep.mubr.bf16.mxu0 0
    %4441 = vmatmul.mubr.bf16.gmra.mrb[0].mxu0 %v4325
    %v4442 = vpop.f32.mrb[0].mxu0
    %v4443 = vadd.f32 0.0, %v4442
    %v4444 = vpop.f32.mrb[0].mxu0
    %v4445 = vadd.f32 0.0, %v4444
    %v4446 = vpop.f32.mrb[0].mxu0
    %v4447 = vpop.f32.mrb[0].mxu0
    %4448 = vdwg.mxu0
    %4449 = vmatprep.subr.bf16.mxu0 %v4268
    %4450 = vmatpush1.bf16.msra.mxu0 %v4267
    %4451 = vmatprep.subr.bf16.mxu0 %v4276
    %4452 = vmatpush1.bf16.msra.mxu0 %v4275
    %4453 = vmatprep.subr.bf16.mxu0 %v4284
    %4454 = vmatpush1.bf16.msra.mxu0 %v4283
    %4455 = vmatprep.subr.bf16.mxu0 %v4292
    %4456 = vmatpush1.bf16.msra.mxu0 %v4291
    %4457 = vmatprep.subr.bf16.mxu0 %v4300
    %4458 = vmatpush1.bf16.msra.mxu0 %v4299
    %4459 = vmatprep.subr.bf16.mxu0 %v4308
    %4460 = vmatpush1.bf16.msra.mxu0 %v4307
    %4461 = vmatprep.subr.bf16.mxu0 %v4316
    %4462 = vmatpush1.bf16.msra.mxu0 %v4315
    %4463 = vmatprep.subr.bf16.mxu0 %v4324
    %4464 = vmatpush1.bf16.msra.mxu0 %v4323
    %4465 = vmatprep.subr.bf16.mxu0 0
    %4466 = vmatpush1.bf16.msra.mxu0 0
    %4467 = vmatprep.subr.bf16.mxu0 0
    %4468 = vmatpush1.bf16.msra.mxu0 0
    %4469 = vmatprep.subr.bf16.mxu0 0
    %4470 = vmatpush1.bf16.msra.mxu0 0
    %4471 = vmatprep.subr.bf16.mxu0 0
    %4472 = vmatpush1.bf16.msra.mxu0 0
    %4473 = vmatprep.subr.bf16.mxu0 0
    %4474 = vmatpush1.bf16.msra.mxu0 0
    %4475 = vmatprep.subr.bf16.mxu0 0
    %4476 = vmatpush1.bf16.msra.mxu0 0
    %4477 = vmatprep.subr.bf16.mxu0 0
    %4478 = vmatpush1.bf16.msra.mxu0 0
    %4479 = vmatprep.subr.bf16.mxu0 0
    %4480 = vmatpush1.bf16.msra.mxu0 0
    %4481 = vmatprep.mubr.bf16.mxu0 0
    %4482 = vmatmul.mubr.bf16.gmra.mrb[0].mxu0 %v4325
    %v4483 = vpop.f32.mrb[0].mxu0
    %v4484 = vadd.f32 0.0, %v4483
    %v4485 = vpop.f32.mrb[0].mxu0
    %v4486 = vadd.f32 0.0, %v4485
    %v4487 = vpop.f32.mrb[0].mxu0
    %v4488 = vpop.f32.mrb[0].mxu0
    %4489 = vdwg.mxu0
    %v4490 = vadd.f32 %v4248, %v4361
    %v4491 = vadd.f32 %v4249, %v4363
    %v4492 = vadd.f32 %v4250, %v4402
    %v4493 = vadd.f32 %v4251, %v4404
    %v4494 = vadd.f32 %v4252, %v4443
    %v4495 = vadd.f32 %v4253, %v4445
    %v4496 = vadd.f32 %v4254, %v4484
    %v4497 = vadd.f32 %v4255, %v4486
    %v4498 = vrot.slane %v588, 7
    %v4500 = vrot.slane %v876, 6
    %v4502 = vsel %vm884, %v4498, %v4500
    %v4503 = vld [vmem:[#allocation2 + $0x1e00] sm:$0xff]
    %v4504 = vld [vmem:[#allocation2 + $0x1e08] sm:$0xff]
    %v4505 = vld [vmem:[#allocation2 + $0x1e10] sm:$0xff]
    %v4506 = vld [vmem:[#allocation2 + $0x1e18] sm:$0xff]
    %v4507 = vld [vmem:[#allocation2 + $0x1e20] sm:$0xff]
    %v4508 = vld [vmem:[#allocation2 + $0x1e28] sm:$0xff]
    %v4509 = vld [vmem:[#allocation2 + $0x1e30] sm:$0xff]
    %v4510 = vld [vmem:[#allocation2 + $0x1e38] sm:$0xff]
    %v4511 = vld [vmem:[#allocation2 + $0x1e40] sm:$0xff]
    %v4512 = vld [vmem:[#allocation2 + $0x1e48] sm:$0xff]
    %v4513 = vld [vmem:[#allocation2 + $0x1e50] sm:$0xff]
    %v4514 = vld [vmem:[#allocation2 + $0x1e58] sm:$0xff]
    %v4515 = vld [vmem:[#allocation2 + $0x1e60] sm:$0xff]
    %v4516 = vld [vmem:[#allocation2 + $0x1e68] sm:$0xff]
    %v4517 = vld [vmem:[#allocation2 + $0x1e70] sm:$0xff]
    %v4518 = vld [vmem:[#allocation2 + $0x1e78] sm:$0xff]
    %v4519 = vld [vmem:[#allocation2 + $0x1e80] sm:$0xff]
    %v4520 = vld [vmem:[#allocation2 + $0x1e88] sm:$0xff]
    %v4521 = vld [vmem:[#allocation2 + $0x1e90] sm:$0xff]
    %v4522 = vld [vmem:[#allocation2 + $0x1e98] sm:$0xff]
    %v4523 = vld [vmem:[#allocation2 + $0x1ea0] sm:$0xff]
    %v4524 = vld [vmem:[#allocation2 + $0x1ea8] sm:$0xff]
    %v4525 = vld [vmem:[#allocation2 + $0x1eb0] sm:$0xff]
    %v4526 = vld [vmem:[#allocation2 + $0x1eb8] sm:$0xff]
    %v4527 = vld [vmem:[#allocation2 + $0x1ec0] sm:$0xff]
    %v4528 = vld [vmem:[#allocation2 + $0x1ec8] sm:$0xff]
    %v4529 = vld [vmem:[#allocation2 + $0x1ed0] sm:$0xff]
    %v4530 = vld [vmem:[#allocation2 + $0x1ed8] sm:$0xff]
    %v4531 = vld [vmem:[#allocation2 + $0x1ee0] sm:$0xff]
    %v4532 = vld [vmem:[#allocation2 + $0x1ee8] sm:$0xff]
    %v4533 = vld [vmem:[#allocation2 + $0x1ef0] sm:$0xff]
    %v4534 = vld [vmem:[#allocation2 + $0x1ef8] sm:$0xff]
    %v4535 = vld [vmem:[#allocation2 + $0x1f00] sm:$0xff]
    %v4536 = vld [vmem:[#allocation2 + $0x1f08] sm:$0xff]
    %v4537 = vld [vmem:[#allocation2 + $0x1f10] sm:$0xff]
    %v4538 = vld [vmem:[#allocation2 + $0x1f18] sm:$0xff]
    %v4539 = vld [vmem:[#allocation2 + $0x1f20] sm:$0xff]
    %v4540 = vld [vmem:[#allocation2 + $0x1f28] sm:$0xff]
    %v4541 = vld [vmem:[#allocation2 + $0x1f30] sm:$0xff]
    %v4542 = vld [vmem:[#allocation2 + $0x1f38] sm:$0xff]
    %v4543 = vld [vmem:[#allocation2 + $0x1f40] sm:$0xff]
    %v4544 = vld [vmem:[#allocation2 + $0x1f48] sm:$0xff]
    %v4545 = vld [vmem:[#allocation2 + $0x1f50] sm:$0xff]
    %v4546 = vld [vmem:[#allocation2 + $0x1f58] sm:$0xff]
    %v4547 = vld [vmem:[#allocation2 + $0x1f60] sm:$0xff]
    %v4548 = vld [vmem:[#allocation2 + $0x1f68] sm:$0xff]
    %v4549 = vld [vmem:[#allocation2 + $0x1f70] sm:$0xff]
    %v4550 = vld [vmem:[#allocation2 + $0x1f78] sm:$0xff]
    %v4551 = vld [vmem:[#allocation2 + $0x1f80] sm:$0xff]
    %v4552 = vld [vmem:[#allocation2 + $0x1f88] sm:$0xff]
    %v4553 = vld [vmem:[#allocation2 + $0x1f90] sm:$0xff]
    %v4554 = vld [vmem:[#allocation2 + $0x1f98] sm:$0xff]
    %v4555 = vld [vmem:[#allocation2 + $0x1fa0] sm:$0xff]
    %v4556 = vld [vmem:[#allocation2 + $0x1fa8] sm:$0xff]
    %v4557 = vld [vmem:[#allocation2 + $0x1fb0] sm:$0xff]
    %v4558 = vld [vmem:[#allocation2 + $0x1fb8] sm:$0xff]
    %v4559 = vld [vmem:[#allocation2 + $0x1fc0] sm:$0xff]
    %v4560 = vld [vmem:[#allocation2 + $0x1fc8] sm:$0xff]
    %v4561 = vld [vmem:[#allocation2 + $0x1fd0] sm:$0xff]
    %v4562 = vld [vmem:[#allocation2 + $0x1fd8] sm:$0xff]
    %v4563 = vld [vmem:[#allocation2 + $0x1fe0] sm:$0xff]
    %v4564 = vld [vmem:[#allocation2 + $0x1fe8] sm:$0xff]
    %v4565 = vld [vmem:[#allocation2 + $0x1ff0] sm:$0xff]
    %v4566 = vld [vmem:[#allocation2 + $0x1ff8] sm:$0xff]
    %v4567 = vpack.c.bf16 %v4502, %v4502
    %4568 = vmatprep.subr.bf16.mxu0 %v4504
    %4569 = vmatpush1.bf16.msra.mxu0 %v4503
    %4570 = vmatprep.subr.bf16.mxu0 %v4512
    %4571 = vmatpush1.bf16.msra.mxu0 %v4511
    %4572 = vmatprep.subr.bf16.mxu0 %v4520
    %4573 = vmatpush1.bf16.msra.mxu0 %v4519
    %4574 = vmatprep.subr.bf16.mxu0 %v4528
    %4575 = vmatpush1.bf16.msra.mxu0 %v4527
    %4576 = vmatprep.subr.bf16.mxu0 %v4536
    %4577 = vmatpush1.bf16.msra.mxu0 %v4535
    %4578 = vmatprep.subr.bf16.mxu0 %v4544
    %4579 = vmatpush1.bf16.msra.mxu0 %v4543
    %4580 = vmatprep.subr.bf16.mxu0 %v4552
    %4581 = vmatpush1.bf16.msra.mxu0 %v4551
    %4582 = vmatprep.subr.bf16.mxu0 %v4560
    %4583 = vmatpush1.bf16.msra.mxu0 %v4559
    %4584 = vmatprep.subr.bf16.mxu0 0
    %4585 = vmatpush1.bf16.msra.mxu0 0
    %4586 = vmatprep.subr.bf16.mxu0 0
    %4587 = vmatpush1.bf16.msra.mxu0 0
    %4588 = vmatprep.subr.bf16.mxu0 0
    %4589 = vmatpush1.bf16.msra.mxu0 0
    %4590 = vmatprep.subr.bf16.mxu0 0
    %4591 = vmatpush1.bf16.msra.mxu0 0
    %4592 = vmatprep.subr.bf16.mxu0 0
    %4593 = vmatpush1.bf16.msra.mxu0 0
    %4594 = vmatprep.subr.bf16.mxu0 0
    %4595 = vmatpush1.bf16.msra.mxu0 0
    %4596 = vmatprep.subr.bf16.mxu0 0
    %4597 = vmatpush1.bf16.msra.mxu0 0
    %4598 = vmatprep.subr.bf16.mxu0 0
    %4599 = vmatpush1.bf16.msra.mxu0 0
    %4600 = vmatprep.mubr.bf16.mxu0 0
    %4601 = vmatmul.mubr.bf16.gmra.mrb[0].mxu0 %v4567
    %v4602 = vpop.f32.mrb[0].mxu0
    %v4603 = vadd.f32 0.0, %v4602
    %v4604 = vpop.f32.mrb[0].mxu0
    %v4605 = vadd.f32 0.0, %v4604
    %v4606 = vpop.f32.mrb[0].mxu0
    %v4607 = vpop.f32.mrb[0].mxu0
    %4608 = vdwg.mxu0
    %4609 = vmatprep.subr.bf16.mxu0 %v4506
    %4610 = vmatpush1.bf16.msra.mxu0 %v4505
    %4611 = vmatprep.subr.bf16.mxu0 %v4514
    %4612 = vmatpush1.bf16.msra.mxu0 %v4513
    %4613 = vmatprep.subr.bf16.mxu0 %v4522
    %4614 = vmatpush1.bf16.msra.mxu0 %v4521
    %4615 = vmatprep.subr.bf16.mxu0 %v4530
    %4616 = vmatpush1.bf16.msra.mxu0 %v4529
    %4617 = vmatprep.subr.bf16.mxu0 %v4538
    %4618 = vmatpush1.bf16.msra.mxu0 %v4537
    %4619 = vmatprep.subr.bf16.mxu0 %v4546
    %4620 = vmatpush1.bf16.msra.mxu0 %v4545
    %4621 = vmatprep.subr.bf16.mxu0 %v4554
    %4622 = vmatpush1.bf16.msra.mxu0 %v4553
    %4623 = vmatprep.subr.bf16.mxu0 %v4562
    %4624 = vmatpush1.bf16.msra.mxu0 %v4561
    %4625 = vmatprep.subr.bf16.mxu0 0
    %4626 = vmatpush1.bf16.msra.mxu0 0
    %4627 = vmatprep.subr.bf16.mxu0 0
    %4628 = vmatpush1.bf16.msra.mxu0 0
    %4629 = vmatprep.subr.bf16.mxu0 0
    %4630 = vmatpush1.bf16.msra.mxu0 0
    %4631 = vmatprep.subr.bf16.mxu0 0
    %4632 = vmatpush1.bf16.msra.mxu0 0
    %4633 = vmatprep.subr.bf16.mxu0 0
    %4634 = vmatpush1.bf16.msra.mxu0 0
    %4635 = vmatprep.subr.bf16.mxu0 0
    %4636 = vmatpush1.bf16.msra.mxu0 0
    %4637 = vmatprep.subr.bf16.mxu0 0
    %4638 = vmatpush1.bf16.msra.mxu0 0
    %4639 = vmatprep.subr.bf16.mxu0 0
    %4640 = vmatpush1.bf16.msra.mxu0 0
    %4641 = vmatprep.mubr.bf16.mxu0 0
    %4642 = vmatmul.mubr.bf16.gmra.mrb[0].mxu0 %v4567
    %v4643 = vpop.f32.mrb[0].mxu0
    %v4644 = vadd.f32 0.0, %v4643
    %v4645 = vpop.f32.mrb[0].mxu0
    %v4646 = vadd.f32 0.0, %v4645
    %v4647 = vpop.f32.mrb[0].mxu0
    %v4648 = vpop.f32.mrb[0].mxu0
    %4649 = vdwg.mxu0
    %4650 = vmatprep.subr.bf16.mxu0 %v4508
    %4651 = vmatpush1.bf16.msra.mxu0 %v4507
    %4652 = vmatprep.subr.bf16.mxu0 %v4516
    %4653 = vmatpush1.bf16.msra.mxu0 %v4515
    %4654 = vmatprep.subr.bf16.mxu0 %v4524
    %4655 = vmatpush1.bf16.msra.mxu0 %v4523
    %4656 = vmatprep.subr.bf16.mxu0 %v4532
    %4657 = vmatpush1.bf16.msra.mxu0 %v4531
    %4658 = vmatprep.subr.bf16.mxu0 %v4540
    %4659 = vmatpush1.bf16.msra.mxu0 %v4539
    %4660 = vmatprep.subr.bf16.mxu0 %v4548
    %4661 = vmatpush1.bf16.msra.mxu0 %v4547
    %4662 = vmatprep.subr.bf16.mxu0 %v4556
    %4663 = vmatpush1.bf16.msra.mxu0 %v4555
    %4664 = vmatprep.subr.bf16.mxu0 %v4564
    %4665 = vmatpush1.bf16.msra.mxu0 %v4563
    %4666 = vmatprep.subr.bf16.mxu0 0
    %4667 = vmatpush1.bf16.msra.mxu0 0
    %4668 = vmatprep.subr.bf16.mxu0 0
    %4669 = vmatpush1.bf16.msra.mxu0 0
    %4670 = vmatprep.subr.bf16.mxu0 0
    %4671 = vmatpush1.bf16.msra.mxu0 0
    %4672 = vmatprep.subr.bf16.mxu0 0
    %4673 = vmatpush1.bf16.msra.mxu0 0
    %4674 = vmatprep.subr.bf16.mxu0 0
    %4675 = vmatpush1.bf16.msra.mxu0 0
    %4676 = vmatprep.subr.bf16.mxu0 0
    %4677 = vmatpush1.bf16.msra.mxu0 0
    %4678 = vmatprep.subr.bf16.mxu0 0
    %4679 = vmatpush1.bf16.msra.mxu0 0
    %4680 = vmatprep.subr.bf16.mxu0 0
    %4681 = vmatpush1.bf16.msra.mxu0 0
    %4682 = vmatprep.mubr.bf16.mxu0 0
    %4683 = vmatmul.mubr.bf16.gmra.mrb[0].mxu0 %v4567
    %v4684 = vpop.f32.mrb[0].mxu0
    %v4685 = vadd.f32 0.0, %v4684
    %v4686 = vpop.f32.mrb[0].mxu0
    %v4687 = vadd.f32 0.0, %v4686
    %v4688 = vpop.f32.mrb[0].mxu0
    %v4689 = vpop.f32.mrb[0].mxu0
    %4690 = vdwg.mxu0
    %4691 = vmatprep.subr.bf16.mxu0 %v4510
    %4692 = vmatpush1.bf16.msra.mxu0 %v4509
    %4693 = vmatprep.subr.bf16.mxu0 %v4518
    %4694 = vmatpush1.bf16.msra.mxu0 %v4517
    %4695 = vmatprep.subr.bf16.mxu0 %v4526
    %4696 = vmatpush1.bf16.msra.mxu0 %v4525
    %4697 = vmatprep.subr.bf16.mxu0 %v4534
    %4698 = vmatpush1.bf16.msra.mxu0 %v4533
    %4699 = vmatprep.subr.bf16.mxu0 %v4542
    %4700 = vmatpush1.bf16.msra.mxu0 %v4541
    %4701 = vmatprep.subr.bf16.mxu0 %v4550
    %4702 = vmatpush1.bf16.msra.mxu0 %v4549
    %4703 = vmatprep.subr.bf16.mxu0 %v4558
    %4704 = vmatpush1.bf16.msra.mxu0 %v4557
    %4705 = vmatprep.subr.bf16.mxu0 %v4566
    %4706 = vmatpush1.bf16.msra.mxu0 %v4565
    %4707 = vmatprep.subr.bf16.mxu0 0
    %4708 = vmatpush1.bf16.msra.mxu0 0
    %4709 = vmatprep.subr.bf16.mxu0 0
    %4710 = vmatpush1.bf16.msra.mxu0 0
    %4711 = vmatprep.subr.bf16.mxu0 0
    %4712 = vmatpush1.bf16.msra.mxu0 0
    %4713 = vmatprep.subr.bf16.mxu0 0
    %4714 = vmatpush1.bf16.msra.mxu0 0
    %4715 = vmatprep.subr.bf16.mxu0 0
    %4716 = vmatpush1.bf16.msra.mxu0 0
    %4717 = vmatprep.subr.bf16.mxu0 0
    %4718 = vmatpush1.bf16.msra.mxu0 0
    %4719 = vmatprep.subr.bf16.mxu0 0
    %4720 = vmatpush1.bf16.msra.mxu0 0
    %4721 = vmatprep.subr.bf16.mxu0 0
    %4722 = vmatpush1.bf16.msra.mxu0 0
    %4723 = vmatprep.mubr.bf16.mxu0 0
    %4724 = vmatmul.mubr.bf16.gmra.mrb[0].mxu0 %v4567
    %v4725 = vpop.f32.mrb[0].mxu0
    %v4726 = vadd.f32 0.0, %v4725
    %v4727 = vpop.f32.mrb[0].mxu0
    %v4728 = vadd.f32 0.0, %v4727
    %v4729 = vpop.f32.mrb[0].mxu0
    %v4730 = vpop.f32.mrb[0].mxu0
    %4731 = vdwg.mxu0
    %v4732 = vadd.f32 %v4490, %v4603
    %v4733 = vadd.f32 %v4491, %v4605
    %v4734 = vadd.f32 %v4492, %v4644
    %v4735 = vadd.f32 %v4493, %v4646
    %v4736 = vadd.f32 %v4494, %v4685
    %v4737 = vadd.f32 %v4495, %v4687
    %v4738 = vadd.f32 %v4496, %v4726
    %v4739 = vadd.f32 %v4497, %v4728
    %v4740 = vld [vmem:[#allocation12] sm:$0xff]
    %v4742 = vlaneseq
    %v4743 = vshrl.u32 %v4742, 7
    %v4744 = vsub.s32 0, %v4743
    %v4745 = vrot.slane %v4740, %v4744
    %v4746 = vlaneseq
    %v4747 = vshrl.u32 %v4746, 7
    %v4748 = vsub.s32 1, %v4747
    %v4749 = vrot.slane %v4740, %v4748
    %v4750 = vlaneseq
    %v4751 = vshrl.u32 %v4750, 7
    %v4752 = vsub.s32 2, %v4751
    %v4753 = vrot.slane %v4740, %v4752
    %v4754 = vlaneseq
    %v4755 = vshrl.u32 %v4754, 7
    %v4756 = vsub.s32 3, %v4755
    %v4757 = vrot.slane %v4740, %v4756
    %v4758 = vlaneseq
    %v4759 = vshrl.u32 %v4758, 7
    %v4760 = vsub.s32 4, %v4759
    %v4761 = vrot.slane %v4740, %v4760
    %v4762 = vlaneseq
    %v4763 = vshrl.u32 %v4762, 7
    %v4764 = vsub.s32 5, %v4763
    %v4765 = vrot.slane %v4740, %v4764
    %v4766 = vlaneseq
    %v4767 = vshrl.u32 %v4766, 7
    %v4768 = vsub.s32 6, %v4767
    %v4769 = vrot.slane %v4740, %v4768
    %v4770 = vlaneseq
    %v4771 = vshrl.u32 %v4770, 7
    %v4772 = vsub.s32 7, %v4771
    %v4773 = vrot.slane %v4740, %v4772
    %v4782 = vadd.f32 %v4732, %v4745
    %v4783 = vadd.f32 %v4733, %v4749
    %v4784 = vadd.f32 %v4734, %v4753
    %v4785 = vadd.f32 %v4735, %v4757
    %v4786 = vadd.f32 %v4736, %v4761
    %v4787 = vadd.f32 %v4737, %v4765
    %v4788 = vadd.f32 %v4738, %v4769
    %v4789 = vadd.f32 %v4739, %v4773
    %v4790 = vmax.f32 %v4782, 0.0
    %v4791 = vmax.f32 %v4783, 0.0
    %v4792 = vmax.f32 %v4784, 0.0
    %v4793 = vmax.f32 %v4785, 0.0
    %v4794 = vmax.f32 %v4786, 0.0
    %v4795 = vmax.f32 %v4787, 0.0
    %v4796 = vmax.f32 %v4788, 0.0
    %v4797 = vmax.f32 %v4789, 0.0
    %v4798 = vpack.c.bf16 %v4790, %v4790
    %v4799 = vpack.c.bf16 %v4791, %v4791
    %v4800 = vpack.c.bf16 %v4792, %v4792
    %v4801 = vpack.c.bf16 %v4793, %v4793
    %v4802 = vpack.c.bf16 %v4794, %v4794
    %v4803 = vpack.c.bf16 %v4795, %v4795
    %v4804 = vpack.c.bf16 %v4796, %v4796
    %v4805 = vpack.c.bf16 %v4797, %v4797
    %v4806 = vld [vmem:[#allocation13] sm:$0xf]
    %v4807 = vld [vmem:[#allocation13 + $0x4] sm:$0xf]
    %v4808 = vld [vmem:[#allocation13 + $0x8] sm:$0xf]
    %v4809 = vld [vmem:[#allocation13 + $0xc] sm:$0xf]
    %v4810 = vld [vmem:[#allocation13 + $0x10] sm:$0xf]
    %v4811 = vld [vmem:[#allocation13 + $0x14] sm:$0xf]
    %v4812 = vld [vmem:[#allocation13 + $0x18] sm:$0xf]
    %v4813 = vld [vmem:[#allocation13 + $0x1c] sm:$0xf]
    %v4814 = vld [vmem:[#allocation13 + $0x20] sm:$0xf]
    %v4815 = vld [vmem:[#allocation13 + $0x24] sm:$0xf]
    %v4816 = vld [vmem:[#allocation13 + $0x28] sm:$0xf]
    %v4817 = vld [vmem:[#allocation13 + $0x2c] sm:$0xf]
    %v4818 = vld [vmem:[#allocation13 + $0x30] sm:$0xf]
    %v4819 = vld [vmem:[#allocation13 + $0x34] sm:$0xf]
    %v4820 = vld [vmem:[#allocation13 + $0x38] sm:$0xf]
    %v4821 = vld [vmem:[#allocation13 + $0x3c] sm:$0xf]
    %v4822 = vld [vmem:[#allocation13 + $0x40] sm:$0xf]
    %v4823 = vld [vmem:[#allocation13 + $0x44] sm:$0xf]
    %v4824 = vld [vmem:[#allocation13 + $0x48] sm:$0xf]
    %v4825 = vld [vmem:[#allocation13 + $0x4c] sm:$0xf]
    %v4826 = vld [vmem:[#allocation13 + $0x50] sm:$0xf]
    %v4827 = vld [vmem:[#allocation13 + $0x54] sm:$0xf]
    %v4828 = vld [vmem:[#allocation13 + $0x58] sm:$0xf]
    %v4829 = vld [vmem:[#allocation13 + $0x5c] sm:$0xf]
    %v4830 = vld [vmem:[#allocation13 + $0x60] sm:$0xf]
    %v4831 = vld [vmem:[#allocation13 + $0x64] sm:$0xf]
    %v4832 = vld [vmem:[#allocation13 + $0x68] sm:$0xf]
    %v4833 = vld [vmem:[#allocation13 + $0x6c] sm:$0xf]
    %v4834 = vld [vmem:[#allocation13 + $0x70] sm:$0xf]
    %v4835 = vld [vmem:[#allocation13 + $0x74] sm:$0xf]
    %v4836 = vld [vmem:[#allocation13 + $0x78] sm:$0xf]
    %v4837 = vld [vmem:[#allocation13 + $0x7c] sm:$0xf]
    %v4838 = vld [vmem:[#allocation13 + $0x80] sm:$0xf]
    %v4839 = vld [vmem:[#allocation13 + $0x84] sm:$0xf]
    %v4840 = vld [vmem:[#allocation13 + $0x88] sm:$0xf]
    %v4841 = vld [vmem:[#allocation13 + $0x8c] sm:$0xf]
    %v4842 = vld [vmem:[#allocation13 + $0x90] sm:$0xf]
    %v4843 = vld [vmem:[#allocation13 + $0x94] sm:$0xf]
    %v4844 = vld [vmem:[#allocation13 + $0x98] sm:$0xf]
    %v4845 = vld [vmem:[#allocation13 + $0x9c] sm:$0xf]
    %v4846 = vld [vmem:[#allocation13 + $0xa0] sm:$0xf]
    %v4847 = vld [vmem:[#allocation13 + $0xa4] sm:$0xf]
    %v4848 = vld [vmem:[#allocation13 + $0xa8] sm:$0xf]
    %v4849 = vld [vmem:[#allocation13 + $0xac] sm:$0xf]
    %v4850 = vld [vmem:[#allocation13 + $0xb0] sm:$0xf]
    %v4851 = vld [vmem:[#allocation13 + $0xb4] sm:$0xf]
    %v4852 = vld [vmem:[#allocation13 + $0xb8] sm:$0xf]
    %v4853 = vld [vmem:[#allocation13 + $0xbc] sm:$0xf]
    %v4854 = vld [vmem:[#allocation13 + $0xc0] sm:$0xf]
    %v4855 = vld [vmem:[#allocation13 + $0xc4] sm:$0xf]
    %v4856 = vld [vmem:[#allocation13 + $0xc8] sm:$0xf]
    %v4857 = vld [vmem:[#allocation13 + $0xcc] sm:$0xf]
    %v4858 = vld [vmem:[#allocation13 + $0xd0] sm:$0xf]
    %v4859 = vld [vmem:[#allocation13 + $0xd4] sm:$0xf]
    %v4860 = vld [vmem:[#allocation13 + $0xd8] sm:$0xf]
    %v4861 = vld [vmem:[#allocation13 + $0xdc] sm:$0xf]
    %v4862 = vld [vmem:[#allocation13 + $0xe0] sm:$0xf]
    %v4863 = vld [vmem:[#allocation13 + $0xe4] sm:$0xf]
    %v4864 = vld [vmem:[#allocation13 + $0xe8] sm:$0xf]
    %v4865 = vld [vmem:[#allocation13 + $0xec] sm:$0xf]
    %v4866 = vld [vmem:[#allocation13 + $0xf0] sm:$0xf]
    %v4867 = vld [vmem:[#allocation13 + $0xf4] sm:$0xf]
    %v4868 = vld [vmem:[#allocation13 + $0xf8] sm:$0xf]
    %v4869 = vld [vmem:[#allocation13 + $0xfc] sm:$0xf]
    %v4870 = vld [vmem:[#allocation13 + $0x100] sm:$0xf]
    %v4871 = vld [vmem:[#allocation13 + $0x104] sm:$0xf]
    %v4872 = vld [vmem:[#allocation13 + $0x108] sm:$0xf]
    %v4873 = vld [vmem:[#allocation13 + $0x10c] sm:$0xf]
    %v4874 = vld [vmem:[#allocation13 + $0x110] sm:$0xf]
    %v4875 = vld [vmem:[#allocation13 + $0x114] sm:$0xf]
    %v4876 = vld [vmem:[#allocation13 + $0x118] sm:$0xf]
    %v4877 = vld [vmem:[#allocation13 + $0x11c] sm:$0xf]
    %v4878 = vld [vmem:[#allocation13 + $0x120] sm:$0xf]
    %v4879 = vld [vmem:[#allocation13 + $0x124] sm:$0xf]
    %v4880 = vld [vmem:[#allocation13 + $0x128] sm:$0xf]
    %v4881 = vld [vmem:[#allocation13 + $0x12c] sm:$0xf]
    %v4882 = vld [vmem:[#allocation13 + $0x130] sm:$0xf]
    %v4883 = vld [vmem:[#allocation13 + $0x134] sm:$0xf]
    %v4884 = vld [vmem:[#allocation13 + $0x138] sm:$0xf]
    %v4885 = vld [vmem:[#allocation13 + $0x13c] sm:$0xf]
    %v4886 = vld [vmem:[#allocation13 + $0x140] sm:$0xf]
    %v4887 = vld [vmem:[#allocation13 + $0x144] sm:$0xf]
    %v4888 = vld [vmem:[#allocation13 + $0x148] sm:$0xf]
    %v4889 = vld [vmem:[#allocation13 + $0x14c] sm:$0xf]
    %v4890 = vld [vmem:[#allocation13 + $0x150] sm:$0xf]
    %v4891 = vld [vmem:[#allocation13 + $0x154] sm:$0xf]
    %v4892 = vld [vmem:[#allocation13 + $0x158] sm:$0xf]
    %v4893 = vld [vmem:[#allocation13 + $0x15c] sm:$0xf]
    %v4894 = vld [vmem:[#allocation13 + $0x160] sm:$0xf]
    %v4895 = vld [vmem:[#allocation13 + $0x164] sm:$0xf]
    %v4896 = vld [vmem:[#allocation13 + $0x168] sm:$0xf]
    %v4897 = vld [vmem:[#allocation13 + $0x16c] sm:$0xf]
    %v4898 = vld [vmem:[#allocation13 + $0x170] sm:$0xf]
    %v4899 = vld [vmem:[#allocation13 + $0x174] sm:$0xf]
    %v4900 = vld [vmem:[#allocation13 + $0x178] sm:$0xf]
    %v4901 = vld [vmem:[#allocation13 + $0x17c] sm:$0xf]
    %v4902 = vld [vmem:[#allocation13 + $0x180] sm:$0xf]
    %v4903 = vld [vmem:[#allocation13 + $0x184] sm:$0xf]
    %v4904 = vld [vmem:[#allocation13 + $0x188] sm:$0xf]
    %v4905 = vld [vmem:[#allocation13 + $0x18c] sm:$0xf]
    %v4906 = vld [vmem:[#allocation13 + $0x190] sm:$0xf]
    %v4907 = vld [vmem:[#allocation13 + $0x194] sm:$0xf]
    %v4908 = vld [vmem:[#allocation13 + $0x198] sm:$0xf]
    %v4909 = vld [vmem:[#allocation13 + $0x19c] sm:$0xf]
    %v4910 = vld [vmem:[#allocation13 + $0x1a0] sm:$0xf]
    %v4911 = vld [vmem:[#allocation13 + $0x1a4] sm:$0xf]
    %v4912 = vld [vmem:[#allocation13 + $0x1a8] sm:$0xf]
    %v4913 = vld [vmem:[#allocation13 + $0x1ac] sm:$0xf]
    %v4914 = vld [vmem:[#allocation13 + $0x1b0] sm:$0xf]
    %v4915 = vld [vmem:[#allocation13 + $0x1b4] sm:$0xf]
    %v4916 = vld [vmem:[#allocation13 + $0x1b8] sm:$0xf]
    %v4917 = vld [vmem:[#allocation13 + $0x1bc] sm:$0xf]
    %v4918 = vld [vmem:[#allocation13 + $0x1c0] sm:$0xf]
    %v4919 = vld [vmem:[#allocation13 + $0x1c4] sm:$0xf]
    %v4920 = vld [vmem:[#allocation13 + $0x1c8] sm:$0xf]
    %v4921 = vld [vmem:[#allocation13 + $0x1cc] sm:$0xf]
    %v4922 = vld [vmem:[#allocation13 + $0x1d0] sm:$0xf]
    %v4923 = vld [vmem:[#allocation13 + $0x1d4] sm:$0xf]
    %v4924 = vld [vmem:[#allocation13 + $0x1d8] sm:$0xf]
    %v4925 = vld [vmem:[#allocation13 + $0x1dc] sm:$0xf]
    %v4926 = vld [vmem:[#allocation13 + $0x1e0] sm:$0xf]
    %v4927 = vld [vmem:[#allocation13 + $0x1e4] sm:$0xf]
    %v4928 = vld [vmem:[#allocation13 + $0x1e8] sm:$0xf]
    %v4929 = vld [vmem:[#allocation13 + $0x1ec] sm:$0xf]
    %v4930 = vld [vmem:[#allocation13 + $0x1f0] sm:$0xf]
    %v4931 = vld [vmem:[#allocation13 + $0x1f4] sm:$0xf]
    %v4932 = vld [vmem:[#allocation13 + $0x1f8] sm:$0xf]
    %v4933 = vld [vmem:[#allocation13 + $0x1fc] sm:$0xf]
    %v4934 = vld [vmem:[#allocation15] sm:$0x1]
    %v4936 = vlaneseq
    %v4937 = vshrl.u32 %v4936, 7
    %v4938 = vsub.s32 0, %v4937
    %v4939 = vrot.slane %v4934, %v4938
    %v5069 = vunpack.c.l.b16 %v4806
    %v5070 = vunpack.c.l.b16 %v4807
    %v5071 = vunpack.c.l.b16 %v4808
    %v5072 = vunpack.c.l.b16 %v4809
    %v5073 = vunpack.c.l.b16 %v4810
    %v5074 = vunpack.c.l.b16 %v4811
    %v5075 = vunpack.c.l.b16 %v4812
    %v5076 = vunpack.c.l.b16 %v4813
    %v5077 = vunpack.c.l.b16 %v4814
    %v5078 = vunpack.c.l.b16 %v4815
    %v5079 = vunpack.c.l.b16 %v4816
    %v5080 = vunpack.c.l.b16 %v4817
    %v5081 = vunpack.c.l.b16 %v4818
    %v5082 = vunpack.c.l.b16 %v4819
    %v5083 = vunpack.c.l.b16 %v4820
    %v5084 = vunpack.c.l.b16 %v4821
    %v5085 = vunpack.c.l.b16 %v4822
    %v5086 = vunpack.c.l.b16 %v4823
    %v5087 = vunpack.c.l.b16 %v4824
    %v5088 = vunpack.c.l.b16 %v4825
    %v5089 = vunpack.c.l.b16 %v4826
    %v5090 = vunpack.c.l.b16 %v4827
    %v5091 = vunpack.c.l.b16 %v4828
    %v5092 = vunpack.c.l.b16 %v4829
    %v5093 = vunpack.c.l.b16 %v4830
    %v5094 = vunpack.c.l.b16 %v4831
    %v5095 = vunpack.c.l.b16 %v4832
    %v5096 = vunpack.c.l.b16 %v4833
    %v5097 = vunpack.c.l.b16 %v4834
    %v5098 = vunpack.c.l.b16 %v4835
    %v5099 = vunpack.c.l.b16 %v4836
    %v5100 = vunpack.c.l.b16 %v4837
    %v5101 = vunpack.c.l.b16 %v4838
    %v5102 = vunpack.c.l.b16 %v4839
    %v5103 = vunpack.c.l.b16 %v4840
    %v5104 = vunpack.c.l.b16 %v4841
    %v5105 = vunpack.c.l.b16 %v4842
    %v5106 = vunpack.c.l.b16 %v4843
    %v5107 = vunpack.c.l.b16 %v4844
    %v5108 = vunpack.c.l.b16 %v4845
    %v5109 = vunpack.c.l.b16 %v4846
    %v5110 = vunpack.c.l.b16 %v4847
    %v5111 = vunpack.c.l.b16 %v4848
    %v5112 = vunpack.c.l.b16 %v4849
    %v5113 = vunpack.c.l.b16 %v4850
    %v5114 = vunpack.c.l.b16 %v4851
    %v5115 = vunpack.c.l.b16 %v4852
    %v5116 = vunpack.c.l.b16 %v4853
    %v5117 = vunpack.c.l.b16 %v4854
    %v5118 = vunpack.c.l.b16 %v4855
    %v5119 = vunpack.c.l.b16 %v4856
    %v5120 = vunpack.c.l.b16 %v4857
    %v5121 = vunpack.c.l.b16 %v4858
    %v5122 = vunpack.c.l.b16 %v4859
    %v5123 = vunpack.c.l.b16 %v4860
    %v5124 = vunpack.c.l.b16 %v4861
    %v5125 = vunpack.c.l.b16 %v4862
    %v5126 = vunpack.c.l.b16 %v4863
    %v5127 = vunpack.c.l.b16 %v4864
    %v5128 = vunpack.c.l.b16 %v4865
    %v5129 = vunpack.c.l.b16 %v4866
    %v5130 = vunpack.c.l.b16 %v4867
    %v5131 = vunpack.c.l.b16 %v4868
    %v5132 = vunpack.c.l.b16 %v4869
    %v5133 = vunpack.c.l.b16 %v4870
    %v5134 = vunpack.c.l.b16 %v4871
    %v5135 = vunpack.c.l.b16 %v4872
    %v5136 = vunpack.c.l.b16 %v4873
    %v5137 = vunpack.c.l.b16 %v4874
    %v5138 = vunpack.c.l.b16 %v4875
    %v5139 = vunpack.c.l.b16 %v4876
    %v5140 = vunpack.c.l.b16 %v4877
    %v5141 = vunpack.c.l.b16 %v4878
    %v5142 = vunpack.c.l.b16 %v4879
    %v5143 = vunpack.c.l.b16 %v4880
    %v5144 = vunpack.c.l.b16 %v4881
    %v5145 = vunpack.c.l.b16 %v4882
    %v5146 = vunpack.c.l.b16 %v4883
    %v5147 = vunpack.c.l.b16 %v4884
    %v5148 = vunpack.c.l.b16 %v4885
    %v5149 = vunpack.c.l.b16 %v4886
    %v5150 = vunpack.c.l.b16 %v4887
    %v5151 = vunpack.c.l.b16 %v4888
    %v5152 = vunpack.c.l.b16 %v4889
    %v5153 = vunpack.c.l.b16 %v4890
    %v5154 = vunpack.c.l.b16 %v4891
    %v5155 = vunpack.c.l.b16 %v4892
    %v5156 = vunpack.c.l.b16 %v4893
    %v5157 = vunpack.c.l.b16 %v4894
    %v5158 = vunpack.c.l.b16 %v4895
    %v5159 = vunpack.c.l.b16 %v4896
    %v5160 = vunpack.c.l.b16 %v4897
    %v5161 = vunpack.c.l.b16 %v4898
    %v5162 = vunpack.c.l.b16 %v4899
    %v5163 = vunpack.c.l.b16 %v4900
    %v5164 = vunpack.c.l.b16 %v4901
    %v5165 = vunpack.c.l.b16 %v4902
    %v5166 = vunpack.c.l.b16 %v4903
    %v5167 = vunpack.c.l.b16 %v4904
    %v5168 = vunpack.c.l.b16 %v4905
    %v5169 = vunpack.c.l.b16 %v4906
    %v5170 = vunpack.c.l.b16 %v4907
    %v5171 = vunpack.c.l.b16 %v4908
    %v5172 = vunpack.c.l.b16 %v4909
    %v5173 = vunpack.c.l.b16 %v4910
    %v5174 = vunpack.c.l.b16 %v4911
    %v5175 = vunpack.c.l.b16 %v4912
    %v5176 = vunpack.c.l.b16 %v4913
    %v5177 = vunpack.c.l.b16 %v4914
    %v5178 = vunpack.c.l.b16 %v4915
    %v5179 = vunpack.c.l.b16 %v4916
    %v5180 = vunpack.c.l.b16 %v4917
    %v5181 = vunpack.c.l.b16 %v4918
    %v5182 = vunpack.c.l.b16 %v4919
    %v5183 = vunpack.c.l.b16 %v4920
    %v5184 = vunpack.c.l.b16 %v4921
    %v5185 = vunpack.c.l.b16 %v4922
    %v5186 = vunpack.c.l.b16 %v4923
    %v5187 = vunpack.c.l.b16 %v4924
    %v5188 = vunpack.c.l.b16 %v4925
    %v5189 = vunpack.c.l.b16 %v4926
    %v5190 = vunpack.c.l.b16 %v4927
    %v5191 = vunpack.c.l.b16 %v4928
    %v5192 = vunpack.c.l.b16 %v4929
    %v5193 = vunpack.c.l.b16 %v4930
    %v5194 = vunpack.c.l.b16 %v4931
    %v5195 = vunpack.c.l.b16 %v4932
    %v5196 = vunpack.c.l.b16 %v4933
    %v5197 = vpack.c.b16 %v5070, %v5069
    %v5198 = vpack.c.b16 %v5072, %v5071
    %v5199 = vpack.c.b16 %v5074, %v5073
    %v5200 = vpack.c.b16 %v5076, %v5075
    %v5201 = vpack.c.b16 %v5078, %v5077
    %v5202 = vpack.c.b16 %v5080, %v5079
    %v5203 = vpack.c.b16 %v5082, %v5081
    %v5204 = vpack.c.b16 %v5084, %v5083
    %v5205 = vpack.c.b16 %v5086, %v5085
    %v5206 = vpack.c.b16 %v5088, %v5087
    %v5207 = vpack.c.b16 %v5090, %v5089
    %v5208 = vpack.c.b16 %v5092, %v5091
    %v5209 = vpack.c.b16 %v5094, %v5093
    %v5210 = vpack.c.b16 %v5096, %v5095
    %v5211 = vpack.c.b16 %v5098, %v5097
    %v5212 = vpack.c.b16 %v5100, %v5099
    %v5213 = vpack.c.b16 %v5102, %v5101
    %v5214 = vpack.c.b16 %v5104, %v5103
    %v5215 = vpack.c.b16 %v5106, %v5105
    %v5216 = vpack.c.b16 %v5108, %v5107
    %v5217 = vpack.c.b16 %v5110, %v5109
    %v5218 = vpack.c.b16 %v5112, %v5111
    %v5219 = vpack.c.b16 %v5114, %v5113
    %v5220 = vpack.c.b16 %v5116, %v5115
    %v5221 = vpack.c.b16 %v5118, %v5117
    %v5222 = vpack.c.b16 %v5120, %v5119
    %v5223 = vpack.c.b16 %v5122, %v5121
    %v5224 = vpack.c.b16 %v5124, %v5123
    %v5225 = vpack.c.b16 %v5126, %v5125
    %v5226 = vpack.c.b16 %v5128, %v5127
    %v5227 = vpack.c.b16 %v5130, %v5129
    %v5228 = vpack.c.b16 %v5132, %v5131
    %v5229 = vpack.c.b16 %v5134, %v5133
    %v5230 = vpack.c.b16 %v5136, %v5135
    %v5231 = vpack.c.b16 %v5138, %v5137
    %v5232 = vpack.c.b16 %v5140, %v5139
    %v5233 = vpack.c.b16 %v5142, %v5141
    %v5234 = vpack.c.b16 %v5144, %v5143
    %v5235 = vpack.c.b16 %v5146, %v5145
    %v5236 = vpack.c.b16 %v5148, %v5147
    %v5237 = vpack.c.b16 %v5150, %v5149
    %v5238 = vpack.c.b16 %v5152, %v5151
    %v5239 = vpack.c.b16 %v5154, %v5153
    %v5240 = vpack.c.b16 %v5156, %v5155
    %v5241 = vpack.c.b16 %v5158, %v5157
    %v5242 = vpack.c.b16 %v5160, %v5159
    %v5243 = vpack.c.b16 %v5162, %v5161
    %v5244 = vpack.c.b16 %v5164, %v5163
    %v5245 = vpack.c.b16 %v5166, %v5165
    %v5246 = vpack.c.b16 %v5168, %v5167
    %v5247 = vpack.c.b16 %v5170, %v5169
    %v5248 = vpack.c.b16 %v5172, %v5171
    %v5249 = vpack.c.b16 %v5174, %v5173
    %v5250 = vpack.c.b16 %v5176, %v5175
    %v5251 = vpack.c.b16 %v5178, %v5177
    %v5252 = vpack.c.b16 %v5180, %v5179
    %v5253 = vpack.c.b16 %v5182, %v5181
    %v5254 = vpack.c.b16 %v5184, %v5183
    %v5255 = vpack.c.b16 %v5186, %v5185
    %v5256 = vpack.c.b16 %v5188, %v5187
    %v5257 = vpack.c.b16 %v5190, %v5189
    %v5258 = vpack.c.b16 %v5192, %v5191
    %v5259 = vpack.c.b16 %v5194, %v5193
    %v5260 = vpack.c.b16 %v5196, %v5195
    %5325 = vmatprep.subr.bf16.mxu0 0
    %5326 = vmatpush1.bf16.msra.mxu0 %v5197
    %5327 = vmatprep.subr.bf16.mxu0 0
    %5328 = vmatpush1.bf16.msra.mxu0 %v5198
    %5329 = vmatprep.subr.bf16.mxu0 0
    %5330 = vmatpush1.bf16.msra.mxu0 %v5199
    %5331 = vmatprep.subr.bf16.mxu0 0
    %5332 = vmatpush1.bf16.msra.mxu0 %v5200
    %5333 = vmatprep.subr.bf16.mxu0 0
    %5334 = vmatpush1.bf16.msra.mxu0 %v5201
    %5335 = vmatprep.subr.bf16.mxu0 0
    %5336 = vmatpush1.bf16.msra.mxu0 %v5202
    %5337 = vmatprep.subr.bf16.mxu0 0
    %5338 = vmatpush1.bf16.msra.mxu0 %v5203
    %5339 = vmatprep.subr.bf16.mxu0 0
    %5340 = vmatpush1.bf16.msra.mxu0 %v5204
    %5341 = vmatprep.subr.bf16.mxu0 0
    %5342 = vmatpush1.bf16.msra.mxu0 %v5205
    %5343 = vmatprep.subr.bf16.mxu0 0
    %5344 = vmatpush1.bf16.msra.mxu0 %v5206
    %5345 = vmatprep.subr.bf16.mxu0 0
    %5346 = vmatpush1.bf16.msra.mxu0 %v5207
    %5347 = vmatprep.subr.bf16.mxu0 0
    %5348 = vmatpush1.bf16.msra.mxu0 %v5208
    %5349 = vmatprep.subr.bf16.mxu0 0
    %5350 = vmatpush1.bf16.msra.mxu0 %v5209
    %5351 = vmatprep.subr.bf16.mxu0 0
    %5352 = vmatpush1.bf16.msra.mxu0 %v5210
    %5353 = vmatprep.subr.bf16.mxu0 0
    %5354 = vmatpush1.bf16.msra.mxu0 %v5211
    %5355 = vmatprep.subr.bf16.mxu0 0
    %5356 = vmatpush1.bf16.msra.mxu0 %v5212
    %5357 = vmatprep.mubr.bf16.mxu0 %v4799
    %5358 = vmatmul.mubr.bf16.gmra.mrb[0].mxu0 %v4798
    %v5359 = vpop.f32.mrb[0].mxu0
    %v5360 = vadd.f32 %v4939, %v5359
    %v5361 = vpop.f32.mrb[0].mxu0
    %v5362 = vpop.f32.mrb[0].mxu0
    %v5363 = vpop.f32.mrb[0].mxu0
    %5364 = vdwg.mxu0
    %5365 = vmatprep.subr.bf16.mxu0 0
    %5366 = vmatpush1.bf16.msra.mxu0 %v5213
    %5367 = vmatprep.subr.bf16.mxu0 0
    %5368 = vmatpush1.bf16.msra.mxu0 %v5214
    %5369 = vmatprep.subr.bf16.mxu0 0
    %5370 = vmatpush1.bf16.msra.mxu0 %v5215
    %5371 = vmatprep.subr.bf16.mxu0 0
    %5372 = vmatpush1.bf16.msra.mxu0 %v5216
    %5373 = vmatprep.subr.bf16.mxu0 0
    %5374 = vmatpush1.bf16.msra.mxu0 %v5217
    %5375 = vmatprep.subr.bf16.mxu0 0
    %5376 = vmatpush1.bf16.msra.mxu0 %v5218
    %5377 = vmatprep.subr.bf16.mxu0 0
    %5378 = vmatpush1.bf16.msra.mxu0 %v5219
    %5379 = vmatprep.subr.bf16.mxu0 0
    %5380 = vmatpush1.bf16.msra.mxu0 %v5220
    %5381 = vmatprep.subr.bf16.mxu0 0
    %5382 = vmatpush1.bf16.msra.mxu0 %v5221
    %5383 = vmatprep.subr.bf16.mxu0 0
    %5384 = vmatpush1.bf16.msra.mxu0 %v5222
    %5385 = vmatprep.subr.bf16.mxu0 0
    %5386 = vmatpush1.bf16.msra.mxu0 %v5223
    %5387 = vmatprep.subr.bf16.mxu0 0
    %5388 = vmatpush1.bf16.msra.mxu0 %v5224
    %5389 = vmatprep.subr.bf16.mxu0 0
    %5390 = vmatpush1.bf16.msra.mxu0 %v5225
    %5391 = vmatprep.subr.bf16.mxu0 0
    %5392 = vmatpush1.bf16.msra.mxu0 %v5226
    %5393 = vmatprep.subr.bf16.mxu0 0
    %5394 = vmatpush1.bf16.msra.mxu0 %v5227
    %5395 = vmatprep.subr.bf16.mxu0 0
    %5396 = vmatpush1.bf16.msra.mxu0 %v5228
    %5397 = vmatprep.mubr.bf16.mxu0 %v4801
    %5398 = vmatmul.mubr.bf16.gmra.mrb[0].mxu0 %v4800
    %v5399 = vpop.f32.mrb[0].mxu0
    %v5400 = vadd.f32 %v5360, %v5399
    %v5401 = vpop.f32.mrb[0].mxu0
    %v5402 = vpop.f32.mrb[0].mxu0
    %v5403 = vpop.f32.mrb[0].mxu0
    %5404 = vdwg.mxu0
    %5405 = vmatprep.subr.bf16.mxu0 0
    %5406 = vmatpush1.bf16.msra.mxu0 %v5229
    %5407 = vmatprep.subr.bf16.mxu0 0
    %5408 = vmatpush1.bf16.msra.mxu0 %v5230
    %5409 = vmatprep.subr.bf16.mxu0 0
    %5410 = vmatpush1.bf16.msra.mxu0 %v5231
    %5411 = vmatprep.subr.bf16.mxu0 0
    %5412 = vmatpush1.bf16.msra.mxu0 %v5232
    %5413 = vmatprep.subr.bf16.mxu0 0
    %5414 = vmatpush1.bf16.msra.mxu0 %v5233
    %5415 = vmatprep.subr.bf16.mxu0 0
    %5416 = vmatpush1.bf16.msra.mxu0 %v5234
    %5417 = vmatprep.subr.bf16.mxu0 0
    %5418 = vmatpush1.bf16.msra.mxu0 %v5235
    %5419 = vmatprep.subr.bf16.mxu0 0
    %5420 = vmatpush1.bf16.msra.mxu0 %v5236
    %5421 = vmatprep.subr.bf16.mxu0 0
    %5422 = vmatpush1.bf16.msra.mxu0 %v5237
    %5423 = vmatprep.subr.bf16.mxu0 0
    %5424 = vmatpush1.bf16.msra.mxu0 %v5238
    %5425 = vmatprep.subr.bf16.mxu0 0
    %5426 = vmatpush1.bf16.msra.mxu0 %v5239
    %5427 = vmatprep.subr.bf16.mxu0 0
    %5428 = vmatpush1.bf16.msra.mxu0 %v5240
    %5429 = vmatprep.subr.bf16.mxu0 0
    %5430 = vmatpush1.bf16.msra.mxu0 %v5241
    %5431 = vmatprep.subr.bf16.mxu0 0
    %5432 = vmatpush1.bf16.msra.mxu0 %v5242
    %5433 = vmatprep.subr.bf16.mxu0 0
    %5434 = vmatpush1.bf16.msra.mxu0 %v5243
    %5435 = vmatprep.subr.bf16.mxu0 0
    %5436 = vmatpush1.bf16.msra.mxu0 %v5244
    %5437 = vmatprep.mubr.bf16.mxu0 %v4803
    %5438 = vmatmul.mubr.bf16.gmra.mrb[0].mxu0 %v4802
    %v5439 = vpop.f32.mrb[0].mxu0
    %v5440 = vadd.f32 %v5400, %v5439
    %v5441 = vpop.f32.mrb[0].mxu0
    %v5442 = vpop.f32.mrb[0].mxu0
    %v5443 = vpop.f32.mrb[0].mxu0
    %5444 = vdwg.mxu0
    %5445 = vmatprep.subr.bf16.mxu0 0
    %5446 = vmatpush1.bf16.msra.mxu0 %v5245
    %5447 = vmatprep.subr.bf16.mxu0 0
    %5448 = vmatpush1.bf16.msra.mxu0 %v5246
    %5449 = vmatprep.subr.bf16.mxu0 0
    %5450 = vmatpush1.bf16.msra.mxu0 %v5247
    %5451 = vmatprep.subr.bf16.mxu0 0
    %5452 = vmatpush1.bf16.msra.mxu0 %v5248
    %5453 = vmatprep.subr.bf16.mxu0 0
    %5454 = vmatpush1.bf16.msra.mxu0 %v5249
    %5455 = vmatprep.subr.bf16.mxu0 0
    %5456 = vmatpush1.bf16.msra.mxu0 %v5250
    %5457 = vmatprep.subr.bf16.mxu0 0
    %5458 = vmatpush1.bf16.msra.mxu0 %v5251
    %5459 = vmatprep.subr.bf16.mxu0 0
    %5460 = vmatpush1.bf16.msra.mxu0 %v5252
    %5461 = vmatprep.subr.bf16.mxu0 0
    %5462 = vmatpush1.bf16.msra.mxu0 %v5253
    %5463 = vmatprep.subr.bf16.mxu0 0
    %5464 = vmatpush1.bf16.msra.mxu0 %v5254
    %5465 = vmatprep.subr.bf16.mxu0 0
    %5466 = vmatpush1.bf16.msra.mxu0 %v5255
    %5467 = vmatprep.subr.bf16.mxu0 0
    %5468 = vmatpush1.bf16.msra.mxu0 %v5256
    %5469 = vmatprep.subr.bf16.mxu0 0
    %5470 = vmatpush1.bf16.msra.mxu0 %v5257
    %5471 = vmatprep.subr.bf16.mxu0 0
    %5472 = vmatpush1.bf16.msra.mxu0 %v5258
    %5473 = vmatprep.subr.bf16.mxu0 0
    %5474 = vmatpush1.bf16.msra.mxu0 %v5259
    %5475 = vmatprep.subr.bf16.mxu0 0
    %5476 = vmatpush1.bf16.msra.mxu0 %v5260
    %5477 = vmatprep.mubr.bf16.mxu0 %v4805
    %5478 = vmatmul.mubr.bf16.gmra.mrb[0].mxu0 %v4804
    %v5479 = vpop.f32.mrb[0].mxu0
    %v5480 = vadd.f32 %v5440, %v5479
    %v5481 = vpop.f32.mrb[0].mxu0
    %v5482 = vpop.f32.mrb[0].mxu0
    %v5483 = vpop.f32.mrb[0].mxu0
    %5484 = vdwg.mxu0
    %5485 = vst [vmem:[#allocation16] sm:$0x3] %v5480
    // Predicated region
    $region62: #{tpu_custom_call.1} parent=1 // pred_check
      _
    $region63: #{tpu_custom_call.1} parent=1 // pred_check_branch
      %5487 = sbr.rel (0) target = $region65
    $region64: #{tpu_custom_call.1} parent=1 // pred_region
      %s5489 = ssub.s32 32, 32
      %5490 = vsyncadd [#allocation6], %s5489
      %s5492 = sshll.u32 [#allocation16], 4
      %s5493 = int_to_ptr.vmem [resolvable:$true] %s5492
      %5495 = dma.vmem_to_hbm [thread:$0]  %s5493, 32, %s9, [#allocation6]
    $region65: #{tpu_custom_call.1} parent=1 // pred_fallthru
      _
    // Predicated region
    $region66: #{tpu_custom_call.1} parent=1 // pred_check
      _
    $region67: #{tpu_custom_call.1} parent=1 // pred_check_branch
      %5497 = sbr.rel (0) target = $region69
    $region68: #{tpu_custom_call.1} parent=1 // pred_region
      %5498 = dma.done [#allocation6], 32
    $region69: #{tpu_custom_call.1} parent=1 // pred_fallthru
      _
    %5499 = vsyncpa [#allocation5], 1
    %5500 = vsyncpa [#allocation8], 1
    %5501 = vsyncpa [#allocation11], 1
    %5502 = vsyncpa [#allocation14], 1
    %5503 = vsyncpa [#allocation6], 1
  %5504 = vsyncmov [#allocation3]
  %s5505 = vpop.sfrf %5504
  %p5506 = scmp.eq.s32.totalorder %s5505, 0
  %p5507 = pneg %p5506
  %5509 = shalt.err (%p5507)
  %s5510 = scalar_lea.sflag [#allocation3], 1
  %5511 = vsyncmov %s5510
  %s5512 = vpop.sfrf %5511
  %p5513 = scmp.eq.s32.totalorder %s5512, 0
  %p5514 = pneg %p5513
  %5516 = shalt.err (%p5514)
  %s5517 = scalar_lea.sflag [#allocation3], 2
  %5518 = vsyncmov %s5517
  %s5519 = vpop.sfrf %5518
  %p5520 = scmp.eq.s32.totalorder %s5519, 0
  %p5521 = pneg %p5520
  %5523 = shalt.err (%p5521)
  %s5524 = scalar_lea.sflag [#allocation3], 3
  %5525 = vsyncmov %s5524
  %s5526 = vpop.sfrf %5525
  %p5527 = scmp.eq.s32.totalorder %s5526, 0
  %p5528 = pneg %p5527
  %5530 = shalt.err (%p5528)

</llo_original>
